<compile_context>
chip_gen: v7x
topology: tpu7x:2x2x1
jax: 0.10.0
libtpu: 0.0.40
codegen_flags: <defaults>
</compile_context>

<pallas_src>
import functools
import math

import jax
import jax.numpy as jnp
from jax.experimental import pallas as pl
from jax.experimental.pallas import tpu as pltpu


PLAQ_IN, RECT_IN = 2, 4
PLAQ_OUT, RECT_OUT = 4, 8
CP = 16                                   # channel dim padded to a multiple of 8 sublanes
_SQRT_HALF = 0.7071067811865476           # 1/sqrt(2)
_INV_TWO_PI = 1.0 / (2.0 * math.pi)


# ----------------------------- pointwise math (kernel + reference) ----------------------------

def _erf(x, *, approx_recip=False):
    # Abramowitz & Stegun 7.1.26 rational approximation (|err| < 1.5e-7).
    a1, a2, a3, a4, a5 = (0.254829592, -0.284496736, 1.421413741,
                          -1.453152027, 1.061405429)
    p = 0.3275911
    sign = jnp.where(x < 0.0, -1.0, 1.0)
    ax = jnp.abs(x)
    d = 1.0 + p * ax
    # In-kernel: put the divide on the EUP slot (shared only with the exp below) instead of a
    # multi-op VPU divide sequence.  Accuracy impact is far below the 3e-3 check tolerance.
    t = pl.reciprocal(d, approx=True) if approx_recip else 1.0 / d
    poly = ((((a5 * t + a4) * t + a3) * t + a2) * t + a1) * t
    return sign * (1.0 - poly * jnp.exp(-ax * ax))


def _gelu_exact(x, *, approx_recip=False):
    # nn.GELU() default (approximate='none'): 0.5 * x * (1 + erf(x / sqrt(2)))
    return 0.5 * x * (1.0 + _erf(x * _SQRT_HALF, approx_recip=approx_recip))


def _arctan(x):
    # Cephes atanf polynomial (float32 accuracy), branch-free via jnp.where.
    pio2 = 1.5707963267948966
    pio4 = 0.7853981633974483
    sign = jnp.where(x < 0.0, -1.0, 1.0)
    ax = jnp.abs(x)
    big = ax > 2.414213562373095    # tan(3*pi/8)
    mid = ax > 0.4142135623730950   # tan(pi/8)
    xr = jnp.where(big, -1.0 / jnp.maximum(ax, 1e-30),
                   jnp.where(mid, (ax - 1.0) / (ax + 1.0), ax))
    yoff = jnp.where(big, pio2, jnp.where(mid, pio4, 0.0))
    z = xr * xr
    y = ((((8.05374449538e-2 * z - 1.38776856032e-1) * z
           + 1.99777106478e-1) * z - 3.33329491539e-1) * z * xr + xr)
    return sign * (yoff + y)


# ----------------------------------- fused Pallas kernel --------------------------------------

def _fused_cnn_kernel(x_ref, w_ref, b_ref, o_ref, *, H, W, num_res_blocks):
    """Entire jointCNN forward for a block of images, fully VMEM-resident.

    x_ref: (bblk, CP, H*W)   activations: channels on sublanes, flattened pixels on lanes
    w_ref: (L, 9, CP, CP)    per-tap conv weights, tap index = ky*3 + kx, L = 2 + 2*num_res_blocks
    b_ref: (L, CP, H*W)      biases pre-broadcast along lanes
    o_ref: (bblk, CP, H*W)
    """
    hw = H * W
    bblk, cp, _ = x_ref.shape

    # Column index of every flattened pixel -> boundary masks for the circular wrap in x.
    col = jax.lax.broadcasted_iota(jnp.int32, (cp, hw), 1) % W
    at_left = col == 0
    at_right = col == (W - 1)

    def conv3x3(v, layer):
        # Circular-'same' 3x3 conv as 9 accumulated (CP,CP)@(CP,HW) MXU matmuls.
        # The two x-shifted variants are built once (2 rolls + 1 select each); the dy = +-1
        # shifts are plain rolls by +-W on the flattened pixel axis (exact circular wrap in y).
        v_xp = jnp.where(at_right, pltpu.roll(v, W - 1, axis=1),
                         pltpu.roll(v, hw - 1, axis=1))        # value at (x+1) mod W
        v_xm = jnp.where(at_left, pltpu.roll(v, hw - W + 1, axis=1),
                         pltpu.roll(v, 1, axis=1))             # value at (x-1) mod W
        xvars = (v_xm, v, v_xp)                                # kx = 0, 1, 2  (dx = -1, 0, +1)

        acc = b_ref[layer]                                     # (CP, HW) f32, bias-initialised
        for ky, dy in enumerate((-1, 0, 1)):
            shift = (-dy * W) % hw
            for kx in range(3):
                tap = xvars[kx] if dy == 0 else pltpu.roll(xvars[kx], shift, axis=1)
                acc = acc + jnp.dot(w_ref[layer, ky * 3 + kx], tap,
                                    preferred_element_type=jnp.float32)
        return acc

    def gelu(v):
        return _gelu_exact(v, approx_recip=True)

    for b in range(bblk):                                      # static unroll over the batch block
        h = gelu(conv3x3(x_ref[b], 0))                         # initial conv + GELU
        for r in range(num_res_blocks):                        # ResBlocks
            identity = h
            t = gelu(conv3x3(h, 1 + 2 * r))
            h = gelu(conv3x3(t, 2 + 2 * r) + identity)
        h = gelu(conv3x3(h, 1 + 2 * num_res_blocks))           # final conv + GELU
        o_ref[b] = (_arctan(h) * _INV_TWO_PI).astype(o_ref.dtype)


# --------------------------------------- wrappers ---------------------------------------------

def _batch_block(B):
    """Fold the whole batch into one grid step on single-TC chips; keep per-image grid elsewhere
    (v7x / megacore chips) so images can be split across TensorCores via 'parallel' semantics."""
    if B <= 1:
        return max(B, 1)
    try:
        kind = jax.devices()[0].device_kind.lower()
    except Exception:
        return 1
    single_core = any(s in kind for s in ("v5 lite", "v5e", "v5lite", "v6 lite", "v6e", "v6lite"))
    return B if single_core else 1


def _joint_cnn_forward(packed_w, packed_b, plaq_features, rect_features):
    B, _, H, W = plaq_features.shape
    hw = H * W
    num_layers = packed_w.shape[0]
    num_res_blocks = (num_layers - 2) // 2
    cout = PLAQ_OUT + RECT_OUT

    # torch.cat([plaq, rect], dim=1) and re-layout to (B, CP, H*W) — cheap one-time glue.
    x = jnp.concatenate([plaq_features, rect_features], axis=1).astype(jnp.float32)
    cin = x.shape[1]
    x = x.reshape(B, cin, hw)
    x = jnp.pad(x, ((0, 0), (0, CP - cin), (0, 0)))            # zero-pad channels to CP

    bblk = _batch_block(B)                                     # static (trace-time) choice
    kernel = functools.partial(_fused_cnn_kernel, H=H, W=W,
                               num_res_blocks=num_res_blocks)
    out = pl.pallas_call(
        kernel,
        out_shape=jax.ShapeDtypeStruct((B, CP, hw), jnp.float32),
        grid=(B // bblk,),
        in_specs=[
            pl.BlockSpec((bblk, CP, hw), lambda i: (i, 0, 0)),
            pl.BlockSpec(packed_w.shape, lambda i: (0, 0, 0, 0)),
            pl.BlockSpec(packed_b.shape, lambda i: (0, 0, 0)),
        ],
        out_specs=pl.BlockSpec((bblk, CP, hw), lambda i: (i, 0, 0)),
        compiler_params=pltpu.CompilerParams(
            dimension_semantics=("parallel",)),
    )(x, packed_w, packed_b)

    y = out[:, :cout, :].reshape(B, cout, H, W)                # NCHW
    plaq_coeffs = y[:, :PLAQ_OUT, :, :]
    rect_coeffs = y[:, PLAQ_OUT:, :, :]
    return plaq_coeffs, rect_coeffs


joint_cnn_forward = jax.jit(_joint_cnn_forward)


# ---------------- parameter init (torch-like uniform) and one-time weight packing --------------

def init_conv_params(key, cin, cout, k=3):
    kw, kb = jax.random.split(key)
    bound = 1.0 / math.sqrt(cin * k * k)
    w = jax.random.uniform(kw, (cout, cin, k, k), jnp.float32, -bound, bound)
    b = jax.random.uniform(kb, (cout,), jnp.float32, -bound, bound)
    return w, b


def init_joint_cnn_params(key, plaq_in=PLAQ_IN, rect_in=RECT_IN,
                          plaq_out=PLAQ_OUT, rect_out=RECT_OUT, num_res_blocks=3):
    cin = plaq_in + rect_in            # 6
    cmid = cin * 2                     # 12
    cout = plaq_out + rect_out         # 12
    keys = jax.random.split(key, 2 + 2 * num_res_blocks)
    return {
        "initial": init_conv_params(keys[0], cin, cmid),
        "final": init_conv_params(keys[1], cmid, cout),
        "res": [
            (init_conv_params(keys[2 + 2 * i], cmid, cmid),
             init_conv_params(keys[3 + 2 * i], cmid, cmid))
            for i in range(num_res_blocks)
        ],
    }


def _pack_conv(w, b, hw):
    # (Cout, Cin, KH, KW) -> weights (9, CP, CP) with layout [ky*3+kx, co, ci] (zero-padded) and
    # bias pre-broadcast to (CP, hw) so the kernel's accumulator can be bias-initialised directly.
    cout, cin, kh, kw = w.shape
    wt = jnp.transpose(w, (2, 3, 0, 1))                        # (KH, KW, Cout, Cin)
    wt = jnp.pad(wt, ((0, 0), (0, 0), (0, CP - cout), (0, CP - cin)))
    wt = wt.reshape(kh * kw, CP, CP).astype(jnp.float32)
    bp = jnp.pad(b, (0, CP - cout)).astype(jnp.float32)
    bb = jnp.broadcast_to(bp[:, None], (CP, hw))
    return wt, bb


def pack_params(params, H, W):
    """Pack all conv layers once (outside the jitted forward) into two VMEM-friendly arrays."""
    hw = H * W
    layers = [params["initial"]]
    for conv1, conv2 in params["res"]:
        layers.extend([conv1, conv2])
    layers.append(params["final"])
    packed = [_pack_conv(w, b, hw) for w, b in layers]
    ws = jnp.stack([w for w, _ in packed])                     # (L, 9, CP, CP)
    bs = jnp.stack([b for _, b in packed])                     # (L, CP, hw)
    return ws, bs


# ---------------------------- pure-JAX reference (for numerical check) -------------------------

def _conv3x3_circular_ref(x, w, b):
    xp = jnp.pad(x, ((0, 0), (0, 0), (1, 1), (1, 1)), mode="wrap")
    y = jax.lax.conv_general_dilated(
        xp, w, window_strides=(1, 1), padding="VALID",
        dimension_numbers=("NCHW", "OIHW", "NCHW"),
        precision=jax.lax.Precision.HIGHEST)
    return y + b.reshape(1, -1, 1, 1)


@jax.jit
def joint_cnn_reference(params, plaq_features, rect_features):
    x = jnp.concatenate([plaq_features, rect_features], axis=1).astype(jnp.float32)
    w, b = params["initial"]
    x = _gelu_exact(_conv3x3_circular_ref(x, w, b))
    for (w1, b1), (w2, b2) in params["res"]:
        identity = x
        h = _gelu_exact(_conv3x3_circular_ref(x, w1, b1))
        x = _gelu_exact(_conv3x3_circular_ref(h, w2, b2) + identity)
    w, b = params["final"]
    x = _gelu_exact(_conv3x3_circular_ref(x, w, b))
    x = _arctan(x) * _INV_TWO_PI
    return x[:, :PLAQ_OUT, :, :], x[:, PLAQ_OUT:, :, :]


# --------------------------------------------- main -------------------------------------------

if __name__ == "__main__":
    key = jax.random.PRNGKey(0)
    kp, kr, kparams = jax.random.split(key, 3)

    B, H, W = 2, 16, 16
    plaq = jax.random.normal(kp, (B, PLAQ_IN, H, W), jnp.float32)
    rect = jax.random.normal(kr, (B, RECT_IN, H, W), jnp.float32)

    params = init_joint_cnn_params(kparams)
    packed_w, packed_b = pack_params(params, H, W)    # pack weights once, outside the jit path

    plaq_c, rect_c = joint_cnn_forward(packed_w, packed_b, plaq, rect)
    jax.block_until_ready((plaq_c, rect_c))

    assert plaq_c.shape == (B, PLAQ_OUT, H, W), plaq_c.shape
    assert rect_c.shape == (B, RECT_OUT, H, W), rect_c.shape
    assert bool(jnp.all(jnp.isfinite(plaq_c))) and bool(jnp.all(jnp.isfinite(rect_c)))

    # Numerical check vs. a pure-JAX/XLA reference of the same network (same polynomials);
    # expected difference ~1e-6..1e-4 (f32 accumulation order + EUP approx reciprocal in erf);
    # structural bugs would show up as ~1e-1.
    plaq_r, rect_r = joint_cnn_reference(params, plaq, rect)
    err = max(float(jnp.max(jnp.abs(plaq_c - plaq_r))),
              float(jnp.max(jnp.abs(rect_c - rect_r))))
    assert err < 3e-3, f"kernel/reference mismatch: max abs err = {err}"

    print("KERNEL_OK")
</pallas_src>

<mosaic_0001>
module attributes {stable_mosaic.version = 11 : i64} {
  func.func @_fused_cnn_kernel(%arg0: i32, %arg1: memref<1x16x256xf32, #tpu.memory_space<vmem>>, %arg2: memref<8x9x16x16xf32, #tpu.memory_space<vmem>>, %arg3: memref<8x16x256xf32, #tpu.memory_space<vmem>>, %arg4: memref<1x16x256xf32, #tpu.memory_space<vmem>>) attributes {dimension_semantics = [#tpu.dimension_semantics<parallel>], iteration_bounds = array<i64: 2>, scalar_prefetch = 0 : i64, scratch_operands = 0 : i64, tpu.core_type = #tpu.core_type<tc>, window_params = [{transform_indices = @transform_0, window_bounds = array<i64: 1, 16, 256>}, {pipeline_mode = #tpu.pipeline_mode<synchronous>, transform_indices = @transform_1, window_bounds = array<i64: 8, 9, 16, 16>}, {pipeline_mode = #tpu.pipeline_mode<synchronous>, transform_indices = @transform_2, window_bounds = array<i64: 8, 16, 256>}, {transform_indices = @transform_3, window_bounds = array<i64: 1, 16, 256>}]} {
    %0 = tpu.iota {dimensions = array<i32: 1>} : vector<16x256xi32>
    %c16_i32 = arith.constant 16 : i32
    %c0_i32 = arith.constant 0 : i32
    %1 = arith.cmpi eq, %c16_i32, %c0_i32 : i32
    %c1_i32 = arith.constant 1 : i32
    %2 = arith.select %1, %c1_i32, %c16_i32 : i32
    %3 = vector.broadcast %2 : i32 to vector<16x256xi32>
    %4 = arith.remsi %0, %3 : vector<16x256xi32>
    %c0_i32_0 = arith.constant 0 : i32
    %5 = vector.broadcast %c0_i32_0 : i32 to vector<16x256xi32>
    %6 = arith.cmpi ne, %4, %5 : vector<16x256xi32>
    %c0_i32_1 = arith.constant 0 : i32
    %7 = vector.broadcast %c0_i32_1 : i32 to vector<16x256xi32>
    %8 = arith.cmpi slt, %4, %7 : vector<16x256xi32>
    %c0_i32_2 = arith.constant 0 : i32
    %9 = arith.cmpi slt, %2, %c0_i32_2 : i32
    %10 = vector.broadcast %9 : i1 to vector<16x256xi1>
    %11 = vector.broadcast %10 : vector<16x256xi1> to vector<16x256xi1>
    %12 = arith.xori %8, %11 : vector<16x256xi1>
    %13 = arith.andi %12, %6 : vector<16x256xi1>
    %14 = vector.broadcast %2 : i32 to vector<16x256xi32>
    %15 = arith.addi %4, %14 : vector<16x256xi32>
    %16 = arith.select %13, %15, %4 : vector<16x256xi1>, vector<16x256xi32>
    %c0_i32_3 = arith.constant 0 : i32
    %17 = vector.broadcast %c0_i32_3 : i32 to vector<16x256xi32>
    %18 = arith.cmpi eq, %16, %17 : vector<16x256xi32>
    %c15_i32 = arith.constant 15 : i32
    %19 = vector.broadcast %c15_i32 : i32 to vector<16x256xi32>
    %20 = arith.cmpi eq, %16, %19 : vector<16x256xi32>
    %c0 = arith.constant 0 : index
    %c0_4 = arith.constant 0 : index
    %c0_5 = arith.constant 0 : index
    %21 = vector.load %arg1[%c0, %c0_4, %c0_5] : memref<1x16x256xf32, #tpu.memory_space<vmem>>, vector<1x16x256xf32>
    %22 = vector.shape_cast %21 : vector<1x16x256xf32> to vector<16x256xf32>
    %c15_i32_6 = arith.constant 15 : i32
    %23 = tpu.dynamic_rotate %22 by %c15_i32_6 dim 1 : vector<16x256xf32>, i32 -> vector<16x256xf32>
    %c255_i32 = arith.constant 255 : i32
    %24 = tpu.dynamic_rotate %22 by %c255_i32 dim 1 : vector<16x256xf32>, i32 -> vector<16x256xf32>
    %25 = arith.select %20, %23, %24 : vector<16x256xi1>, vector<16x256xf32>
    %c241_i32 = arith.constant 241 : i32
    %26 = tpu.dynamic_rotate %22 by %c241_i32 dim 1 : vector<16x256xf32>, i32 -> vector<16x256xf32>
    %c1_i32_7 = arith.constant 1 : i32
    %27 = tpu.dynamic_rotate %22 by %c1_i32_7 dim 1 : vector<16x256xf32>, i32 -> vector<16x256xf32>
    %28 = arith.select %18, %26, %27 : vector<16x256xi1>, vector<16x256xf32>
    %c0_8 = arith.constant 0 : index
    %c0_9 = arith.constant 0 : index
    %c0_10 = arith.constant 0 : index
    %29 = vector.load %arg3[%c0_8, %c0_9, %c0_10] : memref<8x16x256xf32, #tpu.memory_space<vmem>>, vector<1x16x256xf32>
    %30 = vector.shape_cast %29 : vector<1x16x256xf32> to vector<16x256xf32>
    %c16_i32_11 = arith.constant 16 : i32
    %31 = tpu.dynamic_rotate %28 by %c16_i32_11 dim 1 : vector<16x256xf32>, i32 -> vector<16x256xf32>
    %c0_12 = arith.constant 0 : index
    %c0_13 = arith.constant 0 : index
    %c0_14 = arith.constant 0 : index
    %c0_15 = arith.constant 0 : index
    %32 = vector.load %arg2[%c0_12, %c0_13, %c0_14, %c0_15] : memref<8x9x16x16xf32, #tpu.memory_space<vmem>>, vector<1x1x16x16xf32>
    %33 = vector.shape_cast %32 : vector<1x1x16x16xf32> to vector<16x16xf32>
    %cst = arith.constant dense<0.000000e+00> : vector<16x256xf32>
    %34 = tpu.matmul %33, %31, %cst {dimension_numbers = #tpu.dot_dimension_numbers<[1], [0], [0], [1], [0, 0, 1, 1], [], []>} : vector<16x16xf32>, vector<16x256xf32>, vector<16x256xf32> -> vector<16x256xf32>
    %35 = arith.addf %30, %34 : vector<16x256xf32>
    %c16_i32_16 = arith.constant 16 : i32
    %36 = tpu.dynamic_rotate %22 by %c16_i32_16 dim 1 : vector<16x256xf32>, i32 -> vector<16x256xf32>
    %c0_17 = arith.constant 0 : index
    %c1 = arith.constant 1 : index
    %c0_18 = arith.constant 0 : index
    %c0_19 = arith.constant 0 : index
    %37 = vector.load %arg2[%c0_17, %c1, %c0_18, %c0_19] : memref<8x9x16x16xf32, #tpu.memory_space<vmem>>, vector<1x1x16x16xf32>
    %38 = vector.shape_cast %37 : vector<1x1x16x16xf32> to vector<16x16xf32>
    %cst_20 = arith.constant dense<0.000000e+00> : vector<16x256xf32>
    %39 = tpu.matmul %38, %36, %cst_20 {dimension_numbers = #tpu.dot_dimension_numbers<[1], [0], [0], [1], [0, 0, 1, 1], [], []>} : vector<16x16xf32>, vector<16x256xf32>, vector<16x256xf32> -> vector<16x256xf32>
    %40 = arith.addf %35, %39 : vector<16x256xf32>
    %c16_i32_21 = arith.constant 16 : i32
    %41 = tpu.dynamic_rotate %25 by %c16_i32_21 dim 1 : vector<16x256xf32>, i32 -> vector<16x256xf32>
    %c0_22 = arith.constant 0 : index
    %c2 = arith.constant 2 : index
    %c0_23 = arith.constant 0 : index
    %c0_24 = arith.constant 0 : index
    %42 = vector.load %arg2[%c0_22, %c2, %c0_23, %c0_24] : memref<8x9x16x16xf32, #tpu.memory_space<vmem>>, vector<1x1x16x16xf32>
    %43 = vector.shape_cast %42 : vector<1x1x16x16xf32> to vector<16x16xf32>
    %cst_25 = arith.constant dense<0.000000e+00> : vector<16x256xf32>
    %44 = tpu.matmul %43, %41, %cst_25 {dimension_numbers = #tpu.dot_dimension_numbers<[1], [0], [0], [1], [0, 0, 1, 1], [], []>} : vector<16x16xf32>, vector<16x256xf32>, vector<16x256xf32> -> vector<16x256xf32>
    %45 = arith.addf %40, %44 : vector<16x256xf32>
    %c0_26 = arith.constant 0 : index
    %c3 = arith.constant 3 : index
    %c0_27 = arith.constant 0 : index
    %c0_28 = arith.constant 0 : index
    %46 = vector.load %arg2[%c0_26, %c3, %c0_27, %c0_28] : memref<8x9x16x16xf32, #tpu.memory_space<vmem>>, vector<1x1x16x16xf32>
    %47 = vector.shape_cast %46 : vector<1x1x16x16xf32> to vector<16x16xf32>
    %cst_29 = arith.constant dense<0.000000e+00> : vector<16x256xf32>
    %48 = tpu.matmul %47, %28, %cst_29 {dimension_numbers = #tpu.dot_dimension_numbers<[1], [0], [0], [1], [0, 0, 1, 1], [], []>} : vector<16x16xf32>, vector<16x256xf32>, vector<16x256xf32> -> vector<16x256xf32>
    %49 = arith.addf %45, %48 : vector<16x256xf32>
    %c0_30 = arith.constant 0 : index
    %c4 = arith.constant 4 : index
    %c0_31 = arith.constant 0 : index
    %c0_32 = arith.constant 0 : index
    %50 = vector.load %arg2[%c0_30, %c4, %c0_31, %c0_32] : memref<8x9x16x16xf32, #tpu.memory_space<vmem>>, vector<1x1x16x16xf32>
    %51 = vector.shape_cast %50 : vector<1x1x16x16xf32> to vector<16x16xf32>
    %cst_33 = arith.constant dense<0.000000e+00> : vector<16x256xf32>
    %52 = tpu.matmul %51, %22, %cst_33 {dimension_numbers = #tpu.dot_dimension_numbers<[1], [0], [0], [1], [0, 0, 1, 1], [], []>} : vector<16x16xf32>, vector<16x256xf32>, vector<16x256xf32> -> vector<16x256xf32>
    %53 = arith.addf %49, %52 : vector<16x256xf32>
    %c0_34 = arith.constant 0 : index
    %c5 = arith.constant 5 : index
    %c0_35 = arith.constant 0 : index
    %c0_36 = arith.constant 0 : index
    %54 = vector.load %arg2[%c0_34, %c5, %c0_35, %c0_36] : memref<8x9x16x16xf32, #tpu.memory_space<vmem>>, vector<1x1x16x16xf32>
    %55 = vector.shape_cast %54 : vector<1x1x16x16xf32> to vector<16x16xf32>
    %cst_37 = arith.constant dense<0.000000e+00> : vector<16x256xf32>
    %56 = tpu.matmul %55, %25, %cst_37 {dimension_numbers = #tpu.dot_dimension_numbers<[1], [0], [0], [1], [0, 0, 1, 1], [], []>} : vector<16x16xf32>, vector<16x256xf32>, vector<16x256xf32> -> vector<16x256xf32>
    %57 = arith.addf %53, %56 : vector<16x256xf32>
    %c240_i32 = arith.constant 240 : i32
    %58 = tpu.dynamic_rotate %28 by %c240_i32 dim 1 : vector<16x256xf32>, i32 -> vector<16x256xf32>
    %c0_38 = arith.constant 0 : index
    %c6 = arith.constant 6 : index
    %c0_39 = arith.constant 0 : index
    %c0_40 = arith.constant 0 : index
    %59 = vector.load %arg2[%c0_38, %c6, %c0_39, %c0_40] : memref<8x9x16x16xf32, #tpu.memory_space<vmem>>, vector<1x1x16x16xf32>
    %60 = vector.shape_cast %59 : vector<1x1x16x16xf32> to vector<16x16xf32>
    %cst_41 = arith.constant dense<0.000000e+00> : vector<16x256xf32>
    %61 = tpu.matmul %60, %58, %cst_41 {dimension_numbers = #tpu.dot_dimension_numbers<[1], [0], [0], [1], [0, 0, 1, 1], [], []>} : vector<16x16xf32>, vector<16x256xf32>, vector<16x256xf32> -> vector<16x256xf32>
    %62 = arith.addf %57, %61 : vector<16x256xf32>
    %c240_i32_42 = arith.constant 240 : i32
    %63 = tpu.dynamic_rotate %22 by %c240_i32_42 dim 1 : vector<16x256xf32>, i32 -> vector<16x256xf32>
    %c0_43 = arith.constant 0 : index
    %c7 = arith.constant 7 : index
    %c0_44 = arith.constant 0 : index
    %c0_45 = arith.constant 0 : index
    %64 = vector.load %arg2[%c0_43, %c7, %c0_44, %c0_45] : memref<8x9x16x16xf32, #tpu.memory_space<vmem>>, vector<1x1x16x16xf32>
    %65 = vector.shape_cast %64 : vector<1x1x16x16xf32> to vector<16x16xf32>
    %cst_46 = arith.constant dense<0.000000e+00> : vector<16x256xf32>
    %66 = tpu.matmul %65, %63, %cst_46 {dimension_numbers = #tpu.dot_dimension_numbers<[1], [0], [0], [1], [0, 0, 1, 1], [], []>} : vector<16x16xf32>, vector<16x256xf32>, vector<16x256xf32> -> vector<16x256xf32>
    %67 = arith.addf %62, %66 : vector<16x256xf32>
    %c240_i32_47 = arith.constant 240 : i32
    %68 = tpu.dynamic_rotate %25 by %c240_i32_47 dim 1 : vector<16x256xf32>, i32 -> vector<16x256xf32>
    %c0_48 = arith.constant 0 : index
    %c8 = arith.constant 8 : index
    %c0_49 = arith.constant 0 : index
    %c0_50 = arith.constant 0 : index
    %69 = vector.load %arg2[%c0_48, %c8, %c0_49, %c0_50] : memref<8x9x16x16xf32, #tpu.memory_space<vmem>>, vector<1x1x16x16xf32>
    %70 = vector.shape_cast %69 : vector<1x1x16x16xf32> to vector<16x16xf32>
    %cst_51 = arith.constant dense<0.000000e+00> : vector<16x256xf32>
    %71 = tpu.matmul %70, %68, %cst_51 {dimension_numbers = #tpu.dot_dimension_numbers<[1], [0], [0], [1], [0, 0, 1, 1], [], []>} : vector<16x16xf32>, vector<16x256xf32>, vector<16x256xf32> -> vector<16x256xf32>
    %72 = arith.addf %67, %71 : vector<16x256xf32>
    %cst_52 = arith.constant 5.000000e-01 : f32
    %73 = vector.broadcast %cst_52 : f32 to vector<16x256xf32>
    %74 = arith.mulf %73, %72 : vector<16x256xf32>
    %cst_53 = arith.constant 0.707106769 : f32
    %75 = vector.broadcast %cst_53 : f32 to vector<16x256xf32>
    %76 = arith.mulf %72, %75 : vector<16x256xf32>
    %cst_54 = arith.constant 0.000000e+00 : f32
    %77 = vector.broadcast %cst_54 : f32 to vector<16x256xf32>
    %78 = arith.cmpf olt, %76, %77 : vector<16x256xf32>
    %cst_55 = arith.constant -1.000000e+00 : f32
    %cst_56 = arith.constant 1.000000e+00 : f32
    %79 = vector.broadcast %cst_55 : f32 to vector<16x256xf32>
    %80 = vector.broadcast %cst_56 : f32 to vector<16x256xf32>
    %81 = arith.select %78, %79, %80 : vector<16x256xi1>, vector<16x256xf32>
    %82 = math.absf %76 : vector<16x256xf32>
    %cst_57 = arith.constant 0.327591091 : f32
    %83 = vector.broadcast %cst_57 : f32 to vector<16x256xf32>
    %84 = arith.mulf %83, %82 : vector<16x256xf32>
    %cst_58 = arith.constant 1.000000e+00 : f32
    %85 = vector.broadcast %cst_58 : f32 to vector<16x256xf32>
    %86 = arith.addf %85, %84 : vector<16x256xf32>
    %87 = tpu.reciprocal %86 {approx = true} : vector<16x256xf32> -> vector<16x256xf32>
    %cst_59 = arith.constant 1.06140542 : f32
    %88 = vector.broadcast %cst_59 : f32 to vector<16x256xf32>
    %89 = arith.mulf %88, %87 : vector<16x256xf32>
    %cst_60 = arith.constant -1.45315206 : f32
    %90 = vector.broadcast %cst_60 : f32 to vector<16x256xf32>
    %91 = arith.addf %89, %90 : vector<16x256xf32>
    %92 = arith.mulf %91, %87 : vector<16x256xf32>
    %cst_61 = arith.constant 1.42141378 : f32
    %93 = vector.broadcast %cst_61 : f32 to vector<16x256xf32>
    %94 = arith.addf %92, %93 : vector<16x256xf32>
    %95 = arith.mulf %94, %87 : vector<16x256xf32>
    %cst_62 = arith.constant -0.284496725 : f32
    %96 = vector.broadcast %cst_62 : f32 to vector<16x256xf32>
    %97 = arith.addf %95, %96 : vector<16x256xf32>
    %98 = arith.mulf %97, %87 : vector<16x256xf32>
    %cst_63 = arith.constant 0.254829586 : f32
    %99 = vector.broadcast %cst_63 : f32 to vector<16x256xf32>
    %100 = arith.addf %98, %99 : vector<16x256xf32>
    %101 = arith.mulf %100, %87 : vector<16x256xf32>
    %cst_64 = arith.constant 0.000000e+00 : f32
    %102 = vector.broadcast %cst_64 : f32 to vector<16x256xf32>
    %103 = arith.subf %102, %82 : vector<16x256xf32>
    %104 = arith.mulf %103, %82 : vector<16x256xf32>
    %105 = math.exp %104 : vector<16x256xf32>
    %106 = arith.mulf %101, %105 : vector<16x256xf32>
    %cst_65 = arith.constant 1.000000e+00 : f32
    %107 = vector.broadcast %cst_65 : f32 to vector<16x256xf32>
    %108 = arith.subf %107, %106 : vector<16x256xf32>
    %109 = arith.mulf %81, %108 : vector<16x256xf32>
    %cst_66 = arith.constant 1.000000e+00 : f32
    %110 = vector.broadcast %cst_66 : f32 to vector<16x256xf32>
    %111 = arith.addf %110, %109 : vector<16x256xf32>
    %112 = arith.mulf %74, %111 : vector<16x256xf32>
    %c15_i32_67 = arith.constant 15 : i32
    %113 = tpu.dynamic_rotate %112 by %c15_i32_67 dim 1 : vector<16x256xf32>, i32 -> vector<16x256xf32>
    %c255_i32_68 = arith.constant 255 : i32
    %114 = tpu.dynamic_rotate %112 by %c255_i32_68 dim 1 : vector<16x256xf32>, i32 -> vector<16x256xf32>
    %115 = arith.select %20, %113, %114 : vector<16x256xi1>, vector<16x256xf32>
    %c241_i32_69 = arith.constant 241 : i32
    %116 = tpu.dynamic_rotate %112 by %c241_i32_69 dim 1 : vector<16x256xf32>, i32 -> vector<16x256xf32>
    %c1_i32_70 = arith.constant 1 : i32
    %117 = tpu.dynamic_rotate %112 by %c1_i32_70 dim 1 : vector<16x256xf32>, i32 -> vector<16x256xf32>
    %118 = arith.select %18, %116, %117 : vector<16x256xi1>, vector<16x256xf32>
    %c1_71 = arith.constant 1 : index
    %c0_72 = arith.constant 0 : index
    %c0_73 = arith.constant 0 : index
    %119 = vector.load %arg3[%c1_71, %c0_72, %c0_73] : memref<8x16x256xf32, #tpu.memory_space<vmem>>, vector<1x16x256xf32>
    %120 = vector.shape_cast %119 : vector<1x16x256xf32> to vector<16x256xf32>
    %c16_i32_74 = arith.constant 16 : i32
    %121 = tpu.dynamic_rotate %118 by %c16_i32_74 dim 1 : vector<16x256xf32>, i32 -> vector<16x256xf32>
    %c1_75 = arith.constant 1 : index
    %c0_76 = arith.constant 0 : index
    %c0_77 = arith.constant 0 : index
    %c0_78 = arith.constant 0 : index
    %122 = vector.load %arg2[%c1_75, %c0_76, %c0_77, %c0_78] : memref<8x9x16x16xf32, #tpu.memory_space<vmem>>, vector<1x1x16x16xf32>
    %123 = vector.shape_cast %122 : vector<1x1x16x16xf32> to vector<16x16xf32>
    %cst_79 = arith.constant dense<0.000000e+00> : vector<16x256xf32>
    %124 = tpu.matmul %123, %121, %cst_79 {dimension_numbers = #tpu.dot_dimension_numbers<[1], [0], [0], [1], [0, 0, 1, 1], [], []>} : vector<16x16xf32>, vector<16x256xf32>, vector<16x256xf32> -> vector<16x256xf32>
    %125 = arith.addf %120, %124 : vector<16x256xf32>
    %c16_i32_80 = arith.constant 16 : i32
    %126 = tpu.dynamic_rotate %112 by %c16_i32_80 dim 1 : vector<16x256xf32>, i32 -> vector<16x256xf32>
    %c1_81 = arith.constant 1 : index
    %c1_82 = arith.constant 1 : index
    %c0_83 = arith.constant 0 : index
    %c0_84 = arith.constant 0 : index
    %127 = vector.load %arg2[%c1_81, %c1_82, %c0_83, %c0_84] : memref<8x9x16x16xf32, #tpu.memory_space<vmem>>, vector<1x1x16x16xf32>
    %128 = vector.shape_cast %127 : vector<1x1x16x16xf32> to vector<16x16xf32>
    %cst_85 = arith.constant dense<0.000000e+00> : vector<16x256xf32>
    %129 = tpu.matmul %128, %126, %cst_85 {dimension_numbers = #tpu.dot_dimension_numbers<[1], [0], [0], [1], [0, 0, 1, 1], [], []>} : vector<16x16xf32>, vector<16x256xf32>, vector<16x256xf32> -> vector<16x256xf32>
    %130 = arith.addf %125, %129 : vector<16x256xf32>
    %c16_i32_86 = arith.constant 16 : i32
    %131 = tpu.dynamic_rotate %115 by %c16_i32_86 dim 1 : vector<16x256xf32>, i32 -> vector<16x256xf32>
    %c1_87 = arith.constant 1 : index
    %c2_88 = arith.constant 2 : index
    %c0_89 = arith.constant 0 : index
    %c0_90 = arith.constant 0 : index
    %132 = vector.load %arg2[%c1_87, %c2_88, %c0_89, %c0_90] : memref<8x9x16x16xf32, #tpu.memory_space<vmem>>, vector<1x1x16x16xf32>
    %133 = vector.shape_cast %132 : vector<1x1x16x16xf32> to vector<16x16xf32>
    %cst_91 = arith.constant dense<0.000000e+00> : vector<16x256xf32>
    %134 = tpu.matmul %133, %131, %cst_91 {dimension_numbers = #tpu.dot_dimension_numbers<[1], [0], [0], [1], [0, 0, 1, 1], [], []>} : vector<16x16xf32>, vector<16x256xf32>, vector<16x256xf32> -> vector<16x256xf32>
    %135 = arith.addf %130, %134 : vector<16x256xf32>
    %c1_92 = arith.constant 1 : index
    %c3_93 = arith.constant 3 : index
    %c0_94 = arith.constant 0 : index
    %c0_95 = arith.constant 0 : index
    %136 = vector.load %arg2[%c1_92, %c3_93, %c0_94, %c0_95] : memref<8x9x16x16xf32, #tpu.memory_space<vmem>>, vector<1x1x16x16xf32>
    %137 = vector.shape_cast %136 : vector<1x1x16x16xf32> to vector<16x16xf32>
    %cst_96 = arith.constant dense<0.000000e+00> : vector<16x256xf32>
    %138 = tpu.matmul %137, %118, %cst_96 {dimension_numbers = #tpu.dot_dimension_numbers<[1], [0], [0], [1], [0, 0, 1, 1], [], []>} : vector<16x16xf32>, vector<16x256xf32>, vector<16x256xf32> -> vector<16x256xf32>
    %139 = arith.addf %135, %138 : vector<16x256xf32>
    %c1_97 = arith.constant 1 : index
    %c4_98 = arith.constant 4 : index
    %c0_99 = arith.constant 0 : index
    %c0_100 = arith.constant 0 : index
    %140 = vector.load %arg2[%c1_97, %c4_98, %c0_99, %c0_100] : memref<8x9x16x16xf32, #tpu.memory_space<vmem>>, vector<1x1x16x16xf32>
    %141 = vector.shape_cast %140 : vector<1x1x16x16xf32> to vector<16x16xf32>
    %cst_101 = arith.constant dense<0.000000e+00> : vector<16x256xf32>
    %142 = tpu.matmul %141, %112, %cst_101 {dimension_numbers = #tpu.dot_dimension_numbers<[1], [0], [0], [1], [0, 0, 1, 1], [], []>} : vector<16x16xf32>, vector<16x256xf32>, vector<16x256xf32> -> vector<16x256xf32>
    %143 = arith.addf %139, %142 : vector<16x256xf32>
    %c1_102 = arith.constant 1 : index
    %c5_103 = arith.constant 5 : index
    %c0_104 = arith.constant 0 : index
    %c0_105 = arith.constant 0 : index
    %144 = vector.load %arg2[%c1_102, %c5_103, %c0_104, %c0_105] : memref<8x9x16x16xf32, #tpu.memory_space<vmem>>, vector<1x1x16x16xf32>
    %145 = vector.shape_cast %144 : vector<1x1x16x16xf32> to vector<16x16xf32>
    %cst_106 = arith.constant dense<0.000000e+00> : vector<16x256xf32>
    %146 = tpu.matmul %145, %115, %cst_106 {dimension_numbers = #tpu.dot_dimension_numbers<[1], [0], [0], [1], [0, 0, 1, 1], [], []>} : vector<16x16xf32>, vector<16x256xf32>, vector<16x256xf32> -> vector<16x256xf32>
    %147 = arith.addf %143, %146 : vector<16x256xf32>
    %c240_i32_107 = arith.constant 240 : i32
    %148 = tpu.dynamic_rotate %118 by %c240_i32_107 dim 1 : vector<16x256xf32>, i32 -> vector<16x256xf32>
    %c1_108 = arith.constant 1 : index
    %c6_109 = arith.constant 6 : index
    %c0_110 = arith.constant 0 : index
    %c0_111 = arith.constant 0 : index
    %149 = vector.load %arg2[%c1_108, %c6_109, %c0_110, %c0_111] : memref<8x9x16x16xf32, #tpu.memory_space<vmem>>, vector<1x1x16x16xf32>
    %150 = vector.shape_cast %149 : vector<1x1x16x16xf32> to vector<16x16xf32>
    %cst_112 = arith.constant dense<0.000000e+00> : vector<16x256xf32>
    %151 = tpu.matmul %150, %148, %cst_112 {dimension_numbers = #tpu.dot_dimension_numbers<[1], [0], [0], [1], [0, 0, 1, 1], [], []>} : vector<16x16xf32>, vector<16x256xf32>, vector<16x256xf32> -> vector<16x256xf32>
    %152 = arith.addf %147, %151 : vector<16x256xf32>
    %c240_i32_113 = arith.constant 240 : i32
    %153 = tpu.dynamic_rotate %112 by %c240_i32_113 dim 1 : vector<16x256xf32>, i32 -> vector<16x256xf32>
    %c1_114 = arith.constant 1 : index
    %c7_115 = arith.constant 7 : index
    %c0_116 = arith.constant 0 : index
    %c0_117 = arith.constant 0 : index
    %154 = vector.load %arg2[%c1_114, %c7_115, %c0_116, %c0_117] : memref<8x9x16x16xf32, #tpu.memory_space<vmem>>, vector<1x1x16x16xf32>
    %155 = vector.shape_cast %154 : vector<1x1x16x16xf32> to vector<16x16xf32>
    %cst_118 = arith.constant dense<0.000000e+00> : vector<16x256xf32>
    %156 = tpu.matmul %155, %153, %cst_118 {dimension_numbers = #tpu.dot_dimension_numbers<[1], [0], [0], [1], [0, 0, 1, 1], [], []>} : vector<16x16xf32>, vector<16x256xf32>, vector<16x256xf32> -> vector<16x256xf32>
    %157 = arith.addf %152, %156 : vector<16x256xf32>
    %c240_i32_119 = arith.constant 240 : i32
    %158 = tpu.dynamic_rotate %115 by %c240_i32_119 dim 1 : vector<16x256xf32>, i32 -> vector<16x256xf32>
    %c1_120 = arith.constant 1 : index
    %c8_121 = arith.constant 8 : index
    %c0_122 = arith.constant 0 : index
    %c0_123 = arith.constant 0 : index
    %159 = vector.load %arg2[%c1_120, %c8_121, %c0_122, %c0_123] : memref<8x9x16x16xf32, #tpu.memory_space<vmem>>, vector<1x1x16x16xf32>
    %160 = vector.shape_cast %159 : vector<1x1x16x16xf32> to vector<16x16xf32>
    %cst_124 = arith.constant dense<0.000000e+00> : vector<16x256xf32>
    %161 = tpu.matmul %160, %158, %cst_124 {dimension_numbers = #tpu.dot_dimension_numbers<[1], [0], [0], [1], [0, 0, 1, 1], [], []>} : vector<16x16xf32>, vector<16x256xf32>, vector<16x256xf32> -> vector<16x256xf32>
    %162 = arith.addf %157, %161 : vector<16x256xf32>
    %cst_125 = arith.constant 5.000000e-01 : f32
    %163 = vector.broadcast %cst_125 : f32 to vector<16x256xf32>
    %164 = arith.mulf %163, %162 : vector<16x256xf32>
    %cst_126 = arith.constant 0.707106769 : f32
    %165 = vector.broadcast %cst_126 : f32 to vector<16x256xf32>
    %166 = arith.mulf %162, %165 : vector<16x256xf32>
    %cst_127 = arith.constant 0.000000e+00 : f32
    %167 = vector.broadcast %cst_127 : f32 to vector<16x256xf32>
    %168 = arith.cmpf olt, %166, %167 : vector<16x256xf32>
    %cst_128 = arith.constant -1.000000e+00 : f32
    %cst_129 = arith.constant 1.000000e+00 : f32
    %169 = vector.broadcast %cst_128 : f32 to vector<16x256xf32>
    %170 = vector.broadcast %cst_129 : f32 to vector<16x256xf32>
    %171 = arith.select %168, %169, %170 : vector<16x256xi1>, vector<16x256xf32>
    %172 = math.absf %166 : vector<16x256xf32>
    %cst_130 = arith.constant 0.327591091 : f32
    %173 = vector.broadcast %cst_130 : f32 to vector<16x256xf32>
    %174 = arith.mulf %173, %172 : vector<16x256xf32>
    %cst_131 = arith.constant 1.000000e+00 : f32
    %175 = vector.broadcast %cst_131 : f32 to vector<16x256xf32>
    %176 = arith.addf %175, %174 : vector<16x256xf32>
    %177 = tpu.reciprocal %176 {approx = true} : vector<16x256xf32> -> vector<16x256xf32>
    %cst_132 = arith.constant 1.06140542 : f32
    %178 = vector.broadcast %cst_132 : f32 to vector<16x256xf32>
    %179 = arith.mulf %178, %177 : vector<16x256xf32>
    %cst_133 = arith.constant -1.45315206 : f32
    %180 = vector.broadcast %cst_133 : f32 to vector<16x256xf32>
    %181 = arith.addf %179, %180 : vector<16x256xf32>
    %182 = arith.mulf %181, %177 : vector<16x256xf32>
    %cst_134 = arith.constant 1.42141378 : f32
    %183 = vector.broadcast %cst_134 : f32 to vector<16x256xf32>
    %184 = arith.addf %182, %183 : vector<16x256xf32>
    %185 = arith.mulf %184, %177 : vector<16x256xf32>
    %cst_135 = arith.constant -0.284496725 : f32
    %186 = vector.broadcast %cst_135 : f32 to vector<16x256xf32>
    %187 = arith.addf %185, %186 : vector<16x256xf32>
    %188 = arith.mulf %187, %177 : vector<16x256xf32>
    %cst_136 = arith.constant 0.254829586 : f32
    %189 = vector.broadcast %cst_136 : f32 to vector<16x256xf32>
    %190 = arith.addf %188, %189 : vector<16x256xf32>
    %191 = arith.mulf %190, %177 : vector<16x256xf32>
    %cst_137 = arith.constant 0.000000e+00 : f32
    %192 = vector.broadcast %cst_137 : f32 to vector<16x256xf32>
    %193 = arith.subf %192, %172 : vector<16x256xf32>
    %194 = arith.mulf %193, %172 : vector<16x256xf32>
    %195 = math.exp %194 : vector<16x256xf32>
    %196 = arith.mulf %191, %195 : vector<16x256xf32>
    %cst_138 = arith.constant 1.000000e+00 : f32
    %197 = vector.broadcast %cst_138 : f32 to vector<16x256xf32>
    %198 = arith.subf %197, %196 : vector<16x256xf32>
    %199 = arith.mulf %171, %198 : vector<16x256xf32>
    %cst_139 = arith.constant 1.000000e+00 : f32
    %200 = vector.broadcast %cst_139 : f32 to vector<16x256xf32>
    %201 = arith.addf %200, %199 : vector<16x256xf32>
    %202 = arith.mulf %164, %201 : vector<16x256xf32>
    %c15_i32_140 = arith.constant 15 : i32
    %203 = tpu.dynamic_rotate %202 by %c15_i32_140 dim 1 : vector<16x256xf32>, i32 -> vector<16x256xf32>
    %c255_i32_141 = arith.constant 255 : i32
    %204 = tpu.dynamic_rotate %202 by %c255_i32_141 dim 1 : vector<16x256xf32>, i32 -> vector<16x256xf32>
    %205 = arith.select %20, %203, %204 : vector<16x256xi1>, vector<16x256xf32>
    %c241_i32_142 = arith.constant 241 : i32
    %206 = tpu.dynamic_rotate %202 by %c241_i32_142 dim 1 : vector<16x256xf32>, i32 -> vector<16x256xf32>
    %c1_i32_143 = arith.constant 1 : i32
    %207 = tpu.dynamic_rotate %202 by %c1_i32_143 dim 1 : vector<16x256xf32>, i32 -> vector<16x256xf32>
    %208 = arith.select %18, %206, %207 : vector<16x256xi1>, vector<16x256xf32>
    %c2_144 = arith.constant 2 : index
    %c0_145 = arith.constant 0 : index
    %c0_146 = arith.constant 0 : index
    %209 = vector.load %arg3[%c2_144, %c0_145, %c0_146] : memref<8x16x256xf32, #tpu.memory_space<vmem>>, vector<1x16x256xf32>
    %210 = vector.shape_cast %209 : vector<1x16x256xf32> to vector<16x256xf32>
    %c16_i32_147 = arith.constant 16 : i32
    %211 = tpu.dynamic_rotate %208 by %c16_i32_147 dim 1 : vector<16x256xf32>, i32 -> vector<16x256xf32>
    %c2_148 = arith.constant 2 : index
    %c0_149 = arith.constant 0 : index
    %c0_150 = arith.constant 0 : index
    %c0_151 = arith.constant 0 : index
    %212 = vector.load %arg2[%c2_148, %c0_149, %c0_150, %c0_151] : memref<8x9x16x16xf32, #tpu.memory_space<vmem>>, vector<1x1x16x16xf32>
    %213 = vector.shape_cast %212 : vector<1x1x16x16xf32> to vector<16x16xf32>
    %cst_152 = arith.constant dense<0.000000e+00> : vector<16x256xf32>
    %214 = tpu.matmul %213, %211, %cst_152 {dimension_numbers = #tpu.dot_dimension_numbers<[1], [0], [0], [1], [0, 0, 1, 1], [], []>} : vector<16x16xf32>, vector<16x256xf32>, vector<16x256xf32> -> vector<16x256xf32>
    %215 = arith.addf %210, %214 : vector<16x256xf32>
    %c16_i32_153 = arith.constant 16 : i32
    %216 = tpu.dynamic_rotate %202 by %c16_i32_153 dim 1 : vector<16x256xf32>, i32 -> vector<16x256xf32>
    %c2_154 = arith.constant 2 : index
    %c1_155 = arith.constant 1 : index
    %c0_156 = arith.constant 0 : index
    %c0_157 = arith.constant 0 : index
    %217 = vector.load %arg2[%c2_154, %c1_155, %c0_156, %c0_157] : memref<8x9x16x16xf32, #tpu.memory_space<vmem>>, vector<1x1x16x16xf32>
    %218 = vector.shape_cast %217 : vector<1x1x16x16xf32> to vector<16x16xf32>
    %cst_158 = arith.constant dense<0.000000e+00> : vector<16x256xf32>
    %219 = tpu.matmul %218, %216, %cst_158 {dimension_numbers = #tpu.dot_dimension_numbers<[1], [0], [0], [1], [0, 0, 1, 1], [], []>} : vector<16x16xf32>, vector<16x256xf32>, vector<16x256xf32> -> vector<16x256xf32>
    %220 = arith.addf %215, %219 : vector<16x256xf32>
    %c16_i32_159 = arith.constant 16 : i32
    %221 = tpu.dynamic_rotate %205 by %c16_i32_159 dim 1 : vector<16x256xf32>, i32 -> vector<16x256xf32>
    %c2_160 = arith.constant 2 : index
    %c2_161 = arith.constant 2 : index
    %c0_162 = arith.constant 0 : index
    %c0_163 = arith.constant 0 : index
    %222 = vector.load %arg2[%c2_160, %c2_161, %c0_162, %c0_163] : memref<8x9x16x16xf32, #tpu.memory_space<vmem>>, vector<1x1x16x16xf32>
    %223 = vector.shape_cast %222 : vector<1x1x16x16xf32> to vector<16x16xf32>
    %cst_164 = arith.constant dense<0.000000e+00> : vector<16x256xf32>
    %224 = tpu.matmul %223, %221, %cst_164 {dimension_numbers = #tpu.dot_dimension_numbers<[1], [0], [0], [1], [0, 0, 1, 1], [], []>} : vector<16x16xf32>, vector<16x256xf32>, vector<16x256xf32> -> vector<16x256xf32>
    %225 = arith.addf %220, %224 : vector<16x256xf32>
    %c2_165 = arith.constant 2 : index
    %c3_166 = arith.constant 3 : index
    %c0_167 = arith.constant 0 : index
    %c0_168 = arith.constant 0 : index
    %226 = vector.load %arg2[%c2_165, %c3_166, %c0_167, %c0_168] : memref<8x9x16x16xf32, #tpu.memory_space<vmem>>, vector<1x1x16x16xf32>
    %227 = vector.shape_cast %226 : vector<1x1x16x16xf32> to vector<16x16xf32>
    %cst_169 = arith.constant dense<0.000000e+00> : vector<16x256xf32>
    %228 = tpu.matmul %227, %208, %cst_169 {dimension_numbers = #tpu.dot_dimension_numbers<[1], [0], [0], [1], [0, 0, 1, 1], [], []>} : vector<16x16xf32>, vector<16x256xf32>, vector<16x256xf32> -> vector<16x256xf32>
    %229 = arith.addf %225, %228 : vector<16x256xf32>
    %c2_170 = arith.constant 2 : index
    %c4_171 = arith.constant 4 : index
    %c0_172 = arith.constant 0 : index
    %c0_173 = arith.constant 0 : index
    %230 = vector.load %arg2[%c2_170, %c4_171, %c0_172, %c0_173] : memref<8x9x16x16xf32, #tpu.memory_space<vmem>>, vector<1x1x16x16xf32>
    %231 = vector.shape_cast %230 : vector<1x1x16x16xf32> to vector<16x16xf32>
    %cst_174 = arith.constant dense<0.000000e+00> : vector<16x256xf32>
    %232 = tpu.matmul %231, %202, %cst_174 {dimension_numbers = #tpu.dot_dimension_numbers<[1], [0], [0], [1], [0, 0, 1, 1], [], []>} : vector<16x16xf32>, vector<16x256xf32>, vector<16x256xf32> -> vector<16x256xf32>
    %233 = arith.addf %229, %232 : vector<16x256xf32>
    %c2_175 = arith.constant 2 : index
    %c5_176 = arith.constant 5 : index
    %c0_177 = arith.constant 0 : index
    %c0_178 = arith.constant 0 : index
    %234 = vector.load %arg2[%c2_175, %c5_176, %c0_177, %c0_178] : memref<8x9x16x16xf32, #tpu.memory_space<vmem>>, vector<1x1x16x16xf32>
    %235 = vector.shape_cast %234 : vector<1x1x16x16xf32> to vector<16x16xf32>
    %cst_179 = arith.constant dense<0.000000e+00> : vector<16x256xf32>
    %236 = tpu.matmul %235, %205, %cst_179 {dimension_numbers = #tpu.dot_dimension_numbers<[1], [0], [0], [1], [0, 0, 1, 1], [], []>} : vector<16x16xf32>, vector<16x256xf32>, vector<16x256xf32> -> vector<16x256xf32>
    %237 = arith.addf %233, %236 : vector<16x256xf32>
    %c240_i32_180 = arith.constant 240 : i32
    %238 = tpu.dynamic_rotate %208 by %c240_i32_180 dim 1 : vector<16x256xf32>, i32 -> vector<16x256xf32>
    %c2_181 = arith.constant 2 : index
    %c6_182 = arith.constant 6 : index
    %c0_183 = arith.constant 0 : index
    %c0_184 = arith.constant 0 : index
    %239 = vector.load %arg2[%c2_181, %c6_182, %c0_183, %c0_184] : memref<8x9x16x16xf32, #tpu.memory_space<vmem>>, vector<1x1x16x16xf32>
    %240 = vector.shape_cast %239 : vector<1x1x16x16xf32> to vector<16x16xf32>
    %cst_185 = arith.constant dense<0.000000e+00> : vector<16x256xf32>
    %241 = tpu.matmul %240, %238, %cst_185 {dimension_numbers = #tpu.dot_dimension_numbers<[1], [0], [0], [1], [0, 0, 1, 1], [], []>} : vector<16x16xf32>, vector<16x256xf32>, vector<16x256xf32> -> vector<16x256xf32>
    %242 = arith.addf %237, %241 : vector<16x256xf32>
    %c240_i32_186 = arith.constant 240 : i32
    %243 = tpu.dynamic_rotate %202 by %c240_i32_186 dim 1 : vector<16x256xf32>, i32 -> vector<16x256xf32>
    %c2_187 = arith.constant 2 : index
    %c7_188 = arith.constant 7 : index
    %c0_189 = arith.constant 0 : index
    %c0_190 = arith.constant 0 : index
    %244 = vector.load %arg2[%c2_187, %c7_188, %c0_189, %c0_190] : memref<8x9x16x16xf32, #tpu.memory_space<vmem>>, vector<1x1x16x16xf32>
    %245 = vector.shape_cast %244 : vector<1x1x16x16xf32> to vector<16x16xf32>
    %cst_191 = arith.constant dense<0.000000e+00> : vector<16x256xf32>
    %246 = tpu.matmul %245, %243, %cst_191 {dimension_numbers = #tpu.dot_dimension_numbers<[1], [0], [0], [1], [0, 0, 1, 1], [], []>} : vector<16x16xf32>, vector<16x256xf32>, vector<16x256xf32> -> vector<16x256xf32>
    %247 = arith.addf %242, %246 : vector<16x256xf32>
    %c240_i32_192 = arith.constant 240 : i32
    %248 = tpu.dynamic_rotate %205 by %c240_i32_192 dim 1 : vector<16x256xf32>, i32 -> vector<16x256xf32>
    %c2_193 = arith.constant 2 : index
    %c8_194 = arith.constant 8 : index
    %c0_195 = arith.constant 0 : index
    %c0_196 = arith.constant 0 : index
    %249 = vector.load %arg2[%c2_193, %c8_194, %c0_195, %c0_196] : memref<8x9x16x16xf32, #tpu.memory_space<vmem>>, vector<1x1x16x16xf32>
    %250 = vector.shape_cast %249 : vector<1x1x16x16xf32> to vector<16x16xf32>
    %cst_197 = arith.constant dense<0.000000e+00> : vector<16x256xf32>
    %251 = tpu.matmul %250, %248, %cst_197 {dimension_numbers = #tpu.dot_dimension_numbers<[1], [0], [0], [1], [0, 0, 1, 1], [], []>} : vector<16x16xf32>, vector<16x256xf32>, vector<16x256xf32> -> vector<16x256xf32>
    %252 = arith.addf %247, %251 : vector<16x256xf32>
    %253 = arith.addf %252, %112 : vector<16x256xf32>
    %cst_198 = arith.constant 5.000000e-01 : f32
    %254 = vector.broadcast %cst_198 : f32 to vector<16x256xf32>
    %255 = arith.mulf %254, %253 : vector<16x256xf32>
    %cst_199 = arith.constant 0.707106769 : f32
    %256 = vector.broadcast %cst_199 : f32 to vector<16x256xf32>
    %257 = arith.mulf %253, %256 : vector<16x256xf32>
    %cst_200 = arith.constant 0.000000e+00 : f32
    %258 = vector.broadcast %cst_200 : f32 to vector<16x256xf32>
    %259 = arith.cmpf olt, %257, %258 : vector<16x256xf32>
    %cst_201 = arith.constant -1.000000e+00 : f32
    %cst_202 = arith.constant 1.000000e+00 : f32
    %260 = vector.broadcast %cst_201 : f32 to vector<16x256xf32>
    %261 = vector.broadcast %cst_202 : f32 to vector<16x256xf32>
    %262 = arith.select %259, %260, %261 : vector<16x256xi1>, vector<16x256xf32>
    %263 = math.absf %257 : vector<16x256xf32>
    %cst_203 = arith.constant 0.327591091 : f32
    %264 = vector.broadcast %cst_203 : f32 to vector<16x256xf32>
    %265 = arith.mulf %264, %263 : vector<16x256xf32>
    %cst_204 = arith.constant 1.000000e+00 : f32
    %266 = vector.broadcast %cst_204 : f32 to vector<16x256xf32>
    %267 = arith.addf %266, %265 : vector<16x256xf32>
    %268 = tpu.reciprocal %267 {approx = true} : vector<16x256xf32> -> vector<16x256xf32>
    %cst_205 = arith.constant 1.06140542 : f32
    %269 = vector.broadcast %cst_205 : f32 to vector<16x256xf32>
    %270 = arith.mulf %269, %268 : vector<16x256xf32>
    %cst_206 = arith.constant -1.45315206 : f32
    %271 = vector.broadcast %cst_206 : f32 to vector<16x256xf32>
    %272 = arith.addf %270, %271 : vector<16x256xf32>
    %273 = arith.mulf %272, %268 : vector<16x256xf32>
    %cst_207 = arith.constant 1.42141378 : f32
    %274 = vector.broadcast %cst_207 : f32 to vector<16x256xf32>
    %275 = arith.addf %273, %274 : vector<16x256xf32>
    %276 = arith.mulf %275, %268 : vector<16x256xf32>
    %cst_208 = arith.constant -0.284496725 : f32
    %277 = vector.broadcast %cst_208 : f32 to vector<16x256xf32>
    %278 = arith.addf %276, %277 : vector<16x256xf32>
    %279 = arith.mulf %278, %268 : vector<16x256xf32>
    %cst_209 = arith.constant 0.254829586 : f32
    %280 = vector.broadcast %cst_209 : f32 to vector<16x256xf32>
    %281 = arith.addf %279, %280 : vector<16x256xf32>
    %282 = arith.mulf %281, %268 : vector<16x256xf32>
    %cst_210 = arith.constant 0.000000e+00 : f32
    %283 = vector.broadcast %cst_210 : f32 to vector<16x256xf32>
    %284 = arith.subf %283, %263 : vector<16x256xf32>
    %285 = arith.mulf %284, %263 : vector<16x256xf32>
    %286 = math.exp %285 : vector<16x256xf32>
    %287 = arith.mulf %282, %286 : vector<16x256xf32>
    %cst_211 = arith.constant 1.000000e+00 : f32
    %288 = vector.broadcast %cst_211 : f32 to vector<16x256xf32>
    %289 = arith.subf %288, %287 : vector<16x256xf32>
    %290 = arith.mulf %262, %289 : vector<16x256xf32>
    %cst_212 = arith.constant 1.000000e+00 : f32
    %291 = vector.broadcast %cst_212 : f32 to vector<16x256xf32>
    %292 = arith.addf %291, %290 : vector<16x256xf32>
    %293 = arith.mulf %255, %292 : vector<16x256xf32>
    %c15_i32_213 = arith.constant 15 : i32
    %294 = tpu.dynamic_rotate %293 by %c15_i32_213 dim 1 : vector<16x256xf32>, i32 -> vector<16x256xf32>
    %c255_i32_214 = arith.constant 255 : i32
    %295 = tpu.dynamic_rotate %293 by %c255_i32_214 dim 1 : vector<16x256xf32>, i32 -> vector<16x256xf32>
    %296 = arith.select %20, %294, %295 : vector<16x256xi1>, vector<16x256xf32>
    %c241_i32_215 = arith.constant 241 : i32
    %297 = tpu.dynamic_rotate %293 by %c241_i32_215 dim 1 : vector<16x256xf32>, i32 -> vector<16x256xf32>
    %c1_i32_216 = arith.constant 1 : i32
    %298 = tpu.dynamic_rotate %293 by %c1_i32_216 dim 1 : vector<16x256xf32>, i32 -> vector<16x256xf32>
    %299 = arith.select %18, %297, %298 : vector<16x256xi1>, vector<16x256xf32>
    %c3_217 = arith.constant 3 : index
    %c0_218 = arith.constant 0 : index
    %c0_219 = arith.constant 0 : index
    %300 = vector.load %arg3[%c3_217, %c0_218, %c0_219] : memref<8x16x256xf32, #tpu.memory_space<vmem>>, vector<1x16x256xf32>
    %301 = vector.shape_cast %300 : vector<1x16x256xf32> to vector<16x256xf32>
    %c16_i32_220 = arith.constant 16 : i32
    %302 = tpu.dynamic_rotate %299 by %c16_i32_220 dim 1 : vector<16x256xf32>, i32 -> vector<16x256xf32>
    %c3_221 = arith.constant 3 : index
    %c0_222 = arith.constant 0 : index
    %c0_223 = arith.constant 0 : index
    %c0_224 = arith.constant 0 : index
    %303 = vector.load %arg2[%c3_221, %c0_222, %c0_223, %c0_224] : memref<8x9x16x16xf32, #tpu.memory_space<vmem>>, vector<1x1x16x16xf32>
    %304 = vector.shape_cast %303 : vector<1x1x16x16xf32> to vector<16x16xf32>
    %cst_225 = arith.constant dense<0.000000e+00> : vector<16x256xf32>
    %305 = tpu.matmul %304, %302, %cst_225 {dimension_numbers = #tpu.dot_dimension_numbers<[1], [0], [0], [1], [0, 0, 1, 1], [], []>} : vector<16x16xf32>, vector<16x256xf32>, vector<16x256xf32> -> vector<16x256xf32>
    %306 = arith.addf %301, %305 : vector<16x256xf32>
    %c16_i32_226 = arith.constant 16 : i32
    %307 = tpu.dynamic_rotate %293 by %c16_i32_226 dim 1 : vector<16x256xf32>, i32 -> vector<16x256xf32>
    %c3_227 = arith.constant 3 : index
    %c1_228 = arith.constant 1 : index
    %c0_229 = arith.constant 0 : index
    %c0_230 = arith.constant 0 : index
    %308 = vector.load %arg2[%c3_227, %c1_228, %c0_229, %c0_230] : memref<8x9x16x16xf32, #tpu.memory_space<vmem>>, vector<1x1x16x16xf32>
    %309 = vector.shape_cast %308 : vector<1x1x16x16xf32> to vector<16x16xf32>
    %cst_231 = arith.constant dense<0.000000e+00> : vector<16x256xf32>
    %310 = tpu.matmul %309, %307, %cst_231 {dimension_numbers = #tpu.dot_dimension_numbers<[1], [0], [0], [1], [0, 0, 1, 1], [], []>} : vector<16x16xf32>, vector<16x256xf32>, vector<16x256xf32> -> vector<16x256xf32>
    %311 = arith.addf %306, %310 : vector<16x256xf32>
    %c16_i32_232 = arith.constant 16 : i32
    %312 = tpu.dynamic_rotate %296 by %c16_i32_232 dim 1 : vector<16x256xf32>, i32 -> vector<16x256xf32>
    %c3_233 = arith.constant 3 : index
    %c2_234 = arith.constant 2 : index
    %c0_235 = arith.constant 0 : index
    %c0_236 = arith.constant 0 : index
    %313 = vector.load %arg2[%c3_233, %c2_234, %c0_235, %c0_236] : memref<8x9x16x16xf32, #tpu.memory_space<vmem>>, vector<1x1x16x16xf32>
    %314 = vector.shape_cast %313 : vector<1x1x16x16xf32> to vector<16x16xf32>
    %cst_237 = arith.constant dense<0.000000e+00> : vector<16x256xf32>
    %315 = tpu.matmul %314, %312, %cst_237 {dimension_numbers = #tpu.dot_dimension_numbers<[1], [0], [0], [1], [0, 0, 1, 1], [], []>} : vector<16x16xf32>, vector<16x256xf32>, vector<16x256xf32> -> vector<16x256xf32>
    %316 = arith.addf %311, %315 : vector<16x256xf32>
    %c3_238 = arith.constant 3 : index
    %c3_239 = arith.constant 3 : index
    %c0_240 = arith.constant 0 : index
    %c0_241 = arith.constant 0 : index
    %317 = vector.load %arg2[%c3_238, %c3_239, %c0_240, %c0_241] : memref<8x9x16x16xf32, #tpu.memory_space<vmem>>, vector<1x1x16x16xf32>
    %318 = vector.shape_cast %317 : vector<1x1x16x16xf32> to vector<16x16xf32>
    %cst_242 = arith.constant dense<0.000000e+00> : vector<16x256xf32>
    %319 = tpu.matmul %318, %299, %cst_242 {dimension_numbers = #tpu.dot_dimension_numbers<[1], [0], [0], [1], [0, 0, 1, 1], [], []>} : vector<16x16xf32>, vector<16x256xf32>, vector<16x256xf32> -> vector<16x256xf32>
    %320 = arith.addf %316, %319 : vector<16x256xf32>
    %c3_243 = arith.constant 3 : index
    %c4_244 = arith.constant 4 : index
    %c0_245 = arith.constant 0 : index
    %c0_246 = arith.constant 0 : index
    %321 = vector.load %arg2[%c3_243, %c4_244, %c0_245, %c0_246] : memref<8x9x16x16xf32, #tpu.memory_space<vmem>>, vector<1x1x16x16xf32>
    %322 = vector.shape_cast %321 : vector<1x1x16x16xf32> to vector<16x16xf32>
    %cst_247 = arith.constant dense<0.000000e+00> : vector<16x256xf32>
    %323 = tpu.matmul %322, %293, %cst_247 {dimension_numbers = #tpu.dot_dimension_numbers<[1], [0], [0], [1], [0, 0, 1, 1], [], []>} : vector<16x16xf32>, vector<16x256xf32>, vector<16x256xf32> -> vector<16x256xf32>
    %324 = arith.addf %320, %323 : vector<16x256xf32>
    %c3_248 = arith.constant 3 : index
    %c5_249 = arith.constant 5 : index
    %c0_250 = arith.constant 0 : index
    %c0_251 = arith.constant 0 : index
    %325 = vector.load %arg2[%c3_248, %c5_249, %c0_250, %c0_251] : memref<8x9x16x16xf32, #tpu.memory_space<vmem>>, vector<1x1x16x16xf32>
    %326 = vector.shape_cast %325 : vector<1x1x16x16xf32> to vector<16x16xf32>
    %cst_252 = arith.constant dense<0.000000e+00> : vector<16x256xf32>
    %327 = tpu.matmul %326, %296, %cst_252 {dimension_numbers = #tpu.dot_dimension_numbers<[1], [0], [0], [1], [0, 0, 1, 1], [], []>} : vector<16x16xf32>, vector<16x256xf32>, vector<16x256xf32> -> vector<16x256xf32>
    %328 = arith.addf %324, %327 : vector<16x256xf32>
    %c240_i32_253 = arith.constant 240 : i32
    %329 = tpu.dynamic_rotate %299 by %c240_i32_253 dim 1 : vector<16x256xf32>, i32 -> vector<16x256xf32>
    %c3_254 = arith.constant 3 : index
    %c6_255 = arith.constant 6 : index
    %c0_256 = arith.constant 0 : index
    %c0_257 = arith.constant 0 : index
    %330 = vector.load %arg2[%c3_254, %c6_255, %c0_256, %c0_257] : memref<8x9x16x16xf32, #tpu.memory_space<vmem>>, vector<1x1x16x16xf32>
    %331 = vector.shape_cast %330 : vector<1x1x16x16xf32> to vector<16x16xf32>
    %cst_258 = arith.constant dense<0.000000e+00> : vector<16x256xf32>
    %332 = tpu.matmul %331, %329, %cst_258 {dimension_numbers = #tpu.dot_dimension_numbers<[1], [0], [0], [1], [0, 0, 1, 1], [], []>} : vector<16x16xf32>, vector<16x256xf32>, vector<16x256xf32> -> vector<16x256xf32>
    %333 = arith.addf %328, %332 : vector<16x256xf32>
    %c240_i32_259 = arith.constant 240 : i32
    %334 = tpu.dynamic_rotate %293 by %c240_i32_259 dim 1 : vector<16x256xf32>, i32 -> vector<16x256xf32>
    %c3_260 = arith.constant 3 : index
    %c7_261 = arith.constant 7 : index
    %c0_262 = arith.constant 0 : index
    %c0_263 = arith.constant 0 : index
    %335 = vector.load %arg2[%c3_260, %c7_261, %c0_262, %c0_263] : memref<8x9x16x16xf32, #tpu.memory_space<vmem>>, vector<1x1x16x16xf32>
    %336 = vector.shape_cast %335 : vector<1x1x16x16xf32> to vector<16x16xf32>
    %cst_264 = arith.constant dense<0.000000e+00> : vector<16x256xf32>
    %337 = tpu.matmul %336, %334, %cst_264 {dimension_numbers = #tpu.dot_dimension_numbers<[1], [0], [0], [1], [0, 0, 1, 1], [], []>} : vector<16x16xf32>, vector<16x256xf32>, vector<16x256xf32> -> vector<16x256xf32>
    %338 = arith.addf %333, %337 : vector<16x256xf32>
    %c240_i32_265 = arith.constant 240 : i32
    %339 = tpu.dynamic_rotate %296 by %c240_i32_265 dim 1 : vector<16x256xf32>, i32 -> vector<16x256xf32>
    %c3_266 = arith.constant 3 : index
    %c8_267 = arith.constant 8 : index
    %c0_268 = arith.constant 0 : index
    %c0_269 = arith.constant 0 : index
    %340 = vector.load %arg2[%c3_266, %c8_267, %c0_268, %c0_269] : memref<8x9x16x16xf32, #tpu.memory_space<vmem>>, vector<1x1x16x16xf32>
    %341 = vector.shape_cast %340 : vector<1x1x16x16xf32> to vector<16x16xf32>
    %cst_270 = arith.constant dense<0.000000e+00> : vector<16x256xf32>
    %342 = tpu.matmul %341, %339, %cst_270 {dimension_numbers = #tpu.dot_dimension_numbers<[1], [0], [0], [1], [0, 0, 1, 1], [], []>} : vector<16x16xf32>, vector<16x256xf32>, vector<16x256xf32> -> vector<16x256xf32>
    %343 = arith.addf %338, %342 : vector<16x256xf32>
    %cst_271 = arith.constant 5.000000e-01 : f32
    %344 = vector.broadcast %cst_271 : f32 to vector<16x256xf32>
    %345 = arith.mulf %344, %343 : vector<16x256xf32>
    %cst_272 = arith.constant 0.707106769 : f32
    %346 = vector.broadcast %cst_272 : f32 to vector<16x256xf32>
    %347 = arith.mulf %343, %346 : vector<16x256xf32>
    %cst_273 = arith.constant 0.000000e+00 : f32
    %348 = vector.broadcast %cst_273 : f32 to vector<16x256xf32>
    %349 = arith.cmpf olt, %347, %348 : vector<16x256xf32>
    %cst_274 = arith.constant -1.000000e+00 : f32
    %cst_275 = arith.constant 1.000000e+00 : f32
    %350 = vector.broadcast %cst_274 : f32 to vector<16x256xf32>
    %351 = vector.broadcast %cst_275 : f32 to vector<16x256xf32>
    %352 = arith.select %349, %350, %351 : vector<16x256xi1>, vector<16x256xf32>
    %353 = math.absf %347 : vector<16x256xf32>
    %cst_276 = arith.constant 0.327591091 : f32
    %354 = vector.broadcast %cst_276 : f32 to vector<16x256xf32>
    %355 = arith.mulf %354, %353 : vector<16x256xf32>
    %cst_277 = arith.constant 1.000000e+00 : f32
    %356 = vector.broadcast %cst_277 : f32 to vector<16x256xf32>
    %357 = arith.addf %356, %355 : vector<16x256xf32>
    %358 = tpu.reciprocal %357 {approx = true} : vector<16x256xf32> -> vector<16x256xf32>
    %cst_278 = arith.constant 1.06140542 : f32
    %359 = vector.broadcast %cst_278 : f32 to vector<16x256xf32>
    %360 = arith.mulf %359, %358 : vector<16x256xf32>
    %cst_279 = arith.constant -1.45315206 : f32
    %361 = vector.broadcast %cst_279 : f32 to vector<16x256xf32>
    %362 = arith.addf %360, %361 : vector<16x256xf32>
    %363 = arith.mulf %362, %358 : vector<16x256xf32>
    %cst_280 = arith.constant 1.42141378 : f32
    %364 = vector.broadcast %cst_280 : f32 to vector<16x256xf32>
    %365 = arith.addf %363, %364 : vector<16x256xf32>
    %366 = arith.mulf %365, %358 : vector<16x256xf32>
    %cst_281 = arith.constant -0.284496725 : f32
    %367 = vector.broadcast %cst_281 : f32 to vector<16x256xf32>
    %368 = arith.addf %366, %367 : vector<16x256xf32>
    %369 = arith.mulf %368, %358 : vector<16x256xf32>
    %cst_282 = arith.constant 0.254829586 : f32
    %370 = vector.broadcast %cst_282 : f32 to vector<16x256xf32>
    %371 = arith.addf %369, %370 : vector<16x256xf32>
    %372 = arith.mulf %371, %358 : vector<16x256xf32>
    %cst_283 = arith.constant 0.000000e+00 : f32
    %373 = vector.broadcast %cst_283 : f32 to vector<16x256xf32>
    %374 = arith.subf %373, %353 : vector<16x256xf32>
    %375 = arith.mulf %374, %353 : vector<16x256xf32>
    %376 = math.exp %375 : vector<16x256xf32>
    %377 = arith.mulf %372, %376 : vector<16x256xf32>
    %cst_284 = arith.constant 1.000000e+00 : f32
    %378 = vector.broadcast %cst_284 : f32 to vector<16x256xf32>
    %379 = arith.subf %378, %377 : vector<16x256xf32>
    %380 = arith.mulf %352, %379 : vector<16x256xf32>
    %cst_285 = arith.constant 1.000000e+00 : f32
    %381 = vector.broadcast %cst_285 : f32 to vector<16x256xf32>
    %382 = arith.addf %381, %380 : vector<16x256xf32>
    %383 = arith.mulf %345, %382 : vector<16x256xf32>
    %c15_i32_286 = arith.constant 15 : i32
    %384 = tpu.dynamic_rotate %383 by %c15_i32_286 dim 1 : vector<16x256xf32>, i32 -> vector<16x256xf32>
    %c255_i32_287 = arith.constant 255 : i32
    %385 = tpu.dynamic_rotate %383 by %c255_i32_287 dim 1 : vector<16x256xf32>, i32 -> vector<16x256xf32>
    %386 = arith.select %20, %384, %385 : vector<16x256xi1>, vector<16x256xf32>
    %c241_i32_288 = arith.constant 241 : i32
    %387 = tpu.dynamic_rotate %383 by %c241_i32_288 dim 1 : vector<16x256xf32>, i32 -> vector<16x256xf32>
    %c1_i32_289 = arith.constant 1 : i32
    %388 = tpu.dynamic_rotate %383 by %c1_i32_289 dim 1 : vector<16x256xf32>, i32 -> vector<16x256xf32>
    %389 = arith.select %18, %387, %388 : vector<16x256xi1>, vector<16x256xf32>
    %c4_290 = arith.constant 4 : index
    %c0_291 = arith.constant 0 : index
    %c0_292 = arith.constant 0 : index
    %390 = vector.load %arg3[%c4_290, %c0_291, %c0_292] : memref<8x16x256xf32, #tpu.memory_space<vmem>>, vector<1x16x256xf32>
    %391 = vector.shape_cast %390 : vector<1x16x256xf32> to vector<16x256xf32>
    %c16_i32_293 = arith.constant 16 : i32
    %392 = tpu.dynamic_rotate %389 by %c16_i32_293 dim 1 : vector<16x256xf32>, i32 -> vector<16x256xf32>
    %c4_294 = arith.constant 4 : index
    %c0_295 = arith.constant 0 : index
    %c0_296 = arith.constant 0 : index
    %c0_297 = arith.constant 0 : index
    %393 = vector.load %arg2[%c4_294, %c0_295, %c0_296, %c0_297] : memref<8x9x16x16xf32, #tpu.memory_space<vmem>>, vector<1x1x16x16xf32>
    %394 = vector.shape_cast %393 : vector<1x1x16x16xf32> to vector<16x16xf32>
    %cst_298 = arith.constant dense<0.000000e+00> : vector<16x256xf32>
    %395 = tpu.matmul %394, %392, %cst_298 {dimension_numbers = #tpu.dot_dimension_numbers<[1], [0], [0], [1], [0, 0, 1, 1], [], []>} : vector<16x16xf32>, vector<16x256xf32>, vector<16x256xf32> -> vector<16x256xf32>
    %396 = arith.addf %391, %395 : vector<16x256xf32>
    %c16_i32_299 = arith.constant 16 : i32
    %397 = tpu.dynamic_rotate %383 by %c16_i32_299 dim 1 : vector<16x256xf32>, i32 -> vector<16x256xf32>
    %c4_300 = arith.constant 4 : index
    %c1_301 = arith.constant 1 : index
    %c0_302 = arith.constant 0 : index
    %c0_303 = arith.constant 0 : index
    %398 = vector.load %arg2[%c4_300, %c1_301, %c0_302, %c0_303] : memref<8x9x16x16xf32, #tpu.memory_space<vmem>>, vector<1x1x16x16xf32>
    %399 = vector.shape_cast %398 : vector<1x1x16x16xf32> to vector<16x16xf32>
    %cst_304 = arith.constant dense<0.000000e+00> : vector<16x256xf32>
    %400 = tpu.matmul %399, %397, %cst_304 {dimension_numbers = #tpu.dot_dimension_numbers<[1], [0], [0], [1], [0, 0, 1, 1], [], []>} : vector<16x16xf32>, vector<16x256xf32>, vector<16x256xf32> -> vector<16x256xf32>
    %401 = arith.addf %396, %400 : vector<16x256xf32>
    %c16_i32_305 = arith.constant 16 : i32
    %402 = tpu.dynamic_rotate %386 by %c16_i32_305 dim 1 : vector<16x256xf32>, i32 -> vector<16x256xf32>
    %c4_306 = arith.constant 4 : index
    %c2_307 = arith.constant 2 : index
    %c0_308 = arith.constant 0 : index
    %c0_309 = arith.constant 0 : index
    %403 = vector.load %arg2[%c4_306, %c2_307, %c0_308, %c0_309] : memref<8x9x16x16xf32, #tpu.memory_space<vmem>>, vector<1x1x16x16xf32>
    %404 = vector.shape_cast %403 : vector<1x1x16x16xf32> to vector<16x16xf32>
    %cst_310 = arith.constant dense<0.000000e+00> : vector<16x256xf32>
    %405 = tpu.matmul %404, %402, %cst_310 {dimension_numbers = #tpu.dot_dimension_numbers<[1], [0], [0], [1], [0, 0, 1, 1], [], []>} : vector<16x16xf32>, vector<16x256xf32>, vector<16x256xf32> -> vector<16x256xf32>
    %406 = arith.addf %401, %405 : vector<16x256xf32>
    %c4_311 = arith.constant 4 : index
    %c3_312 = arith.constant 3 : index
    %c0_313 = arith.constant 0 : index
    %c0_314 = arith.constant 0 : index
    %407 = vector.load %arg2[%c4_311, %c3_312, %c0_313, %c0_314] : memref<8x9x16x16xf32, #tpu.memory_space<vmem>>, vector<1x1x16x16xf32>
    %408 = vector.shape_cast %407 : vector<1x1x16x16xf32> to vector<16x16xf32>
    %cst_315 = arith.constant dense<0.000000e+00> : vector<16x256xf32>
    %409 = tpu.matmul %408, %389, %cst_315 {dimension_numbers = #tpu.dot_dimension_numbers<[1], [0], [0], [1], [0, 0, 1, 1], [], []>} : vector<16x16xf32>, vector<16x256xf32>, vector<16x256xf32> -> vector<16x256xf32>
    %410 = arith.addf %406, %409 : vector<16x256xf32>
    %c4_316 = arith.constant 4 : index
    %c4_317 = arith.constant 4 : index
    %c0_318 = arith.constant 0 : index
    %c0_319 = arith.constant 0 : index
    %411 = vector.load %arg2[%c4_316, %c4_317, %c0_318, %c0_319] : memref<8x9x16x16xf32, #tpu.memory_space<vmem>>, vector<1x1x16x16xf32>
    %412 = vector.shape_cast %411 : vector<1x1x16x16xf32> to vector<16x16xf32>
    %cst_320 = arith.constant dense<0.000000e+00> : vector<16x256xf32>
    %413 = tpu.matmul %412, %383, %cst_320 {dimension_numbers = #tpu.dot_dimension_numbers<[1], [0], [0], [1], [0, 0, 1, 1], [], []>} : vector<16x16xf32>, vector<16x256xf32>, vector<16x256xf32> -> vector<16x256xf32>
    %414 = arith.addf %410, %413 : vector<16x256xf32>
    %c4_321 = arith.constant 4 : index
    %c5_322 = arith.constant 5 : index
    %c0_323 = arith.constant 0 : index
    %c0_324 = arith.constant 0 : index
    %415 = vector.load %arg2[%c4_321, %c5_322, %c0_323, %c0_324] : memref<8x9x16x16xf32, #tpu.memory_space<vmem>>, vector<1x1x16x16xf32>
    %416 = vector.shape_cast %415 : vector<1x1x16x16xf32> to vector<16x16xf32>
    %cst_325 = arith.constant dense<0.000000e+00> : vector<16x256xf32>
    %417 = tpu.matmul %416, %386, %cst_325 {dimension_numbers = #tpu.dot_dimension_numbers<[1], [0], [0], [1], [0, 0, 1, 1], [], []>} : vector<16x16xf32>, vector<16x256xf32>, vector<16x256xf32> -> vector<16x256xf32>
    %418 = arith.addf %414, %417 : vector<16x256xf32>
    %c240_i32_326 = arith.constant 240 : i32
    %419 = tpu.dynamic_rotate %389 by %c240_i32_326 dim 1 : vector<16x256xf32>, i32 -> vector<16x256xf32>
    %c4_327 = arith.constant 4 : index
    %c6_328 = arith.constant 6 : index
    %c0_329 = arith.constant 0 : index
    %c0_330 = arith.constant 0 : index
    %420 = vector.load %arg2[%c4_327, %c6_328, %c0_329, %c0_330] : memref<8x9x16x16xf32, #tpu.memory_space<vmem>>, vector<1x1x16x16xf32>
    %421 = vector.shape_cast %420 : vector<1x1x16x16xf32> to vector<16x16xf32>
    %cst_331 = arith.constant dense<0.000000e+00> : vector<16x256xf32>
    %422 = tpu.matmul %421, %419, %cst_331 {dimension_numbers = #tpu.dot_dimension_numbers<[1], [0], [0], [1], [0, 0, 1, 1], [], []>} : vector<16x16xf32>, vector<16x256xf32>, vector<16x256xf32> -> vector<16x256xf32>
    %423 = arith.addf %418, %422 : vector<16x256xf32>
    %c240_i32_332 = arith.constant 240 : i32
    %424 = tpu.dynamic_rotate %383 by %c240_i32_332 dim 1 : vector<16x256xf32>, i32 -> vector<16x256xf32>
    %c4_333 = arith.constant 4 : index
    %c7_334 = arith.constant 7 : index
    %c0_335 = arith.constant 0 : index
    %c0_336 = arith.constant 0 : index
    %425 = vector.load %arg2[%c4_333, %c7_334, %c0_335, %c0_336] : memref<8x9x16x16xf32, #tpu.memory_space<vmem>>, vector<1x1x16x16xf32>
    %426 = vector.shape_cast %425 : vector<1x1x16x16xf32> to vector<16x16xf32>
    %cst_337 = arith.constant dense<0.000000e+00> : vector<16x256xf32>
    %427 = tpu.matmul %426, %424, %cst_337 {dimension_numbers = #tpu.dot_dimension_numbers<[1], [0], [0], [1], [0, 0, 1, 1], [], []>} : vector<16x16xf32>, vector<16x256xf32>, vector<16x256xf32> -> vector<16x256xf32>
    %428 = arith.addf %423, %427 : vector<16x256xf32>
    %c240_i32_338 = arith.constant 240 : i32
    %429 = tpu.dynamic_rotate %386 by %c240_i32_338 dim 1 : vector<16x256xf32>, i32 -> vector<16x256xf32>
    %c4_339 = arith.constant 4 : index
    %c8_340 = arith.constant 8 : index
    %c0_341 = arith.constant 0 : index
    %c0_342 = arith.constant 0 : index
    %430 = vector.load %arg2[%c4_339, %c8_340, %c0_341, %c0_342] : memref<8x9x16x16xf32, #tpu.memory_space<vmem>>, vector<1x1x16x16xf32>
    %431 = vector.shape_cast %430 : vector<1x1x16x16xf32> to vector<16x16xf32>
    %cst_343 = arith.constant dense<0.000000e+00> : vector<16x256xf32>
    %432 = tpu.matmul %431, %429, %cst_343 {dimension_numbers = #tpu.dot_dimension_numbers<[1], [0], [0], [1], [0, 0, 1, 1], [], []>} : vector<16x16xf32>, vector<16x256xf32>, vector<16x256xf32> -> vector<16x256xf32>
    %433 = arith.addf %428, %432 : vector<16x256xf32>
    %434 = arith.addf %433, %293 : vector<16x256xf32>
    %cst_344 = arith.constant 5.000000e-01 : f32
    %435 = vector.broadcast %cst_344 : f32 to vector<16x256xf32>
    %436 = arith.mulf %435, %434 : vector<16x256xf32>
    %cst_345 = arith.constant 0.707106769 : f32
    %437 = vector.broadcast %cst_345 : f32 to vector<16x256xf32>
    %438 = arith.mulf %434, %437 : vector<16x256xf32>
    %cst_346 = arith.constant 0.000000e+00 : f32
    %439 = vector.broadcast %cst_346 : f32 to vector<16x256xf32>
    %440 = arith.cmpf olt, %438, %439 : vector<16x256xf32>
    %cst_347 = arith.constant -1.000000e+00 : f32
    %cst_348 = arith.constant 1.000000e+00 : f32
    %441 = vector.broadcast %cst_347 : f32 to vector<16x256xf32>
    %442 = vector.broadcast %cst_348 : f32 to vector<16x256xf32>
    %443 = arith.select %440, %441, %442 : vector<16x256xi1>, vector<16x256xf32>
    %444 = math.absf %438 : vector<16x256xf32>
    %cst_349 = arith.constant 0.327591091 : f32
    %445 = vector.broadcast %cst_349 : f32 to vector<16x256xf32>
    %446 = arith.mulf %445, %444 : vector<16x256xf32>
    %cst_350 = arith.constant 1.000000e+00 : f32
    %447 = vector.broadcast %cst_350 : f32 to vector<16x256xf32>
    %448 = arith.addf %447, %446 : vector<16x256xf32>
    %449 = tpu.reciprocal %448 {approx = true} : vector<16x256xf32> -> vector<16x256xf32>
    %cst_351 = arith.constant 1.06140542 : f32
    %450 = vector.broadcast %cst_351 : f32 to vector<16x256xf32>
    %451 = arith.mulf %450, %449 : vector<16x256xf32>
    %cst_352 = arith.constant -1.45315206 : f32
    %452 = vector.broadcast %cst_352 : f32 to vector<16x256xf32>
    %453 = arith.addf %451, %452 : vector<16x256xf32>
    %454 = arith.mulf %453, %449 : vector<16x256xf32>
    %cst_353 = arith.constant 1.42141378 : f32
    %455 = vector.broadcast %cst_353 : f32 to vector<16x256xf32>
    %456 = arith.addf %454, %455 : vector<16x256xf32>
    %457 = arith.mulf %456, %449 : vector<16x256xf32>
    %cst_354 = arith.constant -0.284496725 : f32
    %458 = vector.broadcast %cst_354 : f32 to vector<16x256xf32>
    %459 = arith.addf %457, %458 : vector<16x256xf32>
    %460 = arith.mulf %459, %449 : vector<16x256xf32>
    %cst_355 = arith.constant 0.254829586 : f32
    %461 = vector.broadcast %cst_355 : f32 to vector<16x256xf32>
    %462 = arith.addf %460, %461 : vector<16x256xf32>
    %463 = arith.mulf %462, %449 : vector<16x256xf32>
    %cst_356 = arith.constant 0.000000e+00 : f32
    %464 = vector.broadcast %cst_356 : f32 to vector<16x256xf32>
    %465 = arith.subf %464, %444 : vector<16x256xf32>
    %466 = arith.mulf %465, %444 : vector<16x256xf32>
    %467 = math.exp %466 : vector<16x256xf32>
    %468 = arith.mulf %463, %467 : vector<16x256xf32>
    %cst_357 = arith.constant 1.000000e+00 : f32
    %469 = vector.broadcast %cst_357 : f32 to vector<16x256xf32>
    %470 = arith.subf %469, %468 : vector<16x256xf32>
    %471 = arith.mulf %443, %470 : vector<16x256xf32>
    %cst_358 = arith.constant 1.000000e+00 : f32
    %472 = vector.broadcast %cst_358 : f32 to vector<16x256xf32>
    %473 = arith.addf %472, %471 : vector<16x256xf32>
    %474 = arith.mulf %436, %473 : vector<16x256xf32>
    %c15_i32_359 = arith.constant 15 : i32
    %475 = tpu.dynamic_rotate %474 by %c15_i32_359 dim 1 : vector<16x256xf32>, i32 -> vector<16x256xf32>
    %c255_i32_360 = arith.constant 255 : i32
    %476 = tpu.dynamic_rotate %474 by %c255_i32_360 dim 1 : vector<16x256xf32>, i32 -> vector<16x256xf32>
    %477 = arith.select %20, %475, %476 : vector<16x256xi1>, vector<16x256xf32>
    %c241_i32_361 = arith.constant 241 : i32
    %478 = tpu.dynamic_rotate %474 by %c241_i32_361 dim 1 : vector<16x256xf32>, i32 -> vector<16x256xf32>
    %c1_i32_362 = arith.constant 1 : i32
    %479 = tpu.dynamic_rotate %474 by %c1_i32_362 dim 1 : vector<16x256xf32>, i32 -> vector<16x256xf32>
    %480 = arith.select %18, %478, %479 : vector<16x256xi1>, vector<16x256xf32>
    %c5_363 = arith.constant 5 : index
    %c0_364 = arith.constant 0 : index
    %c0_365 = arith.constant 0 : index
    %481 = vector.load %arg3[%c5_363, %c0_364, %c0_365] : memref<8x16x256xf32, #tpu.memory_space<vmem>>, vector<1x16x256xf32>
    %482 = vector.shape_cast %481 : vector<1x16x256xf32> to vector<16x256xf32>
    %c16_i32_366 = arith.constant 16 : i32
    %483 = tpu.dynamic_rotate %480 by %c16_i32_366 dim 1 : vector<16x256xf32>, i32 -> vector<16x256xf32>
    %c5_367 = arith.constant 5 : index
    %c0_368 = arith.constant 0 : index
    %c0_369 = arith.constant 0 : index
    %c0_370 = arith.constant 0 : index
    %484 = vector.load %arg2[%c5_367, %c0_368, %c0_369, %c0_370] : memref<8x9x16x16xf32, #tpu.memory_space<vmem>>, vector<1x1x16x16xf32>
    %485 = vector.shape_cast %484 : vector<1x1x16x16xf32> to vector<16x16xf32>
    %cst_371 = arith.constant dense<0.000000e+00> : vector<16x256xf32>
    %486 = tpu.matmul %485, %483, %cst_371 {dimension_numbers = #tpu.dot_dimension_numbers<[1], [0], [0], [1], [0, 0, 1, 1], [], []>} : vector<16x16xf32>, vector<16x256xf32>, vector<16x256xf32> -> vector<16x256xf32>
    %487 = arith.addf %482, %486 : vector<16x256xf32>
    %c16_i32_372 = arith.constant 16 : i32
    %488 = tpu.dynamic_rotate %474 by %c16_i32_372 dim 1 : vector<16x256xf32>, i32 -> vector<16x256xf32>
    %c5_373 = arith.constant 5 : index
    %c1_374 = arith.constant 1 : index
    %c0_375 = arith.constant 0 : index
    %c0_376 = arith.constant 0 : index
    %489 = vector.load %arg2[%c5_373, %c1_374, %c0_375, %c0_376] : memref<8x9x16x16xf32, #tpu.memory_space<vmem>>, vector<1x1x16x16xf32>
    %490 = vector.shape_cast %489 : vector<1x1x16x16xf32> to vector<16x16xf32>
    %cst_377 = arith.constant dense<0.000000e+00> : vector<16x256xf32>
    %491 = tpu.matmul %490, %488, %cst_377 {dimension_numbers = #tpu.dot_dimension_numbers<[1], [0], [0], [1], [0, 0, 1, 1], [], []>} : vector<16x16xf32>, vector<16x256xf32>, vector<16x256xf32> -> vector<16x256xf32>
    %492 = arith.addf %487, %491 : vector<16x256xf32>
    %c16_i32_378 = arith.constant 16 : i32
    %493 = tpu.dynamic_rotate %477 by %c16_i32_378 dim 1 : vector<16x256xf32>, i32 -> vector<16x256xf32>
    %c5_379 = arith.constant 5 : index
    %c2_380 = arith.constant 2 : index
    %c0_381 = arith.constant 0 : index
    %c0_382 = arith.constant 0 : index
    %494 = vector.load %arg2[%c5_379, %c2_380, %c0_381, %c0_382] : memref<8x9x16x16xf32, #tpu.memory_space<vmem>>, vector<1x1x16x16xf32>
    %495 = vector.shape_cast %494 : vector<1x1x16x16xf32> to vector<16x16xf32>
    %cst_383 = arith.constant dense<0.000000e+00> : vector<16x256xf32>
    %496 = tpu.matmul %495, %493, %cst_383 {dimension_numbers = #tpu.dot_dimension_numbers<[1], [0], [0], [1], [0, 0, 1, 1], [], []>} : vector<16x16xf32>, vector<16x256xf32>, vector<16x256xf32> -> vector<16x256xf32>
    %497 = arith.addf %492, %496 : vector<16x256xf32>
    %c5_384 = arith.constant 5 : index
    %c3_385 = arith.constant 3 : index
    %c0_386 = arith.constant 0 : index
    %c0_387 = arith.constant 0 : index
    %498 = vector.load %arg2[%c5_384, %c3_385, %c0_386, %c0_387] : memref<8x9x16x16xf32, #tpu.memory_space<vmem>>, vector<1x1x16x16xf32>
    %499 = vector.shape_cast %498 : vector<1x1x16x16xf32> to vector<16x16xf32>
    %cst_388 = arith.constant dense<0.000000e+00> : vector<16x256xf32>
    %500 = tpu.matmul %499, %480, %cst_388 {dimension_numbers = #tpu.dot_dimension_numbers<[1], [0], [0], [1], [0, 0, 1, 1], [], []>} : vector<16x16xf32>, vector<16x256xf32>, vector<16x256xf32> -> vector<16x256xf32>
    %501 = arith.addf %497, %500 : vector<16x256xf32>
    %c5_389 = arith.constant 5 : index
    %c4_390 = arith.constant 4 : index
    %c0_391 = arith.constant 0 : index
    %c0_392 = arith.constant 0 : index
    %502 = vector.load %arg2[%c5_389, %c4_390, %c0_391, %c0_392] : memref<8x9x16x16xf32, #tpu.memory_space<vmem>>, vector<1x1x16x16xf32>
    %503 = vector.shape_cast %502 : vector<1x1x16x16xf32> to vector<16x16xf32>
    %cst_393 = arith.constant dense<0.000000e+00> : vector<16x256xf32>
    %504 = tpu.matmul %503, %474, %cst_393 {dimension_numbers = #tpu.dot_dimension_numbers<[1], [0], [0], [1], [0, 0, 1, 1], [], []>} : vector<16x16xf32>, vector<16x256xf32>, vector<16x256xf32> -> vector<16x256xf32>
    %505 = arith.addf %501, %504 : vector<16x256xf32>
    %c5_394 = arith.constant 5 : index
    %c5_395 = arith.constant 5 : index
    %c0_396 = arith.constant 0 : index
    %c0_397 = arith.constant 0 : index
    %506 = vector.load %arg2[%c5_394, %c5_395, %c0_396, %c0_397] : memref<8x9x16x16xf32, #tpu.memory_space<vmem>>, vector<1x1x16x16xf32>
    %507 = vector.shape_cast %506 : vector<1x1x16x16xf32> to vector<16x16xf32>
    %cst_398 = arith.constant dense<0.000000e+00> : vector<16x256xf32>
    %508 = tpu.matmul %507, %477, %cst_398 {dimension_numbers = #tpu.dot_dimension_numbers<[1], [0], [0], [1], [0, 0, 1, 1], [], []>} : vector<16x16xf32>, vector<16x256xf32>, vector<16x256xf32> -> vector<16x256xf32>
    %509 = arith.addf %505, %508 : vector<16x256xf32>
    %c240_i32_399 = arith.constant 240 : i32
    %510 = tpu.dynamic_rotate %480 by %c240_i32_399 dim 1 : vector<16x256xf32>, i32 -> vector<16x256xf32>
    %c5_400 = arith.constant 5 : index
    %c6_401 = arith.constant 6 : index
    %c0_402 = arith.constant 0 : index
    %c0_403 = arith.constant 0 : index
    %511 = vector.load %arg2[%c5_400, %c6_401, %c0_402, %c0_403] : memref<8x9x16x16xf32, #tpu.memory_space<vmem>>, vector<1x1x16x16xf32>
    %512 = vector.shape_cast %511 : vector<1x1x16x16xf32> to vector<16x16xf32>
    %cst_404 = arith.constant dense<0.000000e+00> : vector<16x256xf32>
    %513 = tpu.matmul %512, %510, %cst_404 {dimension_numbers = #tpu.dot_dimension_numbers<[1], [0], [0], [1], [0, 0, 1, 1], [], []>} : vector<16x16xf32>, vector<16x256xf32>, vector<16x256xf32> -> vector<16x256xf32>
    %514 = arith.addf %509, %513 : vector<16x256xf32>
    %c240_i32_405 = arith.constant 240 : i32
    %515 = tpu.dynamic_rotate %474 by %c240_i32_405 dim 1 : vector<16x256xf32>, i32 -> vector<16x256xf32>
    %c5_406 = arith.constant 5 : index
    %c7_407 = arith.constant 7 : index
    %c0_408 = arith.constant 0 : index
    %c0_409 = arith.constant 0 : index
    %516 = vector.load %arg2[%c5_406, %c7_407, %c0_408, %c0_409] : memref<8x9x16x16xf32, #tpu.memory_space<vmem>>, vector<1x1x16x16xf32>
    %517 = vector.shape_cast %516 : vector<1x1x16x16xf32> to vector<16x16xf32>
    %cst_410 = arith.constant dense<0.000000e+00> : vector<16x256xf32>
    %518 = tpu.matmul %517, %515, %cst_410 {dimension_numbers = #tpu.dot_dimension_numbers<[1], [0], [0], [1], [0, 0, 1, 1], [], []>} : vector<16x16xf32>, vector<16x256xf32>, vector<16x256xf32> -> vector<16x256xf32>
    %519 = arith.addf %514, %518 : vector<16x256xf32>
    %c240_i32_411 = arith.constant 240 : i32
    %520 = tpu.dynamic_rotate %477 by %c240_i32_411 dim 1 : vector<16x256xf32>, i32 -> vector<16x256xf32>
    %c5_412 = arith.constant 5 : index
    %c8_413 = arith.constant 8 : index
    %c0_414 = arith.constant 0 : index
    %c0_415 = arith.constant 0 : index
    %521 = vector.load %arg2[%c5_412, %c8_413, %c0_414, %c0_415] : memref<8x9x16x16xf32, #tpu.memory_space<vmem>>, vector<1x1x16x16xf32>
    %522 = vector.shape_cast %521 : vector<1x1x16x16xf32> to vector<16x16xf32>
    %cst_416 = arith.constant dense<0.000000e+00> : vector<16x256xf32>
    %523 = tpu.matmul %522, %520, %cst_416 {dimension_numbers = #tpu.dot_dimension_numbers<[1], [0], [0], [1], [0, 0, 1, 1], [], []>} : vector<16x16xf32>, vector<16x256xf32>, vector<16x256xf32> -> vector<16x256xf32>
    %524 = arith.addf %519, %523 : vector<16x256xf32>
    %cst_417 = arith.constant 5.000000e-01 : f32
    %525 = vector.broadcast %cst_417 : f32 to vector<16x256xf32>
    %526 = arith.mulf %525, %524 : vector<16x256xf32>
    %cst_418 = arith.constant 0.707106769 : f32
    %527 = vector.broadcast %cst_418 : f32 to vector<16x256xf32>
    %528 = arith.mulf %524, %527 : vector<16x256xf32>
    %cst_419 = arith.constant 0.000000e+00 : f32
    %529 = vector.broadcast %cst_419 : f32 to vector<16x256xf32>
    %530 = arith.cmpf olt, %528, %529 : vector<16x256xf32>
    %cst_420 = arith.constant -1.000000e+00 : f32
    %cst_421 = arith.constant 1.000000e+00 : f32
    %531 = vector.broadcast %cst_420 : f32 to vector<16x256xf32>
    %532 = vector.broadcast %cst_421 : f32 to vector<16x256xf32>
    %533 = arith.select %530, %531, %532 : vector<16x256xi1>, vector<16x256xf32>
    %534 = math.absf %528 : vector<16x256xf32>
    %cst_422 = arith.constant 0.327591091 : f32
    %535 = vector.broadcast %cst_422 : f32 to vector<16x256xf32>
    %536 = arith.mulf %535, %534 : vector<16x256xf32>
    %cst_423 = arith.constant 1.000000e+00 : f32
    %537 = vector.broadcast %cst_423 : f32 to vector<16x256xf32>
    %538 = arith.addf %537, %536 : vector<16x256xf32>
    %539 = tpu.reciprocal %538 {approx = true} : vector<16x256xf32> -> vector<16x256xf32>
    %cst_424 = arith.constant 1.06140542 : f32
    %540 = vector.broadcast %cst_424 : f32 to vector<16x256xf32>
    %541 = arith.mulf %540, %539 : vector<16x256xf32>
    %cst_425 = arith.constant -1.45315206 : f32
    %542 = vector.broadcast %cst_425 : f32 to vector<16x256xf32>
    %543 = arith.addf %541, %542 : vector<16x256xf32>
    %544 = arith.mulf %543, %539 : vector<16x256xf32>
    %cst_426 = arith.constant 1.42141378 : f32
    %545 = vector.broadcast %cst_426 : f32 to vector<16x256xf32>
    %546 = arith.addf %544, %545 : vector<16x256xf32>
    %547 = arith.mulf %546, %539 : vector<16x256xf32>
    %cst_427 = arith.constant -0.284496725 : f32
    %548 = vector.broadcast %cst_427 : f32 to vector<16x256xf32>
    %549 = arith.addf %547, %548 : vector<16x256xf32>
    %550 = arith.mulf %549, %539 : vector<16x256xf32>
    %cst_428 = arith.constant 0.254829586 : f32
    %551 = vector.broadcast %cst_428 : f32 to vector<16x256xf32>
    %552 = arith.addf %550, %551 : vector<16x256xf32>
    %553 = arith.mulf %552, %539 : vector<16x256xf32>
    %cst_429 = arith.constant 0.000000e+00 : f32
    %554 = vector.broadcast %cst_429 : f32 to vector<16x256xf32>
    %555 = arith.subf %554, %534 : vector<16x256xf32>
    %556 = arith.mulf %555, %534 : vector<16x256xf32>
    %557 = math.exp %556 : vector<16x256xf32>
    %558 = arith.mulf %553, %557 : vector<16x256xf32>
    %cst_430 = arith.constant 1.000000e+00 : f32
    %559 = vector.broadcast %cst_430 : f32 to vector<16x256xf32>
    %560 = arith.subf %559, %558 : vector<16x256xf32>
    %561 = arith.mulf %533, %560 : vector<16x256xf32>
    %cst_431 = arith.constant 1.000000e+00 : f32
    %562 = vector.broadcast %cst_431 : f32 to vector<16x256xf32>
    %563 = arith.addf %562, %561 : vector<16x256xf32>
    %564 = arith.mulf %526, %563 : vector<16x256xf32>
    %c15_i32_432 = arith.constant 15 : i32
    %565 = tpu.dynamic_rotate %564 by %c15_i32_432 dim 1 : vector<16x256xf32>, i32 -> vector<16x256xf32>
    %c255_i32_433 = arith.constant 255 : i32
    %566 = tpu.dynamic_rotate %564 by %c255_i32_433 dim 1 : vector<16x256xf32>, i32 -> vector<16x256xf32>
    %567 = arith.select %20, %565, %566 : vector<16x256xi1>, vector<16x256xf32>
    %c241_i32_434 = arith.constant 241 : i32
    %568 = tpu.dynamic_rotate %564 by %c241_i32_434 dim 1 : vector<16x256xf32>, i32 -> vector<16x256xf32>
    %c1_i32_435 = arith.constant 1 : i32
    %569 = tpu.dynamic_rotate %564 by %c1_i32_435 dim 1 : vector<16x256xf32>, i32 -> vector<16x256xf32>
    %570 = arith.select %18, %568, %569 : vector<16x256xi1>, vector<16x256xf32>
    %c6_436 = arith.constant 6 : index
    %c0_437 = arith.constant 0 : index
    %c0_438 = arith.constant 0 : index
    %571 = vector.load %arg3[%c6_436, %c0_437, %c0_438] : memref<8x16x256xf32, #tpu.memory_space<vmem>>, vector<1x16x256xf32>
    %572 = vector.shape_cast %571 : vector<1x16x256xf32> to vector<16x256xf32>
    %c16_i32_439 = arith.constant 16 : i32
    %573 = tpu.dynamic_rotate %570 by %c16_i32_439 dim 1 : vector<16x256xf32>, i32 -> vector<16x256xf32>
    %c6_440 = arith.constant 6 : index
    %c0_441 = arith.constant 0 : index
    %c0_442 = arith.constant 0 : index
    %c0_443 = arith.constant 0 : index
    %574 = vector.load %arg2[%c6_440, %c0_441, %c0_442, %c0_443] : memref<8x9x16x16xf32, #tpu.memory_space<vmem>>, vector<1x1x16x16xf32>
    %575 = vector.shape_cast %574 : vector<1x1x16x16xf32> to vector<16x16xf32>
    %cst_444 = arith.constant dense<0.000000e+00> : vector<16x256xf32>
    %576 = tpu.matmul %575, %573, %cst_444 {dimension_numbers = #tpu.dot_dimension_numbers<[1], [0], [0], [1], [0, 0, 1, 1], [], []>} : vector<16x16xf32>, vector<16x256xf32>, vector<16x256xf32> -> vector<16x256xf32>
    %577 = arith.addf %572, %576 : vector<16x256xf32>
    %c16_i32_445 = arith.constant 16 : i32
    %578 = tpu.dynamic_rotate %564 by %c16_i32_445 dim 1 : vector<16x256xf32>, i32 -> vector<16x256xf32>
    %c6_446 = arith.constant 6 : index
    %c1_447 = arith.constant 1 : index
    %c0_448 = arith.constant 0 : index
    %c0_449 = arith.constant 0 : index
    %579 = vector.load %arg2[%c6_446, %c1_447, %c0_448, %c0_449] : memref<8x9x16x16xf32, #tpu.memory_space<vmem>>, vector<1x1x16x16xf32>
    %580 = vector.shape_cast %579 : vector<1x1x16x16xf32> to vector<16x16xf32>
    %cst_450 = arith.constant dense<0.000000e+00> : vector<16x256xf32>
    %581 = tpu.matmul %580, %578, %cst_450 {dimension_numbers = #tpu.dot_dimension_numbers<[1], [0], [0], [1], [0, 0, 1, 1], [], []>} : vector<16x16xf32>, vector<16x256xf32>, vector<16x256xf32> -> vector<16x256xf32>
    %582 = arith.addf %577, %581 : vector<16x256xf32>
    %c16_i32_451 = arith.constant 16 : i32
    %583 = tpu.dynamic_rotate %567 by %c16_i32_451 dim 1 : vector<16x256xf32>, i32 -> vector<16x256xf32>
    %c6_452 = arith.constant 6 : index
    %c2_453 = arith.constant 2 : index
    %c0_454 = arith.constant 0 : index
    %c0_455 = arith.constant 0 : index
    %584 = vector.load %arg2[%c6_452, %c2_453, %c0_454, %c0_455] : memref<8x9x16x16xf32, #tpu.memory_space<vmem>>, vector<1x1x16x16xf32>
    %585 = vector.shape_cast %584 : vector<1x1x16x16xf32> to vector<16x16xf32>
    %cst_456 = arith.constant dense<0.000000e+00> : vector<16x256xf32>
    %586 = tpu.matmul %585, %583, %cst_456 {dimension_numbers = #tpu.dot_dimension_numbers<[1], [0], [0], [1], [0, 0, 1, 1], [], []>} : vector<16x16xf32>, vector<16x256xf32>, vector<16x256xf32> -> vector<16x256xf32>
    %587 = arith.addf %582, %586 : vector<16x256xf32>
    %c6_457 = arith.constant 6 : index
    %c3_458 = arith.constant 3 : index
    %c0_459 = arith.constant 0 : index
    %c0_460 = arith.constant 0 : index
    %588 = vector.load %arg2[%c6_457, %c3_458, %c0_459, %c0_460] : memref<8x9x16x16xf32, #tpu.memory_space<vmem>>, vector<1x1x16x16xf32>
    %589 = vector.shape_cast %588 : vector<1x1x16x16xf32> to vector<16x16xf32>
    %cst_461 = arith.constant dense<0.000000e+00> : vector<16x256xf32>
    %590 = tpu.matmul %589, %570, %cst_461 {dimension_numbers = #tpu.dot_dimension_numbers<[1], [0], [0], [1], [0, 0, 1, 1], [], []>} : vector<16x16xf32>, vector<16x256xf32>, vector<16x256xf32> -> vector<16x256xf32>
    %591 = arith.addf %587, %590 : vector<16x256xf32>
    %c6_462 = arith.constant 6 : index
    %c4_463 = arith.constant 4 : index
    %c0_464 = arith.constant 0 : index
    %c0_465 = arith.constant 0 : index
    %592 = vector.load %arg2[%c6_462, %c4_463, %c0_464, %c0_465] : memref<8x9x16x16xf32, #tpu.memory_space<vmem>>, vector<1x1x16x16xf32>
    %593 = vector.shape_cast %592 : vector<1x1x16x16xf32> to vector<16x16xf32>
    %cst_466 = arith.constant dense<0.000000e+00> : vector<16x256xf32>
    %594 = tpu.matmul %593, %564, %cst_466 {dimension_numbers = #tpu.dot_dimension_numbers<[1], [0], [0], [1], [0, 0, 1, 1], [], []>} : vector<16x16xf32>, vector<16x256xf32>, vector<16x256xf32> -> vector<16x256xf32>
    %595 = arith.addf %591, %594 : vector<16x256xf32>
    %c6_467 = arith.constant 6 : index
    %c5_468 = arith.constant 5 : index
    %c0_469 = arith.constant 0 : index
    %c0_470 = arith.constant 0 : index
    %596 = vector.load %arg2[%c6_467, %c5_468, %c0_469, %c0_470] : memref<8x9x16x16xf32, #tpu.memory_space<vmem>>, vector<1x1x16x16xf32>
    %597 = vector.shape_cast %596 : vector<1x1x16x16xf32> to vector<16x16xf32>
    %cst_471 = arith.constant dense<0.000000e+00> : vector<16x256xf32>
    %598 = tpu.matmul %597, %567, %cst_471 {dimension_numbers = #tpu.dot_dimension_numbers<[1], [0], [0], [1], [0, 0, 1, 1], [], []>} : vector<16x16xf32>, vector<16x256xf32>, vector<16x256xf32> -> vector<16x256xf32>
    %599 = arith.addf %595, %598 : vector<16x256xf32>
    %c240_i32_472 = arith.constant 240 : i32
    %600 = tpu.dynamic_rotate %570 by %c240_i32_472 dim 1 : vector<16x256xf32>, i32 -> vector<16x256xf32>
    %c6_473 = arith.constant 6 : index
    %c6_474 = arith.constant 6 : index
    %c0_475 = arith.constant 0 : index
    %c0_476 = arith.constant 0 : index
    %601 = vector.load %arg2[%c6_473, %c6_474, %c0_475, %c0_476] : memref<8x9x16x16xf32, #tpu.memory_space<vmem>>, vector<1x1x16x16xf32>
    %602 = vector.shape_cast %601 : vector<1x1x16x16xf32> to vector<16x16xf32>
    %cst_477 = arith.constant dense<0.000000e+00> : vector<16x256xf32>
    %603 = tpu.matmul %602, %600, %cst_477 {dimension_numbers = #tpu.dot_dimension_numbers<[1], [0], [0], [1], [0, 0, 1, 1], [], []>} : vector<16x16xf32>, vector<16x256xf32>, vector<16x256xf32> -> vector<16x256xf32>
    %604 = arith.addf %599, %603 : vector<16x256xf32>
    %c240_i32_478 = arith.constant 240 : i32
    %605 = tpu.dynamic_rotate %564 by %c240_i32_478 dim 1 : vector<16x256xf32>, i32 -> vector<16x256xf32>
    %c6_479 = arith.constant 6 : index
    %c7_480 = arith.constant 7 : index
    %c0_481 = arith.constant 0 : index
    %c0_482 = arith.constant 0 : index
    %606 = vector.load %arg2[%c6_479, %c7_480, %c0_481, %c0_482] : memref<8x9x16x16xf32, #tpu.memory_space<vmem>>, vector<1x1x16x16xf32>
    %607 = vector.shape_cast %606 : vector<1x1x16x16xf32> to vector<16x16xf32>
    %cst_483 = arith.constant dense<0.000000e+00> : vector<16x256xf32>
    %608 = tpu.matmul %607, %605, %cst_483 {dimension_numbers = #tpu.dot_dimension_numbers<[1], [0], [0], [1], [0, 0, 1, 1], [], []>} : vector<16x16xf32>, vector<16x256xf32>, vector<16x256xf32> -> vector<16x256xf32>
    %609 = arith.addf %604, %608 : vector<16x256xf32>
    %c240_i32_484 = arith.constant 240 : i32
    %610 = tpu.dynamic_rotate %567 by %c240_i32_484 dim 1 : vector<16x256xf32>, i32 -> vector<16x256xf32>
    %c6_485 = arith.constant 6 : index
    %c8_486 = arith.constant 8 : index
    %c0_487 = arith.constant 0 : index
    %c0_488 = arith.constant 0 : index
    %611 = vector.load %arg2[%c6_485, %c8_486, %c0_487, %c0_488] : memref<8x9x16x16xf32, #tpu.memory_space<vmem>>, vector<1x1x16x16xf32>
    %612 = vector.shape_cast %611 : vector<1x1x16x16xf32> to vector<16x16xf32>
    %cst_489 = arith.constant dense<0.000000e+00> : vector<16x256xf32>
    %613 = tpu.matmul %612, %610, %cst_489 {dimension_numbers = #tpu.dot_dimension_numbers<[1], [0], [0], [1], [0, 0, 1, 1], [], []>} : vector<16x16xf32>, vector<16x256xf32>, vector<16x256xf32> -> vector<16x256xf32>
    %614 = arith.addf %609, %613 : vector<16x256xf32>
    %615 = arith.addf %614, %474 : vector<16x256xf32>
    %cst_490 = arith.constant 5.000000e-01 : f32
    %616 = vector.broadcast %cst_490 : f32 to vector<16x256xf32>
    %617 = arith.mulf %616, %615 : vector<16x256xf32>
    %cst_491 = arith.constant 0.707106769 : f32
    %618 = vector.broadcast %cst_491 : f32 to vector<16x256xf32>
    %619 = arith.mulf %615, %618 : vector<16x256xf32>
    %cst_492 = arith.constant 0.000000e+00 : f32
    %620 = vector.broadcast %cst_492 : f32 to vector<16x256xf32>
    %621 = arith.cmpf olt, %619, %620 : vector<16x256xf32>
    %cst_493 = arith.constant -1.000000e+00 : f32
    %cst_494 = arith.constant 1.000000e+00 : f32
    %622 = vector.broadcast %cst_493 : f32 to vector<16x256xf32>
    %623 = vector.broadcast %cst_494 : f32 to vector<16x256xf32>
    %624 = arith.select %621, %622, %623 : vector<16x256xi1>, vector<16x256xf32>
    %625 = math.absf %619 : vector<16x256xf32>
    %cst_495 = arith.constant 0.327591091 : f32
    %626 = vector.broadcast %cst_495 : f32 to vector<16x256xf32>
    %627 = arith.mulf %626, %625 : vector<16x256xf32>
    %cst_496 = arith.constant 1.000000e+00 : f32
    %628 = vector.broadcast %cst_496 : f32 to vector<16x256xf32>
    %629 = arith.addf %628, %627 : vector<16x256xf32>
    %630 = tpu.reciprocal %629 {approx = true} : vector<16x256xf32> -> vector<16x256xf32>
    %cst_497 = arith.constant 1.06140542 : f32
    %631 = vector.broadcast %cst_497 : f32 to vector<16x256xf32>
    %632 = arith.mulf %631, %630 : vector<16x256xf32>
    %cst_498 = arith.constant -1.45315206 : f32
    %633 = vector.broadcast %cst_498 : f32 to vector<16x256xf32>
    %634 = arith.addf %632, %633 : vector<16x256xf32>
    %635 = arith.mulf %634, %630 : vector<16x256xf32>
    %cst_499 = arith.constant 1.42141378 : f32
    %636 = vector.broadcast %cst_499 : f32 to vector<16x256xf32>
    %637 = arith.addf %635, %636 : vector<16x256xf32>
    %638 = arith.mulf %637, %630 : vector<16x256xf32>
    %cst_500 = arith.constant -0.284496725 : f32
    %639 = vector.broadcast %cst_500 : f32 to vector<16x256xf32>
    %640 = arith.addf %638, %639 : vector<16x256xf32>
    %641 = arith.mulf %640, %630 : vector<16x256xf32>
    %cst_501 = arith.constant 0.254829586 : f32
    %642 = vector.broadcast %cst_501 : f32 to vector<16x256xf32>
    %643 = arith.addf %641, %642 : vector<16x256xf32>
    %644 = arith.mulf %643, %630 : vector<16x256xf32>
    %cst_502 = arith.constant 0.000000e+00 : f32
    %645 = vector.broadcast %cst_502 : f32 to vector<16x256xf32>
    %646 = arith.subf %645, %625 : vector<16x256xf32>
    %647 = arith.mulf %646, %625 : vector<16x256xf32>
    %648 = math.exp %647 : vector<16x256xf32>
    %649 = arith.mulf %644, %648 : vector<16x256xf32>
    %cst_503 = arith.constant 1.000000e+00 : f32
    %650 = vector.broadcast %cst_503 : f32 to vector<16x256xf32>
    %651 = arith.subf %650, %649 : vector<16x256xf32>
    %652 = arith.mulf %624, %651 : vector<16x256xf32>
    %cst_504 = arith.constant 1.000000e+00 : f32
    %653 = vector.broadcast %cst_504 : f32 to vector<16x256xf32>
    %654 = arith.addf %653, %652 : vector<16x256xf32>
    %655 = arith.mulf %617, %654 : vector<16x256xf32>
    %c15_i32_505 = arith.constant 15 : i32
    %656 = tpu.dynamic_rotate %655 by %c15_i32_505 dim 1 : vector<16x256xf32>, i32 -> vector<16x256xf32>
    %c255_i32_506 = arith.constant 255 : i32
    %657 = tpu.dynamic_rotate %655 by %c255_i32_506 dim 1 : vector<16x256xf32>, i32 -> vector<16x256xf32>
    %658 = arith.select %20, %656, %657 : vector<16x256xi1>, vector<16x256xf32>
    %c241_i32_507 = arith.constant 241 : i32
    %659 = tpu.dynamic_rotate %655 by %c241_i32_507 dim 1 : vector<16x256xf32>, i32 -> vector<16x256xf32>
    %c1_i32_508 = arith.constant 1 : i32
    %660 = tpu.dynamic_rotate %655 by %c1_i32_508 dim 1 : vector<16x256xf32>, i32 -> vector<16x256xf32>
    %661 = arith.select %18, %659, %660 : vector<16x256xi1>, vector<16x256xf32>
    %c7_509 = arith.constant 7 : index
    %c0_510 = arith.constant 0 : index
    %c0_511 = arith.constant 0 : index
    %662 = vector.load %arg3[%c7_509, %c0_510, %c0_511] : memref<8x16x256xf32, #tpu.memory_space<vmem>>, vector<1x16x256xf32>
    %663 = vector.shape_cast %662 : vector<1x16x256xf32> to vector<16x256xf32>
    %c16_i32_512 = arith.constant 16 : i32
    %664 = tpu.dynamic_rotate %661 by %c16_i32_512 dim 1 : vector<16x256xf32>, i32 -> vector<16x256xf32>
    %c7_513 = arith.constant 7 : index
    %c0_514 = arith.constant 0 : index
    %c0_515 = arith.constant 0 : index
    %c0_516 = arith.constant 0 : index
    %665 = vector.load %arg2[%c7_513, %c0_514, %c0_515, %c0_516] : memref<8x9x16x16xf32, #tpu.memory_space<vmem>>, vector<1x1x16x16xf32>
    %666 = vector.shape_cast %665 : vector<1x1x16x16xf32> to vector<16x16xf32>
    %cst_517 = arith.constant dense<0.000000e+00> : vector<16x256xf32>
    %667 = tpu.matmul %666, %664, %cst_517 {dimension_numbers = #tpu.dot_dimension_numbers<[1], [0], [0], [1], [0, 0, 1, 1], [], []>} : vector<16x16xf32>, vector<16x256xf32>, vector<16x256xf32> -> vector<16x256xf32>
    %668 = arith.addf %663, %667 : vector<16x256xf32>
    %c16_i32_518 = arith.constant 16 : i32
    %669 = tpu.dynamic_rotate %655 by %c16_i32_518 dim 1 : vector<16x256xf32>, i32 -> vector<16x256xf32>
    %c7_519 = arith.constant 7 : index
    %c1_520 = arith.constant 1 : index
    %c0_521 = arith.constant 0 : index
    %c0_522 = arith.constant 0 : index
    %670 = vector.load %arg2[%c7_519, %c1_520, %c0_521, %c0_522] : memref<8x9x16x16xf32, #tpu.memory_space<vmem>>, vector<1x1x16x16xf32>
    %671 = vector.shape_cast %670 : vector<1x1x16x16xf32> to vector<16x16xf32>
    %cst_523 = arith.constant dense<0.000000e+00> : vector<16x256xf32>
    %672 = tpu.matmul %671, %669, %cst_523 {dimension_numbers = #tpu.dot_dimension_numbers<[1], [0], [0], [1], [0, 0, 1, 1], [], []>} : vector<16x16xf32>, vector<16x256xf32>, vector<16x256xf32> -> vector<16x256xf32>
    %673 = arith.addf %668, %672 : vector<16x256xf32>
    %c16_i32_524 = arith.constant 16 : i32
    %674 = tpu.dynamic_rotate %658 by %c16_i32_524 dim 1 : vector<16x256xf32>, i32 -> vector<16x256xf32>
    %c7_525 = arith.constant 7 : index
    %c2_526 = arith.constant 2 : index
    %c0_527 = arith.constant 0 : index
    %c0_528 = arith.constant 0 : index
    %675 = vector.load %arg2[%c7_525, %c2_526, %c0_527, %c0_528] : memref<8x9x16x16xf32, #tpu.memory_space<vmem>>, vector<1x1x16x16xf32>
    %676 = vector.shape_cast %675 : vector<1x1x16x16xf32> to vector<16x16xf32>
    %cst_529 = arith.constant dense<0.000000e+00> : vector<16x256xf32>
    %677 = tpu.matmul %676, %674, %cst_529 {dimension_numbers = #tpu.dot_dimension_numbers<[1], [0], [0], [1], [0, 0, 1, 1], [], []>} : vector<16x16xf32>, vector<16x256xf32>, vector<16x256xf32> -> vector<16x256xf32>
    %678 = arith.addf %673, %677 : vector<16x256xf32>
    %c7_530 = arith.constant 7 : index
    %c3_531 = arith.constant 3 : index
    %c0_532 = arith.constant 0 : index
    %c0_533 = arith.constant 0 : index
    %679 = vector.load %arg2[%c7_530, %c3_531, %c0_532, %c0_533] : memref<8x9x16x16xf32, #tpu.memory_space<vmem>>, vector<1x1x16x16xf32>
    %680 = vector.shape_cast %679 : vector<1x1x16x16xf32> to vector<16x16xf32>
    %cst_534 = arith.constant dense<0.000000e+00> : vector<16x256xf32>
    %681 = tpu.matmul %680, %661, %cst_534 {dimension_numbers = #tpu.dot_dimension_numbers<[1], [0], [0], [1], [0, 0, 1, 1], [], []>} : vector<16x16xf32>, vector<16x256xf32>, vector<16x256xf32> -> vector<16x256xf32>
    %682 = arith.addf %678, %681 : vector<16x256xf32>
    %c7_535 = arith.constant 7 : index
    %c4_536 = arith.constant 4 : index
    %c0_537 = arith.constant 0 : index
    %c0_538 = arith.constant 0 : index
    %683 = vector.load %arg2[%c7_535, %c4_536, %c0_537, %c0_538] : memref<8x9x16x16xf32, #tpu.memory_space<vmem>>, vector<1x1x16x16xf32>
    %684 = vector.shape_cast %683 : vector<1x1x16x16xf32> to vector<16x16xf32>
    %cst_539 = arith.constant dense<0.000000e+00> : vector<16x256xf32>
    %685 = tpu.matmul %684, %655, %cst_539 {dimension_numbers = #tpu.dot_dimension_numbers<[1], [0], [0], [1], [0, 0, 1, 1], [], []>} : vector<16x16xf32>, vector<16x256xf32>, vector<16x256xf32> -> vector<16x256xf32>
    %686 = arith.addf %682, %685 : vector<16x256xf32>
    %c7_540 = arith.constant 7 : index
    %c5_541 = arith.constant 5 : index
    %c0_542 = arith.constant 0 : index
    %c0_543 = arith.constant 0 : index
    %687 = vector.load %arg2[%c7_540, %c5_541, %c0_542, %c0_543] : memref<8x9x16x16xf32, #tpu.memory_space<vmem>>, vector<1x1x16x16xf32>
    %688 = vector.shape_cast %687 : vector<1x1x16x16xf32> to vector<16x16xf32>
    %cst_544 = arith.constant dense<0.000000e+00> : vector<16x256xf32>
    %689 = tpu.matmul %688, %658, %cst_544 {dimension_numbers = #tpu.dot_dimension_numbers<[1], [0], [0], [1], [0, 0, 1, 1], [], []>} : vector<16x16xf32>, vector<16x256xf32>, vector<16x256xf32> -> vector<16x256xf32>
    %690 = arith.addf %686, %689 : vector<16x256xf32>
    %c240_i32_545 = arith.constant 240 : i32
    %691 = tpu.dynamic_rotate %661 by %c240_i32_545 dim 1 : vector<16x256xf32>, i32 -> vector<16x256xf32>
    %c7_546 = arith.constant 7 : index
    %c6_547 = arith.constant 6 : index
    %c0_548 = arith.constant 0 : index
    %c0_549 = arith.constant 0 : index
    %692 = vector.load %arg2[%c7_546, %c6_547, %c0_548, %c0_549] : memref<8x9x16x16xf32, #tpu.memory_space<vmem>>, vector<1x1x16x16xf32>
    %693 = vector.shape_cast %692 : vector<1x1x16x16xf32> to vector<16x16xf32>
    %cst_550 = arith.constant dense<0.000000e+00> : vector<16x256xf32>
    %694 = tpu.matmul %693, %691, %cst_550 {dimension_numbers = #tpu.dot_dimension_numbers<[1], [0], [0], [1], [0, 0, 1, 1], [], []>} : vector<16x16xf32>, vector<16x256xf32>, vector<16x256xf32> -> vector<16x256xf32>
    %695 = arith.addf %690, %694 : vector<16x256xf32>
    %c240_i32_551 = arith.constant 240 : i32
    %696 = tpu.dynamic_rotate %655 by %c240_i32_551 dim 1 : vector<16x256xf32>, i32 -> vector<16x256xf32>
    %c7_552 = arith.constant 7 : index
    %c7_553 = arith.constant 7 : index
    %c0_554 = arith.constant 0 : index
    %c0_555 = arith.constant 0 : index
    %697 = vector.load %arg2[%c7_552, %c7_553, %c0_554, %c0_555] : memref<8x9x16x16xf32, #tpu.memory_space<vmem>>, vector<1x1x16x16xf32>
    %698 = vector.shape_cast %697 : vector<1x1x16x16xf32> to vector<16x16xf32>
    %cst_556 = arith.constant dense<0.000000e+00> : vector<16x256xf32>
    %699 = tpu.matmul %698, %696, %cst_556 {dimension_numbers = #tpu.dot_dimension_numbers<[1], [0], [0], [1], [0, 0, 1, 1], [], []>} : vector<16x16xf32>, vector<16x256xf32>, vector<16x256xf32> -> vector<16x256xf32>
    %700 = arith.addf %695, %699 : vector<16x256xf32>
    %c240_i32_557 = arith.constant 240 : i32
    %701 = tpu.dynamic_rotate %658 by %c240_i32_557 dim 1 : vector<16x256xf32>, i32 -> vector<16x256xf32>
    %c7_558 = arith.constant 7 : index
    %c8_559 = arith.constant 8 : index
    %c0_560 = arith.constant 0 : index
    %c0_561 = arith.constant 0 : index
    %702 = vector.load %arg2[%c7_558, %c8_559, %c0_560, %c0_561] : memref<8x9x16x16xf32, #tpu.memory_space<vmem>>, vector<1x1x16x16xf32>
    %703 = vector.shape_cast %702 : vector<1x1x16x16xf32> to vector<16x16xf32>
    %cst_562 = arith.constant dense<0.000000e+00> : vector<16x256xf32>
    %704 = tpu.matmul %703, %701, %cst_562 {dimension_numbers = #tpu.dot_dimension_numbers<[1], [0], [0], [1], [0, 0, 1, 1], [], []>} : vector<16x16xf32>, vector<16x256xf32>, vector<16x256xf32> -> vector<16x256xf32>
    %705 = arith.addf %700, %704 : vector<16x256xf32>
    %cst_563 = arith.constant 5.000000e-01 : f32
    %706 = vector.broadcast %cst_563 : f32 to vector<16x256xf32>
    %707 = arith.mulf %706, %705 : vector<16x256xf32>
    %cst_564 = arith.constant 0.707106769 : f32
    %708 = vector.broadcast %cst_564 : f32 to vector<16x256xf32>
    %709 = arith.mulf %705, %708 : vector<16x256xf32>
    %cst_565 = arith.constant 0.000000e+00 : f32
    %710 = vector.broadcast %cst_565 : f32 to vector<16x256xf32>
    %711 = arith.cmpf olt, %709, %710 : vector<16x256xf32>
    %cst_566 = arith.constant -1.000000e+00 : f32
    %cst_567 = arith.constant 1.000000e+00 : f32
    %712 = vector.broadcast %cst_566 : f32 to vector<16x256xf32>
    %713 = vector.broadcast %cst_567 : f32 to vector<16x256xf32>
    %714 = arith.select %711, %712, %713 : vector<16x256xi1>, vector<16x256xf32>
    %715 = math.absf %709 : vector<16x256xf32>
    %cst_568 = arith.constant 0.327591091 : f32
    %716 = vector.broadcast %cst_568 : f32 to vector<16x256xf32>
    %717 = arith.mulf %716, %715 : vector<16x256xf32>
    %cst_569 = arith.constant 1.000000e+00 : f32
    %718 = vector.broadcast %cst_569 : f32 to vector<16x256xf32>
    %719 = arith.addf %718, %717 : vector<16x256xf32>
    %720 = tpu.reciprocal %719 {approx = true} : vector<16x256xf32> -> vector<16x256xf32>
    %cst_570 = arith.constant 1.06140542 : f32
    %721 = vector.broadcast %cst_570 : f32 to vector<16x256xf32>
    %722 = arith.mulf %721, %720 : vector<16x256xf32>
    %cst_571 = arith.constant -1.45315206 : f32
    %723 = vector.broadcast %cst_571 : f32 to vector<16x256xf32>
    %724 = arith.addf %722, %723 : vector<16x256xf32>
    %725 = arith.mulf %724, %720 : vector<16x256xf32>
    %cst_572 = arith.constant 1.42141378 : f32
    %726 = vector.broadcast %cst_572 : f32 to vector<16x256xf32>
    %727 = arith.addf %725, %726 : vector<16x256xf32>
    %728 = arith.mulf %727, %720 : vector<16x256xf32>
    %cst_573 = arith.constant -0.284496725 : f32
    %729 = vector.broadcast %cst_573 : f32 to vector<16x256xf32>
    %730 = arith.addf %728, %729 : vector<16x256xf32>
    %731 = arith.mulf %730, %720 : vector<16x256xf32>
    %cst_574 = arith.constant 0.254829586 : f32
    %732 = vector.broadcast %cst_574 : f32 to vector<16x256xf32>
    %733 = arith.addf %731, %732 : vector<16x256xf32>
    %734 = arith.mulf %733, %720 : vector<16x256xf32>
    %cst_575 = arith.constant 0.000000e+00 : f32
    %735 = vector.broadcast %cst_575 : f32 to vector<16x256xf32>
    %736 = arith.subf %735, %715 : vector<16x256xf32>
    %737 = arith.mulf %736, %715 : vector<16x256xf32>
    %738 = math.exp %737 : vector<16x256xf32>
    %739 = arith.mulf %734, %738 : vector<16x256xf32>
    %cst_576 = arith.constant 1.000000e+00 : f32
    %740 = vector.broadcast %cst_576 : f32 to vector<16x256xf32>
    %741 = arith.subf %740, %739 : vector<16x256xf32>
    %742 = arith.mulf %714, %741 : vector<16x256xf32>
    %cst_577 = arith.constant 1.000000e+00 : f32
    %743 = vector.broadcast %cst_577 : f32 to vector<16x256xf32>
    %744 = arith.addf %743, %742 : vector<16x256xf32>
    %745 = arith.mulf %707, %744 : vector<16x256xf32>
    %cst_578 = arith.constant 0.000000e+00 : f32
    %746 = vector.broadcast %cst_578 : f32 to vector<16x256xf32>
    %747 = arith.cmpf olt, %745, %746 : vector<16x256xf32>
    %cst_579 = arith.constant -1.000000e+00 : f32
    %cst_580 = arith.constant 1.000000e+00 : f32
    %748 = vector.broadcast %cst_579 : f32 to vector<16x256xf32>
    %749 = vector.broadcast %cst_580 : f32 to vector<16x256xf32>
    %750 = arith.select %747, %748, %749 : vector<16x256xi1>, vector<16x256xf32>
    %751 = math.absf %745 : vector<16x256xf32>
    %cst_581 = arith.constant 2.41421366 : f32
    %752 = vector.broadcast %cst_581 : f32 to vector<16x256xf32>
    %753 = arith.cmpf ogt, %751, %752 : vector<16x256xf32>
    %cst_582 = arith.constant 0.414213568 : f32
    %754 = vector.broadcast %cst_582 : f32 to vector<16x256xf32>
    %755 = arith.cmpf ogt, %751, %754 : vector<16x256xf32>
    %cst_583 = arith.constant 1.000000e-30 : f32
    %756 = vector.broadcast %cst_583 : f32 to vector<16x256xf32>
    %757 = arith.maximumf %751, %756 : vector<16x256xf32>
    %cst_584 = arith.constant -1.000000e+00 : f32
    %758 = vector.broadcast %cst_584 : f32 to vector<16x256xf32>
    %759 = arith.divf %758, %757 : vector<16x256xf32>
    %cst_585 = arith.constant 1.000000e+00 : f32
    %760 = vector.broadcast %cst_585 : f32 to vector<16x256xf32>
    %761 = arith.subf %751, %760 : vector<16x256xf32>
    %cst_586 = arith.constant 1.000000e+00 : f32
    %762 = vector.broadcast %cst_586 : f32 to vector<16x256xf32>
    %763 = arith.addf %751, %762 : vector<16x256xf32>
    %764 = arith.divf %761, %763 : vector<16x256xf32>
    %765 = arith.select %755, %764, %751 : vector<16x256xi1>, vector<16x256xf32>
    %766 = arith.select %753, %759, %765 : vector<16x256xi1>, vector<16x256xf32>
    %cst_587 = arith.constant 0.785398185 : f32
    %cst_588 = arith.constant 0.000000e+00 : f32
    %767 = vector.broadcast %cst_587 : f32 to vector<16x256xf32>
    %768 = vector.broadcast %cst_588 : f32 to vector<16x256xf32>
    %769 = arith.select %755, %767, %768 : vector<16x256xi1>, vector<16x256xf32>
    %cst_589 = arith.constant 1.57079637 : f32
    %770 = vector.broadcast %cst_589 : f32 to vector<16x256xf32>
    %771 = arith.select %753, %770, %769 : vector<16x256xi1>, vector<16x256xf32>
    %772 = arith.mulf %766, %766 : vector<16x256xf32>
    %cst_590 = arith.constant 0.0805374458 : f32
    %773 = vector.broadcast %cst_590 : f32 to vector<16x256xf32>
    %774 = arith.mulf %773, %772 : vector<16x256xf32>
    %cst_591 = arith.constant 0.138776854 : f32
    %775 = vector.broadcast %cst_591 : f32 to vector<16x256xf32>
    %776 = arith.subf %774, %775 : vector<16x256xf32>
    %777 = arith.mulf %776, %772 : vector<16x256xf32>
    %cst_592 = arith.constant 0.199777111 : f32
    %778 = vector.broadcast %cst_592 : f32 to vector<16x256xf32>
    %779 = arith.addf %777, %778 : vector<16x256xf32>
    %780 = arith.mulf %779, %772 : vector<16x256xf32>
    %cst_593 = arith.constant 0.333329499 : f32
    %781 = vector.broadcast %cst_593 : f32 to vector<16x256xf32>
    %782 = arith.subf %780, %781 : vector<16x256xf32>
    %783 = arith.mulf %782, %772 : vector<16x256xf32>
    %784 = arith.mulf %783, %766 : vector<16x256xf32>
    %785 = arith.addf %784, %766 : vector<16x256xf32>
    %786 = arith.addf %771, %785 : vector<16x256xf32>
    %787 = arith.mulf %750, %786 : vector<16x256xf32>
    %cst_594 = arith.constant 0.159154937 : f32
    %788 = vector.broadcast %cst_594 : f32 to vector<16x256xf32>
    %789 = arith.mulf %787, %788 : vector<16x256xf32>
    %c0_595 = arith.constant 0 : index
    %c0_596 = arith.constant 0 : index
    %c0_597 = arith.constant 0 : index
    %790 = vector.load %arg4[%c0_595, %c0_596, %c0_597] : memref<1x16x256xf32, #tpu.memory_space<vmem>>, vector<1x16x256xf32>
    %791 = vector.shape_cast %790 : vector<1x16x256xf32> to vector<16x256xf32>
    %792 = vector.shape_cast %789 : vector<16x256xf32> to vector<1x16x256xf32>
    tpu.vector_store %arg4[%c0_595, %c0_596, %c0_597], %792 {strides = array<i32>} : memref<1x16x256xf32, #tpu.memory_space<vmem>>, vector<1x16x256xf32>,
    return
  }
  func.func @transform_0(%arg0: i32) -> (i32, i32, i32) {
    %c0_i32 = arith.constant 0 : i32
    %c0_i32_0 = arith.constant 0 : i32
    %c0_i32_1 = arith.constant 0 : i32
    return %arg0, %c0_i32, %c0_i32_0 : i32, i32, i32
  }
  func.func @transform_1(%arg0: i32) -> (i32, i32, i32, i32) {
    %c0_i32 = arith.constant 0 : i32
    %c0_i32_0 = arith.constant 0 : i32
    %c0_i32_1 = arith.constant 0 : i32
    %c0_i32_2 = arith.constant 0 : i32
    %c0_i32_3 = arith.constant 0 : i32
    return %c0_i32, %c0_i32_0, %c0_i32_1, %c0_i32_2 : i32, i32, i32, i32
  }
  func.func @transform_2(%arg0: i32) -> (i32, i32, i32) {
    %c0_i32 = arith.constant 0 : i32
    %c0_i32_0 = arith.constant 0 : i32
    %c0_i32_1 = arith.constant 0 : i32
    %c0_i32_2 = arith.constant 0 : i32
    return %c0_i32, %c0_i32_0, %c0_i32_1 : i32, i32, i32
  }
  func.func @transform_3(%arg0: i32) -> (i32, i32, i32) {
    %c0_i32 = arith.constant 0 : i32
    %c0_i32_0 = arith.constant 0 : i32
    %c0_i32_1 = arith.constant 0 : i32
    return %arg0, %c0_i32, %c0_i32_0 : i32, i32, i32
  }
}

</mosaic_0001>

<llo_original>
// kernel: _joint_cnn_forward.1
$region0: #{_joint_cnn_forward.1}
  #allocation0 [shape = 'u32[]', space=smem, size = 0x4, offset = 0x4, fixed_abs, tag = 'smem constant byte address 0x4 - core index']
  #allocation1 [shape = 'u32[144,128]{1,0:T(1,128)}', space=vmem, size = 0x12000, scoped, tag = 'internal scratch']
  %s0 = inlined_call_operand.vmem [shape: f32[2,16,256], index: 0, kind: input, shape index: {}]
  %s1 = inlined_call_operand.hbm [shape: f32[8,9,16,16], index: 1, kind: input, shape index: {}]
  %s2 = inlined_call_operand.vmem [shape: f32[8,16,256], index: 2, kind: input, shape index: {}]
  %s3 = inlined_call_operand.vmem [shape: f32[2,16,256], index: 3, kind: output, shape index: {}]
  %s4 = sld [smem:[#allocation0]]
  $region49: #{_joint_cnn_forward.1} parent=0
    _
  %s6 = ssub.s32 1, %s4
  %s7 = scalar_select 0, %s6, %s4
  $region1: #{_joint_cnn_forward.1} parent=0
    #allocation2 [shape = 'u8[589824]{0}', space=vmem, size = 0x90000, scoped, tag = 'input window, operand 1, single buffered']
    #allocation3 [shape = 's32[2]{0}', space=sflag, size = 0x8, scoped, tag = 'scoped memory for _joint_cnn_forward.1']
    %8 = vsyncpa [#allocation3], 0
    loop: start=0, step=1, limit=4
    $region2: #{_joint_cnn_forward.1} parent=1 // loop_pre_header
      _
    $region3: #{_joint_cnn_forward.1} parent=1 // loop_header
      %s10 = sphi 0, %s14
      %p11 = scmp.ge.s32.totalorder %s10, 4
      %s20 = sphi 0, %s22
      %s23 = sphi 0, %s20
      %s24 = sphi 0, %s23
      %s40 = sphi 0, %s24
      %s44 = sphi 0, %s44
      %s46 = sphi 0, %s44
      %s47 = sphi 0, %s46
      %s61 = sphi 0, %s47
      %s65 = sphi 0, %s65
      %s67 = sphi 0, %s65
      %s68 = sphi 0, %s67
      %s82 = sphi 0, %s68
      %s88 = sphi 0, %s90
      %s91 = sphi 0, %s88
      %s92 = sphi 0, %s91
      %s108 = sphi 0, %s92
    $region4: #{_joint_cnn_forward.1} parent=1 // loop_header_branch
      %13 = sbr.rel (%p11) target = $region8
    $region5: #{_joint_cnn_forward.1} parent=1 // loop_body
      %s15 = ssub.s32 %s10, 1
      %s16 = ssub.s32 %s10, 2
      %s17 = sadd.s32 %s10, 1
      %s18 = ssub.s32 %s10, %s17
      %p19 = scmp.eq.s32.totalorder %s18, 0
      %s21 = sadd.s32 %s20, 1
      %s22 = scalar_select %p19, %s20, %s21
      %p25 = pneg %p19
      %p26 = scmp.eq.s32.totalorder %s10, 1
      %p27 = por %p25, %p26
      %p28 = scmp.ne.s32.totalorder %s20, %s23
      %p29 = scmp.eq.s32.totalorder %s10, 0
      %p30 = por %p28, %p29
      %p31 = scmp.ne.s32.totalorder %s20, %s23
      %p32 = scmp.eq.s32.totalorder %s15, 1
      %p33 = por %p31, %p32
      %p34 = scmp.ne.s32.totalorder %s23, %s24
      %p35 = scmp.eq.s32.totalorder %s15, 0
      %p36 = por %p34, %p35
      %p37 = scmp.ne.s32.totalorder %s23, %s24
      %p38 = scmp.eq.s32.totalorder %s16, 1
      %p39 = por %p37, %p38
      %p41 = scmp.ne.s32.totalorder %s24, %s40
      %p42 = scmp.eq.s32.totalorder %s16, 0
      %p43 = por %p41, %p42
      %s45 = sadd.s32 %s44, 1
      %p48 = scmp.eq.s32.totalorder %s10, 1
      %p49 = scmp.ne.s32.totalorder %s44, %s46
      %p50 = scmp.eq.s32.totalorder %s10, 0
      %p51 = por %p49, %p50
      %p52 = scmp.ne.s32.totalorder %s44, %s46
      %p53 = scmp.eq.s32.totalorder %s15, 1
      %p54 = por %p52, %p53
      %p55 = scmp.ne.s32.totalorder %s46, %s47
      %p56 = scmp.eq.s32.totalorder %s15, 0
      %p57 = por %p55, %p56
      %p58 = scmp.ne.s32.totalorder %s46, %s47
      %p59 = scmp.eq.s32.totalorder %s16, 1
      %p60 = por %p58, %p59
      %p62 = scmp.ne.s32.totalorder %s47, %s61
      %p63 = scmp.eq.s32.totalorder %s16, 0
      %p64 = por %p62, %p63
      %s66 = sadd.s32 %s65, 1
      %p69 = scmp.eq.s32.totalorder %s10, 1
      %p70 = scmp.ne.s32.totalorder %s65, %s67
      %p71 = scmp.eq.s32.totalorder %s10, 0
      %p72 = por %p70, %p71
      %p73 = scmp.ne.s32.totalorder %s65, %s67
      %p74 = scmp.eq.s32.totalorder %s15, 1
      %p75 = por %p73, %p74
      %p76 = scmp.ne.s32.totalorder %s67, %s68
      %p77 = scmp.eq.s32.totalorder %s15, 0
      %p78 = por %p76, %p77
      %p79 = scmp.ne.s32.totalorder %s67, %s68
      %p80 = scmp.eq.s32.totalorder %s16, 1
      %p81 = por %p79, %p80
      %p83 = scmp.ne.s32.totalorder %s68, %s82
      %p84 = scmp.eq.s32.totalorder %s16, 0
      %p85 = por %p83, %p84
      %s86 = ssub.s32 %s10, %s17
      %p87 = scmp.eq.s32.totalorder %s86, 0
      %s89 = sadd.s32 %s88, 1
      %s90 = scalar_select %p87, %s88, %s89
      %p93 = pneg %p87
      %p94 = scmp.eq.s32.totalorder %s10, 1
      %p95 = por %p93, %p94
      %p96 = scmp.ne.s32.totalorder %s88, %s91
      %p97 = scmp.eq.s32.totalorder %s10, 0
      %p98 = por %p96, %p97
      %p99 = scmp.ne.s32.totalorder %s88, %s91
      %p100 = scmp.eq.s32.totalorder %s15, 1
      %p101 = por %p99, %p100
      %p102 = scmp.ne.s32.totalorder %s91, %s92
      %p103 = scmp.eq.s32.totalorder %s15, 0
      %p104 = por %p102, %p103
      %p105 = scmp.ne.s32.totalorder %s91, %s92
      %p106 = scmp.eq.s32.totalorder %s16, 1
      %p107 = por %p105, %p106
      %p109 = scmp.ne.s32.totalorder %s92, %s108
      %p110 = scmp.eq.s32.totalorder %s16, 0
      %p111 = por %p109, %p110
      %p112 = scmp.le.s32.totalorder 1, %s10
      %p113 = scmp.lt.s32.totalorder %s10, 3
      %p114 = pnand %p112, %p113
      %p115 = pneg %p114
      // Predicated region
      $region9: #{_joint_cnn_forward.1} parent=5 // pred_check
        _
      $region10: #{_joint_cnn_forward.1} parent=5 // pred_check_branch
        %117 = sbr.rel (%p114) target = $region12
      $region11: #{_joint_cnn_forward.1} parent=5 // pred_region
        %s118 = ssub.s32 %s10, 1
        // Predicated region
        $region13: #{_joint_cnn_forward.1} parent=11 // pred_check
          %p119 = pneg %p57
        $region14: #{_joint_cnn_forward.1} parent=11 // pred_check_branch
          %121 = sbr.rel (%p119) target = $region16
        $region15: #{_joint_cnn_forward.1} parent=11 // pred_region
          %s123 = ssub.s32 18432, 18432
          %124 = vsyncadd [#allocation3], %s123
          %s125 = sshll.u32 [#allocation2], 4
          %s126 = int_to_ptr.vmem [resolvable:$true] %s125
          %131 = dma.hbm_to_vmem [thread:$0]  %s1, 18432, %s126, [#allocation3], 128, 128, 8
        $region16: #{_joint_cnn_forward.1} parent=11 // pred_fallthru
          _
        // Predicated region
        $region17: #{_joint_cnn_forward.1} parent=11 // pred_check
          %p132 = pneg %p78
        $region18: #{_joint_cnn_forward.1} parent=11 // pred_check_branch
          %134 = sbr.rel (%p132) target = $region20
        $region19: #{_joint_cnn_forward.1} parent=11 // pred_region
          _
        $region20: #{_joint_cnn_forward.1} parent=11 // pred_fallthru
          _
      $region12: #{_joint_cnn_forward.1} parent=5 // pred_fallthru
        _
      %p135 = scmp.lt.s32.totalorder %s10, 2
      // Predicated region
      $region21: #{_joint_cnn_forward.1} parent=5 // pred_check
        %p136 = pneg %p135
      $region22: #{_joint_cnn_forward.1} parent=5 // pred_check_branch
        %138 = sbr.rel (%p136) target = $region24
      $region23: #{_joint_cnn_forward.1} parent=5 // pred_region
        // Predicated region
        $region25: #{_joint_cnn_forward.1} parent=23 // pred_check
          %p139 = pneg %p30
        $region26: #{_joint_cnn_forward.1} parent=23 // pred_check_branch
          %141 = sbr.rel (%p139) target = $region28
        $region27: #{_joint_cnn_forward.1} parent=23 // pred_region
          %p142 = scmp.lt.s32.totalorder %s10, 1
          %s143 = scalar_select %p142, %s10, 1
          %s144 = smul.addr %s143, 4
          %s145 = smul.addr %s144, 8
          %s146 = scalar_lea.vmem %s0, %s145
        $region28: #{_joint_cnn_forward.1} parent=23 // pred_fallthru
          _
      $region24: #{_joint_cnn_forward.1} parent=5 // pred_fallthru
        _
      %p147 = scmp.le.s32.totalorder 1, %s10
      %p148 = scmp.lt.s32.totalorder %s10, 3
      %p149 = pnand %p147, %p148
      %p150 = pneg %p149
      // Predicated region
      $region29: #{_joint_cnn_forward.1} parent=5 // pred_check
        _
      $region30: #{_joint_cnn_forward.1} parent=5 // pred_check_branch
        %152 = sbr.rel (%p149) target = $region32
      $region31: #{_joint_cnn_forward.1} parent=5 // pred_region
        %s153 = ssub.s32 %s10, 1
        // Predicated region
        $region33: #{_joint_cnn_forward.1} parent=31 // pred_check
          %p154 = pneg %p57
        $region34: #{_joint_cnn_forward.1} parent=31 // pred_check_branch
          %156 = sbr.rel (%p154) target = $region36
        $region35: #{_joint_cnn_forward.1} parent=31 // pred_region
          %157 = dma.done [#allocation3], 18432
        $region36: #{_joint_cnn_forward.1} parent=31 // pred_fallthru
          _
        %p158 = scmp.lt.s32.totalorder %s15, 1
        %s159 = scalar_select %p158, %s15, 1
        %s160 = smul.addr %s159, 4
        %s161 = smul.addr %s160, 8
        %s162 = scalar_lea.vmem %s0, %s161
        %p163 = pneg %p36
        %p164 = pneg %p33
        %p165 = pneg %p57
        %p166 = pneg %p54
        %p167 = pneg %p78
        %p168 = pneg %p75
        %p169 = pneg %p104
        %p170 = pneg %p101
        %p171 = scmp.lt.s32.totalorder %s15, 1
        %s172 = scalar_select %p171, %s15, 1
        %s173 = smul.addr %s172, 4
        %s174 = smul.addr %s173, 8
        %s175 = scalar_lea.vmem %s3, %s174
        %p176 = scmp.lt.s32.totalorder %s15, 1
        %s177 = scalar_select %p176, %s15, 1
        %s178 = smul.addr %s177, 4
        %s179 = smul.addr %s178, 8
        %s180 = scalar_lea.vmem %s0, %s179
        %p181 = scmp.lt.s32.totalorder %s15, 1
        %s182 = scalar_select %p181, %s15, 1
        %s183 = smul.addr %s182, 4
        %s184 = smul.addr %s183, 8
        %s185 = scalar_lea.vmem %s3, %s184
        %v186 = vlaneseq
        %v187 = vand.u32 %v186, 127
        %v188 = vadd.s32 %v187, 128
        %vm189 = vcmp.lt.s32.totalorder %v187, 0
        %v190 = vsub.s32 0, %v187
        %v191 = vsel %vm189, %v190, %v187
        %v192 = vshrl.u32 %v191, 4
        %v193 = vand.u32 %v191, 15
        %v194 = vsub.s32 0, %v193
        %v195 = vsel %vm189, %v194, %v193
        %vm196 = vcmp.lt.s32.totalorder %v188, 0
        %v197 = vsub.s32 0, %v188
        %v198 = vsel %vm196, %v197, %v188
        %v199 = vshrl.u32 %v198, 4
        %v200 = vand.u32 %v198, 15
        %v201 = vsub.s32 0, %v200
        %v202 = vsel %vm196, %v201, %v200
        %vm203 = vcmp.ne.s32.totalorder %v195, 0
        %vm204 = vcmp.ne.s32.totalorder %v202, 0
        %vm205 = vcmp.lt.s32.totalorder %v195, 0
        %vm206 = vcmp.lt.s32.totalorder %v202, 0
        %vm207 = vmand %vm205, %vm203
        %vm208 = vmand %vm206, %vm204
        %v209 = vadd.s32 %v195, 16
        %v210 = vadd.s32 %v202, 16
        %v211 = vsel %vm207, %v209, %v195
        %v212 = vsel %vm208, %v210, %v202
        %vm213 = vcmp.eq.s32.totalorder %v211, 0
        %vm214 = vcmp.eq.s32.totalorder %v212, 0
        %vm215 = vcmp.eq.s32.totalorder %v211, 15
        %vm216 = vcmp.eq.s32.totalorder %v212, 15
        %v217 = vld [vmem:[%s180] sm:$0xff]
        %v218 = vld [vmem:[%s180 + $0x8] sm:$0xff]
        %v219 = vld [vmem:[%s180 + $0x10] sm:$0xff]
        %v220 = vld [vmem:[%s180 + $0x18] sm:$0xff]
        %221 = vrot.lane.b32.xlu0 %v217, 15
        %v222 = vpop.permute.xlu0 %221
        %223 = vrot.lane.b32.xlu0 %v219, 15
        %v224 = vpop.permute.xlu0 %223
        %225 = vrot.lane.b32.xlu0 %v218, 15
        %v226 = vpop.permute.xlu0 %225
        %227 = vrot.lane.b32.xlu0 %v220, 15
        %v228 = vpop.permute.xlu0 %227
        %vm229 = vcmp.lt.s32.totalorder %v187, 15
        %v230 = vsel %vm229, %v222, %v226
        %v231 = vsel %vm229, %v224, %v228
        %v232 = vsel %vm229, %v226, %v222
        %v233 = vsel %vm229, %v228, %v224
        %234 = vrot.lane.b32.xlu0 %v217, 127
        %v235 = vpop.permute.xlu0 %234
        %236 = vrot.lane.b32.xlu0 %v219, 127
        %v237 = vpop.permute.xlu0 %236
        %238 = vrot.lane.b32.xlu0 %v218, 127
        %v239 = vpop.permute.xlu0 %238
        %240 = vrot.lane.b32.xlu0 %v220, 127
        %v241 = vpop.permute.xlu0 %240
        %vm242 = vcmp.lt.s32.totalorder %v187, 127
        %v243 = vsel %vm242, %v235, %v239
        %v244 = vsel %vm242, %v237, %v241
        %v245 = vsel %vm242, %v239, %v235
        %v246 = vsel %vm242, %v241, %v237
        %v247 = vsel %vm215, %v232, %v243
        %v248 = vsel %vm216, %v230, %v245
        %v249 = vsel %vm215, %v233, %v244
        %v250 = vsel %vm216, %v231, %v246
        %251 = vrot.lane.b32.xlu0 %v217, 113
        %v252 = vpop.permute.xlu0 %251
        %253 = vrot.lane.b32.xlu0 %v219, 113
        %v254 = vpop.permute.xlu0 %253
        %255 = vrot.lane.b32.xlu0 %v218, 113
        %v256 = vpop.permute.xlu0 %255
        %257 = vrot.lane.b32.xlu0 %v220, 113
        %v258 = vpop.permute.xlu0 %257
        %vm259 = vcmp.lt.s32.totalorder %v187, 113
        %v260 = vsel %vm259, %v252, %v256
        %v261 = vsel %vm259, %v254, %v258
        %v262 = vsel %vm259, %v256, %v252
        %v263 = vsel %vm259, %v258, %v254
        %264 = vrot.lane.b32.xlu0 %v217, 1
        %v265 = vpop.permute.xlu0 %264
        %266 = vrot.lane.b32.xlu0 %v219, 1
        %v267 = vpop.permute.xlu0 %266
        %268 = vrot.lane.b32.xlu0 %v218, 1
        %v269 = vpop.permute.xlu0 %268
        %270 = vrot.lane.b32.xlu0 %v220, 1
        %v271 = vpop.permute.xlu0 %270
        %vm272 = vcmp.lt.s32.totalorder %v187, 1
        %v273 = vsel %vm272, %v265, %v269
        %v274 = vsel %vm272, %v267, %v271
        %v275 = vsel %vm272, %v269, %v265
        %v276 = vsel %vm272, %v271, %v267
        %v277 = vsel %vm213, %v260, %v275
        %v278 = vsel %vm214, %v262, %v273
        %v279 = vsel %vm213, %v261, %v276
        %v280 = vsel %vm214, %v263, %v274
        %v281 = vld [vmem:[%s2] sm:$0xff]
        %v282 = vld [vmem:[%s2 + $0x8] sm:$0xff]
        %v283 = vld [vmem:[%s2 + $0x10] sm:$0xff]
        %v284 = vld [vmem:[%s2 + $0x18] sm:$0xff]
        %285 = vrot.lane.b32.xlu0 %v277, 16
        %v286 = vpop.permute.xlu0 %285
        %287 = vrot.lane.b32.xlu0 %v279, 16
        %v288 = vpop.permute.xlu0 %287
        %289 = vrot.lane.b32.xlu0 %v278, 16
        %v290 = vpop.permute.xlu0 %289
        %291 = vrot.lane.b32.xlu0 %v280, 16
        %v292 = vpop.permute.xlu0 %291
        %vm293 = vcmp.lt.s32.totalorder %v187, 16
        %v294 = vsel %vm293, %v286, %v290
        %v295 = vsel %vm293, %v288, %v292
        %v296 = vsel %vm293, %v290, %v286
        %v297 = vsel %vm293, %v292, %v288
        %v298 = vld [vmem:[#allocation2] sm:$0xff]
        %v299 = vld [vmem:[#allocation2 + $0x8] sm:$0xff]
        %vm300 = vcmask 130048
        %v302 = vsel %vm300, %v298, 0
        %v305 = vsel %vm300, %v299, 0
        %307 = vmatprep.subr.mxu0 %v294
        %308 = vmatpush1.msra.mxu0 %v296
        %309 = vmatprep.subr.mxu0 %v295
        %310 = vmatpush1.msra.mxu0 %v297
        %311 = vmatprep.subr.mxu0 0.0
        %312 = vmatpush1.msra.mxu0 0.0
        %313 = vmatprep.subr.mxu0 0.0
        %314 = vmatpush1.msra.mxu0 0.0
        %315 = vmatprep.subr.mxu0 0.0
        %316 = vmatpush1.msra.mxu0 0.0
        %317 = vmatprep.subr.mxu0 0.0
        %318 = vmatpush1.msra.mxu0 0.0
        %319 = vmatprep.subr.mxu0 0.0
        %320 = vmatpush1.msra.mxu0 0.0
        %321 = vmatprep.subr.mxu0 0.0
        %322 = vmatpush1.msra.mxu0 0.0
        %323 = vmatprep.subr.mxu0 0.0
        %324 = vmatpush1.msra.mxu0 0.0
        %325 = vmatprep.subr.mxu0 0.0
        %326 = vmatpush1.msra.mxu0 0.0
        %327 = vmatprep.subr.mxu0 0.0
        %328 = vmatpush1.msra.mxu0 0.0
        %329 = vmatprep.subr.mxu0 0.0
        %330 = vmatpush1.msra.mxu0 0.0
        %331 = vmatprep.subr.mxu0 0.0
        %332 = vmatpush1.msra.mxu0 0.0
        %333 = vmatprep.subr.mxu0 0.0
        %334 = vmatpush1.msra.mxu0 0.0
        %335 = vmatprep.subr.mxu0 0.0
        %336 = vmatpush1.msra.mxu0 0.0
        %337 = vmatprep.subr.mxu0 0.0
        %338 = vmatpush1.msra.mxu0 0.0
        %339 = vmatprep.subr.mxu0 0.0
        %340 = vmatpush1.msra.mxu0 0.0
        %341 = vmatprep.subr.mxu0 0.0
        %342 = vmatpush1.msra.mxu0 0.0
        %343 = vmatprep.subr.mxu0 0.0
        %344 = vmatpush1.msra.mxu0 0.0
        %345 = vmatprep.subr.mxu0 0.0
        %346 = vmatpush1.msra.mxu0 0.0
        %347 = vmatprep.subr.mxu0 0.0
        %348 = vmatpush1.msra.mxu0 0.0
        %349 = vmatprep.subr.mxu0 0.0
        %350 = vmatpush1.msra.mxu0 0.0
        %351 = vmatprep.subr.mxu0 0.0
        %352 = vmatpush1.msra.mxu0 0.0
        %353 = vmatprep.subr.mxu0 0.0
        %354 = vmatpush1.msra.mxu0 0.0
        %355 = vmatprep.subr.mxu0 0.0
        %356 = vmatpush1.msra.mxu0 0.0
        %357 = vmatprep.subr.mxu0 0.0
        %358 = vmatpush1.msra.mxu0 0.0
        %359 = vmatprep.subr.mxu0 0.0
        %360 = vmatpush1.msra.mxu0 0.0
        %361 = vmatprep.subr.mxu0 0.0
        %362 = vmatpush1.msra.mxu0 0.0
        %363 = vmatprep.subr.mxu0 0.0
        %364 = vmatpush1.msra.mxu0 0.0
        %365 = vmatprep.subr.mxu0 0.0
        %366 = vmatpush1.msra.mxu0 0.0
        %367 = vmatprep.subr.mxu0 0.0
        %368 = vmatpush1.msra.mxu0 0.0
        %369 = vmatprep.subr.mxu0 0.0
        %370 = vmatpush1.msra.mxu0 0.0
        %371 = vmatprep.mubr.f32.mxu0 0.0
        %372 = vmatmul.mubr.f32.gmra.mrb[0].mxu0 %v302
        %v373 = vpop.f32.mrb[0].mxu0
        %v374 = vadd.f32 0.0, %v373
        %v375 = vpop.f32.mrb[0].mxu0
        %v376 = vadd.f32 0.0, %v375
        %377 = vmatprep.mubr.f32.mxu0 0.0
        %378 = vmatmul.mubr.f32.gmra.mrb[0].mxu0 %v305
        %v379 = vpop.f32.mrb[0].mxu0
        %v380 = vadd.f32 0.0, %v379
        %v381 = vpop.f32.mrb[0].mxu0
        %v382 = vadd.f32 0.0, %v381
        %383 = vdwg.mxu0
        %v384 = vadd.f32 %v281, %v374
        %v385 = vadd.f32 %v282, %v376
        %v386 = vadd.f32 %v283, %v380
        %v387 = vadd.f32 %v284, %v382
        %388 = vrot.lane.b32.xlu0 %v217, 16
        %v389 = vpop.permute.xlu0 %388
        %390 = vrot.lane.b32.xlu0 %v219, 16
        %v391 = vpop.permute.xlu0 %390
        %392 = vrot.lane.b32.xlu0 %v218, 16
        %v393 = vpop.permute.xlu0 %392
        %394 = vrot.lane.b32.xlu0 %v220, 16
        %v395 = vpop.permute.xlu0 %394
        %v396 = vsel %vm293, %v389, %v393
        %v397 = vsel %vm293, %v391, %v395
        %v398 = vsel %vm293, %v393, %v389
        %v399 = vsel %vm293, %v395, %v391
        %s400 = scalar_lea.vmem [#allocation2], 16
        %v401 = vld [vmem:[%s400] sm:$0xff]
        %v402 = vld [vmem:[%s400 + $0x8] sm:$0xff]
        %v404 = vsel %vm300, %v401, 0
        %v407 = vsel %vm300, %v402, 0
        %409 = vmatprep.subr.mxu0 %v396
        %410 = vmatpush1.msra.mxu0 %v398
        %411 = vmatprep.subr.mxu0 %v397
        %412 = vmatpush1.msra.mxu0 %v399
        %413 = vmatprep.subr.mxu0 0.0
        %414 = vmatpush1.msra.mxu0 0.0
        %415 = vmatprep.subr.mxu0 0.0
        %416 = vmatpush1.msra.mxu0 0.0
        %417 = vmatprep.subr.mxu0 0.0
        %418 = vmatpush1.msra.mxu0 0.0
        %419 = vmatprep.subr.mxu0 0.0
        %420 = vmatpush1.msra.mxu0 0.0
        %421 = vmatprep.subr.mxu0 0.0
        %422 = vmatpush1.msra.mxu0 0.0
        %423 = vmatprep.subr.mxu0 0.0
        %424 = vmatpush1.msra.mxu0 0.0
        %425 = vmatprep.subr.mxu0 0.0
        %426 = vmatpush1.msra.mxu0 0.0
        %427 = vmatprep.subr.mxu0 0.0
        %428 = vmatpush1.msra.mxu0 0.0
        %429 = vmatprep.subr.mxu0 0.0
        %430 = vmatpush1.msra.mxu0 0.0
        %431 = vmatprep.subr.mxu0 0.0
        %432 = vmatpush1.msra.mxu0 0.0
        %433 = vmatprep.subr.mxu0 0.0
        %434 = vmatpush1.msra.mxu0 0.0
        %435 = vmatprep.subr.mxu0 0.0
        %436 = vmatpush1.msra.mxu0 0.0
        %437 = vmatprep.subr.mxu0 0.0
        %438 = vmatpush1.msra.mxu0 0.0
        %439 = vmatprep.subr.mxu0 0.0
        %440 = vmatpush1.msra.mxu0 0.0
        %441 = vmatprep.subr.mxu0 0.0
        %442 = vmatpush1.msra.mxu0 0.0
        %443 = vmatprep.subr.mxu0 0.0
        %444 = vmatpush1.msra.mxu0 0.0
        %445 = vmatprep.subr.mxu0 0.0
        %446 = vmatpush1.msra.mxu0 0.0
        %447 = vmatprep.subr.mxu0 0.0
        %448 = vmatpush1.msra.mxu0 0.0
        %449 = vmatprep.subr.mxu0 0.0
        %450 = vmatpush1.msra.mxu0 0.0
        %451 = vmatprep.subr.mxu0 0.0
        %452 = vmatpush1.msra.mxu0 0.0
        %453 = vmatprep.subr.mxu0 0.0
        %454 = vmatpush1.msra.mxu0 0.0
        %455 = vmatprep.subr.mxu0 0.0
        %456 = vmatpush1.msra.mxu0 0.0
        %457 = vmatprep.subr.mxu0 0.0
        %458 = vmatpush1.msra.mxu0 0.0
        %459 = vmatprep.subr.mxu0 0.0
        %460 = vmatpush1.msra.mxu0 0.0
        %461 = vmatprep.subr.mxu0 0.0
        %462 = vmatpush1.msra.mxu0 0.0
        %463 = vmatprep.subr.mxu0 0.0
        %464 = vmatpush1.msra.mxu0 0.0
        %465 = vmatprep.subr.mxu0 0.0
        %466 = vmatpush1.msra.mxu0 0.0
        %467 = vmatprep.subr.mxu0 0.0
        %468 = vmatpush1.msra.mxu0 0.0
        %469 = vmatprep.subr.mxu0 0.0
        %470 = vmatpush1.msra.mxu0 0.0
        %471 = vmatprep.subr.mxu0 0.0
        %472 = vmatpush1.msra.mxu0 0.0
        %473 = vmatprep.mubr.f32.mxu0 0.0
        %474 = vmatmul.mubr.f32.gmra.mrb[0].mxu0 %v404
        %v475 = vpop.f32.mrb[0].mxu0
        %v476 = vadd.f32 0.0, %v475
        %v477 = vpop.f32.mrb[0].mxu0
        %v478 = vadd.f32 0.0, %v477
        %479 = vmatprep.mubr.f32.mxu0 0.0
        %480 = vmatmul.mubr.f32.gmra.mrb[0].mxu0 %v407
        %v481 = vpop.f32.mrb[0].mxu0
        %v482 = vadd.f32 0.0, %v481
        %v483 = vpop.f32.mrb[0].mxu0
        %v484 = vadd.f32 0.0, %v483
        %485 = vdwg.mxu0
        %v486 = vadd.f32 %v384, %v476
        %v487 = vadd.f32 %v385, %v478
        %v488 = vadd.f32 %v386, %v482
        %v489 = vadd.f32 %v387, %v484
        %490 = vrot.lane.b32.xlu0 %v247, 16
        %v491 = vpop.permute.xlu0 %490
        %492 = vrot.lane.b32.xlu0 %v249, 16
        %v493 = vpop.permute.xlu0 %492
        %494 = vrot.lane.b32.xlu0 %v248, 16
        %v495 = vpop.permute.xlu0 %494
        %496 = vrot.lane.b32.xlu0 %v250, 16
        %v497 = vpop.permute.xlu0 %496
        %v498 = vsel %vm293, %v491, %v495
        %v499 = vsel %vm293, %v493, %v497
        %v500 = vsel %vm293, %v495, %v491
        %v501 = vsel %vm293, %v497, %v493
        %s502 = scalar_lea.vmem [#allocation2], 32
        %v503 = vld [vmem:[%s502] sm:$0xff]
        %v504 = vld [vmem:[%s502 + $0x8] sm:$0xff]
        %v506 = vsel %vm300, %v503, 0
        %v509 = vsel %vm300, %v504, 0
        %511 = vmatprep.subr.mxu0 %v498
        %512 = vmatpush1.msra.mxu0 %v500
        %513 = vmatprep.subr.mxu0 %v499
        %514 = vmatpush1.msra.mxu0 %v501
        %515 = vmatprep.subr.mxu0 0.0
        %516 = vmatpush1.msra.mxu0 0.0
        %517 = vmatprep.subr.mxu0 0.0
        %518 = vmatpush1.msra.mxu0 0.0
        %519 = vmatprep.subr.mxu0 0.0
        %520 = vmatpush1.msra.mxu0 0.0
        %521 = vmatprep.subr.mxu0 0.0
        %522 = vmatpush1.msra.mxu0 0.0
        %523 = vmatprep.subr.mxu0 0.0
        %524 = vmatpush1.msra.mxu0 0.0
        %525 = vmatprep.subr.mxu0 0.0
        %526 = vmatpush1.msra.mxu0 0.0
        %527 = vmatprep.subr.mxu0 0.0
        %528 = vmatpush1.msra.mxu0 0.0
        %529 = vmatprep.subr.mxu0 0.0
        %530 = vmatpush1.msra.mxu0 0.0
        %531 = vmatprep.subr.mxu0 0.0
        %532 = vmatpush1.msra.mxu0 0.0
        %533 = vmatprep.subr.mxu0 0.0
        %534 = vmatpush1.msra.mxu0 0.0
        %535 = vmatprep.subr.mxu0 0.0
        %536 = vmatpush1.msra.mxu0 0.0
        %537 = vmatprep.subr.mxu0 0.0
        %538 = vmatpush1.msra.mxu0 0.0
        %539 = vmatprep.subr.mxu0 0.0
        %540 = vmatpush1.msra.mxu0 0.0
        %541 = vmatprep.subr.mxu0 0.0
        %542 = vmatpush1.msra.mxu0 0.0
        %543 = vmatprep.subr.mxu0 0.0
        %544 = vmatpush1.msra.mxu0 0.0
        %545 = vmatprep.subr.mxu0 0.0
        %546 = vmatpush1.msra.mxu0 0.0
        %547 = vmatprep.subr.mxu0 0.0
        %548 = vmatpush1.msra.mxu0 0.0
        %549 = vmatprep.subr.mxu0 0.0
        %550 = vmatpush1.msra.mxu0 0.0
        %551 = vmatprep.subr.mxu0 0.0
        %552 = vmatpush1.msra.mxu0 0.0
        %553 = vmatprep.subr.mxu0 0.0
        %554 = vmatpush1.msra.mxu0 0.0
        %555 = vmatprep.subr.mxu0 0.0
        %556 = vmatpush1.msra.mxu0 0.0
        %557 = vmatprep.subr.mxu0 0.0
        %558 = vmatpush1.msra.mxu0 0.0
        %559 = vmatprep.subr.mxu0 0.0
        %560 = vmatpush1.msra.mxu0 0.0
        %561 = vmatprep.subr.mxu0 0.0
        %562 = vmatpush1.msra.mxu0 0.0
        %563 = vmatprep.subr.mxu0 0.0
        %564 = vmatpush1.msra.mxu0 0.0
        %565 = vmatprep.subr.mxu0 0.0
        %566 = vmatpush1.msra.mxu0 0.0
        %567 = vmatprep.subr.mxu0 0.0
        %568 = vmatpush1.msra.mxu0 0.0
        %569 = vmatprep.subr.mxu0 0.0
        %570 = vmatpush1.msra.mxu0 0.0
        %571 = vmatprep.subr.mxu0 0.0
        %572 = vmatpush1.msra.mxu0 0.0
        %573 = vmatprep.subr.mxu0 0.0
        %574 = vmatpush1.msra.mxu0 0.0
        %575 = vmatprep.mubr.f32.mxu0 0.0
        %576 = vmatmul.mubr.f32.gmra.mrb[0].mxu0 %v506
        %v577 = vpop.f32.mrb[0].mxu0
        %v578 = vadd.f32 0.0, %v577
        %v579 = vpop.f32.mrb[0].mxu0
        %v580 = vadd.f32 0.0, %v579
        %581 = vmatprep.mubr.f32.mxu0 0.0
        %582 = vmatmul.mubr.f32.gmra.mrb[0].mxu0 %v509
        %v583 = vpop.f32.mrb[0].mxu0
        %v584 = vadd.f32 0.0, %v583
        %v585 = vpop.f32.mrb[0].mxu0
        %v586 = vadd.f32 0.0, %v585
        %587 = vdwg.mxu0
        %v588 = vadd.f32 %v486, %v578
        %v589 = vadd.f32 %v487, %v580
        %v590 = vadd.f32 %v488, %v584
        %v591 = vadd.f32 %v489, %v586
        %s592 = scalar_lea.vmem [#allocation2], 48
        %v593 = vld [vmem:[%s592] sm:$0xff]
        %v594 = vld [vmem:[%s592 + $0x8] sm:$0xff]
        %v596 = vsel %vm300, %v593, 0
        %v599 = vsel %vm300, %v594, 0
        %601 = vmatprep.subr.mxu0 %v278
        %602 = vmatpush1.msra.mxu0 %v277
        %603 = vmatprep.subr.mxu0 %v280
        %604 = vmatpush1.msra.mxu0 %v279
        %605 = vmatprep.subr.mxu0 0.0
        %606 = vmatpush1.msra.mxu0 0.0
        %607 = vmatprep.subr.mxu0 0.0
        %608 = vmatpush1.msra.mxu0 0.0
        %609 = vmatprep.subr.mxu0 0.0
        %610 = vmatpush1.msra.mxu0 0.0
        %611 = vmatprep.subr.mxu0 0.0
        %612 = vmatpush1.msra.mxu0 0.0
        %613 = vmatprep.subr.mxu0 0.0
        %614 = vmatpush1.msra.mxu0 0.0
        %615 = vmatprep.subr.mxu0 0.0
        %616 = vmatpush1.msra.mxu0 0.0
        %617 = vmatprep.subr.mxu0 0.0
        %618 = vmatpush1.msra.mxu0 0.0
        %619 = vmatprep.subr.mxu0 0.0
        %620 = vmatpush1.msra.mxu0 0.0
        %621 = vmatprep.subr.mxu0 0.0
        %622 = vmatpush1.msra.mxu0 0.0
        %623 = vmatprep.subr.mxu0 0.0
        %624 = vmatpush1.msra.mxu0 0.0
        %625 = vmatprep.subr.mxu0 0.0
        %626 = vmatpush1.msra.mxu0 0.0
        %627 = vmatprep.subr.mxu0 0.0
        %628 = vmatpush1.msra.mxu0 0.0
        %629 = vmatprep.subr.mxu0 0.0
        %630 = vmatpush1.msra.mxu0 0.0
        %631 = vmatprep.subr.mxu0 0.0
        %632 = vmatpush1.msra.mxu0 0.0
        %633 = vmatprep.subr.mxu0 0.0
        %634 = vmatpush1.msra.mxu0 0.0
        %635 = vmatprep.subr.mxu0 0.0
        %636 = vmatpush1.msra.mxu0 0.0
        %637 = vmatprep.subr.mxu0 0.0
        %638 = vmatpush1.msra.mxu0 0.0
        %639 = vmatprep.subr.mxu0 0.0
        %640 = vmatpush1.msra.mxu0 0.0
        %641 = vmatprep.subr.mxu0 0.0
        %642 = vmatpush1.msra.mxu0 0.0
        %643 = vmatprep.subr.mxu0 0.0
        %644 = vmatpush1.msra.mxu0 0.0
        %645 = vmatprep.subr.mxu0 0.0
        %646 = vmatpush1.msra.mxu0 0.0
        %647 = vmatprep.subr.mxu0 0.0
        %648 = vmatpush1.msra.mxu0 0.0
        %649 = vmatprep.subr.mxu0 0.0
        %650 = vmatpush1.msra.mxu0 0.0
        %651 = vmatprep.subr.mxu0 0.0
        %652 = vmatpush1.msra.mxu0 0.0
        %653 = vmatprep.subr.mxu0 0.0
        %654 = vmatpush1.msra.mxu0 0.0
        %655 = vmatprep.subr.mxu0 0.0
        %656 = vmatpush1.msra.mxu0 0.0
        %657 = vmatprep.subr.mxu0 0.0
        %658 = vmatpush1.msra.mxu0 0.0
        %659 = vmatprep.subr.mxu0 0.0
        %660 = vmatpush1.msra.mxu0 0.0
        %661 = vmatprep.subr.mxu0 0.0
        %662 = vmatpush1.msra.mxu0 0.0
        %663 = vmatprep.subr.mxu0 0.0
        %664 = vmatpush1.msra.mxu0 0.0
        %665 = vmatprep.mubr.f32.mxu0 0.0
        %666 = vmatmul.mubr.f32.gmra.mrb[0].mxu0 %v596
        %v667 = vpop.f32.mrb[0].mxu0
        %v668 = vadd.f32 0.0, %v667
        %v669 = vpop.f32.mrb[0].mxu0
        %v670 = vadd.f32 0.0, %v669
        %671 = vmatprep.mubr.f32.mxu0 0.0
        %672 = vmatmul.mubr.f32.gmra.mrb[0].mxu0 %v599
        %v673 = vpop.f32.mrb[0].mxu0
        %v674 = vadd.f32 0.0, %v673
        %v675 = vpop.f32.mrb[0].mxu0
        %v676 = vadd.f32 0.0, %v675
        %677 = vdwg.mxu0
        %v678 = vadd.f32 %v588, %v668
        %v679 = vadd.f32 %v589, %v670
        %v680 = vadd.f32 %v590, %v674
        %v681 = vadd.f32 %v591, %v676
        %s682 = scalar_lea.vmem [#allocation2], 64
        %v683 = vld [vmem:[%s682] sm:$0xff]
        %v684 = vld [vmem:[%s682 + $0x8] sm:$0xff]
        %v686 = vsel %vm300, %v683, 0
        %v689 = vsel %vm300, %v684, 0
        %691 = vmatprep.subr.mxu0 %v218
        %692 = vmatpush1.msra.mxu0 %v217
        %693 = vmatprep.subr.mxu0 %v220
        %694 = vmatpush1.msra.mxu0 %v219
        %695 = vmatprep.subr.mxu0 0.0
        %696 = vmatpush1.msra.mxu0 0.0
        %697 = vmatprep.subr.mxu0 0.0
        %698 = vmatpush1.msra.mxu0 0.0
        %699 = vmatprep.subr.mxu0 0.0
        %700 = vmatpush1.msra.mxu0 0.0
        %701 = vmatprep.subr.mxu0 0.0
        %702 = vmatpush1.msra.mxu0 0.0
        %703 = vmatprep.subr.mxu0 0.0
        %704 = vmatpush1.msra.mxu0 0.0
        %705 = vmatprep.subr.mxu0 0.0
        %706 = vmatpush1.msra.mxu0 0.0
        %707 = vmatprep.subr.mxu0 0.0
        %708 = vmatpush1.msra.mxu0 0.0
        %709 = vmatprep.subr.mxu0 0.0
        %710 = vmatpush1.msra.mxu0 0.0
        %711 = vmatprep.subr.mxu0 0.0
        %712 = vmatpush1.msra.mxu0 0.0
        %713 = vmatprep.subr.mxu0 0.0
        %714 = vmatpush1.msra.mxu0 0.0
        %715 = vmatprep.subr.mxu0 0.0
        %716 = vmatpush1.msra.mxu0 0.0
        %717 = vmatprep.subr.mxu0 0.0
        %718 = vmatpush1.msra.mxu0 0.0
        %719 = vmatprep.subr.mxu0 0.0
        %720 = vmatpush1.msra.mxu0 0.0
        %721 = vmatprep.subr.mxu0 0.0
        %722 = vmatpush1.msra.mxu0 0.0
        %723 = vmatprep.subr.mxu0 0.0
        %724 = vmatpush1.msra.mxu0 0.0
        %725 = vmatprep.subr.mxu0 0.0
        %726 = vmatpush1.msra.mxu0 0.0
        %727 = vmatprep.subr.mxu0 0.0
        %728 = vmatpush1.msra.mxu0 0.0
        %729 = vmatprep.subr.mxu0 0.0
        %730 = vmatpush1.msra.mxu0 0.0
        %731 = vmatprep.subr.mxu0 0.0
        %732 = vmatpush1.msra.mxu0 0.0
        %733 = vmatprep.subr.mxu0 0.0
        %734 = vmatpush1.msra.mxu0 0.0
        %735 = vmatprep.subr.mxu0 0.0
        %736 = vmatpush1.msra.mxu0 0.0
        %737 = vmatprep.subr.mxu0 0.0
        %738 = vmatpush1.msra.mxu0 0.0
        %739 = vmatprep.subr.mxu0 0.0
        %740 = vmatpush1.msra.mxu0 0.0
        %741 = vmatprep.subr.mxu0 0.0
        %742 = vmatpush1.msra.mxu0 0.0
        %743 = vmatprep.subr.mxu0 0.0
        %744 = vmatpush1.msra.mxu0 0.0
        %745 = vmatprep.subr.mxu0 0.0
        %746 = vmatpush1.msra.mxu0 0.0
        %747 = vmatprep.subr.mxu0 0.0
        %748 = vmatpush1.msra.mxu0 0.0
        %749 = vmatprep.subr.mxu0 0.0
        %750 = vmatpush1.msra.mxu0 0.0
        %751 = vmatprep.subr.mxu0 0.0
        %752 = vmatpush1.msra.mxu0 0.0
        %753 = vmatprep.subr.mxu0 0.0
        %754 = vmatpush1.msra.mxu0 0.0
        %755 = vmatprep.mubr.f32.mxu0 0.0
        %756 = vmatmul.mubr.f32.gmra.mrb[0].mxu0 %v686
        %v757 = vpop.f32.mrb[0].mxu0
        %v758 = vadd.f32 0.0, %v757
        %v759 = vpop.f32.mrb[0].mxu0
        %v760 = vadd.f32 0.0, %v759
        %761 = vmatprep.mubr.f32.mxu0 0.0
        %762 = vmatmul.mubr.f32.gmra.mrb[0].mxu0 %v689
        %v763 = vpop.f32.mrb[0].mxu0
        %v764 = vadd.f32 0.0, %v763
        %v765 = vpop.f32.mrb[0].mxu0
        %v766 = vadd.f32 0.0, %v765
        %767 = vdwg.mxu0
        %v768 = vadd.f32 %v678, %v758
        %v769 = vadd.f32 %v679, %v760
        %v770 = vadd.f32 %v680, %v764
        %v771 = vadd.f32 %v681, %v766
        %s772 = scalar_lea.vmem [#allocation2], 80
        %v773 = vld [vmem:[%s772] sm:$0xff]
        %v774 = vld [vmem:[%s772 + $0x8] sm:$0xff]
        %v776 = vsel %vm300, %v773, 0
        %v779 = vsel %vm300, %v774, 0
        %781 = vmatprep.subr.mxu0 %v248
        %782 = vmatpush1.msra.mxu0 %v247
        %783 = vmatprep.subr.mxu0 %v250
        %784 = vmatpush1.msra.mxu0 %v249
        %785 = vmatprep.subr.mxu0 0.0
        %786 = vmatpush1.msra.mxu0 0.0
        %787 = vmatprep.subr.mxu0 0.0
        %788 = vmatpush1.msra.mxu0 0.0
        %789 = vmatprep.subr.mxu0 0.0
        %790 = vmatpush1.msra.mxu0 0.0
        %791 = vmatprep.subr.mxu0 0.0
        %792 = vmatpush1.msra.mxu0 0.0
        %793 = vmatprep.subr.mxu0 0.0
        %794 = vmatpush1.msra.mxu0 0.0
        %795 = vmatprep.subr.mxu0 0.0
        %796 = vmatpush1.msra.mxu0 0.0
        %797 = vmatprep.subr.mxu0 0.0
        %798 = vmatpush1.msra.mxu0 0.0
        %799 = vmatprep.subr.mxu0 0.0
        %800 = vmatpush1.msra.mxu0 0.0
        %801 = vmatprep.subr.mxu0 0.0
        %802 = vmatpush1.msra.mxu0 0.0
        %803 = vmatprep.subr.mxu0 0.0
        %804 = vmatpush1.msra.mxu0 0.0
        %805 = vmatprep.subr.mxu0 0.0
        %806 = vmatpush1.msra.mxu0 0.0
        %807 = vmatprep.subr.mxu0 0.0
        %808 = vmatpush1.msra.mxu0 0.0
        %809 = vmatprep.subr.mxu0 0.0
        %810 = vmatpush1.msra.mxu0 0.0
        %811 = vmatprep.subr.mxu0 0.0
        %812 = vmatpush1.msra.mxu0 0.0
        %813 = vmatprep.subr.mxu0 0.0
        %814 = vmatpush1.msra.mxu0 0.0
        %815 = vmatprep.subr.mxu0 0.0
        %816 = vmatpush1.msra.mxu0 0.0
        %817 = vmatprep.subr.mxu0 0.0
        %818 = vmatpush1.msra.mxu0 0.0
        %819 = vmatprep.subr.mxu0 0.0
        %820 = vmatpush1.msra.mxu0 0.0
        %821 = vmatprep.subr.mxu0 0.0
        %822 = vmatpush1.msra.mxu0 0.0
        %823 = vmatprep.subr.mxu0 0.0
        %824 = vmatpush1.msra.mxu0 0.0
        %825 = vmatprep.subr.mxu0 0.0
        %826 = vmatpush1.msra.mxu0 0.0
        %827 = vmatprep.subr.mxu0 0.0
        %828 = vmatpush1.msra.mxu0 0.0
        %829 = vmatprep.subr.mxu0 0.0
        %830 = vmatpush1.msra.mxu0 0.0
        %831 = vmatprep.subr.mxu0 0.0
        %832 = vmatpush1.msra.mxu0 0.0
        %833 = vmatprep.subr.mxu0 0.0
        %834 = vmatpush1.msra.mxu0 0.0
        %835 = vmatprep.subr.mxu0 0.0
        %836 = vmatpush1.msra.mxu0 0.0
        %837 = vmatprep.subr.mxu0 0.0
        %838 = vmatpush1.msra.mxu0 0.0
        %839 = vmatprep.subr.mxu0 0.0
        %840 = vmatpush1.msra.mxu0 0.0
        %841 = vmatprep.subr.mxu0 0.0
        %842 = vmatpush1.msra.mxu0 0.0
        %843 = vmatprep.subr.mxu0 0.0
        %844 = vmatpush1.msra.mxu0 0.0
        %845 = vmatprep.mubr.f32.mxu0 0.0
        %846 = vmatmul.mubr.f32.gmra.mrb[0].mxu0 %v776
        %v847 = vpop.f32.mrb[0].mxu0
        %v848 = vadd.f32 0.0, %v847
        %v849 = vpop.f32.mrb[0].mxu0
        %v850 = vadd.f32 0.0, %v849
        %851 = vmatprep.mubr.f32.mxu0 0.0
        %852 = vmatmul.mubr.f32.gmra.mrb[0].mxu0 %v779
        %v853 = vpop.f32.mrb[0].mxu0
        %v854 = vadd.f32 0.0, %v853
        %v855 = vpop.f32.mrb[0].mxu0
        %v856 = vadd.f32 0.0, %v855
        %857 = vdwg.mxu0
        %v858 = vadd.f32 %v768, %v848
        %v859 = vadd.f32 %v769, %v850
        %v860 = vadd.f32 %v770, %v854
        %v861 = vadd.f32 %v771, %v856
        %862 = vrot.lane.b32.xlu0 %v277, 112
        %v863 = vpop.permute.xlu0 %862
        %864 = vrot.lane.b32.xlu0 %v279, 112
        %v865 = vpop.permute.xlu0 %864
        %866 = vrot.lane.b32.xlu0 %v278, 112
        %v867 = vpop.permute.xlu0 %866
        %868 = vrot.lane.b32.xlu0 %v280, 112
        %v869 = vpop.permute.xlu0 %868
        %vm870 = vcmp.lt.s32.totalorder %v187, 112
        %v871 = vsel %vm870, %v863, %v867
        %v872 = vsel %vm870, %v865, %v869
        %v873 = vsel %vm870, %v867, %v863
        %v874 = vsel %vm870, %v869, %v865
        %s875 = scalar_lea.vmem [#allocation2], 96
        %v876 = vld [vmem:[%s875] sm:$0xff]
        %v877 = vld [vmem:[%s875 + $0x8] sm:$0xff]
        %v879 = vsel %vm300, %v876, 0
        %v882 = vsel %vm300, %v877, 0
        %884 = vmatprep.subr.mxu0 %v873
        %885 = vmatpush1.msra.mxu0 %v871
        %886 = vmatprep.subr.mxu0 %v874
        %887 = vmatpush1.msra.mxu0 %v872
        %888 = vmatprep.subr.mxu0 0.0
        %889 = vmatpush1.msra.mxu0 0.0
        %890 = vmatprep.subr.mxu0 0.0
        %891 = vmatpush1.msra.mxu0 0.0
        %892 = vmatprep.subr.mxu0 0.0
        %893 = vmatpush1.msra.mxu0 0.0
        %894 = vmatprep.subr.mxu0 0.0
        %895 = vmatpush1.msra.mxu0 0.0
        %896 = vmatprep.subr.mxu0 0.0
        %897 = vmatpush1.msra.mxu0 0.0
        %898 = vmatprep.subr.mxu0 0.0
        %899 = vmatpush1.msra.mxu0 0.0
        %900 = vmatprep.subr.mxu0 0.0
        %901 = vmatpush1.msra.mxu0 0.0
        %902 = vmatprep.subr.mxu0 0.0
        %903 = vmatpush1.msra.mxu0 0.0
        %904 = vmatprep.subr.mxu0 0.0
        %905 = vmatpush1.msra.mxu0 0.0
        %906 = vmatprep.subr.mxu0 0.0
        %907 = vmatpush1.msra.mxu0 0.0
        %908 = vmatprep.subr.mxu0 0.0
        %909 = vmatpush1.msra.mxu0 0.0
        %910 = vmatprep.subr.mxu0 0.0
        %911 = vmatpush1.msra.mxu0 0.0
        %912 = vmatprep.subr.mxu0 0.0
        %913 = vmatpush1.msra.mxu0 0.0
        %914 = vmatprep.subr.mxu0 0.0
        %915 = vmatpush1.msra.mxu0 0.0
        %916 = vmatprep.subr.mxu0 0.0
        %917 = vmatpush1.msra.mxu0 0.0
        %918 = vmatprep.subr.mxu0 0.0
        %919 = vmatpush1.msra.mxu0 0.0
        %920 = vmatprep.subr.mxu0 0.0
        %921 = vmatpush1.msra.mxu0 0.0
        %922 = vmatprep.subr.mxu0 0.0
        %923 = vmatpush1.msra.mxu0 0.0
        %924 = vmatprep.subr.mxu0 0.0
        %925 = vmatpush1.msra.mxu0 0.0
        %926 = vmatprep.subr.mxu0 0.0
        %927 = vmatpush1.msra.mxu0 0.0
        %928 = vmatprep.subr.mxu0 0.0
        %929 = vmatpush1.msra.mxu0 0.0
        %930 = vmatprep.subr.mxu0 0.0
        %931 = vmatpush1.msra.mxu0 0.0
        %932 = vmatprep.subr.mxu0 0.0
        %933 = vmatpush1.msra.mxu0 0.0
        %934 = vmatprep.subr.mxu0 0.0
        %935 = vmatpush1.msra.mxu0 0.0
        %936 = vmatprep.subr.mxu0 0.0
        %937 = vmatpush1.msra.mxu0 0.0
        %938 = vmatprep.subr.mxu0 0.0
        %939 = vmatpush1.msra.mxu0 0.0
        %940 = vmatprep.subr.mxu0 0.0
        %941 = vmatpush1.msra.mxu0 0.0
        %942 = vmatprep.subr.mxu0 0.0
        %943 = vmatpush1.msra.mxu0 0.0
        %944 = vmatprep.subr.mxu0 0.0
        %945 = vmatpush1.msra.mxu0 0.0
        %946 = vmatprep.subr.mxu0 0.0
        %947 = vmatpush1.msra.mxu0 0.0
        %948 = vmatprep.mubr.f32.mxu0 0.0
        %949 = vmatmul.mubr.f32.gmra.mrb[0].mxu0 %v879
        %v950 = vpop.f32.mrb[0].mxu0
        %v951 = vadd.f32 0.0, %v950
        %v952 = vpop.f32.mrb[0].mxu0
        %v953 = vadd.f32 0.0, %v952
        %954 = vmatprep.mubr.f32.mxu0 0.0
        %955 = vmatmul.mubr.f32.gmra.mrb[0].mxu0 %v882
        %v956 = vpop.f32.mrb[0].mxu0
        %v957 = vadd.f32 0.0, %v956
        %v958 = vpop.f32.mrb[0].mxu0
        %v959 = vadd.f32 0.0, %v958
        %960 = vdwg.mxu0
        %v961 = vadd.f32 %v858, %v951
        %v962 = vadd.f32 %v859, %v953
        %v963 = vadd.f32 %v860, %v957
        %v964 = vadd.f32 %v861, %v959
        %965 = vrot.lane.b32.xlu0 %v217, 112
        %v966 = vpop.permute.xlu0 %965
        %967 = vrot.lane.b32.xlu0 %v219, 112
        %v968 = vpop.permute.xlu0 %967
        %969 = vrot.lane.b32.xlu0 %v218, 112
        %v970 = vpop.permute.xlu0 %969
        %971 = vrot.lane.b32.xlu0 %v220, 112
        %v972 = vpop.permute.xlu0 %971
        %v973 = vsel %vm870, %v966, %v970
        %v974 = vsel %vm870, %v968, %v972
        %v975 = vsel %vm870, %v970, %v966
        %v976 = vsel %vm870, %v972, %v968
        %s977 = scalar_lea.vmem [#allocation2], 112
        %v978 = vld [vmem:[%s977] sm:$0xff]
        %v979 = vld [vmem:[%s977 + $0x8] sm:$0xff]
        %v981 = vsel %vm300, %v978, 0
        %v984 = vsel %vm300, %v979, 0
        %986 = vmatprep.subr.mxu0 %v975
        %987 = vmatpush1.msra.mxu0 %v973
        %988 = vmatprep.subr.mxu0 %v976
        %989 = vmatpush1.msra.mxu0 %v974
        %990 = vmatprep.subr.mxu0 0.0
        %991 = vmatpush1.msra.mxu0 0.0
        %992 = vmatprep.subr.mxu0 0.0
        %993 = vmatpush1.msra.mxu0 0.0
        %994 = vmatprep.subr.mxu0 0.0
        %995 = vmatpush1.msra.mxu0 0.0
        %996 = vmatprep.subr.mxu0 0.0
        %997 = vmatpush1.msra.mxu0 0.0
        %998 = vmatprep.subr.mxu0 0.0
        %999 = vmatpush1.msra.mxu0 0.0
        %1000 = vmatprep.subr.mxu0 0.0
        %1001 = vmatpush1.msra.mxu0 0.0
        %1002 = vmatprep.subr.mxu0 0.0
        %1003 = vmatpush1.msra.mxu0 0.0
        %1004 = vmatprep.subr.mxu0 0.0
        %1005 = vmatpush1.msra.mxu0 0.0
        %1006 = vmatprep.subr.mxu0 0.0
        %1007 = vmatpush1.msra.mxu0 0.0
        %1008 = vmatprep.subr.mxu0 0.0
        %1009 = vmatpush1.msra.mxu0 0.0
        %1010 = vmatprep.subr.mxu0 0.0
        %1011 = vmatpush1.msra.mxu0 0.0
        %1012 = vmatprep.subr.mxu0 0.0
        %1013 = vmatpush1.msra.mxu0 0.0
        %1014 = vmatprep.subr.mxu0 0.0
        %1015 = vmatpush1.msra.mxu0 0.0
        %1016 = vmatprep.subr.mxu0 0.0
        %1017 = vmatpush1.msra.mxu0 0.0
        %1018 = vmatprep.subr.mxu0 0.0
        %1019 = vmatpush1.msra.mxu0 0.0
        %1020 = vmatprep.subr.mxu0 0.0
        %1021 = vmatpush1.msra.mxu0 0.0
        %1022 = vmatprep.subr.mxu0 0.0
        %1023 = vmatpush1.msra.mxu0 0.0
        %1024 = vmatprep.subr.mxu0 0.0
        %1025 = vmatpush1.msra.mxu0 0.0
        %1026 = vmatprep.subr.mxu0 0.0
        %1027 = vmatpush1.msra.mxu0 0.0
        %1028 = vmatprep.subr.mxu0 0.0
        %1029 = vmatpush1.msra.mxu0 0.0
        %1030 = vmatprep.subr.mxu0 0.0
        %1031 = vmatpush1.msra.mxu0 0.0
        %1032 = vmatprep.subr.mxu0 0.0
        %1033 = vmatpush1.msra.mxu0 0.0
        %1034 = vmatprep.subr.mxu0 0.0
        %1035 = vmatpush1.msra.mxu0 0.0
        %1036 = vmatprep.subr.mxu0 0.0
        %1037 = vmatpush1.msra.mxu0 0.0
        %1038 = vmatprep.subr.mxu0 0.0
        %1039 = vmatpush1.msra.mxu0 0.0
        %1040 = vmatprep.subr.mxu0 0.0
        %1041 = vmatpush1.msra.mxu0 0.0
        %1042 = vmatprep.subr.mxu0 0.0
        %1043 = vmatpush1.msra.mxu0 0.0
        %1044 = vmatprep.subr.mxu0 0.0
        %1045 = vmatpush1.msra.mxu0 0.0
        %1046 = vmatprep.subr.mxu0 0.0
        %1047 = vmatpush1.msra.mxu0 0.0
        %1048 = vmatprep.subr.mxu0 0.0
        %1049 = vmatpush1.msra.mxu0 0.0
        %1050 = vmatprep.mubr.f32.mxu0 0.0
        %1051 = vmatmul.mubr.f32.gmra.mrb[0].mxu0 %v981
        %v1052 = vpop.f32.mrb[0].mxu0
        %v1053 = vadd.f32 0.0, %v1052
        %v1054 = vpop.f32.mrb[0].mxu0
        %v1055 = vadd.f32 0.0, %v1054
        %1056 = vmatprep.mubr.f32.mxu0 0.0
        %1057 = vmatmul.mubr.f32.gmra.mrb[0].mxu0 %v984
        %v1058 = vpop.f32.mrb[0].mxu0
        %v1059 = vadd.f32 0.0, %v1058
        %v1060 = vpop.f32.mrb[0].mxu0
        %v1061 = vadd.f32 0.0, %v1060
        %1062 = vdwg.mxu0
        %v1063 = vadd.f32 %v961, %v1053
        %v1064 = vadd.f32 %v962, %v1055
        %v1065 = vadd.f32 %v963, %v1059
        %v1066 = vadd.f32 %v964, %v1061
        %1067 = vrot.lane.b32.xlu0 %v247, 112
        %v1068 = vpop.permute.xlu0 %1067
        %1069 = vrot.lane.b32.xlu0 %v249, 112
        %v1070 = vpop.permute.xlu0 %1069
        %1071 = vrot.lane.b32.xlu0 %v248, 112
        %v1072 = vpop.permute.xlu0 %1071
        %1073 = vrot.lane.b32.xlu0 %v250, 112
        %v1074 = vpop.permute.xlu0 %1073
        %v1075 = vsel %vm870, %v1068, %v1072
        %v1076 = vsel %vm870, %v1070, %v1074
        %v1077 = vsel %vm870, %v1072, %v1068
        %v1078 = vsel %vm870, %v1074, %v1070
        %s1079 = scalar_lea.vmem [#allocation2], 128
        %v1080 = vld [vmem:[%s1079] sm:$0xff]
        %v1081 = vld [vmem:[%s1079 + $0x8] sm:$0xff]
        %v1083 = vsel %vm300, %v1080, 0
        %v1086 = vsel %vm300, %v1081, 0
        %1088 = vmatprep.subr.mxu0 %v1077
        %1089 = vmatpush1.msra.mxu0 %v1075
        %1090 = vmatprep.subr.mxu0 %v1078
        %1091 = vmatpush1.msra.mxu0 %v1076
        %1092 = vmatprep.subr.mxu0 0.0
        %1093 = vmatpush1.msra.mxu0 0.0
        %1094 = vmatprep.subr.mxu0 0.0
        %1095 = vmatpush1.msra.mxu0 0.0
        %1096 = vmatprep.subr.mxu0 0.0
        %1097 = vmatpush1.msra.mxu0 0.0
        %1098 = vmatprep.subr.mxu0 0.0
        %1099 = vmatpush1.msra.mxu0 0.0
        %1100 = vmatprep.subr.mxu0 0.0
        %1101 = vmatpush1.msra.mxu0 0.0
        %1102 = vmatprep.subr.mxu0 0.0
        %1103 = vmatpush1.msra.mxu0 0.0
        %1104 = vmatprep.subr.mxu0 0.0
        %1105 = vmatpush1.msra.mxu0 0.0
        %1106 = vmatprep.subr.mxu0 0.0
        %1107 = vmatpush1.msra.mxu0 0.0
        %1108 = vmatprep.subr.mxu0 0.0
        %1109 = vmatpush1.msra.mxu0 0.0
        %1110 = vmatprep.subr.mxu0 0.0
        %1111 = vmatpush1.msra.mxu0 0.0
        %1112 = vmatprep.subr.mxu0 0.0
        %1113 = vmatpush1.msra.mxu0 0.0
        %1114 = vmatprep.subr.mxu0 0.0
        %1115 = vmatpush1.msra.mxu0 0.0
        %1116 = vmatprep.subr.mxu0 0.0
        %1117 = vmatpush1.msra.mxu0 0.0
        %1118 = vmatprep.subr.mxu0 0.0
        %1119 = vmatpush1.msra.mxu0 0.0
        %1120 = vmatprep.subr.mxu0 0.0
        %1121 = vmatpush1.msra.mxu0 0.0
        %1122 = vmatprep.subr.mxu0 0.0
        %1123 = vmatpush1.msra.mxu0 0.0
        %1124 = vmatprep.subr.mxu0 0.0
        %1125 = vmatpush1.msra.mxu0 0.0
        %1126 = vmatprep.subr.mxu0 0.0
        %1127 = vmatpush1.msra.mxu0 0.0
        %1128 = vmatprep.subr.mxu0 0.0
        %1129 = vmatpush1.msra.mxu0 0.0
        %1130 = vmatprep.subr.mxu0 0.0
        %1131 = vmatpush1.msra.mxu0 0.0
        %1132 = vmatprep.subr.mxu0 0.0
        %1133 = vmatpush1.msra.mxu0 0.0
        %1134 = vmatprep.subr.mxu0 0.0
        %1135 = vmatpush1.msra.mxu0 0.0
        %1136 = vmatprep.subr.mxu0 0.0
        %1137 = vmatpush1.msra.mxu0 0.0
        %1138 = vmatprep.subr.mxu0 0.0
        %1139 = vmatpush1.msra.mxu0 0.0
        %1140 = vmatprep.subr.mxu0 0.0
        %1141 = vmatpush1.msra.mxu0 0.0
        %1142 = vmatprep.subr.mxu0 0.0
        %1143 = vmatpush1.msra.mxu0 0.0
        %1144 = vmatprep.subr.mxu0 0.0
        %1145 = vmatpush1.msra.mxu0 0.0
        %1146 = vmatprep.subr.mxu0 0.0
        %1147 = vmatpush1.msra.mxu0 0.0
        %1148 = vmatprep.subr.mxu0 0.0
        %1149 = vmatpush1.msra.mxu0 0.0
        %1150 = vmatprep.subr.mxu0 0.0
        %1151 = vmatpush1.msra.mxu0 0.0
        %1152 = vmatprep.mubr.f32.mxu0 0.0
        %1153 = vmatmul.mubr.f32.gmra.mrb[0].mxu0 %v1083
        %v1154 = vpop.f32.mrb[0].mxu0
        %v1155 = vadd.f32 0.0, %v1154
        %v1156 = vpop.f32.mrb[0].mxu0
        %v1157 = vadd.f32 0.0, %v1156
        %1158 = vmatprep.mubr.f32.mxu0 0.0
        %1159 = vmatmul.mubr.f32.gmra.mrb[0].mxu0 %v1086
        %v1160 = vpop.f32.mrb[0].mxu0
        %v1161 = vadd.f32 0.0, %v1160
        %v1162 = vpop.f32.mrb[0].mxu0
        %v1163 = vadd.f32 0.0, %v1162
        %1164 = vdwg.mxu0
        %v1165 = vadd.f32 %v1063, %v1155
        %v1166 = vadd.f32 %v1064, %v1157
        %v1167 = vadd.f32 %v1065, %v1161
        %v1168 = vadd.f32 %v1066, %v1163
        %v1169 = vmul.f32 %v1165, 0.5
        %v1170 = vmul.f32 %v1166, 0.5
        %v1171 = vmul.f32 %v1167, 0.5
        %v1172 = vmul.f32 %v1168, 0.5
        %v1173 = vmul.f32 %v1165, 0.70710677
        %v1174 = vmul.f32 %v1166, 0.70710677
        %v1175 = vmul.f32 %v1167, 0.70710677
        %v1176 = vmul.f32 %v1168, 0.70710677
        %vm1177 = vcmp.lt.f32.partialorder %v1173, 0.0
        %vm1178 = vcmp.lt.f32.partialorder %v1174, 0.0
        %vm1179 = vcmp.lt.f32.partialorder %v1175, 0.0
        %vm1180 = vcmp.lt.f32.partialorder %v1176, 0.0
        %v1181 = vsel %vm1177, -1.0, 1.0
        %v1182 = vsel %vm1178, -1.0, 1.0
        %v1183 = vsel %vm1179, -1.0, 1.0
        %v1184 = vsel %vm1180, -1.0, 1.0
        %v1185 = vand.u32 2147483647, %v1173
        %v1186 = vand.u32 2147483647, %v1174
        %v1187 = vand.u32 2147483647, %v1175
        %v1188 = vand.u32 2147483647, %v1176
        %v1189 = vmul.f32 %v1185, 0.3275911
        %v1190 = vmul.f32 %v1186, 0.3275911
        %v1191 = vmul.f32 %v1187, 0.3275911
        %v1192 = vmul.f32 %v1188, 0.3275911
        %v1193 = vadd.f32 %v1189, 1.0
        %v1194 = vadd.f32 %v1190, 1.0
        %v1195 = vadd.f32 %v1191, 1.0
        %v1196 = vadd.f32 %v1192, 1.0
        %v1197 = vrcp.pop %v1193
        %v1198 = vrcp.pop %v1194
        %v1199 = vrcp.pop %v1195
        %v1200 = vrcp.pop %v1196
        %v1201 = vmul.f32 %v1197, 1.0614054
        %v1202 = vmul.f32 %v1198, 1.0614054
        %v1203 = vmul.f32 %v1199, 1.0614054
        %v1204 = vmul.f32 %v1200, 1.0614054
        %v1205 = vadd.f32 %v1201, -1.4531521
        %v1206 = vadd.f32 %v1202, -1.4531521
        %v1207 = vadd.f32 %v1203, -1.4531521
        %v1208 = vadd.f32 %v1204, -1.4531521
        %v1209 = vmul.f32 %v1205, %v1197
        %v1210 = vmul.f32 %v1206, %v1198
        %v1211 = vmul.f32 %v1207, %v1199
        %v1212 = vmul.f32 %v1208, %v1200
        %v1213 = vadd.f32 %v1209, 1.4214138
        %v1214 = vadd.f32 %v1210, 1.4214138
        %v1215 = vadd.f32 %v1211, 1.4214138
        %v1216 = vadd.f32 %v1212, 1.4214138
        %v1217 = vmul.f32 %v1213, %v1197
        %v1218 = vmul.f32 %v1214, %v1198
        %v1219 = vmul.f32 %v1215, %v1199
        %v1220 = vmul.f32 %v1216, %v1200
        %v1221 = vadd.f32 %v1217, -0.28449672
        %v1222 = vadd.f32 %v1218, -0.28449672
        %v1223 = vadd.f32 %v1219, -0.28449672
        %v1224 = vadd.f32 %v1220, -0.28449672
        %v1225 = vmul.f32 %v1221, %v1197
        %v1226 = vmul.f32 %v1222, %v1198
        %v1227 = vmul.f32 %v1223, %v1199
        %v1228 = vmul.f32 %v1224, %v1200
        %v1229 = vadd.f32 %v1225, 0.2548296
        %v1230 = vadd.f32 %v1226, 0.2548296
        %v1231 = vadd.f32 %v1227, 0.2548296
        %v1232 = vadd.f32 %v1228, 0.2548296
        %v1233 = vmul.f32 %v1229, %v1197
        %v1234 = vmul.f32 %v1230, %v1198
        %v1235 = vmul.f32 %v1231, %v1199
        %v1236 = vmul.f32 %v1232, %v1200
        %v1237 = vsub.f32 0.0, %v1185
        %v1238 = vsub.f32 0.0, %v1186
        %v1239 = vsub.f32 0.0, %v1187
        %v1240 = vsub.f32 0.0, %v1188
        %v1241 = vmul.f32 %v1237, %v1185
        %v1242 = vmul.f32 %v1238, %v1186
        %v1243 = vmul.f32 %v1239, %v1187
        %v1244 = vmul.f32 %v1240, %v1188
        %v1245 = vmul.f32 %v1241, 1.442695
        %v1246 = vpow.pop %v1245
        %v1247 = vmul.f32 %v1242, 1.442695
        %v1248 = vpow.pop %v1247
        %v1249 = vmul.f32 %v1243, 1.442695
        %v1250 = vpow.pop %v1249
        %v1251 = vmul.f32 %v1244, 1.442695
        %v1252 = vpow.pop %v1251
        %v1253 = vmul.f32 %v1233, %v1246
        %v1254 = vmul.f32 %v1234, %v1248
        %v1255 = vmul.f32 %v1235, %v1250
        %v1256 = vmul.f32 %v1236, %v1252
        %v1257 = vsub.f32 1.0, %v1253
        %v1258 = vsub.f32 1.0, %v1254
        %v1259 = vsub.f32 1.0, %v1255
        %v1260 = vsub.f32 1.0, %v1256
        %v1261 = vmul.f32 %v1181, %v1257
        %v1262 = vmul.f32 %v1182, %v1258
        %v1263 = vmul.f32 %v1183, %v1259
        %v1264 = vmul.f32 %v1184, %v1260
        %v1265 = vadd.f32 %v1261, 1.0
        %v1266 = vadd.f32 %v1262, 1.0
        %v1267 = vadd.f32 %v1263, 1.0
        %v1268 = vadd.f32 %v1264, 1.0
        %v1269 = vmul.f32 %v1169, %v1265
        %v1270 = vmul.f32 %v1170, %v1266
        %v1271 = vmul.f32 %v1171, %v1267
        %v1272 = vmul.f32 %v1172, %v1268
        %1273 = vrot.lane.b32.xlu0 %v1269, 15
        %v1274 = vpop.permute.xlu0 %1273
        %1275 = vrot.lane.b32.xlu0 %v1271, 15
        %v1276 = vpop.permute.xlu0 %1275
        %1277 = vrot.lane.b32.xlu0 %v1270, 15
        %v1278 = vpop.permute.xlu0 %1277
        %1279 = vrot.lane.b32.xlu0 %v1272, 15
        %v1280 = vpop.permute.xlu0 %1279
        %v1281 = vsel %vm229, %v1274, %v1278
        %v1282 = vsel %vm229, %v1276, %v1280
        %v1283 = vsel %vm229, %v1278, %v1274
        %v1284 = vsel %vm229, %v1280, %v1276
        %1285 = vrot.lane.b32.xlu0 %v1269, 127
        %v1286 = vpop.permute.xlu0 %1285
        %1287 = vrot.lane.b32.xlu0 %v1271, 127
        %v1288 = vpop.permute.xlu0 %1287
        %1289 = vrot.lane.b32.xlu0 %v1270, 127
        %v1290 = vpop.permute.xlu0 %1289
        %1291 = vrot.lane.b32.xlu0 %v1272, 127
        %v1292 = vpop.permute.xlu0 %1291
        %v1293 = vsel %vm242, %v1286, %v1290
        %v1294 = vsel %vm242, %v1288, %v1292
        %v1295 = vsel %vm242, %v1290, %v1286
        %v1296 = vsel %vm242, %v1292, %v1288
        %v1297 = vsel %vm215, %v1283, %v1293
        %v1298 = vsel %vm216, %v1281, %v1295
        %v1299 = vsel %vm215, %v1284, %v1294
        %v1300 = vsel %vm216, %v1282, %v1296
        %1301 = vrot.lane.b32.xlu0 %v1269, 113
        %v1302 = vpop.permute.xlu0 %1301
        %1303 = vrot.lane.b32.xlu0 %v1271, 113
        %v1304 = vpop.permute.xlu0 %1303
        %1305 = vrot.lane.b32.xlu0 %v1270, 113
        %v1306 = vpop.permute.xlu0 %1305
        %1307 = vrot.lane.b32.xlu0 %v1272, 113
        %v1308 = vpop.permute.xlu0 %1307
        %v1309 = vsel %vm259, %v1302, %v1306
        %v1310 = vsel %vm259, %v1304, %v1308
        %v1311 = vsel %vm259, %v1306, %v1302
        %v1312 = vsel %vm259, %v1308, %v1304
        %1313 = vrot.lane.b32.xlu0 %v1269, 1
        %v1314 = vpop.permute.xlu0 %1313
        %1315 = vrot.lane.b32.xlu0 %v1271, 1
        %v1316 = vpop.permute.xlu0 %1315
        %1317 = vrot.lane.b32.xlu0 %v1270, 1
        %v1318 = vpop.permute.xlu0 %1317
        %1319 = vrot.lane.b32.xlu0 %v1272, 1
        %v1320 = vpop.permute.xlu0 %1319
        %v1321 = vsel %vm272, %v1314, %v1318
        %v1322 = vsel %vm272, %v1316, %v1320
        %v1323 = vsel %vm272, %v1318, %v1314
        %v1324 = vsel %vm272, %v1320, %v1316
        %v1325 = vsel %vm213, %v1309, %v1323
        %v1326 = vsel %vm214, %v1311, %v1321
        %v1327 = vsel %vm213, %v1310, %v1324
        %v1328 = vsel %vm214, %v1312, %v1322
        %s1329 = scalar_lea.vmem %s2, 32
        %v1330 = vld [vmem:[%s1329] sm:$0xff]
        %v1331 = vld [vmem:[%s1329 + $0x8] sm:$0xff]
        %v1332 = vld [vmem:[%s1329 + $0x10] sm:$0xff]
        %v1333 = vld [vmem:[%s1329 + $0x18] sm:$0xff]
        %1334 = vrot.lane.b32.xlu0 %v1325, 16
        %v1335 = vpop.permute.xlu0 %1334
        %1336 = vrot.lane.b32.xlu0 %v1327, 16
        %v1337 = vpop.permute.xlu0 %1336
        %1338 = vrot.lane.b32.xlu0 %v1326, 16
        %v1339 = vpop.permute.xlu0 %1338
        %1340 = vrot.lane.b32.xlu0 %v1328, 16
        %v1341 = vpop.permute.xlu0 %1340
        %v1342 = vsel %vm293, %v1335, %v1339
        %v1343 = vsel %vm293, %v1337, %v1341
        %v1344 = vsel %vm293, %v1339, %v1335
        %v1345 = vsel %vm293, %v1341, %v1337
        %s1346 = scalar_lea.vmem [#allocation2], 144
        %v1347 = vld [vmem:[%s1346] sm:$0xff]
        %v1348 = vld [vmem:[%s1346 + $0x8] sm:$0xff]
        %v1350 = vsel %vm300, %v1347, 0
        %v1353 = vsel %vm300, %v1348, 0
        %1355 = vmatprep.subr.mxu0 %v1342
        %1356 = vmatpush1.msra.mxu0 %v1344
        %1357 = vmatprep.subr.mxu0 %v1343
        %1358 = vmatpush1.msra.mxu0 %v1345
        %1359 = vmatprep.subr.mxu0 0.0
        %1360 = vmatpush1.msra.mxu0 0.0
        %1361 = vmatprep.subr.mxu0 0.0
        %1362 = vmatpush1.msra.mxu0 0.0
        %1363 = vmatprep.subr.mxu0 0.0
        %1364 = vmatpush1.msra.mxu0 0.0
        %1365 = vmatprep.subr.mxu0 0.0
        %1366 = vmatpush1.msra.mxu0 0.0
        %1367 = vmatprep.subr.mxu0 0.0
        %1368 = vmatpush1.msra.mxu0 0.0
        %1369 = vmatprep.subr.mxu0 0.0
        %1370 = vmatpush1.msra.mxu0 0.0
        %1371 = vmatprep.subr.mxu0 0.0
        %1372 = vmatpush1.msra.mxu0 0.0
        %1373 = vmatprep.subr.mxu0 0.0
        %1374 = vmatpush1.msra.mxu0 0.0
        %1375 = vmatprep.subr.mxu0 0.0
        %1376 = vmatpush1.msra.mxu0 0.0
        %1377 = vmatprep.subr.mxu0 0.0
        %1378 = vmatpush1.msra.mxu0 0.0
        %1379 = vmatprep.subr.mxu0 0.0
        %1380 = vmatpush1.msra.mxu0 0.0
        %1381 = vmatprep.subr.mxu0 0.0
        %1382 = vmatpush1.msra.mxu0 0.0
        %1383 = vmatprep.subr.mxu0 0.0
        %1384 = vmatpush1.msra.mxu0 0.0
        %1385 = vmatprep.subr.mxu0 0.0
        %1386 = vmatpush1.msra.mxu0 0.0
        %1387 = vmatprep.subr.mxu0 0.0
        %1388 = vmatpush1.msra.mxu0 0.0
        %1389 = vmatprep.subr.mxu0 0.0
        %1390 = vmatpush1.msra.mxu0 0.0
        %1391 = vmatprep.subr.mxu0 0.0
        %1392 = vmatpush1.msra.mxu0 0.0
        %1393 = vmatprep.subr.mxu0 0.0
        %1394 = vmatpush1.msra.mxu0 0.0
        %1395 = vmatprep.subr.mxu0 0.0
        %1396 = vmatpush1.msra.mxu0 0.0
        %1397 = vmatprep.subr.mxu0 0.0
        %1398 = vmatpush1.msra.mxu0 0.0
        %1399 = vmatprep.subr.mxu0 0.0
        %1400 = vmatpush1.msra.mxu0 0.0
        %1401 = vmatprep.subr.mxu0 0.0
        %1402 = vmatpush1.msra.mxu0 0.0
        %1403 = vmatprep.subr.mxu0 0.0
        %1404 = vmatpush1.msra.mxu0 0.0
        %1405 = vmatprep.subr.mxu0 0.0
        %1406 = vmatpush1.msra.mxu0 0.0
        %1407 = vmatprep.subr.mxu0 0.0
        %1408 = vmatpush1.msra.mxu0 0.0
        %1409 = vmatprep.subr.mxu0 0.0
        %1410 = vmatpush1.msra.mxu0 0.0
        %1411 = vmatprep.subr.mxu0 0.0
        %1412 = vmatpush1.msra.mxu0 0.0
        %1413 = vmatprep.subr.mxu0 0.0
        %1414 = vmatpush1.msra.mxu0 0.0
        %1415 = vmatprep.subr.mxu0 0.0
        %1416 = vmatpush1.msra.mxu0 0.0
        %1417 = vmatprep.subr.mxu0 0.0
        %1418 = vmatpush1.msra.mxu0 0.0
        %1419 = vmatprep.mubr.f32.mxu0 0.0
        %1420 = vmatmul.mubr.f32.gmra.mrb[0].mxu0 %v1350
        %v1421 = vpop.f32.mrb[0].mxu0
        %v1422 = vadd.f32 0.0, %v1421
        %v1423 = vpop.f32.mrb[0].mxu0
        %v1424 = vadd.f32 0.0, %v1423
        %1425 = vmatprep.mubr.f32.mxu0 0.0
        %1426 = vmatmul.mubr.f32.gmra.mrb[0].mxu0 %v1353
        %v1427 = vpop.f32.mrb[0].mxu0
        %v1428 = vadd.f32 0.0, %v1427
        %v1429 = vpop.f32.mrb[0].mxu0
        %v1430 = vadd.f32 0.0, %v1429
        %1431 = vdwg.mxu0
        %v1432 = vadd.f32 %v1330, %v1422
        %v1433 = vadd.f32 %v1331, %v1424
        %v1434 = vadd.f32 %v1332, %v1428
        %v1435 = vadd.f32 %v1333, %v1430
        %1436 = vrot.lane.b32.xlu0 %v1269, 16
        %v1437 = vpop.permute.xlu0 %1436
        %1438 = vrot.lane.b32.xlu0 %v1271, 16
        %v1439 = vpop.permute.xlu0 %1438
        %1440 = vrot.lane.b32.xlu0 %v1270, 16
        %v1441 = vpop.permute.xlu0 %1440
        %1442 = vrot.lane.b32.xlu0 %v1272, 16
        %v1443 = vpop.permute.xlu0 %1442
        %v1444 = vsel %vm293, %v1437, %v1441
        %v1445 = vsel %vm293, %v1439, %v1443
        %v1446 = vsel %vm293, %v1441, %v1437
        %v1447 = vsel %vm293, %v1443, %v1439
        %s1448 = scalar_lea.vmem [#allocation2], 160
        %v1449 = vld [vmem:[%s1448] sm:$0xff]
        %v1450 = vld [vmem:[%s1448 + $0x8] sm:$0xff]
        %v1452 = vsel %vm300, %v1449, 0
        %v1455 = vsel %vm300, %v1450, 0
        %1457 = vmatprep.subr.mxu0 %v1444
        %1458 = vmatpush1.msra.mxu0 %v1446
        %1459 = vmatprep.subr.mxu0 %v1445
        %1460 = vmatpush1.msra.mxu0 %v1447
        %1461 = vmatprep.subr.mxu0 0.0
        %1462 = vmatpush1.msra.mxu0 0.0
        %1463 = vmatprep.subr.mxu0 0.0
        %1464 = vmatpush1.msra.mxu0 0.0
        %1465 = vmatprep.subr.mxu0 0.0
        %1466 = vmatpush1.msra.mxu0 0.0
        %1467 = vmatprep.subr.mxu0 0.0
        %1468 = vmatpush1.msra.mxu0 0.0
        %1469 = vmatprep.subr.mxu0 0.0
        %1470 = vmatpush1.msra.mxu0 0.0
        %1471 = vmatprep.subr.mxu0 0.0
        %1472 = vmatpush1.msra.mxu0 0.0
        %1473 = vmatprep.subr.mxu0 0.0
        %1474 = vmatpush1.msra.mxu0 0.0
        %1475 = vmatprep.subr.mxu0 0.0
        %1476 = vmatpush1.msra.mxu0 0.0
        %1477 = vmatprep.subr.mxu0 0.0
        %1478 = vmatpush1.msra.mxu0 0.0
        %1479 = vmatprep.subr.mxu0 0.0
        %1480 = vmatpush1.msra.mxu0 0.0
        %1481 = vmatprep.subr.mxu0 0.0
        %1482 = vmatpush1.msra.mxu0 0.0
        %1483 = vmatprep.subr.mxu0 0.0
        %1484 = vmatpush1.msra.mxu0 0.0
        %1485 = vmatprep.subr.mxu0 0.0
        %1486 = vmatpush1.msra.mxu0 0.0
        %1487 = vmatprep.subr.mxu0 0.0
        %1488 = vmatpush1.msra.mxu0 0.0
        %1489 = vmatprep.subr.mxu0 0.0
        %1490 = vmatpush1.msra.mxu0 0.0
        %1491 = vmatprep.subr.mxu0 0.0
        %1492 = vmatpush1.msra.mxu0 0.0
        %1493 = vmatprep.subr.mxu0 0.0
        %1494 = vmatpush1.msra.mxu0 0.0
        %1495 = vmatprep.subr.mxu0 0.0
        %1496 = vmatpush1.msra.mxu0 0.0
        %1497 = vmatprep.subr.mxu0 0.0
        %1498 = vmatpush1.msra.mxu0 0.0
        %1499 = vmatprep.subr.mxu0 0.0
        %1500 = vmatpush1.msra.mxu0 0.0
        %1501 = vmatprep.subr.mxu0 0.0
        %1502 = vmatpush1.msra.mxu0 0.0
        %1503 = vmatprep.subr.mxu0 0.0
        %1504 = vmatpush1.msra.mxu0 0.0
        %1505 = vmatprep.subr.mxu0 0.0
        %1506 = vmatpush1.msra.mxu0 0.0
        %1507 = vmatprep.subr.mxu0 0.0
        %1508 = vmatpush1.msra.mxu0 0.0
        %1509 = vmatprep.subr.mxu0 0.0
        %1510 = vmatpush1.msra.mxu0 0.0
        %1511 = vmatprep.subr.mxu0 0.0
        %1512 = vmatpush1.msra.mxu0 0.0
        %1513 = vmatprep.subr.mxu0 0.0
        %1514 = vmatpush1.msra.mxu0 0.0
        %1515 = vmatprep.subr.mxu0 0.0
        %1516 = vmatpush1.msra.mxu0 0.0
        %1517 = vmatprep.subr.mxu0 0.0
        %1518 = vmatpush1.msra.mxu0 0.0
        %1519 = vmatprep.subr.mxu0 0.0
        %1520 = vmatpush1.msra.mxu0 0.0
        %1521 = vmatprep.mubr.f32.mxu0 0.0
        %1522 = vmatmul.mubr.f32.gmra.mrb[0].mxu0 %v1452
        %v1523 = vpop.f32.mrb[0].mxu0
        %v1524 = vadd.f32 0.0, %v1523
        %v1525 = vpop.f32.mrb[0].mxu0
        %v1526 = vadd.f32 0.0, %v1525
        %1527 = vmatprep.mubr.f32.mxu0 0.0
        %1528 = vmatmul.mubr.f32.gmra.mrb[0].mxu0 %v1455
        %v1529 = vpop.f32.mrb[0].mxu0
        %v1530 = vadd.f32 0.0, %v1529
        %v1531 = vpop.f32.mrb[0].mxu0
        %v1532 = vadd.f32 0.0, %v1531
        %1533 = vdwg.mxu0
        %v1534 = vadd.f32 %v1432, %v1524
        %v1535 = vadd.f32 %v1433, %v1526
        %v1536 = vadd.f32 %v1434, %v1530
        %v1537 = vadd.f32 %v1435, %v1532
        %1538 = vrot.lane.b32.xlu0 %v1297, 16
        %v1539 = vpop.permute.xlu0 %1538
        %1540 = vrot.lane.b32.xlu0 %v1299, 16
        %v1541 = vpop.permute.xlu0 %1540
        %1542 = vrot.lane.b32.xlu0 %v1298, 16
        %v1543 = vpop.permute.xlu0 %1542
        %1544 = vrot.lane.b32.xlu0 %v1300, 16
        %v1545 = vpop.permute.xlu0 %1544
        %v1546 = vsel %vm293, %v1539, %v1543
        %v1547 = vsel %vm293, %v1541, %v1545
        %v1548 = vsel %vm293, %v1543, %v1539
        %v1549 = vsel %vm293, %v1545, %v1541
        %s1550 = scalar_lea.vmem [#allocation2], 176
        %v1551 = vld [vmem:[%s1550] sm:$0xff]
        %v1552 = vld [vmem:[%s1550 + $0x8] sm:$0xff]
        %v1554 = vsel %vm300, %v1551, 0
        %v1557 = vsel %vm300, %v1552, 0
        %1559 = vmatprep.subr.mxu0 %v1546
        %1560 = vmatpush1.msra.mxu0 %v1548
        %1561 = vmatprep.subr.mxu0 %v1547
        %1562 = vmatpush1.msra.mxu0 %v1549
        %1563 = vmatprep.subr.mxu0 0.0
        %1564 = vmatpush1.msra.mxu0 0.0
        %1565 = vmatprep.subr.mxu0 0.0
        %1566 = vmatpush1.msra.mxu0 0.0
        %1567 = vmatprep.subr.mxu0 0.0
        %1568 = vmatpush1.msra.mxu0 0.0
        %1569 = vmatprep.subr.mxu0 0.0
        %1570 = vmatpush1.msra.mxu0 0.0
        %1571 = vmatprep.subr.mxu0 0.0
        %1572 = vmatpush1.msra.mxu0 0.0
        %1573 = vmatprep.subr.mxu0 0.0
        %1574 = vmatpush1.msra.mxu0 0.0
        %1575 = vmatprep.subr.mxu0 0.0
        %1576 = vmatpush1.msra.mxu0 0.0
        %1577 = vmatprep.subr.mxu0 0.0
        %1578 = vmatpush1.msra.mxu0 0.0
        %1579 = vmatprep.subr.mxu0 0.0
        %1580 = vmatpush1.msra.mxu0 0.0
        %1581 = vmatprep.subr.mxu0 0.0
        %1582 = vmatpush1.msra.mxu0 0.0
        %1583 = vmatprep.subr.mxu0 0.0
        %1584 = vmatpush1.msra.mxu0 0.0
        %1585 = vmatprep.subr.mxu0 0.0
        %1586 = vmatpush1.msra.mxu0 0.0
        %1587 = vmatprep.subr.mxu0 0.0
        %1588 = vmatpush1.msra.mxu0 0.0
        %1589 = vmatprep.subr.mxu0 0.0
        %1590 = vmatpush1.msra.mxu0 0.0
        %1591 = vmatprep.subr.mxu0 0.0
        %1592 = vmatpush1.msra.mxu0 0.0
        %1593 = vmatprep.subr.mxu0 0.0
        %1594 = vmatpush1.msra.mxu0 0.0
        %1595 = vmatprep.subr.mxu0 0.0
        %1596 = vmatpush1.msra.mxu0 0.0
        %1597 = vmatprep.subr.mxu0 0.0
        %1598 = vmatpush1.msra.mxu0 0.0
        %1599 = vmatprep.subr.mxu0 0.0
        %1600 = vmatpush1.msra.mxu0 0.0
        %1601 = vmatprep.subr.mxu0 0.0
        %1602 = vmatpush1.msra.mxu0 0.0
        %1603 = vmatprep.subr.mxu0 0.0
        %1604 = vmatpush1.msra.mxu0 0.0
        %1605 = vmatprep.subr.mxu0 0.0
        %1606 = vmatpush1.msra.mxu0 0.0
        %1607 = vmatprep.subr.mxu0 0.0
        %1608 = vmatpush1.msra.mxu0 0.0
        %1609 = vmatprep.subr.mxu0 0.0
        %1610 = vmatpush1.msra.mxu0 0.0
        %1611 = vmatprep.subr.mxu0 0.0
        %1612 = vmatpush1.msra.mxu0 0.0
        %1613 = vmatprep.subr.mxu0 0.0
        %1614 = vmatpush1.msra.mxu0 0.0
        %1615 = vmatprep.subr.mxu0 0.0
        %1616 = vmatpush1.msra.mxu0 0.0
        %1617 = vmatprep.subr.mxu0 0.0
        %1618 = vmatpush1.msra.mxu0 0.0
        %1619 = vmatprep.subr.mxu0 0.0
        %1620 = vmatpush1.msra.mxu0 0.0
        %1621 = vmatprep.subr.mxu0 0.0
        %1622 = vmatpush1.msra.mxu0 0.0
        %1623 = vmatprep.mubr.f32.mxu0 0.0
        %1624 = vmatmul.mubr.f32.gmra.mrb[0].mxu0 %v1554
        %v1625 = vpop.f32.mrb[0].mxu0
        %v1626 = vadd.f32 0.0, %v1625
        %v1627 = vpop.f32.mrb[0].mxu0
        %v1628 = vadd.f32 0.0, %v1627
        %1629 = vmatprep.mubr.f32.mxu0 0.0
        %1630 = vmatmul.mubr.f32.gmra.mrb[0].mxu0 %v1557
        %v1631 = vpop.f32.mrb[0].mxu0
        %v1632 = vadd.f32 0.0, %v1631
        %v1633 = vpop.f32.mrb[0].mxu0
        %v1634 = vadd.f32 0.0, %v1633
        %1635 = vdwg.mxu0
        %v1636 = vadd.f32 %v1534, %v1626
        %v1637 = vadd.f32 %v1535, %v1628
        %v1638 = vadd.f32 %v1536, %v1632
        %v1639 = vadd.f32 %v1537, %v1634
        %s1640 = scalar_lea.vmem [#allocation2], 192
        %v1641 = vld [vmem:[%s1640] sm:$0xff]
        %v1642 = vld [vmem:[%s1640 + $0x8] sm:$0xff]
        %v1644 = vsel %vm300, %v1641, 0
        %v1647 = vsel %vm300, %v1642, 0
        %1649 = vmatprep.subr.mxu0 %v1326
        %1650 = vmatpush1.msra.mxu0 %v1325
        %1651 = vmatprep.subr.mxu0 %v1328
        %1652 = vmatpush1.msra.mxu0 %v1327
        %1653 = vmatprep.subr.mxu0 0.0
        %1654 = vmatpush1.msra.mxu0 0.0
        %1655 = vmatprep.subr.mxu0 0.0
        %1656 = vmatpush1.msra.mxu0 0.0
        %1657 = vmatprep.subr.mxu0 0.0
        %1658 = vmatpush1.msra.mxu0 0.0
        %1659 = vmatprep.subr.mxu0 0.0
        %1660 = vmatpush1.msra.mxu0 0.0
        %1661 = vmatprep.subr.mxu0 0.0
        %1662 = vmatpush1.msra.mxu0 0.0
        %1663 = vmatprep.subr.mxu0 0.0
        %1664 = vmatpush1.msra.mxu0 0.0
        %1665 = vmatprep.subr.mxu0 0.0
        %1666 = vmatpush1.msra.mxu0 0.0
        %1667 = vmatprep.subr.mxu0 0.0
        %1668 = vmatpush1.msra.mxu0 0.0
        %1669 = vmatprep.subr.mxu0 0.0
        %1670 = vmatpush1.msra.mxu0 0.0
        %1671 = vmatprep.subr.mxu0 0.0
        %1672 = vmatpush1.msra.mxu0 0.0
        %1673 = vmatprep.subr.mxu0 0.0
        %1674 = vmatpush1.msra.mxu0 0.0
        %1675 = vmatprep.subr.mxu0 0.0
        %1676 = vmatpush1.msra.mxu0 0.0
        %1677 = vmatprep.subr.mxu0 0.0
        %1678 = vmatpush1.msra.mxu0 0.0
        %1679 = vmatprep.subr.mxu0 0.0
        %1680 = vmatpush1.msra.mxu0 0.0
        %1681 = vmatprep.subr.mxu0 0.0
        %1682 = vmatpush1.msra.mxu0 0.0
        %1683 = vmatprep.subr.mxu0 0.0
        %1684 = vmatpush1.msra.mxu0 0.0
        %1685 = vmatprep.subr.mxu0 0.0
        %1686 = vmatpush1.msra.mxu0 0.0
        %1687 = vmatprep.subr.mxu0 0.0
        %1688 = vmatpush1.msra.mxu0 0.0
        %1689 = vmatprep.subr.mxu0 0.0
        %1690 = vmatpush1.msra.mxu0 0.0
        %1691 = vmatprep.subr.mxu0 0.0
        %1692 = vmatpush1.msra.mxu0 0.0
        %1693 = vmatprep.subr.mxu0 0.0
        %1694 = vmatpush1.msra.mxu0 0.0
        %1695 = vmatprep.subr.mxu0 0.0
        %1696 = vmatpush1.msra.mxu0 0.0
        %1697 = vmatprep.subr.mxu0 0.0
        %1698 = vmatpush1.msra.mxu0 0.0
        %1699 = vmatprep.subr.mxu0 0.0
        %1700 = vmatpush1.msra.mxu0 0.0
        %1701 = vmatprep.subr.mxu0 0.0
        %1702 = vmatpush1.msra.mxu0 0.0
        %1703 = vmatprep.subr.mxu0 0.0
        %1704 = vmatpush1.msra.mxu0 0.0
        %1705 = vmatprep.subr.mxu0 0.0
        %1706 = vmatpush1.msra.mxu0 0.0
        %1707 = vmatprep.subr.mxu0 0.0
        %1708 = vmatpush1.msra.mxu0 0.0
        %1709 = vmatprep.subr.mxu0 0.0
        %1710 = vmatpush1.msra.mxu0 0.0
        %1711 = vmatprep.subr.mxu0 0.0
        %1712 = vmatpush1.msra.mxu0 0.0
        %1713 = vmatprep.mubr.f32.mxu0 0.0
        %1714 = vmatmul.mubr.f32.gmra.mrb[0].mxu0 %v1644
        %v1715 = vpop.f32.mrb[0].mxu0
        %v1716 = vadd.f32 0.0, %v1715
        %v1717 = vpop.f32.mrb[0].mxu0
        %v1718 = vadd.f32 0.0, %v1717
        %1719 = vmatprep.mubr.f32.mxu0 0.0
        %1720 = vmatmul.mubr.f32.gmra.mrb[0].mxu0 %v1647
        %v1721 = vpop.f32.mrb[0].mxu0
        %v1722 = vadd.f32 0.0, %v1721
        %v1723 = vpop.f32.mrb[0].mxu0
        %v1724 = vadd.f32 0.0, %v1723
        %1725 = vdwg.mxu0
        %v1726 = vadd.f32 %v1636, %v1716
        %v1727 = vadd.f32 %v1637, %v1718
        %v1728 = vadd.f32 %v1638, %v1722
        %v1729 = vadd.f32 %v1639, %v1724
        %s1730 = scalar_lea.vmem [#allocation2], 208
        %v1731 = vld [vmem:[%s1730] sm:$0xff]
        %v1732 = vld [vmem:[%s1730 + $0x8] sm:$0xff]
        %v1734 = vsel %vm300, %v1731, 0
        %v1737 = vsel %vm300, %v1732, 0
        %1739 = vmatprep.subr.mxu0 %v1270
        %1740 = vmatpush1.msra.mxu0 %v1269
        %1741 = vmatprep.subr.mxu0 %v1272
        %1742 = vmatpush1.msra.mxu0 %v1271
        %1743 = vmatprep.subr.mxu0 0.0
        %1744 = vmatpush1.msra.mxu0 0.0
        %1745 = vmatprep.subr.mxu0 0.0
        %1746 = vmatpush1.msra.mxu0 0.0
        %1747 = vmatprep.subr.mxu0 0.0
        %1748 = vmatpush1.msra.mxu0 0.0
        %1749 = vmatprep.subr.mxu0 0.0
        %1750 = vmatpush1.msra.mxu0 0.0
        %1751 = vmatprep.subr.mxu0 0.0
        %1752 = vmatpush1.msra.mxu0 0.0
        %1753 = vmatprep.subr.mxu0 0.0
        %1754 = vmatpush1.msra.mxu0 0.0
        %1755 = vmatprep.subr.mxu0 0.0
        %1756 = vmatpush1.msra.mxu0 0.0
        %1757 = vmatprep.subr.mxu0 0.0
        %1758 = vmatpush1.msra.mxu0 0.0
        %1759 = vmatprep.subr.mxu0 0.0
        %1760 = vmatpush1.msra.mxu0 0.0
        %1761 = vmatprep.subr.mxu0 0.0
        %1762 = vmatpush1.msra.mxu0 0.0
        %1763 = vmatprep.subr.mxu0 0.0
        %1764 = vmatpush1.msra.mxu0 0.0
        %1765 = vmatprep.subr.mxu0 0.0
        %1766 = vmatpush1.msra.mxu0 0.0
        %1767 = vmatprep.subr.mxu0 0.0
        %1768 = vmatpush1.msra.mxu0 0.0
        %1769 = vmatprep.subr.mxu0 0.0
        %1770 = vmatpush1.msra.mxu0 0.0
        %1771 = vmatprep.subr.mxu0 0.0
        %1772 = vmatpush1.msra.mxu0 0.0
        %1773 = vmatprep.subr.mxu0 0.0
        %1774 = vmatpush1.msra.mxu0 0.0
        %1775 = vmatprep.subr.mxu0 0.0
        %1776 = vmatpush1.msra.mxu0 0.0
        %1777 = vmatprep.subr.mxu0 0.0
        %1778 = vmatpush1.msra.mxu0 0.0
        %1779 = vmatprep.subr.mxu0 0.0
        %1780 = vmatpush1.msra.mxu0 0.0
        %1781 = vmatprep.subr.mxu0 0.0
        %1782 = vmatpush1.msra.mxu0 0.0
        %1783 = vmatprep.subr.mxu0 0.0
        %1784 = vmatpush1.msra.mxu0 0.0
        %1785 = vmatprep.subr.mxu0 0.0
        %1786 = vmatpush1.msra.mxu0 0.0
        %1787 = vmatprep.subr.mxu0 0.0
        %1788 = vmatpush1.msra.mxu0 0.0
        %1789 = vmatprep.subr.mxu0 0.0
        %1790 = vmatpush1.msra.mxu0 0.0
        %1791 = vmatprep.subr.mxu0 0.0
        %1792 = vmatpush1.msra.mxu0 0.0
        %1793 = vmatprep.subr.mxu0 0.0
        %1794 = vmatpush1.msra.mxu0 0.0
        %1795 = vmatprep.subr.mxu0 0.0
        %1796 = vmatpush1.msra.mxu0 0.0
        %1797 = vmatprep.subr.mxu0 0.0
        %1798 = vmatpush1.msra.mxu0 0.0
        %1799 = vmatprep.subr.mxu0 0.0
        %1800 = vmatpush1.msra.mxu0 0.0
        %1801 = vmatprep.subr.mxu0 0.0
        %1802 = vmatpush1.msra.mxu0 0.0
        %1803 = vmatprep.mubr.f32.mxu0 0.0
        %1804 = vmatmul.mubr.f32.gmra.mrb[0].mxu0 %v1734
        %v1805 = vpop.f32.mrb[0].mxu0
        %v1806 = vadd.f32 0.0, %v1805
        %v1807 = vpop.f32.mrb[0].mxu0
        %v1808 = vadd.f32 0.0, %v1807
        %1809 = vmatprep.mubr.f32.mxu0 0.0
        %1810 = vmatmul.mubr.f32.gmra.mrb[0].mxu0 %v1737
        %v1811 = vpop.f32.mrb[0].mxu0
        %v1812 = vadd.f32 0.0, %v1811
        %v1813 = vpop.f32.mrb[0].mxu0
        %v1814 = vadd.f32 0.0, %v1813
        %1815 = vdwg.mxu0
        %v1816 = vadd.f32 %v1726, %v1806
        %v1817 = vadd.f32 %v1727, %v1808
        %v1818 = vadd.f32 %v1728, %v1812
        %v1819 = vadd.f32 %v1729, %v1814
        %s1820 = scalar_lea.vmem [#allocation2], 224
        %v1821 = vld [vmem:[%s1820] sm:$0xff]
        %v1822 = vld [vmem:[%s1820 + $0x8] sm:$0xff]
        %v1824 = vsel %vm300, %v1821, 0
        %v1827 = vsel %vm300, %v1822, 0
        %1829 = vmatprep.subr.mxu0 %v1298
        %1830 = vmatpush1.msra.mxu0 %v1297
        %1831 = vmatprep.subr.mxu0 %v1300
        %1832 = vmatpush1.msra.mxu0 %v1299
        %1833 = vmatprep.subr.mxu0 0.0
        %1834 = vmatpush1.msra.mxu0 0.0
        %1835 = vmatprep.subr.mxu0 0.0
        %1836 = vmatpush1.msra.mxu0 0.0
        %1837 = vmatprep.subr.mxu0 0.0
        %1838 = vmatpush1.msra.mxu0 0.0
        %1839 = vmatprep.subr.mxu0 0.0
        %1840 = vmatpush1.msra.mxu0 0.0
        %1841 = vmatprep.subr.mxu0 0.0
        %1842 = vmatpush1.msra.mxu0 0.0
        %1843 = vmatprep.subr.mxu0 0.0
        %1844 = vmatpush1.msra.mxu0 0.0
        %1845 = vmatprep.subr.mxu0 0.0
        %1846 = vmatpush1.msra.mxu0 0.0
        %1847 = vmatprep.subr.mxu0 0.0
        %1848 = vmatpush1.msra.mxu0 0.0
        %1849 = vmatprep.subr.mxu0 0.0
        %1850 = vmatpush1.msra.mxu0 0.0
        %1851 = vmatprep.subr.mxu0 0.0
        %1852 = vmatpush1.msra.mxu0 0.0
        %1853 = vmatprep.subr.mxu0 0.0
        %1854 = vmatpush1.msra.mxu0 0.0
        %1855 = vmatprep.subr.mxu0 0.0
        %1856 = vmatpush1.msra.mxu0 0.0
        %1857 = vmatprep.subr.mxu0 0.0
        %1858 = vmatpush1.msra.mxu0 0.0
        %1859 = vmatprep.subr.mxu0 0.0
        %1860 = vmatpush1.msra.mxu0 0.0
        %1861 = vmatprep.subr.mxu0 0.0
        %1862 = vmatpush1.msra.mxu0 0.0
        %1863 = vmatprep.subr.mxu0 0.0
        %1864 = vmatpush1.msra.mxu0 0.0
        %1865 = vmatprep.subr.mxu0 0.0
        %1866 = vmatpush1.msra.mxu0 0.0
        %1867 = vmatprep.subr.mxu0 0.0
        %1868 = vmatpush1.msra.mxu0 0.0
        %1869 = vmatprep.subr.mxu0 0.0
        %1870 = vmatpush1.msra.mxu0 0.0
        %1871 = vmatprep.subr.mxu0 0.0
        %1872 = vmatpush1.msra.mxu0 0.0
        %1873 = vmatprep.subr.mxu0 0.0
        %1874 = vmatpush1.msra.mxu0 0.0
        %1875 = vmatprep.subr.mxu0 0.0
        %1876 = vmatpush1.msra.mxu0 0.0
        %1877 = vmatprep.subr.mxu0 0.0
        %1878 = vmatpush1.msra.mxu0 0.0
        %1879 = vmatprep.subr.mxu0 0.0
        %1880 = vmatpush1.msra.mxu0 0.0
        %1881 = vmatprep.subr.mxu0 0.0
        %1882 = vmatpush1.msra.mxu0 0.0
        %1883 = vmatprep.subr.mxu0 0.0
        %1884 = vmatpush1.msra.mxu0 0.0
        %1885 = vmatprep.subr.mxu0 0.0
        %1886 = vmatpush1.msra.mxu0 0.0
        %1887 = vmatprep.subr.mxu0 0.0
        %1888 = vmatpush1.msra.mxu0 0.0
        %1889 = vmatprep.subr.mxu0 0.0
        %1890 = vmatpush1.msra.mxu0 0.0
        %1891 = vmatprep.subr.mxu0 0.0
        %1892 = vmatpush1.msra.mxu0 0.0
        %1893 = vmatprep.mubr.f32.mxu0 0.0
        %1894 = vmatmul.mubr.f32.gmra.mrb[0].mxu0 %v1824
        %v1895 = vpop.f32.mrb[0].mxu0
        %v1896 = vadd.f32 0.0, %v1895
        %v1897 = vpop.f32.mrb[0].mxu0
        %v1898 = vadd.f32 0.0, %v1897
        %1899 = vmatprep.mubr.f32.mxu0 0.0
        %1900 = vmatmul.mubr.f32.gmra.mrb[0].mxu0 %v1827
        %v1901 = vpop.f32.mrb[0].mxu0
        %v1902 = vadd.f32 0.0, %v1901
        %v1903 = vpop.f32.mrb[0].mxu0
        %v1904 = vadd.f32 0.0, %v1903
        %1905 = vdwg.mxu0
        %v1906 = vadd.f32 %v1816, %v1896
        %v1907 = vadd.f32 %v1817, %v1898
        %v1908 = vadd.f32 %v1818, %v1902
        %v1909 = vadd.f32 %v1819, %v1904
        %1910 = vrot.lane.b32.xlu0 %v1325, 112
        %v1911 = vpop.permute.xlu0 %1910
        %1912 = vrot.lane.b32.xlu0 %v1327, 112
        %v1913 = vpop.permute.xlu0 %1912
        %1914 = vrot.lane.b32.xlu0 %v1326, 112
        %v1915 = vpop.permute.xlu0 %1914
        %1916 = vrot.lane.b32.xlu0 %v1328, 112
        %v1917 = vpop.permute.xlu0 %1916
        %v1918 = vsel %vm870, %v1911, %v1915
        %v1919 = vsel %vm870, %v1913, %v1917
        %v1920 = vsel %vm870, %v1915, %v1911
        %v1921 = vsel %vm870, %v1917, %v1913
        %s1922 = scalar_lea.vmem [#allocation2], 240
        %v1923 = vld [vmem:[%s1922] sm:$0xff]
        %v1924 = vld [vmem:[%s1922 + $0x8] sm:$0xff]
        %v1926 = vsel %vm300, %v1923, 0
        %v1929 = vsel %vm300, %v1924, 0
        %1931 = vmatprep.subr.mxu0 %v1920
        %1932 = vmatpush1.msra.mxu0 %v1918
        %1933 = vmatprep.subr.mxu0 %v1921
        %1934 = vmatpush1.msra.mxu0 %v1919
        %1935 = vmatprep.subr.mxu0 0.0
        %1936 = vmatpush1.msra.mxu0 0.0
        %1937 = vmatprep.subr.mxu0 0.0
        %1938 = vmatpush1.msra.mxu0 0.0
        %1939 = vmatprep.subr.mxu0 0.0
        %1940 = vmatpush1.msra.mxu0 0.0
        %1941 = vmatprep.subr.mxu0 0.0
        %1942 = vmatpush1.msra.mxu0 0.0
        %1943 = vmatprep.subr.mxu0 0.0
        %1944 = vmatpush1.msra.mxu0 0.0
        %1945 = vmatprep.subr.mxu0 0.0
        %1946 = vmatpush1.msra.mxu0 0.0
        %1947 = vmatprep.subr.mxu0 0.0
        %1948 = vmatpush1.msra.mxu0 0.0
        %1949 = vmatprep.subr.mxu0 0.0
        %1950 = vmatpush1.msra.mxu0 0.0
        %1951 = vmatprep.subr.mxu0 0.0
        %1952 = vmatpush1.msra.mxu0 0.0
        %1953 = vmatprep.subr.mxu0 0.0
        %1954 = vmatpush1.msra.mxu0 0.0
        %1955 = vmatprep.subr.mxu0 0.0
        %1956 = vmatpush1.msra.mxu0 0.0
        %1957 = vmatprep.subr.mxu0 0.0
        %1958 = vmatpush1.msra.mxu0 0.0
        %1959 = vmatprep.subr.mxu0 0.0
        %1960 = vmatpush1.msra.mxu0 0.0
        %1961 = vmatprep.subr.mxu0 0.0
        %1962 = vmatpush1.msra.mxu0 0.0
        %1963 = vmatprep.subr.mxu0 0.0
        %1964 = vmatpush1.msra.mxu0 0.0
        %1965 = vmatprep.subr.mxu0 0.0
        %1966 = vmatpush1.msra.mxu0 0.0
        %1967 = vmatprep.subr.mxu0 0.0
        %1968 = vmatpush1.msra.mxu0 0.0
        %1969 = vmatprep.subr.mxu0 0.0
        %1970 = vmatpush1.msra.mxu0 0.0
        %1971 = vmatprep.subr.mxu0 0.0
        %1972 = vmatpush1.msra.mxu0 0.0
        %1973 = vmatprep.subr.mxu0 0.0
        %1974 = vmatpush1.msra.mxu0 0.0
        %1975 = vmatprep.subr.mxu0 0.0
        %1976 = vmatpush1.msra.mxu0 0.0
        %1977 = vmatprep.subr.mxu0 0.0
        %1978 = vmatpush1.msra.mxu0 0.0
        %1979 = vmatprep.subr.mxu0 0.0
        %1980 = vmatpush1.msra.mxu0 0.0
        %1981 = vmatprep.subr.mxu0 0.0
        %1982 = vmatpush1.msra.mxu0 0.0
        %1983 = vmatprep.subr.mxu0 0.0
        %1984 = vmatpush1.msra.mxu0 0.0
        %1985 = vmatprep.subr.mxu0 0.0
        %1986 = vmatpush1.msra.mxu0 0.0
        %1987 = vmatprep.subr.mxu0 0.0
        %1988 = vmatpush1.msra.mxu0 0.0
        %1989 = vmatprep.subr.mxu0 0.0
        %1990 = vmatpush1.msra.mxu0 0.0
        %1991 = vmatprep.subr.mxu0 0.0
        %1992 = vmatpush1.msra.mxu0 0.0
        %1993 = vmatprep.subr.mxu0 0.0
        %1994 = vmatpush1.msra.mxu0 0.0
        %1995 = vmatprep.mubr.f32.mxu0 0.0
        %1996 = vmatmul.mubr.f32.gmra.mrb[0].mxu0 %v1926
        %v1997 = vpop.f32.mrb[0].mxu0
        %v1998 = vadd.f32 0.0, %v1997
        %v1999 = vpop.f32.mrb[0].mxu0
        %v2000 = vadd.f32 0.0, %v1999
        %2001 = vmatprep.mubr.f32.mxu0 0.0
        %2002 = vmatmul.mubr.f32.gmra.mrb[0].mxu0 %v1929
        %v2003 = vpop.f32.mrb[0].mxu0
        %v2004 = vadd.f32 0.0, %v2003
        %v2005 = vpop.f32.mrb[0].mxu0
        %v2006 = vadd.f32 0.0, %v2005
        %2007 = vdwg.mxu0
        %v2008 = vadd.f32 %v1906, %v1998
        %v2009 = vadd.f32 %v1907, %v2000
        %v2010 = vadd.f32 %v1908, %v2004
        %v2011 = vadd.f32 %v1909, %v2006
        %2012 = vrot.lane.b32.xlu0 %v1269, 112
        %v2013 = vpop.permute.xlu0 %2012
        %2014 = vrot.lane.b32.xlu0 %v1271, 112
        %v2015 = vpop.permute.xlu0 %2014
        %2016 = vrot.lane.b32.xlu0 %v1270, 112
        %v2017 = vpop.permute.xlu0 %2016
        %2018 = vrot.lane.b32.xlu0 %v1272, 112
        %v2019 = vpop.permute.xlu0 %2018
        %v2020 = vsel %vm870, %v2013, %v2017
        %v2021 = vsel %vm870, %v2015, %v2019
        %v2022 = vsel %vm870, %v2017, %v2013
        %v2023 = vsel %vm870, %v2019, %v2015
        %s2024 = scalar_lea.vmem [#allocation2], 256
        %v2025 = vld [vmem:[%s2024] sm:$0xff]
        %v2026 = vld [vmem:[%s2024 + $0x8] sm:$0xff]
        %v2028 = vsel %vm300, %v2025, 0
        %v2031 = vsel %vm300, %v2026, 0
        %2033 = vmatprep.subr.mxu0 %v2022
        %2034 = vmatpush1.msra.mxu0 %v2020
        %2035 = vmatprep.subr.mxu0 %v2023
        %2036 = vmatpush1.msra.mxu0 %v2021
        %2037 = vmatprep.subr.mxu0 0.0
        %2038 = vmatpush1.msra.mxu0 0.0
        %2039 = vmatprep.subr.mxu0 0.0
        %2040 = vmatpush1.msra.mxu0 0.0
        %2041 = vmatprep.subr.mxu0 0.0
        %2042 = vmatpush1.msra.mxu0 0.0
        %2043 = vmatprep.subr.mxu0 0.0
        %2044 = vmatpush1.msra.mxu0 0.0
        %2045 = vmatprep.subr.mxu0 0.0
        %2046 = vmatpush1.msra.mxu0 0.0
        %2047 = vmatprep.subr.mxu0 0.0
        %2048 = vmatpush1.msra.mxu0 0.0
        %2049 = vmatprep.subr.mxu0 0.0
        %2050 = vmatpush1.msra.mxu0 0.0
        %2051 = vmatprep.subr.mxu0 0.0
        %2052 = vmatpush1.msra.mxu0 0.0
        %2053 = vmatprep.subr.mxu0 0.0
        %2054 = vmatpush1.msra.mxu0 0.0
        %2055 = vmatprep.subr.mxu0 0.0
        %2056 = vmatpush1.msra.mxu0 0.0
        %2057 = vmatprep.subr.mxu0 0.0
        %2058 = vmatpush1.msra.mxu0 0.0
        %2059 = vmatprep.subr.mxu0 0.0
        %2060 = vmatpush1.msra.mxu0 0.0
        %2061 = vmatprep.subr.mxu0 0.0
        %2062 = vmatpush1.msra.mxu0 0.0
        %2063 = vmatprep.subr.mxu0 0.0
        %2064 = vmatpush1.msra.mxu0 0.0
        %2065 = vmatprep.subr.mxu0 0.0
        %2066 = vmatpush1.msra.mxu0 0.0
        %2067 = vmatprep.subr.mxu0 0.0
        %2068 = vmatpush1.msra.mxu0 0.0
        %2069 = vmatprep.subr.mxu0 0.0
        %2070 = vmatpush1.msra.mxu0 0.0
        %2071 = vmatprep.subr.mxu0 0.0
        %2072 = vmatpush1.msra.mxu0 0.0
        %2073 = vmatprep.subr.mxu0 0.0
        %2074 = vmatpush1.msra.mxu0 0.0
        %2075 = vmatprep.subr.mxu0 0.0
        %2076 = vmatpush1.msra.mxu0 0.0
        %2077 = vmatprep.subr.mxu0 0.0
        %2078 = vmatpush1.msra.mxu0 0.0
        %2079 = vmatprep.subr.mxu0 0.0
        %2080 = vmatpush1.msra.mxu0 0.0
        %2081 = vmatprep.subr.mxu0 0.0
        %2082 = vmatpush1.msra.mxu0 0.0
        %2083 = vmatprep.subr.mxu0 0.0
        %2084 = vmatpush1.msra.mxu0 0.0
        %2085 = vmatprep.subr.mxu0 0.0
        %2086 = vmatpush1.msra.mxu0 0.0
        %2087 = vmatprep.subr.mxu0 0.0
        %2088 = vmatpush1.msra.mxu0 0.0
        %2089 = vmatprep.subr.mxu0 0.0
        %2090 = vmatpush1.msra.mxu0 0.0
        %2091 = vmatprep.subr.mxu0 0.0
        %2092 = vmatpush1.msra.mxu0 0.0
        %2093 = vmatprep.subr.mxu0 0.0
        %2094 = vmatpush1.msra.mxu0 0.0
        %2095 = vmatprep.subr.mxu0 0.0
        %2096 = vmatpush1.msra.mxu0 0.0
        %2097 = vmatprep.mubr.f32.mxu0 0.0
        %2098 = vmatmul.mubr.f32.gmra.mrb[0].mxu0 %v2028
        %v2099 = vpop.f32.mrb[0].mxu0
        %v2100 = vadd.f32 0.0, %v2099
        %v2101 = vpop.f32.mrb[0].mxu0
        %v2102 = vadd.f32 0.0, %v2101
        %2103 = vmatprep.mubr.f32.mxu0 0.0
        %2104 = vmatmul.mubr.f32.gmra.mrb[0].mxu0 %v2031
        %v2105 = vpop.f32.mrb[0].mxu0
        %v2106 = vadd.f32 0.0, %v2105
        %v2107 = vpop.f32.mrb[0].mxu0
        %v2108 = vadd.f32 0.0, %v2107
        %2109 = vdwg.mxu0
        %v2110 = vadd.f32 %v2008, %v2100
        %v2111 = vadd.f32 %v2009, %v2102
        %v2112 = vadd.f32 %v2010, %v2106
        %v2113 = vadd.f32 %v2011, %v2108
        %2114 = vrot.lane.b32.xlu0 %v1297, 112
        %v2115 = vpop.permute.xlu0 %2114
        %2116 = vrot.lane.b32.xlu0 %v1299, 112
        %v2117 = vpop.permute.xlu0 %2116
        %2118 = vrot.lane.b32.xlu0 %v1298, 112
        %v2119 = vpop.permute.xlu0 %2118
        %2120 = vrot.lane.b32.xlu0 %v1300, 112
        %v2121 = vpop.permute.xlu0 %2120
        %v2122 = vsel %vm870, %v2115, %v2119
        %v2123 = vsel %vm870, %v2117, %v2121
        %v2124 = vsel %vm870, %v2119, %v2115
        %v2125 = vsel %vm870, %v2121, %v2117
        %s2126 = scalar_lea.vmem [#allocation2], 272
        %v2127 = vld [vmem:[%s2126] sm:$0xff]
        %v2128 = vld [vmem:[%s2126 + $0x8] sm:$0xff]
        %v2130 = vsel %vm300, %v2127, 0
        %v2133 = vsel %vm300, %v2128, 0
        %2135 = vmatprep.subr.mxu0 %v2124
        %2136 = vmatpush1.msra.mxu0 %v2122
        %2137 = vmatprep.subr.mxu0 %v2125
        %2138 = vmatpush1.msra.mxu0 %v2123
        %2139 = vmatprep.subr.mxu0 0.0
        %2140 = vmatpush1.msra.mxu0 0.0
        %2141 = vmatprep.subr.mxu0 0.0
        %2142 = vmatpush1.msra.mxu0 0.0
        %2143 = vmatprep.subr.mxu0 0.0
        %2144 = vmatpush1.msra.mxu0 0.0
        %2145 = vmatprep.subr.mxu0 0.0
        %2146 = vmatpush1.msra.mxu0 0.0
        %2147 = vmatprep.subr.mxu0 0.0
        %2148 = vmatpush1.msra.mxu0 0.0
        %2149 = vmatprep.subr.mxu0 0.0
        %2150 = vmatpush1.msra.mxu0 0.0
        %2151 = vmatprep.subr.mxu0 0.0
        %2152 = vmatpush1.msra.mxu0 0.0
        %2153 = vmatprep.subr.mxu0 0.0
        %2154 = vmatpush1.msra.mxu0 0.0
        %2155 = vmatprep.subr.mxu0 0.0
        %2156 = vmatpush1.msra.mxu0 0.0
        %2157 = vmatprep.subr.mxu0 0.0
        %2158 = vmatpush1.msra.mxu0 0.0
        %2159 = vmatprep.subr.mxu0 0.0
        %2160 = vmatpush1.msra.mxu0 0.0
        %2161 = vmatprep.subr.mxu0 0.0
        %2162 = vmatpush1.msra.mxu0 0.0
        %2163 = vmatprep.subr.mxu0 0.0
        %2164 = vmatpush1.msra.mxu0 0.0
        %2165 = vmatprep.subr.mxu0 0.0
        %2166 = vmatpush1.msra.mxu0 0.0
        %2167 = vmatprep.subr.mxu0 0.0
        %2168 = vmatpush1.msra.mxu0 0.0
        %2169 = vmatprep.subr.mxu0 0.0
        %2170 = vmatpush1.msra.mxu0 0.0
        %2171 = vmatprep.subr.mxu0 0.0
        %2172 = vmatpush1.msra.mxu0 0.0
        %2173 = vmatprep.subr.mxu0 0.0
        %2174 = vmatpush1.msra.mxu0 0.0
        %2175 = vmatprep.subr.mxu0 0.0
        %2176 = vmatpush1.msra.mxu0 0.0
        %2177 = vmatprep.subr.mxu0 0.0
        %2178 = vmatpush1.msra.mxu0 0.0
        %2179 = vmatprep.subr.mxu0 0.0
        %2180 = vmatpush1.msra.mxu0 0.0
        %2181 = vmatprep.subr.mxu0 0.0
        %2182 = vmatpush1.msra.mxu0 0.0
        %2183 = vmatprep.subr.mxu0 0.0
        %2184 = vmatpush1.msra.mxu0 0.0
        %2185 = vmatprep.subr.mxu0 0.0
        %2186 = vmatpush1.msra.mxu0 0.0
        %2187 = vmatprep.subr.mxu0 0.0
        %2188 = vmatpush1.msra.mxu0 0.0
        %2189 = vmatprep.subr.mxu0 0.0
        %2190 = vmatpush1.msra.mxu0 0.0
        %2191 = vmatprep.subr.mxu0 0.0
        %2192 = vmatpush1.msra.mxu0 0.0
        %2193 = vmatprep.subr.mxu0 0.0
        %2194 = vmatpush1.msra.mxu0 0.0
        %2195 = vmatprep.subr.mxu0 0.0
        %2196 = vmatpush1.msra.mxu0 0.0
        %2197 = vmatprep.subr.mxu0 0.0
        %2198 = vmatpush1.msra.mxu0 0.0
        %2199 = vmatprep.mubr.f32.mxu0 0.0
        %2200 = vmatmul.mubr.f32.gmra.mrb[0].mxu0 %v2130
        %v2201 = vpop.f32.mrb[0].mxu0
        %v2202 = vadd.f32 0.0, %v2201
        %v2203 = vpop.f32.mrb[0].mxu0
        %v2204 = vadd.f32 0.0, %v2203
        %2205 = vmatprep.mubr.f32.mxu0 0.0
        %2206 = vmatmul.mubr.f32.gmra.mrb[0].mxu0 %v2133
        %v2207 = vpop.f32.mrb[0].mxu0
        %v2208 = vadd.f32 0.0, %v2207
        %v2209 = vpop.f32.mrb[0].mxu0
        %v2210 = vadd.f32 0.0, %v2209
        %2211 = vdwg.mxu0
        %v2212 = vadd.f32 %v2110, %v2202
        %v2213 = vadd.f32 %v2111, %v2204
        %v2214 = vadd.f32 %v2112, %v2208
        %v2215 = vadd.f32 %v2113, %v2210
        %v2216 = vmul.f32 %v2212, 0.5
        %v2217 = vmul.f32 %v2213, 0.5
        %v2218 = vmul.f32 %v2214, 0.5
        %v2219 = vmul.f32 %v2215, 0.5
        %v2220 = vmul.f32 %v2212, 0.70710677
        %v2221 = vmul.f32 %v2213, 0.70710677
        %v2222 = vmul.f32 %v2214, 0.70710677
        %v2223 = vmul.f32 %v2215, 0.70710677
        %vm2224 = vcmp.lt.f32.partialorder %v2220, 0.0
        %vm2225 = vcmp.lt.f32.partialorder %v2221, 0.0
        %vm2226 = vcmp.lt.f32.partialorder %v2222, 0.0
        %vm2227 = vcmp.lt.f32.partialorder %v2223, 0.0
        %v2228 = vsel %vm2224, -1.0, 1.0
        %v2229 = vsel %vm2225, -1.0, 1.0
        %v2230 = vsel %vm2226, -1.0, 1.0
        %v2231 = vsel %vm2227, -1.0, 1.0
        %v2232 = vand.u32 2147483647, %v2220
        %v2233 = vand.u32 2147483647, %v2221
        %v2234 = vand.u32 2147483647, %v2222
        %v2235 = vand.u32 2147483647, %v2223
        %v2236 = vmul.f32 %v2232, 0.3275911
        %v2237 = vmul.f32 %v2233, 0.3275911
        %v2238 = vmul.f32 %v2234, 0.3275911
        %v2239 = vmul.f32 %v2235, 0.3275911
        %v2240 = vadd.f32 %v2236, 1.0
        %v2241 = vadd.f32 %v2237, 1.0
        %v2242 = vadd.f32 %v2238, 1.0
        %v2243 = vadd.f32 %v2239, 1.0
        %v2244 = vrcp.pop %v2240
        %v2245 = vrcp.pop %v2241
        %v2246 = vrcp.pop %v2242
        %v2247 = vrcp.pop %v2243
        %v2248 = vmul.f32 %v2244, 1.0614054
        %v2249 = vmul.f32 %v2245, 1.0614054
        %v2250 = vmul.f32 %v2246, 1.0614054
        %v2251 = vmul.f32 %v2247, 1.0614054
        %v2252 = vadd.f32 %v2248, -1.4531521
        %v2253 = vadd.f32 %v2249, -1.4531521
        %v2254 = vadd.f32 %v2250, -1.4531521
        %v2255 = vadd.f32 %v2251, -1.4531521
        %v2256 = vmul.f32 %v2252, %v2244
        %v2257 = vmul.f32 %v2253, %v2245
        %v2258 = vmul.f32 %v2254, %v2246
        %v2259 = vmul.f32 %v2255, %v2247
        %v2260 = vadd.f32 %v2256, 1.4214138
        %v2261 = vadd.f32 %v2257, 1.4214138
        %v2262 = vadd.f32 %v2258, 1.4214138
        %v2263 = vadd.f32 %v2259, 1.4214138
        %v2264 = vmul.f32 %v2260, %v2244
        %v2265 = vmul.f32 %v2261, %v2245
        %v2266 = vmul.f32 %v2262, %v2246
        %v2267 = vmul.f32 %v2263, %v2247
        %v2268 = vadd.f32 %v2264, -0.28449672
        %v2269 = vadd.f32 %v2265, -0.28449672
        %v2270 = vadd.f32 %v2266, -0.28449672
        %v2271 = vadd.f32 %v2267, -0.28449672
        %v2272 = vmul.f32 %v2268, %v2244
        %v2273 = vmul.f32 %v2269, %v2245
        %v2274 = vmul.f32 %v2270, %v2246
        %v2275 = vmul.f32 %v2271, %v2247
        %v2276 = vadd.f32 %v2272, 0.2548296
        %v2277 = vadd.f32 %v2273, 0.2548296
        %v2278 = vadd.f32 %v2274, 0.2548296
        %v2279 = vadd.f32 %v2275, 0.2548296
        %v2280 = vmul.f32 %v2276, %v2244
        %v2281 = vmul.f32 %v2277, %v2245
        %v2282 = vmul.f32 %v2278, %v2246
        %v2283 = vmul.f32 %v2279, %v2247
        %v2284 = vsub.f32 0.0, %v2232
        %v2285 = vsub.f32 0.0, %v2233
        %v2286 = vsub.f32 0.0, %v2234
        %v2287 = vsub.f32 0.0, %v2235
        %v2288 = vmul.f32 %v2284, %v2232
        %v2289 = vmul.f32 %v2285, %v2233
        %v2290 = vmul.f32 %v2286, %v2234
        %v2291 = vmul.f32 %v2287, %v2235
        %v2292 = vmul.f32 %v2288, 1.442695
        %v2293 = vpow.pop %v2292
        %v2294 = vmul.f32 %v2289, 1.442695
        %v2295 = vpow.pop %v2294
        %v2296 = vmul.f32 %v2290, 1.442695
        %v2297 = vpow.pop %v2296
        %v2298 = vmul.f32 %v2291, 1.442695
        %v2299 = vpow.pop %v2298
        %v2300 = vmul.f32 %v2280, %v2293
        %v2301 = vmul.f32 %v2281, %v2295
        %v2302 = vmul.f32 %v2282, %v2297
        %v2303 = vmul.f32 %v2283, %v2299
        %v2304 = vsub.f32 1.0, %v2300
        %v2305 = vsub.f32 1.0, %v2301
        %v2306 = vsub.f32 1.0, %v2302
        %v2307 = vsub.f32 1.0, %v2303
        %v2308 = vmul.f32 %v2228, %v2304
        %v2309 = vmul.f32 %v2229, %v2305
        %v2310 = vmul.f32 %v2230, %v2306
        %v2311 = vmul.f32 %v2231, %v2307
        %v2312 = vadd.f32 %v2308, 1.0
        %v2313 = vadd.f32 %v2309, 1.0
        %v2314 = vadd.f32 %v2310, 1.0
        %v2315 = vadd.f32 %v2311, 1.0
        %v2316 = vmul.f32 %v2216, %v2312
        %v2317 = vmul.f32 %v2217, %v2313
        %v2318 = vmul.f32 %v2218, %v2314
        %v2319 = vmul.f32 %v2219, %v2315
        %2320 = vrot.lane.b32.xlu0 %v2316, 15
        %v2321 = vpop.permute.xlu0 %2320
        %2322 = vrot.lane.b32.xlu0 %v2318, 15
        %v2323 = vpop.permute.xlu0 %2322
        %2324 = vrot.lane.b32.xlu0 %v2317, 15
        %v2325 = vpop.permute.xlu0 %2324
        %2326 = vrot.lane.b32.xlu0 %v2319, 15
        %v2327 = vpop.permute.xlu0 %2326
        %v2328 = vsel %vm229, %v2321, %v2325
        %v2329 = vsel %vm229, %v2323, %v2327
        %v2330 = vsel %vm229, %v2325, %v2321
        %v2331 = vsel %vm229, %v2327, %v2323
        %2332 = vrot.lane.b32.xlu0 %v2316, 127
        %v2333 = vpop.permute.xlu0 %2332
        %2334 = vrot.lane.b32.xlu0 %v2318, 127
        %v2335 = vpop.permute.xlu0 %2334
        %2336 = vrot.lane.b32.xlu0 %v2317, 127
        %v2337 = vpop.permute.xlu0 %2336
        %2338 = vrot.lane.b32.xlu0 %v2319, 127
        %v2339 = vpop.permute.xlu0 %2338
        %v2340 = vsel %vm242, %v2333, %v2337
        %v2341 = vsel %vm242, %v2335, %v2339
        %v2342 = vsel %vm242, %v2337, %v2333
        %v2343 = vsel %vm242, %v2339, %v2335
        %v2344 = vsel %vm215, %v2330, %v2340
        %v2345 = vsel %vm216, %v2328, %v2342
        %v2346 = vsel %vm215, %v2331, %v2341
        %v2347 = vsel %vm216, %v2329, %v2343
        %2348 = vrot.lane.b32.xlu0 %v2316, 113
        %v2349 = vpop.permute.xlu0 %2348
        %2350 = vrot.lane.b32.xlu0 %v2318, 113
        %v2351 = vpop.permute.xlu0 %2350
        %2352 = vrot.lane.b32.xlu0 %v2317, 113
        %v2353 = vpop.permute.xlu0 %2352
        %2354 = vrot.lane.b32.xlu0 %v2319, 113
        %v2355 = vpop.permute.xlu0 %2354
        %v2356 = vsel %vm259, %v2349, %v2353
        %v2357 = vsel %vm259, %v2351, %v2355
        %v2358 = vsel %vm259, %v2353, %v2349
        %v2359 = vsel %vm259, %v2355, %v2351
        %2360 = vrot.lane.b32.xlu0 %v2316, 1
        %v2361 = vpop.permute.xlu0 %2360
        %2362 = vrot.lane.b32.xlu0 %v2318, 1
        %v2363 = vpop.permute.xlu0 %2362
        %2364 = vrot.lane.b32.xlu0 %v2317, 1
        %v2365 = vpop.permute.xlu0 %2364
        %2366 = vrot.lane.b32.xlu0 %v2319, 1
        %v2367 = vpop.permute.xlu0 %2366
        %v2368 = vsel %vm272, %v2361, %v2365
        %v2369 = vsel %vm272, %v2363, %v2367
        %v2370 = vsel %vm272, %v2365, %v2361
        %v2371 = vsel %vm272, %v2367, %v2363
        %v2372 = vsel %vm213, %v2356, %v2370
        %v2373 = vsel %vm214, %v2358, %v2368
        %v2374 = vsel %vm213, %v2357, %v2371
        %v2375 = vsel %vm214, %v2359, %v2369
        %s2376 = scalar_lea.vmem %s2, 64
        %v2377 = vld [vmem:[%s2376] sm:$0xff]
        %v2378 = vld [vmem:[%s2376 + $0x8] sm:$0xff]
        %v2379 = vld [vmem:[%s2376 + $0x10] sm:$0xff]
        %v2380 = vld [vmem:[%s2376 + $0x18] sm:$0xff]
        %2381 = vrot.lane.b32.xlu0 %v2372, 16
        %v2382 = vpop.permute.xlu0 %2381
        %2383 = vrot.lane.b32.xlu0 %v2374, 16
        %v2384 = vpop.permute.xlu0 %2383
        %2385 = vrot.lane.b32.xlu0 %v2373, 16
        %v2386 = vpop.permute.xlu0 %2385
        %2387 = vrot.lane.b32.xlu0 %v2375, 16
        %v2388 = vpop.permute.xlu0 %2387
        %v2389 = vsel %vm293, %v2382, %v2386
        %v2390 = vsel %vm293, %v2384, %v2388
        %v2391 = vsel %vm293, %v2386, %v2382
        %v2392 = vsel %vm293, %v2388, %v2384
        %s2393 = scalar_lea.vmem [#allocation2], 288
        %v2394 = vld [vmem:[%s2393] sm:$0xff]
        %v2395 = vld [vmem:[%s2393 + $0x8] sm:$0xff]
        %v2397 = vsel %vm300, %v2394, 0
        %v2400 = vsel %vm300, %v2395, 0
        %2402 = vmatprep.subr.mxu0 %v2389
        %2403 = vmatpush1.msra.mxu0 %v2391
        %2404 = vmatprep.subr.mxu0 %v2390
        %2405 = vmatpush1.msra.mxu0 %v2392
        %2406 = vmatprep.subr.mxu0 0.0
        %2407 = vmatpush1.msra.mxu0 0.0
        %2408 = vmatprep.subr.mxu0 0.0
        %2409 = vmatpush1.msra.mxu0 0.0
        %2410 = vmatprep.subr.mxu0 0.0
        %2411 = vmatpush1.msra.mxu0 0.0
        %2412 = vmatprep.subr.mxu0 0.0
        %2413 = vmatpush1.msra.mxu0 0.0
        %2414 = vmatprep.subr.mxu0 0.0
        %2415 = vmatpush1.msra.mxu0 0.0
        %2416 = vmatprep.subr.mxu0 0.0
        %2417 = vmatpush1.msra.mxu0 0.0
        %2418 = vmatprep.subr.mxu0 0.0
        %2419 = vmatpush1.msra.mxu0 0.0
        %2420 = vmatprep.subr.mxu0 0.0
        %2421 = vmatpush1.msra.mxu0 0.0
        %2422 = vmatprep.subr.mxu0 0.0
        %2423 = vmatpush1.msra.mxu0 0.0
        %2424 = vmatprep.subr.mxu0 0.0
        %2425 = vmatpush1.msra.mxu0 0.0
        %2426 = vmatprep.subr.mxu0 0.0
        %2427 = vmatpush1.msra.mxu0 0.0
        %2428 = vmatprep.subr.mxu0 0.0
        %2429 = vmatpush1.msra.mxu0 0.0
        %2430 = vmatprep.subr.mxu0 0.0
        %2431 = vmatpush1.msra.mxu0 0.0
        %2432 = vmatprep.subr.mxu0 0.0
        %2433 = vmatpush1.msra.mxu0 0.0
        %2434 = vmatprep.subr.mxu0 0.0
        %2435 = vmatpush1.msra.mxu0 0.0
        %2436 = vmatprep.subr.mxu0 0.0
        %2437 = vmatpush1.msra.mxu0 0.0
        %2438 = vmatprep.subr.mxu0 0.0
        %2439 = vmatpush1.msra.mxu0 0.0
        %2440 = vmatprep.subr.mxu0 0.0
        %2441 = vmatpush1.msra.mxu0 0.0
        %2442 = vmatprep.subr.mxu0 0.0
        %2443 = vmatpush1.msra.mxu0 0.0
        %2444 = vmatprep.subr.mxu0 0.0
        %2445 = vmatpush1.msra.mxu0 0.0
        %2446 = vmatprep.subr.mxu0 0.0
        %2447 = vmatpush1.msra.mxu0 0.0
        %2448 = vmatprep.subr.mxu0 0.0
        %2449 = vmatpush1.msra.mxu0 0.0
        %2450 = vmatprep.subr.mxu0 0.0
        %2451 = vmatpush1.msra.mxu0 0.0
        %2452 = vmatprep.subr.mxu0 0.0
        %2453 = vmatpush1.msra.mxu0 0.0
        %2454 = vmatprep.subr.mxu0 0.0
        %2455 = vmatpush1.msra.mxu0 0.0
        %2456 = vmatprep.subr.mxu0 0.0
        %2457 = vmatpush1.msra.mxu0 0.0
        %2458 = vmatprep.subr.mxu0 0.0
        %2459 = vmatpush1.msra.mxu0 0.0
        %2460 = vmatprep.subr.mxu0 0.0
        %2461 = vmatpush1.msra.mxu0 0.0
        %2462 = vmatprep.subr.mxu0 0.0
        %2463 = vmatpush1.msra.mxu0 0.0
        %2464 = vmatprep.subr.mxu0 0.0
        %2465 = vmatpush1.msra.mxu0 0.0
        %2466 = vmatprep.mubr.f32.mxu0 0.0
        %2467 = vmatmul.mubr.f32.gmra.mrb[0].mxu0 %v2397
        %v2468 = vpop.f32.mrb[0].mxu0
        %v2469 = vadd.f32 0.0, %v2468
        %v2470 = vpop.f32.mrb[0].mxu0
        %v2471 = vadd.f32 0.0, %v2470
        %2472 = vmatprep.mubr.f32.mxu0 0.0
        %2473 = vmatmul.mubr.f32.gmra.mrb[0].mxu0 %v2400
        %v2474 = vpop.f32.mrb[0].mxu0
        %v2475 = vadd.f32 0.0, %v2474
        %v2476 = vpop.f32.mrb[0].mxu0
        %v2477 = vadd.f32 0.0, %v2476
        %2478 = vdwg.mxu0
        %v2479 = vadd.f32 %v2377, %v2469
        %v2480 = vadd.f32 %v2378, %v2471
        %v2481 = vadd.f32 %v2379, %v2475
        %v2482 = vadd.f32 %v2380, %v2477
        %2483 = vrot.lane.b32.xlu0 %v2316, 16
        %v2484 = vpop.permute.xlu0 %2483
        %2485 = vrot.lane.b32.xlu0 %v2318, 16
        %v2486 = vpop.permute.xlu0 %2485
        %2487 = vrot.lane.b32.xlu0 %v2317, 16
        %v2488 = vpop.permute.xlu0 %2487
        %2489 = vrot.lane.b32.xlu0 %v2319, 16
        %v2490 = vpop.permute.xlu0 %2489
        %v2491 = vsel %vm293, %v2484, %v2488
        %v2492 = vsel %vm293, %v2486, %v2490
        %v2493 = vsel %vm293, %v2488, %v2484
        %v2494 = vsel %vm293, %v2490, %v2486
        %s2495 = scalar_lea.vmem [#allocation2], 304
        %v2496 = vld [vmem:[%s2495] sm:$0xff]
        %v2497 = vld [vmem:[%s2495 + $0x8] sm:$0xff]
        %v2499 = vsel %vm300, %v2496, 0
        %v2502 = vsel %vm300, %v2497, 0
        %2504 = vmatprep.subr.mxu0 %v2491
        %2505 = vmatpush1.msra.mxu0 %v2493
        %2506 = vmatprep.subr.mxu0 %v2492
        %2507 = vmatpush1.msra.mxu0 %v2494
        %2508 = vmatprep.subr.mxu0 0.0
        %2509 = vmatpush1.msra.mxu0 0.0
        %2510 = vmatprep.subr.mxu0 0.0
        %2511 = vmatpush1.msra.mxu0 0.0
        %2512 = vmatprep.subr.mxu0 0.0
        %2513 = vmatpush1.msra.mxu0 0.0
        %2514 = vmatprep.subr.mxu0 0.0
        %2515 = vmatpush1.msra.mxu0 0.0
        %2516 = vmatprep.subr.mxu0 0.0
        %2517 = vmatpush1.msra.mxu0 0.0
        %2518 = vmatprep.subr.mxu0 0.0
        %2519 = vmatpush1.msra.mxu0 0.0
        %2520 = vmatprep.subr.mxu0 0.0
        %2521 = vmatpush1.msra.mxu0 0.0
        %2522 = vmatprep.subr.mxu0 0.0
        %2523 = vmatpush1.msra.mxu0 0.0
        %2524 = vmatprep.subr.mxu0 0.0
        %2525 = vmatpush1.msra.mxu0 0.0
        %2526 = vmatprep.subr.mxu0 0.0
        %2527 = vmatpush1.msra.mxu0 0.0
        %2528 = vmatprep.subr.mxu0 0.0
        %2529 = vmatpush1.msra.mxu0 0.0
        %2530 = vmatprep.subr.mxu0 0.0
        %2531 = vmatpush1.msra.mxu0 0.0
        %2532 = vmatprep.subr.mxu0 0.0
        %2533 = vmatpush1.msra.mxu0 0.0
        %2534 = vmatprep.subr.mxu0 0.0
        %2535 = vmatpush1.msra.mxu0 0.0
        %2536 = vmatprep.subr.mxu0 0.0
        %2537 = vmatpush1.msra.mxu0 0.0
        %2538 = vmatprep.subr.mxu0 0.0
        %2539 = vmatpush1.msra.mxu0 0.0
        %2540 = vmatprep.subr.mxu0 0.0
        %2541 = vmatpush1.msra.mxu0 0.0
        %2542 = vmatprep.subr.mxu0 0.0
        %2543 = vmatpush1.msra.mxu0 0.0
        %2544 = vmatprep.subr.mxu0 0.0
        %2545 = vmatpush1.msra.mxu0 0.0
        %2546 = vmatprep.subr.mxu0 0.0
        %2547 = vmatpush1.msra.mxu0 0.0
        %2548 = vmatprep.subr.mxu0 0.0
        %2549 = vmatpush1.msra.mxu0 0.0
        %2550 = vmatprep.subr.mxu0 0.0
        %2551 = vmatpush1.msra.mxu0 0.0
        %2552 = vmatprep.subr.mxu0 0.0
        %2553 = vmatpush1.msra.mxu0 0.0
        %2554 = vmatprep.subr.mxu0 0.0
        %2555 = vmatpush1.msra.mxu0 0.0
        %2556 = vmatprep.subr.mxu0 0.0
        %2557 = vmatpush1.msra.mxu0 0.0
        %2558 = vmatprep.subr.mxu0 0.0
        %2559 = vmatpush1.msra.mxu0 0.0
        %2560 = vmatprep.subr.mxu0 0.0
        %2561 = vmatpush1.msra.mxu0 0.0
        %2562 = vmatprep.subr.mxu0 0.0
        %2563 = vmatpush1.msra.mxu0 0.0
        %2564 = vmatprep.subr.mxu0 0.0
        %2565 = vmatpush1.msra.mxu0 0.0
        %2566 = vmatprep.subr.mxu0 0.0
        %2567 = vmatpush1.msra.mxu0 0.0
        %2568 = vmatprep.mubr.f32.mxu0 0.0
        %2569 = vmatmul.mubr.f32.gmra.mrb[0].mxu0 %v2499
        %v2570 = vpop.f32.mrb[0].mxu0
        %v2571 = vadd.f32 0.0, %v2570
        %v2572 = vpop.f32.mrb[0].mxu0
        %v2573 = vadd.f32 0.0, %v2572
        %2574 = vmatprep.mubr.f32.mxu0 0.0
        %2575 = vmatmul.mubr.f32.gmra.mrb[0].mxu0 %v2502
        %v2576 = vpop.f32.mrb[0].mxu0
        %v2577 = vadd.f32 0.0, %v2576
        %v2578 = vpop.f32.mrb[0].mxu0
        %v2579 = vadd.f32 0.0, %v2578
        %2580 = vdwg.mxu0
        %v2581 = vadd.f32 %v2479, %v2571
        %v2582 = vadd.f32 %v2480, %v2573
        %v2583 = vadd.f32 %v2481, %v2577
        %v2584 = vadd.f32 %v2482, %v2579
        %2585 = vrot.lane.b32.xlu0 %v2344, 16
        %v2586 = vpop.permute.xlu0 %2585
        %2587 = vrot.lane.b32.xlu0 %v2346, 16
        %v2588 = vpop.permute.xlu0 %2587
        %2589 = vrot.lane.b32.xlu0 %v2345, 16
        %v2590 = vpop.permute.xlu0 %2589
        %2591 = vrot.lane.b32.xlu0 %v2347, 16
        %v2592 = vpop.permute.xlu0 %2591
        %v2593 = vsel %vm293, %v2586, %v2590
        %v2594 = vsel %vm293, %v2588, %v2592
        %v2595 = vsel %vm293, %v2590, %v2586
        %v2596 = vsel %vm293, %v2592, %v2588
        %s2597 = scalar_lea.vmem [#allocation2], 320
        %v2598 = vld [vmem:[%s2597] sm:$0xff]
        %v2599 = vld [vmem:[%s2597 + $0x8] sm:$0xff]
        %v2601 = vsel %vm300, %v2598, 0
        %v2604 = vsel %vm300, %v2599, 0
        %2606 = vmatprep.subr.mxu0 %v2593
        %2607 = vmatpush1.msra.mxu0 %v2595
        %2608 = vmatprep.subr.mxu0 %v2594
        %2609 = vmatpush1.msra.mxu0 %v2596
        %2610 = vmatprep.subr.mxu0 0.0
        %2611 = vmatpush1.msra.mxu0 0.0
        %2612 = vmatprep.subr.mxu0 0.0
        %2613 = vmatpush1.msra.mxu0 0.0
        %2614 = vmatprep.subr.mxu0 0.0
        %2615 = vmatpush1.msra.mxu0 0.0
        %2616 = vmatprep.subr.mxu0 0.0
        %2617 = vmatpush1.msra.mxu0 0.0
        %2618 = vmatprep.subr.mxu0 0.0
        %2619 = vmatpush1.msra.mxu0 0.0
        %2620 = vmatprep.subr.mxu0 0.0
        %2621 = vmatpush1.msra.mxu0 0.0
        %2622 = vmatprep.subr.mxu0 0.0
        %2623 = vmatpush1.msra.mxu0 0.0
        %2624 = vmatprep.subr.mxu0 0.0
        %2625 = vmatpush1.msra.mxu0 0.0
        %2626 = vmatprep.subr.mxu0 0.0
        %2627 = vmatpush1.msra.mxu0 0.0
        %2628 = vmatprep.subr.mxu0 0.0
        %2629 = vmatpush1.msra.mxu0 0.0
        %2630 = vmatprep.subr.mxu0 0.0
        %2631 = vmatpush1.msra.mxu0 0.0
        %2632 = vmatprep.subr.mxu0 0.0
        %2633 = vmatpush1.msra.mxu0 0.0
        %2634 = vmatprep.subr.mxu0 0.0
        %2635 = vmatpush1.msra.mxu0 0.0
        %2636 = vmatprep.subr.mxu0 0.0
        %2637 = vmatpush1.msra.mxu0 0.0
        %2638 = vmatprep.subr.mxu0 0.0
        %2639 = vmatpush1.msra.mxu0 0.0
        %2640 = vmatprep.subr.mxu0 0.0
        %2641 = vmatpush1.msra.mxu0 0.0
        %2642 = vmatprep.subr.mxu0 0.0
        %2643 = vmatpush1.msra.mxu0 0.0
        %2644 = vmatprep.subr.mxu0 0.0
        %2645 = vmatpush1.msra.mxu0 0.0
        %2646 = vmatprep.subr.mxu0 0.0
        %2647 = vmatpush1.msra.mxu0 0.0
        %2648 = vmatprep.subr.mxu0 0.0
        %2649 = vmatpush1.msra.mxu0 0.0
        %2650 = vmatprep.subr.mxu0 0.0
        %2651 = vmatpush1.msra.mxu0 0.0
        %2652 = vmatprep.subr.mxu0 0.0
        %2653 = vmatpush1.msra.mxu0 0.0
        %2654 = vmatprep.subr.mxu0 0.0
        %2655 = vmatpush1.msra.mxu0 0.0
        %2656 = vmatprep.subr.mxu0 0.0
        %2657 = vmatpush1.msra.mxu0 0.0
        %2658 = vmatprep.subr.mxu0 0.0
        %2659 = vmatpush1.msra.mxu0 0.0
        %2660 = vmatprep.subr.mxu0 0.0
        %2661 = vmatpush1.msra.mxu0 0.0
        %2662 = vmatprep.subr.mxu0 0.0
        %2663 = vmatpush1.msra.mxu0 0.0
        %2664 = vmatprep.subr.mxu0 0.0
        %2665 = vmatpush1.msra.mxu0 0.0
        %2666 = vmatprep.subr.mxu0 0.0
        %2667 = vmatpush1.msra.mxu0 0.0
        %2668 = vmatprep.subr.mxu0 0.0
        %2669 = vmatpush1.msra.mxu0 0.0
        %2670 = vmatprep.mubr.f32.mxu0 0.0
        %2671 = vmatmul.mubr.f32.gmra.mrb[0].mxu0 %v2601
        %v2672 = vpop.f32.mrb[0].mxu0
        %v2673 = vadd.f32 0.0, %v2672
        %v2674 = vpop.f32.mrb[0].mxu0
        %v2675 = vadd.f32 0.0, %v2674
        %2676 = vmatprep.mubr.f32.mxu0 0.0
        %2677 = vmatmul.mubr.f32.gmra.mrb[0].mxu0 %v2604
        %v2678 = vpop.f32.mrb[0].mxu0
        %v2679 = vadd.f32 0.0, %v2678
        %v2680 = vpop.f32.mrb[0].mxu0
        %v2681 = vadd.f32 0.0, %v2680
        %2682 = vdwg.mxu0
        %v2683 = vadd.f32 %v2581, %v2673
        %v2684 = vadd.f32 %v2582, %v2675
        %v2685 = vadd.f32 %v2583, %v2679
        %v2686 = vadd.f32 %v2584, %v2681
        %s2687 = scalar_lea.vmem [#allocation2], 336
        %v2688 = vld [vmem:[%s2687] sm:$0xff]
        %v2689 = vld [vmem:[%s2687 + $0x8] sm:$0xff]
        %v2691 = vsel %vm300, %v2688, 0
        %v2694 = vsel %vm300, %v2689, 0
        %2696 = vmatprep.subr.mxu0 %v2373
        %2697 = vmatpush1.msra.mxu0 %v2372
        %2698 = vmatprep.subr.mxu0 %v2375
        %2699 = vmatpush1.msra.mxu0 %v2374
        %2700 = vmatprep.subr.mxu0 0.0
        %2701 = vmatpush1.msra.mxu0 0.0
        %2702 = vmatprep.subr.mxu0 0.0
        %2703 = vmatpush1.msra.mxu0 0.0
        %2704 = vmatprep.subr.mxu0 0.0
        %2705 = vmatpush1.msra.mxu0 0.0
        %2706 = vmatprep.subr.mxu0 0.0
        %2707 = vmatpush1.msra.mxu0 0.0
        %2708 = vmatprep.subr.mxu0 0.0
        %2709 = vmatpush1.msra.mxu0 0.0
        %2710 = vmatprep.subr.mxu0 0.0
        %2711 = vmatpush1.msra.mxu0 0.0
        %2712 = vmatprep.subr.mxu0 0.0
        %2713 = vmatpush1.msra.mxu0 0.0
        %2714 = vmatprep.subr.mxu0 0.0
        %2715 = vmatpush1.msra.mxu0 0.0
        %2716 = vmatprep.subr.mxu0 0.0
        %2717 = vmatpush1.msra.mxu0 0.0
        %2718 = vmatprep.subr.mxu0 0.0
        %2719 = vmatpush1.msra.mxu0 0.0
        %2720 = vmatprep.subr.mxu0 0.0
        %2721 = vmatpush1.msra.mxu0 0.0
        %2722 = vmatprep.subr.mxu0 0.0
        %2723 = vmatpush1.msra.mxu0 0.0
        %2724 = vmatprep.subr.mxu0 0.0
        %2725 = vmatpush1.msra.mxu0 0.0
        %2726 = vmatprep.subr.mxu0 0.0
        %2727 = vmatpush1.msra.mxu0 0.0
        %2728 = vmatprep.subr.mxu0 0.0
        %2729 = vmatpush1.msra.mxu0 0.0
        %2730 = vmatprep.subr.mxu0 0.0
        %2731 = vmatpush1.msra.mxu0 0.0
        %2732 = vmatprep.subr.mxu0 0.0
        %2733 = vmatpush1.msra.mxu0 0.0
        %2734 = vmatprep.subr.mxu0 0.0
        %2735 = vmatpush1.msra.mxu0 0.0
        %2736 = vmatprep.subr.mxu0 0.0
        %2737 = vmatpush1.msra.mxu0 0.0
        %2738 = vmatprep.subr.mxu0 0.0
        %2739 = vmatpush1.msra.mxu0 0.0
        %2740 = vmatprep.subr.mxu0 0.0
        %2741 = vmatpush1.msra.mxu0 0.0
        %2742 = vmatprep.subr.mxu0 0.0
        %2743 = vmatpush1.msra.mxu0 0.0
        %2744 = vmatprep.subr.mxu0 0.0
        %2745 = vmatpush1.msra.mxu0 0.0
        %2746 = vmatprep.subr.mxu0 0.0
        %2747 = vmatpush1.msra.mxu0 0.0
        %2748 = vmatprep.subr.mxu0 0.0
        %2749 = vmatpush1.msra.mxu0 0.0
        %2750 = vmatprep.subr.mxu0 0.0
        %2751 = vmatpush1.msra.mxu0 0.0
        %2752 = vmatprep.subr.mxu0 0.0
        %2753 = vmatpush1.msra.mxu0 0.0
        %2754 = vmatprep.subr.mxu0 0.0
        %2755 = vmatpush1.msra.mxu0 0.0
        %2756 = vmatprep.subr.mxu0 0.0
        %2757 = vmatpush1.msra.mxu0 0.0
        %2758 = vmatprep.subr.mxu0 0.0
        %2759 = vmatpush1.msra.mxu0 0.0
        %2760 = vmatprep.mubr.f32.mxu0 0.0
        %2761 = vmatmul.mubr.f32.gmra.mrb[0].mxu0 %v2691
        %v2762 = vpop.f32.mrb[0].mxu0
        %v2763 = vadd.f32 0.0, %v2762
        %v2764 = vpop.f32.mrb[0].mxu0
        %v2765 = vadd.f32 0.0, %v2764
        %2766 = vmatprep.mubr.f32.mxu0 0.0
        %2767 = vmatmul.mubr.f32.gmra.mrb[0].mxu0 %v2694
        %v2768 = vpop.f32.mrb[0].mxu0
        %v2769 = vadd.f32 0.0, %v2768
        %v2770 = vpop.f32.mrb[0].mxu0
        %v2771 = vadd.f32 0.0, %v2770
        %2772 = vdwg.mxu0
        %v2773 = vadd.f32 %v2683, %v2763
        %v2774 = vadd.f32 %v2684, %v2765
        %v2775 = vadd.f32 %v2685, %v2769
        %v2776 = vadd.f32 %v2686, %v2771
        %s2777 = scalar_lea.vmem [#allocation2], 352
        %v2778 = vld [vmem:[%s2777] sm:$0xff]
        %v2779 = vld [vmem:[%s2777 + $0x8] sm:$0xff]
        %v2781 = vsel %vm300, %v2778, 0
        %v2784 = vsel %vm300, %v2779, 0
        %2786 = vmatprep.subr.mxu0 %v2317
        %2787 = vmatpush1.msra.mxu0 %v2316
        %2788 = vmatprep.subr.mxu0 %v2319
        %2789 = vmatpush1.msra.mxu0 %v2318
        %2790 = vmatprep.subr.mxu0 0.0
        %2791 = vmatpush1.msra.mxu0 0.0
        %2792 = vmatprep.subr.mxu0 0.0
        %2793 = vmatpush1.msra.mxu0 0.0
        %2794 = vmatprep.subr.mxu0 0.0
        %2795 = vmatpush1.msra.mxu0 0.0
        %2796 = vmatprep.subr.mxu0 0.0
        %2797 = vmatpush1.msra.mxu0 0.0
        %2798 = vmatprep.subr.mxu0 0.0
        %2799 = vmatpush1.msra.mxu0 0.0
        %2800 = vmatprep.subr.mxu0 0.0
        %2801 = vmatpush1.msra.mxu0 0.0
        %2802 = vmatprep.subr.mxu0 0.0
        %2803 = vmatpush1.msra.mxu0 0.0
        %2804 = vmatprep.subr.mxu0 0.0
        %2805 = vmatpush1.msra.mxu0 0.0
        %2806 = vmatprep.subr.mxu0 0.0
        %2807 = vmatpush1.msra.mxu0 0.0
        %2808 = vmatprep.subr.mxu0 0.0
        %2809 = vmatpush1.msra.mxu0 0.0
        %2810 = vmatprep.subr.mxu0 0.0
        %2811 = vmatpush1.msra.mxu0 0.0
        %2812 = vmatprep.subr.mxu0 0.0
        %2813 = vmatpush1.msra.mxu0 0.0
        %2814 = vmatprep.subr.mxu0 0.0
        %2815 = vmatpush1.msra.mxu0 0.0
        %2816 = vmatprep.subr.mxu0 0.0
        %2817 = vmatpush1.msra.mxu0 0.0
        %2818 = vmatprep.subr.mxu0 0.0
        %2819 = vmatpush1.msra.mxu0 0.0
        %2820 = vmatprep.subr.mxu0 0.0
        %2821 = vmatpush1.msra.mxu0 0.0
        %2822 = vmatprep.subr.mxu0 0.0
        %2823 = vmatpush1.msra.mxu0 0.0
        %2824 = vmatprep.subr.mxu0 0.0
        %2825 = vmatpush1.msra.mxu0 0.0
        %2826 = vmatprep.subr.mxu0 0.0
        %2827 = vmatpush1.msra.mxu0 0.0
        %2828 = vmatprep.subr.mxu0 0.0
        %2829 = vmatpush1.msra.mxu0 0.0
        %2830 = vmatprep.subr.mxu0 0.0
        %2831 = vmatpush1.msra.mxu0 0.0
        %2832 = vmatprep.subr.mxu0 0.0
        %2833 = vmatpush1.msra.mxu0 0.0
        %2834 = vmatprep.subr.mxu0 0.0
        %2835 = vmatpush1.msra.mxu0 0.0
        %2836 = vmatprep.subr.mxu0 0.0
        %2837 = vmatpush1.msra.mxu0 0.0
        %2838 = vmatprep.subr.mxu0 0.0
        %2839 = vmatpush1.msra.mxu0 0.0
        %2840 = vmatprep.subr.mxu0 0.0
        %2841 = vmatpush1.msra.mxu0 0.0
        %2842 = vmatprep.subr.mxu0 0.0
        %2843 = vmatpush1.msra.mxu0 0.0
        %2844 = vmatprep.subr.mxu0 0.0
        %2845 = vmatpush1.msra.mxu0 0.0
        %2846 = vmatprep.subr.mxu0 0.0
        %2847 = vmatpush1.msra.mxu0 0.0
        %2848 = vmatprep.subr.mxu0 0.0
        %2849 = vmatpush1.msra.mxu0 0.0
        %2850 = vmatprep.mubr.f32.mxu0 0.0
        %2851 = vmatmul.mubr.f32.gmra.mrb[0].mxu0 %v2781
        %v2852 = vpop.f32.mrb[0].mxu0
        %v2853 = vadd.f32 0.0, %v2852
        %v2854 = vpop.f32.mrb[0].mxu0
        %v2855 = vadd.f32 0.0, %v2854
        %2856 = vmatprep.mubr.f32.mxu0 0.0
        %2857 = vmatmul.mubr.f32.gmra.mrb[0].mxu0 %v2784
        %v2858 = vpop.f32.mrb[0].mxu0
        %v2859 = vadd.f32 0.0, %v2858
        %v2860 = vpop.f32.mrb[0].mxu0
        %v2861 = vadd.f32 0.0, %v2860
        %2862 = vdwg.mxu0
        %v2863 = vadd.f32 %v2773, %v2853
        %v2864 = vadd.f32 %v2774, %v2855
        %v2865 = vadd.f32 %v2775, %v2859
        %v2866 = vadd.f32 %v2776, %v2861
        %s2867 = scalar_lea.vmem [#allocation2], 368
        %v2868 = vld [vmem:[%s2867] sm:$0xff]
        %v2869 = vld [vmem:[%s2867 + $0x8] sm:$0xff]
        %v2871 = vsel %vm300, %v2868, 0
        %v2874 = vsel %vm300, %v2869, 0
        %2876 = vmatprep.subr.mxu0 %v2345
        %2877 = vmatpush1.msra.mxu0 %v2344
        %2878 = vmatprep.subr.mxu0 %v2347
        %2879 = vmatpush1.msra.mxu0 %v2346
        %2880 = vmatprep.subr.mxu0 0.0
        %2881 = vmatpush1.msra.mxu0 0.0
        %2882 = vmatprep.subr.mxu0 0.0
        %2883 = vmatpush1.msra.mxu0 0.0
        %2884 = vmatprep.subr.mxu0 0.0
        %2885 = vmatpush1.msra.mxu0 0.0
        %2886 = vmatprep.subr.mxu0 0.0
        %2887 = vmatpush1.msra.mxu0 0.0
        %2888 = vmatprep.subr.mxu0 0.0
        %2889 = vmatpush1.msra.mxu0 0.0
        %2890 = vmatprep.subr.mxu0 0.0
        %2891 = vmatpush1.msra.mxu0 0.0
        %2892 = vmatprep.subr.mxu0 0.0
        %2893 = vmatpush1.msra.mxu0 0.0
        %2894 = vmatprep.subr.mxu0 0.0
        %2895 = vmatpush1.msra.mxu0 0.0
        %2896 = vmatprep.subr.mxu0 0.0
        %2897 = vmatpush1.msra.mxu0 0.0
        %2898 = vmatprep.subr.mxu0 0.0
        %2899 = vmatpush1.msra.mxu0 0.0
        %2900 = vmatprep.subr.mxu0 0.0
        %2901 = vmatpush1.msra.mxu0 0.0
        %2902 = vmatprep.subr.mxu0 0.0
        %2903 = vmatpush1.msra.mxu0 0.0
        %2904 = vmatprep.subr.mxu0 0.0
        %2905 = vmatpush1.msra.mxu0 0.0
        %2906 = vmatprep.subr.mxu0 0.0
        %2907 = vmatpush1.msra.mxu0 0.0
        %2908 = vmatprep.subr.mxu0 0.0
        %2909 = vmatpush1.msra.mxu0 0.0
        %2910 = vmatprep.subr.mxu0 0.0
        %2911 = vmatpush1.msra.mxu0 0.0
        %2912 = vmatprep.subr.mxu0 0.0
        %2913 = vmatpush1.msra.mxu0 0.0
        %2914 = vmatprep.subr.mxu0 0.0
        %2915 = vmatpush1.msra.mxu0 0.0
        %2916 = vmatprep.subr.mxu0 0.0
        %2917 = vmatpush1.msra.mxu0 0.0
        %2918 = vmatprep.subr.mxu0 0.0
        %2919 = vmatpush1.msra.mxu0 0.0
        %2920 = vmatprep.subr.mxu0 0.0
        %2921 = vmatpush1.msra.mxu0 0.0
        %2922 = vmatprep.subr.mxu0 0.0
        %2923 = vmatpush1.msra.mxu0 0.0
        %2924 = vmatprep.subr.mxu0 0.0
        %2925 = vmatpush1.msra.mxu0 0.0
        %2926 = vmatprep.subr.mxu0 0.0
        %2927 = vmatpush1.msra.mxu0 0.0
        %2928 = vmatprep.subr.mxu0 0.0
        %2929 = vmatpush1.msra.mxu0 0.0
        %2930 = vmatprep.subr.mxu0 0.0
        %2931 = vmatpush1.msra.mxu0 0.0
        %2932 = vmatprep.subr.mxu0 0.0
        %2933 = vmatpush1.msra.mxu0 0.0
        %2934 = vmatprep.subr.mxu0 0.0
        %2935 = vmatpush1.msra.mxu0 0.0
        %2936 = vmatprep.subr.mxu0 0.0
        %2937 = vmatpush1.msra.mxu0 0.0
        %2938 = vmatprep.subr.mxu0 0.0
        %2939 = vmatpush1.msra.mxu0 0.0
        %2940 = vmatprep.mubr.f32.mxu0 0.0
        %2941 = vmatmul.mubr.f32.gmra.mrb[0].mxu0 %v2871
        %v2942 = vpop.f32.mrb[0].mxu0
        %v2943 = vadd.f32 0.0, %v2942
        %v2944 = vpop.f32.mrb[0].mxu0
        %v2945 = vadd.f32 0.0, %v2944
        %2946 = vmatprep.mubr.f32.mxu0 0.0
        %2947 = vmatmul.mubr.f32.gmra.mrb[0].mxu0 %v2874
        %v2948 = vpop.f32.mrb[0].mxu0
        %v2949 = vadd.f32 0.0, %v2948
        %v2950 = vpop.f32.mrb[0].mxu0
        %v2951 = vadd.f32 0.0, %v2950
        %2952 = vdwg.mxu0
        %v2953 = vadd.f32 %v2863, %v2943
        %v2954 = vadd.f32 %v2864, %v2945
        %v2955 = vadd.f32 %v2865, %v2949
        %v2956 = vadd.f32 %v2866, %v2951
        %2957 = vrot.lane.b32.xlu0 %v2372, 112
        %v2958 = vpop.permute.xlu0 %2957
        %2959 = vrot.lane.b32.xlu0 %v2374, 112
        %v2960 = vpop.permute.xlu0 %2959
        %2961 = vrot.lane.b32.xlu0 %v2373, 112
        %v2962 = vpop.permute.xlu0 %2961
        %2963 = vrot.lane.b32.xlu0 %v2375, 112
        %v2964 = vpop.permute.xlu0 %2963
        %v2965 = vsel %vm870, %v2958, %v2962
        %v2966 = vsel %vm870, %v2960, %v2964
        %v2967 = vsel %vm870, %v2962, %v2958
        %v2968 = vsel %vm870, %v2964, %v2960
        %s2969 = scalar_lea.vmem [#allocation2], 384
        %v2970 = vld [vmem:[%s2969] sm:$0xff]
        %v2971 = vld [vmem:[%s2969 + $0x8] sm:$0xff]
        %v2973 = vsel %vm300, %v2970, 0
        %v2976 = vsel %vm300, %v2971, 0
        %2978 = vmatprep.subr.mxu0 %v2967
        %2979 = vmatpush1.msra.mxu0 %v2965
        %2980 = vmatprep.subr.mxu0 %v2968
        %2981 = vmatpush1.msra.mxu0 %v2966
        %2982 = vmatprep.subr.mxu0 0.0
        %2983 = vmatpush1.msra.mxu0 0.0
        %2984 = vmatprep.subr.mxu0 0.0
        %2985 = vmatpush1.msra.mxu0 0.0
        %2986 = vmatprep.subr.mxu0 0.0
        %2987 = vmatpush1.msra.mxu0 0.0
        %2988 = vmatprep.subr.mxu0 0.0
        %2989 = vmatpush1.msra.mxu0 0.0
        %2990 = vmatprep.subr.mxu0 0.0
        %2991 = vmatpush1.msra.mxu0 0.0
        %2992 = vmatprep.subr.mxu0 0.0
        %2993 = vmatpush1.msra.mxu0 0.0
        %2994 = vmatprep.subr.mxu0 0.0
        %2995 = vmatpush1.msra.mxu0 0.0
        %2996 = vmatprep.subr.mxu0 0.0
        %2997 = vmatpush1.msra.mxu0 0.0
        %2998 = vmatprep.subr.mxu0 0.0
        %2999 = vmatpush1.msra.mxu0 0.0
        %3000 = vmatprep.subr.mxu0 0.0
        %3001 = vmatpush1.msra.mxu0 0.0
        %3002 = vmatprep.subr.mxu0 0.0
        %3003 = vmatpush1.msra.mxu0 0.0
        %3004 = vmatprep.subr.mxu0 0.0
        %3005 = vmatpush1.msra.mxu0 0.0
        %3006 = vmatprep.subr.mxu0 0.0
        %3007 = vmatpush1.msra.mxu0 0.0
        %3008 = vmatprep.subr.mxu0 0.0
        %3009 = vmatpush1.msra.mxu0 0.0
        %3010 = vmatprep.subr.mxu0 0.0
        %3011 = vmatpush1.msra.mxu0 0.0
        %3012 = vmatprep.subr.mxu0 0.0
        %3013 = vmatpush1.msra.mxu0 0.0
        %3014 = vmatprep.subr.mxu0 0.0
        %3015 = vmatpush1.msra.mxu0 0.0
        %3016 = vmatprep.subr.mxu0 0.0
        %3017 = vmatpush1.msra.mxu0 0.0
        %3018 = vmatprep.subr.mxu0 0.0
        %3019 = vmatpush1.msra.mxu0 0.0
        %3020 = vmatprep.subr.mxu0 0.0
        %3021 = vmatpush1.msra.mxu0 0.0
        %3022 = vmatprep.subr.mxu0 0.0
        %3023 = vmatpush1.msra.mxu0 0.0
        %3024 = vmatprep.subr.mxu0 0.0
        %3025 = vmatpush1.msra.mxu0 0.0
        %3026 = vmatprep.subr.mxu0 0.0
        %3027 = vmatpush1.msra.mxu0 0.0
        %3028 = vmatprep.subr.mxu0 0.0
        %3029 = vmatpush1.msra.mxu0 0.0
        %3030 = vmatprep.subr.mxu0 0.0
        %3031 = vmatpush1.msra.mxu0 0.0
        %3032 = vmatprep.subr.mxu0 0.0
        %3033 = vmatpush1.msra.mxu0 0.0
        %3034 = vmatprep.subr.mxu0 0.0
        %3035 = vmatpush1.msra.mxu0 0.0
        %3036 = vmatprep.subr.mxu0 0.0
        %3037 = vmatpush1.msra.mxu0 0.0
        %3038 = vmatprep.subr.mxu0 0.0
        %3039 = vmatpush1.msra.mxu0 0.0
        %3040 = vmatprep.subr.mxu0 0.0
        %3041 = vmatpush1.msra.mxu0 0.0
        %3042 = vmatprep.mubr.f32.mxu0 0.0
        %3043 = vmatmul.mubr.f32.gmra.mrb[0].mxu0 %v2973
        %v3044 = vpop.f32.mrb[0].mxu0
        %v3045 = vadd.f32 0.0, %v3044
        %v3046 = vpop.f32.mrb[0].mxu0
        %v3047 = vadd.f32 0.0, %v3046
        %3048 = vmatprep.mubr.f32.mxu0 0.0
        %3049 = vmatmul.mubr.f32.gmra.mrb[0].mxu0 %v2976
        %v3050 = vpop.f32.mrb[0].mxu0
        %v3051 = vadd.f32 0.0, %v3050
        %v3052 = vpop.f32.mrb[0].mxu0
        %v3053 = vadd.f32 0.0, %v3052
        %3054 = vdwg.mxu0
        %v3055 = vadd.f32 %v2953, %v3045
        %v3056 = vadd.f32 %v2954, %v3047
        %v3057 = vadd.f32 %v2955, %v3051
        %v3058 = vadd.f32 %v2956, %v3053
        %3059 = vrot.lane.b32.xlu0 %v2316, 112
        %v3060 = vpop.permute.xlu0 %3059
        %3061 = vrot.lane.b32.xlu0 %v2318, 112
        %v3062 = vpop.permute.xlu0 %3061
        %3063 = vrot.lane.b32.xlu0 %v2317, 112
        %v3064 = vpop.permute.xlu0 %3063
        %3065 = vrot.lane.b32.xlu0 %v2319, 112
        %v3066 = vpop.permute.xlu0 %3065
        %v3067 = vsel %vm870, %v3060, %v3064
        %v3068 = vsel %vm870, %v3062, %v3066
        %v3069 = vsel %vm870, %v3064, %v3060
        %v3070 = vsel %vm870, %v3066, %v3062
        %s3071 = scalar_lea.vmem [#allocation2], 400
        %v3072 = vld [vmem:[%s3071] sm:$0xff]
        %v3073 = vld [vmem:[%s3071 + $0x8] sm:$0xff]
        %v3075 = vsel %vm300, %v3072, 0
        %v3078 = vsel %vm300, %v3073, 0
        %3080 = vmatprep.subr.mxu0 %v3069
        %3081 = vmatpush1.msra.mxu0 %v3067
        %3082 = vmatprep.subr.mxu0 %v3070
        %3083 = vmatpush1.msra.mxu0 %v3068
        %3084 = vmatprep.subr.mxu0 0.0
        %3085 = vmatpush1.msra.mxu0 0.0
        %3086 = vmatprep.subr.mxu0 0.0
        %3087 = vmatpush1.msra.mxu0 0.0
        %3088 = vmatprep.subr.mxu0 0.0
        %3089 = vmatpush1.msra.mxu0 0.0
        %3090 = vmatprep.subr.mxu0 0.0
        %3091 = vmatpush1.msra.mxu0 0.0
        %3092 = vmatprep.subr.mxu0 0.0
        %3093 = vmatpush1.msra.mxu0 0.0
        %3094 = vmatprep.subr.mxu0 0.0
        %3095 = vmatpush1.msra.mxu0 0.0
        %3096 = vmatprep.subr.mxu0 0.0
        %3097 = vmatpush1.msra.mxu0 0.0
        %3098 = vmatprep.subr.mxu0 0.0
        %3099 = vmatpush1.msra.mxu0 0.0
        %3100 = vmatprep.subr.mxu0 0.0
        %3101 = vmatpush1.msra.mxu0 0.0
        %3102 = vmatprep.subr.mxu0 0.0
        %3103 = vmatpush1.msra.mxu0 0.0
        %3104 = vmatprep.subr.mxu0 0.0
        %3105 = vmatpush1.msra.mxu0 0.0
        %3106 = vmatprep.subr.mxu0 0.0
        %3107 = vmatpush1.msra.mxu0 0.0
        %3108 = vmatprep.subr.mxu0 0.0
        %3109 = vmatpush1.msra.mxu0 0.0
        %3110 = vmatprep.subr.mxu0 0.0
        %3111 = vmatpush1.msra.mxu0 0.0
        %3112 = vmatprep.subr.mxu0 0.0
        %3113 = vmatpush1.msra.mxu0 0.0
        %3114 = vmatprep.subr.mxu0 0.0
        %3115 = vmatpush1.msra.mxu0 0.0
        %3116 = vmatprep.subr.mxu0 0.0
        %3117 = vmatpush1.msra.mxu0 0.0
        %3118 = vmatprep.subr.mxu0 0.0
        %3119 = vmatpush1.msra.mxu0 0.0
        %3120 = vmatprep.subr.mxu0 0.0
        %3121 = vmatpush1.msra.mxu0 0.0
        %3122 = vmatprep.subr.mxu0 0.0
        %3123 = vmatpush1.msra.mxu0 0.0
        %3124 = vmatprep.subr.mxu0 0.0
        %3125 = vmatpush1.msra.mxu0 0.0
        %3126 = vmatprep.subr.mxu0 0.0
        %3127 = vmatpush1.msra.mxu0 0.0
        %3128 = vmatprep.subr.mxu0 0.0
        %3129 = vmatpush1.msra.mxu0 0.0
        %3130 = vmatprep.subr.mxu0 0.0
        %3131 = vmatpush1.msra.mxu0 0.0
        %3132 = vmatprep.subr.mxu0 0.0
        %3133 = vmatpush1.msra.mxu0 0.0
        %3134 = vmatprep.subr.mxu0 0.0
        %3135 = vmatpush1.msra.mxu0 0.0
        %3136 = vmatprep.subr.mxu0 0.0
        %3137 = vmatpush1.msra.mxu0 0.0
        %3138 = vmatprep.subr.mxu0 0.0
        %3139 = vmatpush1.msra.mxu0 0.0
        %3140 = vmatprep.subr.mxu0 0.0
        %3141 = vmatpush1.msra.mxu0 0.0
        %3142 = vmatprep.subr.mxu0 0.0
        %3143 = vmatpush1.msra.mxu0 0.0
        %3144 = vmatprep.mubr.f32.mxu0 0.0
        %3145 = vmatmul.mubr.f32.gmra.mrb[0].mxu0 %v3075
        %v3146 = vpop.f32.mrb[0].mxu0
        %v3147 = vadd.f32 0.0, %v3146
        %v3148 = vpop.f32.mrb[0].mxu0
        %v3149 = vadd.f32 0.0, %v3148
        %3150 = vmatprep.mubr.f32.mxu0 0.0
        %3151 = vmatmul.mubr.f32.gmra.mrb[0].mxu0 %v3078
        %v3152 = vpop.f32.mrb[0].mxu0
        %v3153 = vadd.f32 0.0, %v3152
        %v3154 = vpop.f32.mrb[0].mxu0
        %v3155 = vadd.f32 0.0, %v3154
        %3156 = vdwg.mxu0
        %v3157 = vadd.f32 %v3055, %v3147
        %v3158 = vadd.f32 %v3056, %v3149
        %v3159 = vadd.f32 %v3057, %v3153
        %v3160 = vadd.f32 %v3058, %v3155
        %3161 = vrot.lane.b32.xlu0 %v2344, 112
        %v3162 = vpop.permute.xlu0 %3161
        %3163 = vrot.lane.b32.xlu0 %v2346, 112
        %v3164 = vpop.permute.xlu0 %3163
        %3165 = vrot.lane.b32.xlu0 %v2345, 112
        %v3166 = vpop.permute.xlu0 %3165
        %3167 = vrot.lane.b32.xlu0 %v2347, 112
        %v3168 = vpop.permute.xlu0 %3167
        %v3169 = vsel %vm870, %v3162, %v3166
        %v3170 = vsel %vm870, %v3164, %v3168
        %v3171 = vsel %vm870, %v3166, %v3162
        %v3172 = vsel %vm870, %v3168, %v3164
        %s3173 = scalar_lea.vmem [#allocation2], 416
        %v3174 = vld [vmem:[%s3173] sm:$0xff]
        %v3175 = vld [vmem:[%s3173 + $0x8] sm:$0xff]
        %v3177 = vsel %vm300, %v3174, 0
        %v3180 = vsel %vm300, %v3175, 0
        %3182 = vmatprep.subr.mxu0 %v3171
        %3183 = vmatpush1.msra.mxu0 %v3169
        %3184 = vmatprep.subr.mxu0 %v3172
        %3185 = vmatpush1.msra.mxu0 %v3170
        %3186 = vmatprep.subr.mxu0 0.0
        %3187 = vmatpush1.msra.mxu0 0.0
        %3188 = vmatprep.subr.mxu0 0.0
        %3189 = vmatpush1.msra.mxu0 0.0
        %3190 = vmatprep.subr.mxu0 0.0
        %3191 = vmatpush1.msra.mxu0 0.0
        %3192 = vmatprep.subr.mxu0 0.0
        %3193 = vmatpush1.msra.mxu0 0.0
        %3194 = vmatprep.subr.mxu0 0.0
        %3195 = vmatpush1.msra.mxu0 0.0
        %3196 = vmatprep.subr.mxu0 0.0
        %3197 = vmatpush1.msra.mxu0 0.0
        %3198 = vmatprep.subr.mxu0 0.0
        %3199 = vmatpush1.msra.mxu0 0.0
        %3200 = vmatprep.subr.mxu0 0.0
        %3201 = vmatpush1.msra.mxu0 0.0
        %3202 = vmatprep.subr.mxu0 0.0
        %3203 = vmatpush1.msra.mxu0 0.0
        %3204 = vmatprep.subr.mxu0 0.0
        %3205 = vmatpush1.msra.mxu0 0.0
        %3206 = vmatprep.subr.mxu0 0.0
        %3207 = vmatpush1.msra.mxu0 0.0
        %3208 = vmatprep.subr.mxu0 0.0
        %3209 = vmatpush1.msra.mxu0 0.0
        %3210 = vmatprep.subr.mxu0 0.0
        %3211 = vmatpush1.msra.mxu0 0.0
        %3212 = vmatprep.subr.mxu0 0.0
        %3213 = vmatpush1.msra.mxu0 0.0
        %3214 = vmatprep.subr.mxu0 0.0
        %3215 = vmatpush1.msra.mxu0 0.0
        %3216 = vmatprep.subr.mxu0 0.0
        %3217 = vmatpush1.msra.mxu0 0.0
        %3218 = vmatprep.subr.mxu0 0.0
        %3219 = vmatpush1.msra.mxu0 0.0
        %3220 = vmatprep.subr.mxu0 0.0
        %3221 = vmatpush1.msra.mxu0 0.0
        %3222 = vmatprep.subr.mxu0 0.0
        %3223 = vmatpush1.msra.mxu0 0.0
        %3224 = vmatprep.subr.mxu0 0.0
        %3225 = vmatpush1.msra.mxu0 0.0
        %3226 = vmatprep.subr.mxu0 0.0
        %3227 = vmatpush1.msra.mxu0 0.0
        %3228 = vmatprep.subr.mxu0 0.0
        %3229 = vmatpush1.msra.mxu0 0.0
        %3230 = vmatprep.subr.mxu0 0.0
        %3231 = vmatpush1.msra.mxu0 0.0
        %3232 = vmatprep.subr.mxu0 0.0
        %3233 = vmatpush1.msra.mxu0 0.0
        %3234 = vmatprep.subr.mxu0 0.0
        %3235 = vmatpush1.msra.mxu0 0.0
        %3236 = vmatprep.subr.mxu0 0.0
        %3237 = vmatpush1.msra.mxu0 0.0
        %3238 = vmatprep.subr.mxu0 0.0
        %3239 = vmatpush1.msra.mxu0 0.0
        %3240 = vmatprep.subr.mxu0 0.0
        %3241 = vmatpush1.msra.mxu0 0.0
        %3242 = vmatprep.subr.mxu0 0.0
        %3243 = vmatpush1.msra.mxu0 0.0
        %3244 = vmatprep.subr.mxu0 0.0
        %3245 = vmatpush1.msra.mxu0 0.0
        %3246 = vmatprep.mubr.f32.mxu0 0.0
        %3247 = vmatmul.mubr.f32.gmra.mrb[0].mxu0 %v3177
        %v3248 = vpop.f32.mrb[0].mxu0
        %v3249 = vadd.f32 0.0, %v3248
        %v3250 = vpop.f32.mrb[0].mxu0
        %v3251 = vadd.f32 0.0, %v3250
        %3252 = vmatprep.mubr.f32.mxu0 0.0
        %3253 = vmatmul.mubr.f32.gmra.mrb[0].mxu0 %v3180
        %v3254 = vpop.f32.mrb[0].mxu0
        %v3255 = vadd.f32 0.0, %v3254
        %v3256 = vpop.f32.mrb[0].mxu0
        %v3257 = vadd.f32 0.0, %v3256
        %3258 = vdwg.mxu0
        %v3259 = vadd.f32 %v3157, %v3249
        %v3260 = vadd.f32 %v3158, %v3251
        %v3261 = vadd.f32 %v3159, %v3255
        %v3262 = vadd.f32 %v3160, %v3257
        %v3263 = vadd.f32 %v3259, %v1269
        %v3264 = vadd.f32 %v3260, %v1270
        %v3265 = vadd.f32 %v3261, %v1271
        %v3266 = vadd.f32 %v3262, %v1272
        %v3267 = vmul.f32 %v3263, 0.5
        %v3268 = vmul.f32 %v3264, 0.5
        %v3269 = vmul.f32 %v3265, 0.5
        %v3270 = vmul.f32 %v3266, 0.5
        %v3271 = vmul.f32 %v3263, 0.70710677
        %v3272 = vmul.f32 %v3264, 0.70710677
        %v3273 = vmul.f32 %v3265, 0.70710677
        %v3274 = vmul.f32 %v3266, 0.70710677
        %vm3275 = vcmp.lt.f32.partialorder %v3271, 0.0
        %vm3276 = vcmp.lt.f32.partialorder %v3272, 0.0
        %vm3277 = vcmp.lt.f32.partialorder %v3273, 0.0
        %vm3278 = vcmp.lt.f32.partialorder %v3274, 0.0
        %v3279 = vsel %vm3275, -1.0, 1.0
        %v3280 = vsel %vm3276, -1.0, 1.0
        %v3281 = vsel %vm3277, -1.0, 1.0
        %v3282 = vsel %vm3278, -1.0, 1.0
        %v3283 = vand.u32 2147483647, %v3271
        %v3284 = vand.u32 2147483647, %v3272
        %v3285 = vand.u32 2147483647, %v3273
        %v3286 = vand.u32 2147483647, %v3274
        %v3287 = vmul.f32 %v3283, 0.3275911
        %v3288 = vmul.f32 %v3284, 0.3275911
        %v3289 = vmul.f32 %v3285, 0.3275911
        %v3290 = vmul.f32 %v3286, 0.3275911
        %v3291 = vadd.f32 %v3287, 1.0
        %v3292 = vadd.f32 %v3288, 1.0
        %v3293 = vadd.f32 %v3289, 1.0
        %v3294 = vadd.f32 %v3290, 1.0
        %v3295 = vrcp.pop %v3291
        %v3296 = vrcp.pop %v3292
        %v3297 = vrcp.pop %v3293
        %v3298 = vrcp.pop %v3294
        %v3299 = vmul.f32 %v3295, 1.0614054
        %v3300 = vmul.f32 %v3296, 1.0614054
        %v3301 = vmul.f32 %v3297, 1.0614054
        %v3302 = vmul.f32 %v3298, 1.0614054
        %v3303 = vadd.f32 %v3299, -1.4531521
        %v3304 = vadd.f32 %v3300, -1.4531521
        %v3305 = vadd.f32 %v3301, -1.4531521
        %v3306 = vadd.f32 %v3302, -1.4531521
        %v3307 = vmul.f32 %v3303, %v3295
        %v3308 = vmul.f32 %v3304, %v3296
        %v3309 = vmul.f32 %v3305, %v3297
        %v3310 = vmul.f32 %v3306, %v3298
        %v3311 = vadd.f32 %v3307, 1.4214138
        %v3312 = vadd.f32 %v3308, 1.4214138
        %v3313 = vadd.f32 %v3309, 1.4214138
        %v3314 = vadd.f32 %v3310, 1.4214138
        %v3315 = vmul.f32 %v3311, %v3295
        %v3316 = vmul.f32 %v3312, %v3296
        %v3317 = vmul.f32 %v3313, %v3297
        %v3318 = vmul.f32 %v3314, %v3298
        %v3319 = vadd.f32 %v3315, -0.28449672
        %v3320 = vadd.f32 %v3316, -0.28449672
        %v3321 = vadd.f32 %v3317, -0.28449672
        %v3322 = vadd.f32 %v3318, -0.28449672
        %v3323 = vmul.f32 %v3319, %v3295
        %v3324 = vmul.f32 %v3320, %v3296
        %v3325 = vmul.f32 %v3321, %v3297
        %v3326 = vmul.f32 %v3322, %v3298
        %v3327 = vadd.f32 %v3323, 0.2548296
        %v3328 = vadd.f32 %v3324, 0.2548296
        %v3329 = vadd.f32 %v3325, 0.2548296
        %v3330 = vadd.f32 %v3326, 0.2548296
        %v3331 = vmul.f32 %v3327, %v3295
        %v3332 = vmul.f32 %v3328, %v3296
        %v3333 = vmul.f32 %v3329, %v3297
        %v3334 = vmul.f32 %v3330, %v3298
        %v3335 = vsub.f32 0.0, %v3283
        %v3336 = vsub.f32 0.0, %v3284
        %v3337 = vsub.f32 0.0, %v3285
        %v3338 = vsub.f32 0.0, %v3286
        %v3339 = vmul.f32 %v3335, %v3283
        %v3340 = vmul.f32 %v3336, %v3284
        %v3341 = vmul.f32 %v3337, %v3285
        %v3342 = vmul.f32 %v3338, %v3286
        %v3343 = vmul.f32 %v3339, 1.442695
        %v3344 = vpow.pop %v3343
        %v3345 = vmul.f32 %v3340, 1.442695
        %v3346 = vpow.pop %v3345
        %v3347 = vmul.f32 %v3341, 1.442695
        %v3348 = vpow.pop %v3347
        %v3349 = vmul.f32 %v3342, 1.442695
        %v3350 = vpow.pop %v3349
        %v3351 = vmul.f32 %v3331, %v3344
        %v3352 = vmul.f32 %v3332, %v3346
        %v3353 = vmul.f32 %v3333, %v3348
        %v3354 = vmul.f32 %v3334, %v3350
        %v3355 = vsub.f32 1.0, %v3351
        %v3356 = vsub.f32 1.0, %v3352
        %v3357 = vsub.f32 1.0, %v3353
        %v3358 = vsub.f32 1.0, %v3354
        %v3359 = vmul.f32 %v3279, %v3355
        %v3360 = vmul.f32 %v3280, %v3356
        %v3361 = vmul.f32 %v3281, %v3357
        %v3362 = vmul.f32 %v3282, %v3358
        %v3363 = vadd.f32 %v3359, 1.0
        %v3364 = vadd.f32 %v3360, 1.0
        %v3365 = vadd.f32 %v3361, 1.0
        %v3366 = vadd.f32 %v3362, 1.0
        %v3367 = vmul.f32 %v3267, %v3363
        %v3368 = vmul.f32 %v3268, %v3364
        %v3369 = vmul.f32 %v3269, %v3365
        %v3370 = vmul.f32 %v3270, %v3366
        %3371 = vrot.lane.b32.xlu0 %v3367, 15
        %v3372 = vpop.permute.xlu0 %3371
        %3373 = vrot.lane.b32.xlu0 %v3369, 15
        %v3374 = vpop.permute.xlu0 %3373
        %3375 = vrot.lane.b32.xlu0 %v3368, 15
        %v3376 = vpop.permute.xlu0 %3375
        %3377 = vrot.lane.b32.xlu0 %v3370, 15
        %v3378 = vpop.permute.xlu0 %3377
        %v3379 = vsel %vm229, %v3372, %v3376
        %v3380 = vsel %vm229, %v3374, %v3378
        %v3381 = vsel %vm229, %v3376, %v3372
        %v3382 = vsel %vm229, %v3378, %v3374
        %3383 = vrot.lane.b32.xlu0 %v3367, 127
        %v3384 = vpop.permute.xlu0 %3383
        %3385 = vrot.lane.b32.xlu0 %v3369, 127
        %v3386 = vpop.permute.xlu0 %3385
        %3387 = vrot.lane.b32.xlu0 %v3368, 127
        %v3388 = vpop.permute.xlu0 %3387
        %3389 = vrot.lane.b32.xlu0 %v3370, 127
        %v3390 = vpop.permute.xlu0 %3389
        %v3391 = vsel %vm242, %v3384, %v3388
        %v3392 = vsel %vm242, %v3386, %v3390
        %v3393 = vsel %vm242, %v3388, %v3384
        %v3394 = vsel %vm242, %v3390, %v3386
        %v3395 = vsel %vm215, %v3381, %v3391
        %v3396 = vsel %vm216, %v3379, %v3393
        %v3397 = vsel %vm215, %v3382, %v3392
        %v3398 = vsel %vm216, %v3380, %v3394
        %3399 = vrot.lane.b32.xlu0 %v3367, 113
        %v3400 = vpop.permute.xlu0 %3399
        %3401 = vrot.lane.b32.xlu0 %v3369, 113
        %v3402 = vpop.permute.xlu0 %3401
        %3403 = vrot.lane.b32.xlu0 %v3368, 113
        %v3404 = vpop.permute.xlu0 %3403
        %3405 = vrot.lane.b32.xlu0 %v3370, 113
        %v3406 = vpop.permute.xlu0 %3405
        %v3407 = vsel %vm259, %v3400, %v3404
        %v3408 = vsel %vm259, %v3402, %v3406
        %v3409 = vsel %vm259, %v3404, %v3400
        %v3410 = vsel %vm259, %v3406, %v3402
        %3411 = vrot.lane.b32.xlu0 %v3367, 1
        %v3412 = vpop.permute.xlu0 %3411
        %3413 = vrot.lane.b32.xlu0 %v3369, 1
        %v3414 = vpop.permute.xlu0 %3413
        %3415 = vrot.lane.b32.xlu0 %v3368, 1
        %v3416 = vpop.permute.xlu0 %3415
        %3417 = vrot.lane.b32.xlu0 %v3370, 1
        %v3418 = vpop.permute.xlu0 %3417
        %v3419 = vsel %vm272, %v3412, %v3416
        %v3420 = vsel %vm272, %v3414, %v3418
        %v3421 = vsel %vm272, %v3416, %v3412
        %v3422 = vsel %vm272, %v3418, %v3414
        %v3423 = vsel %vm213, %v3407, %v3421
        %v3424 = vsel %vm214, %v3409, %v3419
        %v3425 = vsel %vm213, %v3408, %v3422
        %v3426 = vsel %vm214, %v3410, %v3420
        %s3427 = scalar_lea.vmem %s2, 96
        %v3428 = vld [vmem:[%s3427] sm:$0xff]
        %v3429 = vld [vmem:[%s3427 + $0x8] sm:$0xff]
        %v3430 = vld [vmem:[%s3427 + $0x10] sm:$0xff]
        %v3431 = vld [vmem:[%s3427 + $0x18] sm:$0xff]
        %3432 = vrot.lane.b32.xlu0 %v3423, 16
        %v3433 = vpop.permute.xlu0 %3432
        %3434 = vrot.lane.b32.xlu0 %v3425, 16
        %v3435 = vpop.permute.xlu0 %3434
        %3436 = vrot.lane.b32.xlu0 %v3424, 16
        %v3437 = vpop.permute.xlu0 %3436
        %3438 = vrot.lane.b32.xlu0 %v3426, 16
        %v3439 = vpop.permute.xlu0 %3438
        %v3440 = vsel %vm293, %v3433, %v3437
        %v3441 = vsel %vm293, %v3435, %v3439
        %v3442 = vsel %vm293, %v3437, %v3433
        %v3443 = vsel %vm293, %v3439, %v3435
        %s3444 = scalar_lea.vmem [#allocation2], 432
        %v3445 = vld [vmem:[%s3444] sm:$0xff]
        %v3446 = vld [vmem:[%s3444 + $0x8] sm:$0xff]
        %v3448 = vsel %vm300, %v3445, 0
        %v3451 = vsel %vm300, %v3446, 0
        %3453 = vmatprep.subr.mxu0 %v3440
        %3454 = vmatpush1.msra.mxu0 %v3442
        %3455 = vmatprep.subr.mxu0 %v3441
        %3456 = vmatpush1.msra.mxu0 %v3443
        %3457 = vmatprep.subr.mxu0 0.0
        %3458 = vmatpush1.msra.mxu0 0.0
        %3459 = vmatprep.subr.mxu0 0.0
        %3460 = vmatpush1.msra.mxu0 0.0
        %3461 = vmatprep.subr.mxu0 0.0
        %3462 = vmatpush1.msra.mxu0 0.0
        %3463 = vmatprep.subr.mxu0 0.0
        %3464 = vmatpush1.msra.mxu0 0.0
        %3465 = vmatprep.subr.mxu0 0.0
        %3466 = vmatpush1.msra.mxu0 0.0
        %3467 = vmatprep.subr.mxu0 0.0
        %3468 = vmatpush1.msra.mxu0 0.0
        %3469 = vmatprep.subr.mxu0 0.0
        %3470 = vmatpush1.msra.mxu0 0.0
        %3471 = vmatprep.subr.mxu0 0.0
        %3472 = vmatpush1.msra.mxu0 0.0
        %3473 = vmatprep.subr.mxu0 0.0
        %3474 = vmatpush1.msra.mxu0 0.0
        %3475 = vmatprep.subr.mxu0 0.0
        %3476 = vmatpush1.msra.mxu0 0.0
        %3477 = vmatprep.subr.mxu0 0.0
        %3478 = vmatpush1.msra.mxu0 0.0
        %3479 = vmatprep.subr.mxu0 0.0
        %3480 = vmatpush1.msra.mxu0 0.0
        %3481 = vmatprep.subr.mxu0 0.0
        %3482 = vmatpush1.msra.mxu0 0.0
        %3483 = vmatprep.subr.mxu0 0.0
        %3484 = vmatpush1.msra.mxu0 0.0
        %3485 = vmatprep.subr.mxu0 0.0
        %3486 = vmatpush1.msra.mxu0 0.0
        %3487 = vmatprep.subr.mxu0 0.0
        %3488 = vmatpush1.msra.mxu0 0.0
        %3489 = vmatprep.subr.mxu0 0.0
        %3490 = vmatpush1.msra.mxu0 0.0
        %3491 = vmatprep.subr.mxu0 0.0
        %3492 = vmatpush1.msra.mxu0 0.0
        %3493 = vmatprep.subr.mxu0 0.0
        %3494 = vmatpush1.msra.mxu0 0.0
        %3495 = vmatprep.subr.mxu0 0.0
        %3496 = vmatpush1.msra.mxu0 0.0
        %3497 = vmatprep.subr.mxu0 0.0
        %3498 = vmatpush1.msra.mxu0 0.0
        %3499 = vmatprep.subr.mxu0 0.0
        %3500 = vmatpush1.msra.mxu0 0.0
        %3501 = vmatprep.subr.mxu0 0.0
        %3502 = vmatpush1.msra.mxu0 0.0
        %3503 = vmatprep.subr.mxu0 0.0
        %3504 = vmatpush1.msra.mxu0 0.0
        %3505 = vmatprep.subr.mxu0 0.0
        %3506 = vmatpush1.msra.mxu0 0.0
        %3507 = vmatprep.subr.mxu0 0.0
        %3508 = vmatpush1.msra.mxu0 0.0
        %3509 = vmatprep.subr.mxu0 0.0
        %3510 = vmatpush1.msra.mxu0 0.0
        %3511 = vmatprep.subr.mxu0 0.0
        %3512 = vmatpush1.msra.mxu0 0.0
        %3513 = vmatprep.subr.mxu0 0.0
        %3514 = vmatpush1.msra.mxu0 0.0
        %3515 = vmatprep.subr.mxu0 0.0
        %3516 = vmatpush1.msra.mxu0 0.0
        %3517 = vmatprep.mubr.f32.mxu0 0.0
        %3518 = vmatmul.mubr.f32.gmra.mrb[0].mxu0 %v3448
        %v3519 = vpop.f32.mrb[0].mxu0
        %v3520 = vadd.f32 0.0, %v3519
        %v3521 = vpop.f32.mrb[0].mxu0
        %v3522 = vadd.f32 0.0, %v3521
        %3523 = vmatprep.mubr.f32.mxu0 0.0
        %3524 = vmatmul.mubr.f32.gmra.mrb[0].mxu0 %v3451
        %v3525 = vpop.f32.mrb[0].mxu0
        %v3526 = vadd.f32 0.0, %v3525
        %v3527 = vpop.f32.mrb[0].mxu0
        %v3528 = vadd.f32 0.0, %v3527
        %3529 = vdwg.mxu0
        %v3530 = vadd.f32 %v3428, %v3520
        %v3531 = vadd.f32 %v3429, %v3522
        %v3532 = vadd.f32 %v3430, %v3526
        %v3533 = vadd.f32 %v3431, %v3528
        %3534 = vrot.lane.b32.xlu0 %v3367, 16
        %v3535 = vpop.permute.xlu0 %3534
        %3536 = vrot.lane.b32.xlu0 %v3369, 16
        %v3537 = vpop.permute.xlu0 %3536
        %3538 = vrot.lane.b32.xlu0 %v3368, 16
        %v3539 = vpop.permute.xlu0 %3538
        %3540 = vrot.lane.b32.xlu0 %v3370, 16
        %v3541 = vpop.permute.xlu0 %3540
        %v3542 = vsel %vm293, %v3535, %v3539
        %v3543 = vsel %vm293, %v3537, %v3541
        %v3544 = vsel %vm293, %v3539, %v3535
        %v3545 = vsel %vm293, %v3541, %v3537
        %s3546 = scalar_lea.vmem [#allocation2], 448
        %v3547 = vld [vmem:[%s3546] sm:$0xff]
        %v3548 = vld [vmem:[%s3546 + $0x8] sm:$0xff]
        %v3550 = vsel %vm300, %v3547, 0
        %v3553 = vsel %vm300, %v3548, 0
        %3555 = vmatprep.subr.mxu0 %v3542
        %3556 = vmatpush1.msra.mxu0 %v3544
        %3557 = vmatprep.subr.mxu0 %v3543
        %3558 = vmatpush1.msra.mxu0 %v3545
        %3559 = vmatprep.subr.mxu0 0.0
        %3560 = vmatpush1.msra.mxu0 0.0
        %3561 = vmatprep.subr.mxu0 0.0
        %3562 = vmatpush1.msra.mxu0 0.0
        %3563 = vmatprep.subr.mxu0 0.0
        %3564 = vmatpush1.msra.mxu0 0.0
        %3565 = vmatprep.subr.mxu0 0.0
        %3566 = vmatpush1.msra.mxu0 0.0
        %3567 = vmatprep.subr.mxu0 0.0
        %3568 = vmatpush1.msra.mxu0 0.0
        %3569 = vmatprep.subr.mxu0 0.0
        %3570 = vmatpush1.msra.mxu0 0.0
        %3571 = vmatprep.subr.mxu0 0.0
        %3572 = vmatpush1.msra.mxu0 0.0
        %3573 = vmatprep.subr.mxu0 0.0
        %3574 = vmatpush1.msra.mxu0 0.0
        %3575 = vmatprep.subr.mxu0 0.0
        %3576 = vmatpush1.msra.mxu0 0.0
        %3577 = vmatprep.subr.mxu0 0.0
        %3578 = vmatpush1.msra.mxu0 0.0
        %3579 = vmatprep.subr.mxu0 0.0
        %3580 = vmatpush1.msra.mxu0 0.0
        %3581 = vmatprep.subr.mxu0 0.0
        %3582 = vmatpush1.msra.mxu0 0.0
        %3583 = vmatprep.subr.mxu0 0.0
        %3584 = vmatpush1.msra.mxu0 0.0
        %3585 = vmatprep.subr.mxu0 0.0
        %3586 = vmatpush1.msra.mxu0 0.0
        %3587 = vmatprep.subr.mxu0 0.0
        %3588 = vmatpush1.msra.mxu0 0.0
        %3589 = vmatprep.subr.mxu0 0.0
        %3590 = vmatpush1.msra.mxu0 0.0
        %3591 = vmatprep.subr.mxu0 0.0
        %3592 = vmatpush1.msra.mxu0 0.0
        %3593 = vmatprep.subr.mxu0 0.0
        %3594 = vmatpush1.msra.mxu0 0.0
        %3595 = vmatprep.subr.mxu0 0.0
        %3596 = vmatpush1.msra.mxu0 0.0
        %3597 = vmatprep.subr.mxu0 0.0
        %3598 = vmatpush1.msra.mxu0 0.0
        %3599 = vmatprep.subr.mxu0 0.0
        %3600 = vmatpush1.msra.mxu0 0.0
        %3601 = vmatprep.subr.mxu0 0.0
        %3602 = vmatpush1.msra.mxu0 0.0
        %3603 = vmatprep.subr.mxu0 0.0
        %3604 = vmatpush1.msra.mxu0 0.0
        %3605 = vmatprep.subr.mxu0 0.0
        %3606 = vmatpush1.msra.mxu0 0.0
        %3607 = vmatprep.subr.mxu0 0.0
        %3608 = vmatpush1.msra.mxu0 0.0
        %3609 = vmatprep.subr.mxu0 0.0
        %3610 = vmatpush1.msra.mxu0 0.0
        %3611 = vmatprep.subr.mxu0 0.0
        %3612 = vmatpush1.msra.mxu0 0.0
        %3613 = vmatprep.subr.mxu0 0.0
        %3614 = vmatpush1.msra.mxu0 0.0
        %3615 = vmatprep.subr.mxu0 0.0
        %3616 = vmatpush1.msra.mxu0 0.0
        %3617 = vmatprep.subr.mxu0 0.0
        %3618 = vmatpush1.msra.mxu0 0.0
        %3619 = vmatprep.mubr.f32.mxu0 0.0
        %3620 = vmatmul.mubr.f32.gmra.mrb[0].mxu0 %v3550
        %v3621 = vpop.f32.mrb[0].mxu0
        %v3622 = vadd.f32 0.0, %v3621
        %v3623 = vpop.f32.mrb[0].mxu0
        %v3624 = vadd.f32 0.0, %v3623
        %3625 = vmatprep.mubr.f32.mxu0 0.0
        %3626 = vmatmul.mubr.f32.gmra.mrb[0].mxu0 %v3553
        %v3627 = vpop.f32.mrb[0].mxu0
        %v3628 = vadd.f32 0.0, %v3627
        %v3629 = vpop.f32.mrb[0].mxu0
        %v3630 = vadd.f32 0.0, %v3629
        %3631 = vdwg.mxu0
        %v3632 = vadd.f32 %v3530, %v3622
        %v3633 = vadd.f32 %v3531, %v3624
        %v3634 = vadd.f32 %v3532, %v3628
        %v3635 = vadd.f32 %v3533, %v3630
        %3636 = vrot.lane.b32.xlu0 %v3395, 16
        %v3637 = vpop.permute.xlu0 %3636
        %3638 = vrot.lane.b32.xlu0 %v3397, 16
        %v3639 = vpop.permute.xlu0 %3638
        %3640 = vrot.lane.b32.xlu0 %v3396, 16
        %v3641 = vpop.permute.xlu0 %3640
        %3642 = vrot.lane.b32.xlu0 %v3398, 16
        %v3643 = vpop.permute.xlu0 %3642
        %v3644 = vsel %vm293, %v3637, %v3641
        %v3645 = vsel %vm293, %v3639, %v3643
        %v3646 = vsel %vm293, %v3641, %v3637
        %v3647 = vsel %vm293, %v3643, %v3639
        %s3648 = scalar_lea.vmem [#allocation2], 464
        %v3649 = vld [vmem:[%s3648] sm:$0xff]
        %v3650 = vld [vmem:[%s3648 + $0x8] sm:$0xff]
        %v3652 = vsel %vm300, %v3649, 0
        %v3655 = vsel %vm300, %v3650, 0
        %3657 = vmatprep.subr.mxu0 %v3644
        %3658 = vmatpush1.msra.mxu0 %v3646
        %3659 = vmatprep.subr.mxu0 %v3645
        %3660 = vmatpush1.msra.mxu0 %v3647
        %3661 = vmatprep.subr.mxu0 0.0
        %3662 = vmatpush1.msra.mxu0 0.0
        %3663 = vmatprep.subr.mxu0 0.0
        %3664 = vmatpush1.msra.mxu0 0.0
        %3665 = vmatprep.subr.mxu0 0.0
        %3666 = vmatpush1.msra.mxu0 0.0
        %3667 = vmatprep.subr.mxu0 0.0
        %3668 = vmatpush1.msra.mxu0 0.0
        %3669 = vmatprep.subr.mxu0 0.0
        %3670 = vmatpush1.msra.mxu0 0.0
        %3671 = vmatprep.subr.mxu0 0.0
        %3672 = vmatpush1.msra.mxu0 0.0
        %3673 = vmatprep.subr.mxu0 0.0
        %3674 = vmatpush1.msra.mxu0 0.0
        %3675 = vmatprep.subr.mxu0 0.0
        %3676 = vmatpush1.msra.mxu0 0.0
        %3677 = vmatprep.subr.mxu0 0.0
        %3678 = vmatpush1.msra.mxu0 0.0
        %3679 = vmatprep.subr.mxu0 0.0
        %3680 = vmatpush1.msra.mxu0 0.0
        %3681 = vmatprep.subr.mxu0 0.0
        %3682 = vmatpush1.msra.mxu0 0.0
        %3683 = vmatprep.subr.mxu0 0.0
        %3684 = vmatpush1.msra.mxu0 0.0
        %3685 = vmatprep.subr.mxu0 0.0
        %3686 = vmatpush1.msra.mxu0 0.0
        %3687 = vmatprep.subr.mxu0 0.0
        %3688 = vmatpush1.msra.mxu0 0.0
        %3689 = vmatprep.subr.mxu0 0.0
        %3690 = vmatpush1.msra.mxu0 0.0
        %3691 = vmatprep.subr.mxu0 0.0
        %3692 = vmatpush1.msra.mxu0 0.0
        %3693 = vmatprep.subr.mxu0 0.0
        %3694 = vmatpush1.msra.mxu0 0.0
        %3695 = vmatprep.subr.mxu0 0.0
        %3696 = vmatpush1.msra.mxu0 0.0
        %3697 = vmatprep.subr.mxu0 0.0
        %3698 = vmatpush1.msra.mxu0 0.0
        %3699 = vmatprep.subr.mxu0 0.0
        %3700 = vmatpush1.msra.mxu0 0.0
        %3701 = vmatprep.subr.mxu0 0.0
        %3702 = vmatpush1.msra.mxu0 0.0
        %3703 = vmatprep.subr.mxu0 0.0
        %3704 = vmatpush1.msra.mxu0 0.0
        %3705 = vmatprep.subr.mxu0 0.0
        %3706 = vmatpush1.msra.mxu0 0.0
        %3707 = vmatprep.subr.mxu0 0.0
        %3708 = vmatpush1.msra.mxu0 0.0
        %3709 = vmatprep.subr.mxu0 0.0
        %3710 = vmatpush1.msra.mxu0 0.0
        %3711 = vmatprep.subr.mxu0 0.0
        %3712 = vmatpush1.msra.mxu0 0.0
        %3713 = vmatprep.subr.mxu0 0.0
        %3714 = vmatpush1.msra.mxu0 0.0
        %3715 = vmatprep.subr.mxu0 0.0
        %3716 = vmatpush1.msra.mxu0 0.0
        %3717 = vmatprep.subr.mxu0 0.0
        %3718 = vmatpush1.msra.mxu0 0.0
        %3719 = vmatprep.subr.mxu0 0.0
        %3720 = vmatpush1.msra.mxu0 0.0
        %3721 = vmatprep.mubr.f32.mxu0 0.0
        %3722 = vmatmul.mubr.f32.gmra.mrb[0].mxu0 %v3652
        %v3723 = vpop.f32.mrb[0].mxu0
        %v3724 = vadd.f32 0.0, %v3723
        %v3725 = vpop.f32.mrb[0].mxu0
        %v3726 = vadd.f32 0.0, %v3725
        %3727 = vmatprep.mubr.f32.mxu0 0.0
        %3728 = vmatmul.mubr.f32.gmra.mrb[0].mxu0 %v3655
        %v3729 = vpop.f32.mrb[0].mxu0
        %v3730 = vadd.f32 0.0, %v3729
        %v3731 = vpop.f32.mrb[0].mxu0
        %v3732 = vadd.f32 0.0, %v3731
        %3733 = vdwg.mxu0
        %v3734 = vadd.f32 %v3632, %v3724
        %v3735 = vadd.f32 %v3633, %v3726
        %v3736 = vadd.f32 %v3634, %v3730
        %v3737 = vadd.f32 %v3635, %v3732
        %s3738 = scalar_lea.vmem [#allocation2], 480
        %v3739 = vld [vmem:[%s3738] sm:$0xff]
        %v3740 = vld [vmem:[%s3738 + $0x8] sm:$0xff]
        %v3742 = vsel %vm300, %v3739, 0
        %v3745 = vsel %vm300, %v3740, 0
        %3747 = vmatprep.subr.mxu0 %v3424
        %3748 = vmatpush1.msra.mxu0 %v3423
        %3749 = vmatprep.subr.mxu0 %v3426
        %3750 = vmatpush1.msra.mxu0 %v3425
        %3751 = vmatprep.subr.mxu0 0.0
        %3752 = vmatpush1.msra.mxu0 0.0
        %3753 = vmatprep.subr.mxu0 0.0
        %3754 = vmatpush1.msra.mxu0 0.0
        %3755 = vmatprep.subr.mxu0 0.0
        %3756 = vmatpush1.msra.mxu0 0.0
        %3757 = vmatprep.subr.mxu0 0.0
        %3758 = vmatpush1.msra.mxu0 0.0
        %3759 = vmatprep.subr.mxu0 0.0
        %3760 = vmatpush1.msra.mxu0 0.0
        %3761 = vmatprep.subr.mxu0 0.0
        %3762 = vmatpush1.msra.mxu0 0.0
        %3763 = vmatprep.subr.mxu0 0.0
        %3764 = vmatpush1.msra.mxu0 0.0
        %3765 = vmatprep.subr.mxu0 0.0
        %3766 = vmatpush1.msra.mxu0 0.0
        %3767 = vmatprep.subr.mxu0 0.0
        %3768 = vmatpush1.msra.mxu0 0.0
        %3769 = vmatprep.subr.mxu0 0.0
        %3770 = vmatpush1.msra.mxu0 0.0
        %3771 = vmatprep.subr.mxu0 0.0
        %3772 = vmatpush1.msra.mxu0 0.0
        %3773 = vmatprep.subr.mxu0 0.0
        %3774 = vmatpush1.msra.mxu0 0.0
        %3775 = vmatprep.subr.mxu0 0.0
        %3776 = vmatpush1.msra.mxu0 0.0
        %3777 = vmatprep.subr.mxu0 0.0
        %3778 = vmatpush1.msra.mxu0 0.0
        %3779 = vmatprep.subr.mxu0 0.0
        %3780 = vmatpush1.msra.mxu0 0.0
        %3781 = vmatprep.subr.mxu0 0.0
        %3782 = vmatpush1.msra.mxu0 0.0
        %3783 = vmatprep.subr.mxu0 0.0
        %3784 = vmatpush1.msra.mxu0 0.0
        %3785 = vmatprep.subr.mxu0 0.0
        %3786 = vmatpush1.msra.mxu0 0.0
        %3787 = vmatprep.subr.mxu0 0.0
        %3788 = vmatpush1.msra.mxu0 0.0
        %3789 = vmatprep.subr.mxu0 0.0
        %3790 = vmatpush1.msra.mxu0 0.0
        %3791 = vmatprep.subr.mxu0 0.0
        %3792 = vmatpush1.msra.mxu0 0.0
        %3793 = vmatprep.subr.mxu0 0.0
        %3794 = vmatpush1.msra.mxu0 0.0
        %3795 = vmatprep.subr.mxu0 0.0
        %3796 = vmatpush1.msra.mxu0 0.0
        %3797 = vmatprep.subr.mxu0 0.0
        %3798 = vmatpush1.msra.mxu0 0.0
        %3799 = vmatprep.subr.mxu0 0.0
        %3800 = vmatpush1.msra.mxu0 0.0
        %3801 = vmatprep.subr.mxu0 0.0
        %3802 = vmatpush1.msra.mxu0 0.0
        %3803 = vmatprep.subr.mxu0 0.0
        %3804 = vmatpush1.msra.mxu0 0.0
        %3805 = vmatprep.subr.mxu0 0.0
        %3806 = vmatpush1.msra.mxu0 0.0
        %3807 = vmatprep.subr.mxu0 0.0
        %3808 = vmatpush1.msra.mxu0 0.0
        %3809 = vmatprep.subr.mxu0 0.0
        %3810 = vmatpush1.msra.mxu0 0.0
        %3811 = vmatprep.mubr.f32.mxu0 0.0
        %3812 = vmatmul.mubr.f32.gmra.mrb[0].mxu0 %v3742
        %v3813 = vpop.f32.mrb[0].mxu0
        %v3814 = vadd.f32 0.0, %v3813
        %v3815 = vpop.f32.mrb[0].mxu0
        %v3816 = vadd.f32 0.0, %v3815
        %3817 = vmatprep.mubr.f32.mxu0 0.0
        %3818 = vmatmul.mubr.f32.gmra.mrb[0].mxu0 %v3745
        %v3819 = vpop.f32.mrb[0].mxu0
        %v3820 = vadd.f32 0.0, %v3819
        %v3821 = vpop.f32.mrb[0].mxu0
        %v3822 = vadd.f32 0.0, %v3821
        %3823 = vdwg.mxu0
        %v3824 = vadd.f32 %v3734, %v3814
        %v3825 = vadd.f32 %v3735, %v3816
        %v3826 = vadd.f32 %v3736, %v3820
        %v3827 = vadd.f32 %v3737, %v3822
        %s3828 = scalar_lea.vmem [#allocation2], 496
        %v3829 = vld [vmem:[%s3828] sm:$0xff]
        %v3830 = vld [vmem:[%s3828 + $0x8] sm:$0xff]
        %v3832 = vsel %vm300, %v3829, 0
        %v3835 = vsel %vm300, %v3830, 0
        %3837 = vmatprep.subr.mxu0 %v3368
        %3838 = vmatpush1.msra.mxu0 %v3367
        %3839 = vmatprep.subr.mxu0 %v3370
        %3840 = vmatpush1.msra.mxu0 %v3369
        %3841 = vmatprep.subr.mxu0 0.0
        %3842 = vmatpush1.msra.mxu0 0.0
        %3843 = vmatprep.subr.mxu0 0.0
        %3844 = vmatpush1.msra.mxu0 0.0
        %3845 = vmatprep.subr.mxu0 0.0
        %3846 = vmatpush1.msra.mxu0 0.0
        %3847 = vmatprep.subr.mxu0 0.0
        %3848 = vmatpush1.msra.mxu0 0.0
        %3849 = vmatprep.subr.mxu0 0.0
        %3850 = vmatpush1.msra.mxu0 0.0
        %3851 = vmatprep.subr.mxu0 0.0
        %3852 = vmatpush1.msra.mxu0 0.0
        %3853 = vmatprep.subr.mxu0 0.0
        %3854 = vmatpush1.msra.mxu0 0.0
        %3855 = vmatprep.subr.mxu0 0.0
        %3856 = vmatpush1.msra.mxu0 0.0
        %3857 = vmatprep.subr.mxu0 0.0
        %3858 = vmatpush1.msra.mxu0 0.0
        %3859 = vmatprep.subr.mxu0 0.0
        %3860 = vmatpush1.msra.mxu0 0.0
        %3861 = vmatprep.subr.mxu0 0.0
        %3862 = vmatpush1.msra.mxu0 0.0
        %3863 = vmatprep.subr.mxu0 0.0
        %3864 = vmatpush1.msra.mxu0 0.0
        %3865 = vmatprep.subr.mxu0 0.0
        %3866 = vmatpush1.msra.mxu0 0.0
        %3867 = vmatprep.subr.mxu0 0.0
        %3868 = vmatpush1.msra.mxu0 0.0
        %3869 = vmatprep.subr.mxu0 0.0
        %3870 = vmatpush1.msra.mxu0 0.0
        %3871 = vmatprep.subr.mxu0 0.0
        %3872 = vmatpush1.msra.mxu0 0.0
        %3873 = vmatprep.subr.mxu0 0.0
        %3874 = vmatpush1.msra.mxu0 0.0
        %3875 = vmatprep.subr.mxu0 0.0
        %3876 = vmatpush1.msra.mxu0 0.0
        %3877 = vmatprep.subr.mxu0 0.0
        %3878 = vmatpush1.msra.mxu0 0.0
        %3879 = vmatprep.subr.mxu0 0.0
        %3880 = vmatpush1.msra.mxu0 0.0
        %3881 = vmatprep.subr.mxu0 0.0
        %3882 = vmatpush1.msra.mxu0 0.0
        %3883 = vmatprep.subr.mxu0 0.0
        %3884 = vmatpush1.msra.mxu0 0.0
        %3885 = vmatprep.subr.mxu0 0.0
        %3886 = vmatpush1.msra.mxu0 0.0
        %3887 = vmatprep.subr.mxu0 0.0
        %3888 = vmatpush1.msra.mxu0 0.0
        %3889 = vmatprep.subr.mxu0 0.0
        %3890 = vmatpush1.msra.mxu0 0.0
        %3891 = vmatprep.subr.mxu0 0.0
        %3892 = vmatpush1.msra.mxu0 0.0
        %3893 = vmatprep.subr.mxu0 0.0
        %3894 = vmatpush1.msra.mxu0 0.0
        %3895 = vmatprep.subr.mxu0 0.0
        %3896 = vmatpush1.msra.mxu0 0.0
        %3897 = vmatprep.subr.mxu0 0.0
        %3898 = vmatpush1.msra.mxu0 0.0
        %3899 = vmatprep.subr.mxu0 0.0
        %3900 = vmatpush1.msra.mxu0 0.0
        %3901 = vmatprep.mubr.f32.mxu0 0.0
        %3902 = vmatmul.mubr.f32.gmra.mrb[0].mxu0 %v3832
        %v3903 = vpop.f32.mrb[0].mxu0
        %v3904 = vadd.f32 0.0, %v3903
        %v3905 = vpop.f32.mrb[0].mxu0
        %v3906 = vadd.f32 0.0, %v3905
        %3907 = vmatprep.mubr.f32.mxu0 0.0
        %3908 = vmatmul.mubr.f32.gmra.mrb[0].mxu0 %v3835
        %v3909 = vpop.f32.mrb[0].mxu0
        %v3910 = vadd.f32 0.0, %v3909
        %v3911 = vpop.f32.mrb[0].mxu0
        %v3912 = vadd.f32 0.0, %v3911
        %3913 = vdwg.mxu0
        %v3914 = vadd.f32 %v3824, %v3904
        %v3915 = vadd.f32 %v3825, %v3906
        %v3916 = vadd.f32 %v3826, %v3910
        %v3917 = vadd.f32 %v3827, %v3912
        %s3918 = scalar_lea.vmem [#allocation2], 512
        %v3919 = vld [vmem:[%s3918] sm:$0xff]
        %v3920 = vld [vmem:[%s3918 + $0x8] sm:$0xff]
        %v3922 = vsel %vm300, %v3919, 0
        %v3925 = vsel %vm300, %v3920, 0
        %3927 = vmatprep.subr.mxu0 %v3396
        %3928 = vmatpush1.msra.mxu0 %v3395
        %3929 = vmatprep.subr.mxu0 %v3398
        %3930 = vmatpush1.msra.mxu0 %v3397
        %3931 = vmatprep.subr.mxu0 0.0
        %3932 = vmatpush1.msra.mxu0 0.0
        %3933 = vmatprep.subr.mxu0 0.0
        %3934 = vmatpush1.msra.mxu0 0.0
        %3935 = vmatprep.subr.mxu0 0.0
        %3936 = vmatpush1.msra.mxu0 0.0
        %3937 = vmatprep.subr.mxu0 0.0
        %3938 = vmatpush1.msra.mxu0 0.0
        %3939 = vmatprep.subr.mxu0 0.0
        %3940 = vmatpush1.msra.mxu0 0.0
        %3941 = vmatprep.subr.mxu0 0.0
        %3942 = vmatpush1.msra.mxu0 0.0
        %3943 = vmatprep.subr.mxu0 0.0
        %3944 = vmatpush1.msra.mxu0 0.0
        %3945 = vmatprep.subr.mxu0 0.0
        %3946 = vmatpush1.msra.mxu0 0.0
        %3947 = vmatprep.subr.mxu0 0.0
        %3948 = vmatpush1.msra.mxu0 0.0
        %3949 = vmatprep.subr.mxu0 0.0
        %3950 = vmatpush1.msra.mxu0 0.0
        %3951 = vmatprep.subr.mxu0 0.0
        %3952 = vmatpush1.msra.mxu0 0.0
        %3953 = vmatprep.subr.mxu0 0.0
        %3954 = vmatpush1.msra.mxu0 0.0
        %3955 = vmatprep.subr.mxu0 0.0
        %3956 = vmatpush1.msra.mxu0 0.0
        %3957 = vmatprep.subr.mxu0 0.0
        %3958 = vmatpush1.msra.mxu0 0.0
        %3959 = vmatprep.subr.mxu0 0.0
        %3960 = vmatpush1.msra.mxu0 0.0
        %3961 = vmatprep.subr.mxu0 0.0
        %3962 = vmatpush1.msra.mxu0 0.0
        %3963 = vmatprep.subr.mxu0 0.0
        %3964 = vmatpush1.msra.mxu0 0.0
        %3965 = vmatprep.subr.mxu0 0.0
        %3966 = vmatpush1.msra.mxu0 0.0
        %3967 = vmatprep.subr.mxu0 0.0
        %3968 = vmatpush1.msra.mxu0 0.0
        %3969 = vmatprep.subr.mxu0 0.0
        %3970 = vmatpush1.msra.mxu0 0.0
        %3971 = vmatprep.subr.mxu0 0.0
        %3972 = vmatpush1.msra.mxu0 0.0
        %3973 = vmatprep.subr.mxu0 0.0
        %3974 = vmatpush1.msra.mxu0 0.0
        %3975 = vmatprep.subr.mxu0 0.0
        %3976 = vmatpush1.msra.mxu0 0.0
        %3977 = vmatprep.subr.mxu0 0.0
        %3978 = vmatpush1.msra.mxu0 0.0
        %3979 = vmatprep.subr.mxu0 0.0
        %3980 = vmatpush1.msra.mxu0 0.0
        %3981 = vmatprep.subr.mxu0 0.0
        %3982 = vmatpush1.msra.mxu0 0.0
        %3983 = vmatprep.subr.mxu0 0.0
        %3984 = vmatpush1.msra.mxu0 0.0
        %3985 = vmatprep.subr.mxu0 0.0
        %3986 = vmatpush1.msra.mxu0 0.0
        %3987 = vmatprep.subr.mxu0 0.0
        %3988 = vmatpush1.msra.mxu0 0.0
        %3989 = vmatprep.subr.mxu0 0.0
        %3990 = vmatpush1.msra.mxu0 0.0
        %3991 = vmatprep.mubr.f32.mxu0 0.0
        %3992 = vmatmul.mubr.f32.gmra.mrb[0].mxu0 %v3922
        %v3993 = vpop.f32.mrb[0].mxu0
        %v3994 = vadd.f32 0.0, %v3993
        %v3995 = vpop.f32.mrb[0].mxu0
        %v3996 = vadd.f32 0.0, %v3995
        %3997 = vmatprep.mubr.f32.mxu0 0.0
        %3998 = vmatmul.mubr.f32.gmra.mrb[0].mxu0 %v3925
        %v3999 = vpop.f32.mrb[0].mxu0
        %v4000 = vadd.f32 0.0, %v3999
        %v4001 = vpop.f32.mrb[0].mxu0
        %v4002 = vadd.f32 0.0, %v4001
        %4003 = vdwg.mxu0
        %v4004 = vadd.f32 %v3914, %v3994
        %v4005 = vadd.f32 %v3915, %v3996
        %v4006 = vadd.f32 %v3916, %v4000
        %v4007 = vadd.f32 %v3917, %v4002
        %4008 = vrot.lane.b32.xlu0 %v3423, 112
        %v4009 = vpop.permute.xlu0 %4008
        %4010 = vrot.lane.b32.xlu0 %v3425, 112
        %v4011 = vpop.permute.xlu0 %4010
        %4012 = vrot.lane.b32.xlu0 %v3424, 112
        %v4013 = vpop.permute.xlu0 %4012
        %4014 = vrot.lane.b32.xlu0 %v3426, 112
        %v4015 = vpop.permute.xlu0 %4014
        %v4016 = vsel %vm870, %v4009, %v4013
        %v4017 = vsel %vm870, %v4011, %v4015
        %v4018 = vsel %vm870, %v4013, %v4009
        %v4019 = vsel %vm870, %v4015, %v4011
        %s4020 = scalar_lea.vmem [#allocation2], 528
        %v4021 = vld [vmem:[%s4020] sm:$0xff]
        %v4022 = vld [vmem:[%s4020 + $0x8] sm:$0xff]
        %v4024 = vsel %vm300, %v4021, 0
        %v4027 = vsel %vm300, %v4022, 0
        %4029 = vmatprep.subr.mxu0 %v4018
        %4030 = vmatpush1.msra.mxu0 %v4016
        %4031 = vmatprep.subr.mxu0 %v4019
        %4032 = vmatpush1.msra.mxu0 %v4017
        %4033 = vmatprep.subr.mxu0 0.0
        %4034 = vmatpush1.msra.mxu0 0.0
        %4035 = vmatprep.subr.mxu0 0.0
        %4036 = vmatpush1.msra.mxu0 0.0
        %4037 = vmatprep.subr.mxu0 0.0
        %4038 = vmatpush1.msra.mxu0 0.0
        %4039 = vmatprep.subr.mxu0 0.0
        %4040 = vmatpush1.msra.mxu0 0.0
        %4041 = vmatprep.subr.mxu0 0.0
        %4042 = vmatpush1.msra.mxu0 0.0
        %4043 = vmatprep.subr.mxu0 0.0
        %4044 = vmatpush1.msra.mxu0 0.0
        %4045 = vmatprep.subr.mxu0 0.0
        %4046 = vmatpush1.msra.mxu0 0.0
        %4047 = vmatprep.subr.mxu0 0.0
        %4048 = vmatpush1.msra.mxu0 0.0
        %4049 = vmatprep.subr.mxu0 0.0
        %4050 = vmatpush1.msra.mxu0 0.0
        %4051 = vmatprep.subr.mxu0 0.0
        %4052 = vmatpush1.msra.mxu0 0.0
        %4053 = vmatprep.subr.mxu0 0.0
        %4054 = vmatpush1.msra.mxu0 0.0
        %4055 = vmatprep.subr.mxu0 0.0
        %4056 = vmatpush1.msra.mxu0 0.0
        %4057 = vmatprep.subr.mxu0 0.0
        %4058 = vmatpush1.msra.mxu0 0.0
        %4059 = vmatprep.subr.mxu0 0.0
        %4060 = vmatpush1.msra.mxu0 0.0
        %4061 = vmatprep.subr.mxu0 0.0
        %4062 = vmatpush1.msra.mxu0 0.0
        %4063 = vmatprep.subr.mxu0 0.0
        %4064 = vmatpush1.msra.mxu0 0.0
        %4065 = vmatprep.subr.mxu0 0.0
        %4066 = vmatpush1.msra.mxu0 0.0
        %4067 = vmatprep.subr.mxu0 0.0
        %4068 = vmatpush1.msra.mxu0 0.0
        %4069 = vmatprep.subr.mxu0 0.0
        %4070 = vmatpush1.msra.mxu0 0.0
        %4071 = vmatprep.subr.mxu0 0.0
        %4072 = vmatpush1.msra.mxu0 0.0
        %4073 = vmatprep.subr.mxu0 0.0
        %4074 = vmatpush1.msra.mxu0 0.0
        %4075 = vmatprep.subr.mxu0 0.0
        %4076 = vmatpush1.msra.mxu0 0.0
        %4077 = vmatprep.subr.mxu0 0.0
        %4078 = vmatpush1.msra.mxu0 0.0
        %4079 = vmatprep.subr.mxu0 0.0
        %4080 = vmatpush1.msra.mxu0 0.0
        %4081 = vmatprep.subr.mxu0 0.0
        %4082 = vmatpush1.msra.mxu0 0.0
        %4083 = vmatprep.subr.mxu0 0.0
        %4084 = vmatpush1.msra.mxu0 0.0
        %4085 = vmatprep.subr.mxu0 0.0
        %4086 = vmatpush1.msra.mxu0 0.0
        %4087 = vmatprep.subr.mxu0 0.0
        %4088 = vmatpush1.msra.mxu0 0.0
        %4089 = vmatprep.subr.mxu0 0.0
        %4090 = vmatpush1.msra.mxu0 0.0
        %4091 = vmatprep.subr.mxu0 0.0
        %4092 = vmatpush1.msra.mxu0 0.0
        %4093 = vmatprep.mubr.f32.mxu0 0.0
        %4094 = vmatmul.mubr.f32.gmra.mrb[0].mxu0 %v4024
        %v4095 = vpop.f32.mrb[0].mxu0
        %v4096 = vadd.f32 0.0, %v4095
        %v4097 = vpop.f32.mrb[0].mxu0
        %v4098 = vadd.f32 0.0, %v4097
        %4099 = vmatprep.mubr.f32.mxu0 0.0
        %4100 = vmatmul.mubr.f32.gmra.mrb[0].mxu0 %v4027
        %v4101 = vpop.f32.mrb[0].mxu0
        %v4102 = vadd.f32 0.0, %v4101
        %v4103 = vpop.f32.mrb[0].mxu0
        %v4104 = vadd.f32 0.0, %v4103
        %4105 = vdwg.mxu0
        %v4106 = vadd.f32 %v4004, %v4096
        %v4107 = vadd.f32 %v4005, %v4098
        %v4108 = vadd.f32 %v4006, %v4102
        %v4109 = vadd.f32 %v4007, %v4104
        %4110 = vrot.lane.b32.xlu0 %v3367, 112
        %v4111 = vpop.permute.xlu0 %4110
        %4112 = vrot.lane.b32.xlu0 %v3369, 112
        %v4113 = vpop.permute.xlu0 %4112
        %4114 = vrot.lane.b32.xlu0 %v3368, 112
        %v4115 = vpop.permute.xlu0 %4114
        %4116 = vrot.lane.b32.xlu0 %v3370, 112
        %v4117 = vpop.permute.xlu0 %4116
        %v4118 = vsel %vm870, %v4111, %v4115
        %v4119 = vsel %vm870, %v4113, %v4117
        %v4120 = vsel %vm870, %v4115, %v4111
        %v4121 = vsel %vm870, %v4117, %v4113
        %s4122 = scalar_lea.vmem [#allocation2], 544
        %v4123 = vld [vmem:[%s4122] sm:$0xff]
        %v4124 = vld [vmem:[%s4122 + $0x8] sm:$0xff]
        %v4126 = vsel %vm300, %v4123, 0
        %v4129 = vsel %vm300, %v4124, 0
        %4131 = vmatprep.subr.mxu0 %v4120
        %4132 = vmatpush1.msra.mxu0 %v4118
        %4133 = vmatprep.subr.mxu0 %v4121
        %4134 = vmatpush1.msra.mxu0 %v4119
        %4135 = vmatprep.subr.mxu0 0.0
        %4136 = vmatpush1.msra.mxu0 0.0
        %4137 = vmatprep.subr.mxu0 0.0
        %4138 = vmatpush1.msra.mxu0 0.0
        %4139 = vmatprep.subr.mxu0 0.0
        %4140 = vmatpush1.msra.mxu0 0.0
        %4141 = vmatprep.subr.mxu0 0.0
        %4142 = vmatpush1.msra.mxu0 0.0
        %4143 = vmatprep.subr.mxu0 0.0
        %4144 = vmatpush1.msra.mxu0 0.0
        %4145 = vmatprep.subr.mxu0 0.0
        %4146 = vmatpush1.msra.mxu0 0.0
        %4147 = vmatprep.subr.mxu0 0.0
        %4148 = vmatpush1.msra.mxu0 0.0
        %4149 = vmatprep.subr.mxu0 0.0
        %4150 = vmatpush1.msra.mxu0 0.0
        %4151 = vmatprep.subr.mxu0 0.0
        %4152 = vmatpush1.msra.mxu0 0.0
        %4153 = vmatprep.subr.mxu0 0.0
        %4154 = vmatpush1.msra.mxu0 0.0
        %4155 = vmatprep.subr.mxu0 0.0
        %4156 = vmatpush1.msra.mxu0 0.0
        %4157 = vmatprep.subr.mxu0 0.0
        %4158 = vmatpush1.msra.mxu0 0.0
        %4159 = vmatprep.subr.mxu0 0.0
        %4160 = vmatpush1.msra.mxu0 0.0
        %4161 = vmatprep.subr.mxu0 0.0
        %4162 = vmatpush1.msra.mxu0 0.0
        %4163 = vmatprep.subr.mxu0 0.0
        %4164 = vmatpush1.msra.mxu0 0.0
        %4165 = vmatprep.subr.mxu0 0.0
        %4166 = vmatpush1.msra.mxu0 0.0
        %4167 = vmatprep.subr.mxu0 0.0
        %4168 = vmatpush1.msra.mxu0 0.0
        %4169 = vmatprep.subr.mxu0 0.0
        %4170 = vmatpush1.msra.mxu0 0.0
        %4171 = vmatprep.subr.mxu0 0.0
        %4172 = vmatpush1.msra.mxu0 0.0
        %4173 = vmatprep.subr.mxu0 0.0
        %4174 = vmatpush1.msra.mxu0 0.0
        %4175 = vmatprep.subr.mxu0 0.0
        %4176 = vmatpush1.msra.mxu0 0.0
        %4177 = vmatprep.subr.mxu0 0.0
        %4178 = vmatpush1.msra.mxu0 0.0
        %4179 = vmatprep.subr.mxu0 0.0
        %4180 = vmatpush1.msra.mxu0 0.0
        %4181 = vmatprep.subr.mxu0 0.0
        %4182 = vmatpush1.msra.mxu0 0.0
        %4183 = vmatprep.subr.mxu0 0.0
        %4184 = vmatpush1.msra.mxu0 0.0
        %4185 = vmatprep.subr.mxu0 0.0
        %4186 = vmatpush1.msra.mxu0 0.0
        %4187 = vmatprep.subr.mxu0 0.0
        %4188 = vmatpush1.msra.mxu0 0.0
        %4189 = vmatprep.subr.mxu0 0.0
        %4190 = vmatpush1.msra.mxu0 0.0
        %4191 = vmatprep.subr.mxu0 0.0
        %4192 = vmatpush1.msra.mxu0 0.0
        %4193 = vmatprep.subr.mxu0 0.0
        %4194 = vmatpush1.msra.mxu0 0.0
        %4195 = vmatprep.mubr.f32.mxu0 0.0
        %4196 = vmatmul.mubr.f32.gmra.mrb[0].mxu0 %v4126
        %v4197 = vpop.f32.mrb[0].mxu0
        %v4198 = vadd.f32 0.0, %v4197
        %v4199 = vpop.f32.mrb[0].mxu0
        %v4200 = vadd.f32 0.0, %v4199
        %4201 = vmatprep.mubr.f32.mxu0 0.0
        %4202 = vmatmul.mubr.f32.gmra.mrb[0].mxu0 %v4129
        %v4203 = vpop.f32.mrb[0].mxu0
        %v4204 = vadd.f32 0.0, %v4203
        %v4205 = vpop.f32.mrb[0].mxu0
        %v4206 = vadd.f32 0.0, %v4205
        %4207 = vdwg.mxu0
        %v4208 = vadd.f32 %v4106, %v4198
        %v4209 = vadd.f32 %v4107, %v4200
        %v4210 = vadd.f32 %v4108, %v4204
        %v4211 = vadd.f32 %v4109, %v4206
        %4212 = vrot.lane.b32.xlu0 %v3395, 112
        %v4213 = vpop.permute.xlu0 %4212
        %4214 = vrot.lane.b32.xlu0 %v3397, 112
        %v4215 = vpop.permute.xlu0 %4214
        %4216 = vrot.lane.b32.xlu0 %v3396, 112
        %v4217 = vpop.permute.xlu0 %4216
        %4218 = vrot.lane.b32.xlu0 %v3398, 112
        %v4219 = vpop.permute.xlu0 %4218
        %v4220 = vsel %vm870, %v4213, %v4217
        %v4221 = vsel %vm870, %v4215, %v4219
        %v4222 = vsel %vm870, %v4217, %v4213
        %v4223 = vsel %vm870, %v4219, %v4215
        %s4224 = scalar_lea.vmem [#allocation2], 560
        %v4225 = vld [vmem:[%s4224] sm:$0xff]
        %v4226 = vld [vmem:[%s4224 + $0x8] sm:$0xff]
        %v4228 = vsel %vm300, %v4225, 0
        %v4231 = vsel %vm300, %v4226, 0
        %4233 = vmatprep.subr.mxu0 %v4222
        %4234 = vmatpush1.msra.mxu0 %v4220
        %4235 = vmatprep.subr.mxu0 %v4223
        %4236 = vmatpush1.msra.mxu0 %v4221
        %4237 = vmatprep.subr.mxu0 0.0
        %4238 = vmatpush1.msra.mxu0 0.0
        %4239 = vmatprep.subr.mxu0 0.0
        %4240 = vmatpush1.msra.mxu0 0.0
        %4241 = vmatprep.subr.mxu0 0.0
        %4242 = vmatpush1.msra.mxu0 0.0
        %4243 = vmatprep.subr.mxu0 0.0
        %4244 = vmatpush1.msra.mxu0 0.0
        %4245 = vmatprep.subr.mxu0 0.0
        %4246 = vmatpush1.msra.mxu0 0.0
        %4247 = vmatprep.subr.mxu0 0.0
        %4248 = vmatpush1.msra.mxu0 0.0
        %4249 = vmatprep.subr.mxu0 0.0
        %4250 = vmatpush1.msra.mxu0 0.0
        %4251 = vmatprep.subr.mxu0 0.0
        %4252 = vmatpush1.msra.mxu0 0.0
        %4253 = vmatprep.subr.mxu0 0.0
        %4254 = vmatpush1.msra.mxu0 0.0
        %4255 = vmatprep.subr.mxu0 0.0
        %4256 = vmatpush1.msra.mxu0 0.0
        %4257 = vmatprep.subr.mxu0 0.0
        %4258 = vmatpush1.msra.mxu0 0.0
        %4259 = vmatprep.subr.mxu0 0.0
        %4260 = vmatpush1.msra.mxu0 0.0
        %4261 = vmatprep.subr.mxu0 0.0
        %4262 = vmatpush1.msra.mxu0 0.0
        %4263 = vmatprep.subr.mxu0 0.0
        %4264 = vmatpush1.msra.mxu0 0.0
        %4265 = vmatprep.subr.mxu0 0.0
        %4266 = vmatpush1.msra.mxu0 0.0
        %4267 = vmatprep.subr.mxu0 0.0
        %4268 = vmatpush1.msra.mxu0 0.0
        %4269 = vmatprep.subr.mxu0 0.0
        %4270 = vmatpush1.msra.mxu0 0.0
        %4271 = vmatprep.subr.mxu0 0.0
        %4272 = vmatpush1.msra.mxu0 0.0
        %4273 = vmatprep.subr.mxu0 0.0
        %4274 = vmatpush1.msra.mxu0 0.0
        %4275 = vmatprep.subr.mxu0 0.0
        %4276 = vmatpush1.msra.mxu0 0.0
        %4277 = vmatprep.subr.mxu0 0.0
        %4278 = vmatpush1.msra.mxu0 0.0
        %4279 = vmatprep.subr.mxu0 0.0
        %4280 = vmatpush1.msra.mxu0 0.0
        %4281 = vmatprep.subr.mxu0 0.0
        %4282 = vmatpush1.msra.mxu0 0.0
        %4283 = vmatprep.subr.mxu0 0.0
        %4284 = vmatpush1.msra.mxu0 0.0
        %4285 = vmatprep.subr.mxu0 0.0
        %4286 = vmatpush1.msra.mxu0 0.0
        %4287 = vmatprep.subr.mxu0 0.0
        %4288 = vmatpush1.msra.mxu0 0.0
        %4289 = vmatprep.subr.mxu0 0.0
        %4290 = vmatpush1.msra.mxu0 0.0
        %4291 = vmatprep.subr.mxu0 0.0
        %4292 = vmatpush1.msra.mxu0 0.0
        %4293 = vmatprep.subr.mxu0 0.0
        %4294 = vmatpush1.msra.mxu0 0.0
        %4295 = vmatprep.subr.mxu0 0.0
        %4296 = vmatpush1.msra.mxu0 0.0
        %4297 = vmatprep.mubr.f32.mxu0 0.0
        %4298 = vmatmul.mubr.f32.gmra.mrb[0].mxu0 %v4228
        %v4299 = vpop.f32.mrb[0].mxu0
        %v4300 = vadd.f32 0.0, %v4299
        %v4301 = vpop.f32.mrb[0].mxu0
        %v4302 = vadd.f32 0.0, %v4301
        %4303 = vmatprep.mubr.f32.mxu0 0.0
        %4304 = vmatmul.mubr.f32.gmra.mrb[0].mxu0 %v4231
        %v4305 = vpop.f32.mrb[0].mxu0
        %v4306 = vadd.f32 0.0, %v4305
        %v4307 = vpop.f32.mrb[0].mxu0
        %v4308 = vadd.f32 0.0, %v4307
        %4309 = vdwg.mxu0
        %v4310 = vadd.f32 %v4208, %v4300
        %v4311 = vadd.f32 %v4209, %v4302
        %v4312 = vadd.f32 %v4210, %v4306
        %v4313 = vadd.f32 %v4211, %v4308
        %v4314 = vmul.f32 %v4310, 0.5
        %v4315 = vmul.f32 %v4311, 0.5
        %v4316 = vmul.f32 %v4312, 0.5
        %v4317 = vmul.f32 %v4313, 0.5
        %v4318 = vmul.f32 %v4310, 0.70710677
        %v4319 = vmul.f32 %v4311, 0.70710677
        %v4320 = vmul.f32 %v4312, 0.70710677
        %v4321 = vmul.f32 %v4313, 0.70710677
        %vm4322 = vcmp.lt.f32.partialorder %v4318, 0.0
        %vm4323 = vcmp.lt.f32.partialorder %v4319, 0.0
        %vm4324 = vcmp.lt.f32.partialorder %v4320, 0.0
        %vm4325 = vcmp.lt.f32.partialorder %v4321, 0.0
        %v4326 = vsel %vm4322, -1.0, 1.0
        %v4327 = vsel %vm4323, -1.0, 1.0
        %v4328 = vsel %vm4324, -1.0, 1.0
        %v4329 = vsel %vm4325, -1.0, 1.0
        %v4330 = vand.u32 2147483647, %v4318
        %v4331 = vand.u32 2147483647, %v4319
        %v4332 = vand.u32 2147483647, %v4320
        %v4333 = vand.u32 2147483647, %v4321
        %v4334 = vmul.f32 %v4330, 0.3275911
        %v4335 = vmul.f32 %v4331, 0.3275911
        %v4336 = vmul.f32 %v4332, 0.3275911
        %v4337 = vmul.f32 %v4333, 0.3275911
        %v4338 = vadd.f32 %v4334, 1.0
        %v4339 = vadd.f32 %v4335, 1.0
        %v4340 = vadd.f32 %v4336, 1.0
        %v4341 = vadd.f32 %v4337, 1.0
        %v4342 = vrcp.pop %v4338
        %v4343 = vrcp.pop %v4339
        %v4344 = vrcp.pop %v4340
        %v4345 = vrcp.pop %v4341
        %v4346 = vmul.f32 %v4342, 1.0614054
        %v4347 = vmul.f32 %v4343, 1.0614054
        %v4348 = vmul.f32 %v4344, 1.0614054
        %v4349 = vmul.f32 %v4345, 1.0614054
        %v4350 = vadd.f32 %v4346, -1.4531521
        %v4351 = vadd.f32 %v4347, -1.4531521
        %v4352 = vadd.f32 %v4348, -1.4531521
        %v4353 = vadd.f32 %v4349, -1.4531521
        %v4354 = vmul.f32 %v4350, %v4342
        %v4355 = vmul.f32 %v4351, %v4343
        %v4356 = vmul.f32 %v4352, %v4344
        %v4357 = vmul.f32 %v4353, %v4345
        %v4358 = vadd.f32 %v4354, 1.4214138
        %v4359 = vadd.f32 %v4355, 1.4214138
        %v4360 = vadd.f32 %v4356, 1.4214138
        %v4361 = vadd.f32 %v4357, 1.4214138
        %v4362 = vmul.f32 %v4358, %v4342
        %v4363 = vmul.f32 %v4359, %v4343
        %v4364 = vmul.f32 %v4360, %v4344
        %v4365 = vmul.f32 %v4361, %v4345
        %v4366 = vadd.f32 %v4362, -0.28449672
        %v4367 = vadd.f32 %v4363, -0.28449672
        %v4368 = vadd.f32 %v4364, -0.28449672
        %v4369 = vadd.f32 %v4365, -0.28449672
        %v4370 = vmul.f32 %v4366, %v4342
        %v4371 = vmul.f32 %v4367, %v4343
        %v4372 = vmul.f32 %v4368, %v4344
        %v4373 = vmul.f32 %v4369, %v4345
        %v4374 = vadd.f32 %v4370, 0.2548296
        %v4375 = vadd.f32 %v4371, 0.2548296
        %v4376 = vadd.f32 %v4372, 0.2548296
        %v4377 = vadd.f32 %v4373, 0.2548296
        %v4378 = vmul.f32 %v4374, %v4342
        %v4379 = vmul.f32 %v4375, %v4343
        %v4380 = vmul.f32 %v4376, %v4344
        %v4381 = vmul.f32 %v4377, %v4345
        %v4382 = vsub.f32 0.0, %v4330
        %v4383 = vsub.f32 0.0, %v4331
        %v4384 = vsub.f32 0.0, %v4332
        %v4385 = vsub.f32 0.0, %v4333
        %v4386 = vmul.f32 %v4382, %v4330
        %v4387 = vmul.f32 %v4383, %v4331
        %v4388 = vmul.f32 %v4384, %v4332
        %v4389 = vmul.f32 %v4385, %v4333
        %v4390 = vmul.f32 %v4386, 1.442695
        %v4391 = vpow.pop %v4390
        %v4392 = vmul.f32 %v4387, 1.442695
        %v4393 = vpow.pop %v4392
        %v4394 = vmul.f32 %v4388, 1.442695
        %v4395 = vpow.pop %v4394
        %v4396 = vmul.f32 %v4389, 1.442695
        %v4397 = vpow.pop %v4396
        %v4398 = vmul.f32 %v4378, %v4391
        %v4399 = vmul.f32 %v4379, %v4393
        %v4400 = vmul.f32 %v4380, %v4395
        %v4401 = vmul.f32 %v4381, %v4397
        %v4402 = vsub.f32 1.0, %v4398
        %v4403 = vsub.f32 1.0, %v4399
        %v4404 = vsub.f32 1.0, %v4400
        %v4405 = vsub.f32 1.0, %v4401
        %v4406 = vmul.f32 %v4326, %v4402
        %v4407 = vmul.f32 %v4327, %v4403
        %v4408 = vmul.f32 %v4328, %v4404
        %v4409 = vmul.f32 %v4329, %v4405
        %v4410 = vadd.f32 %v4406, 1.0
        %v4411 = vadd.f32 %v4407, 1.0
        %v4412 = vadd.f32 %v4408, 1.0
        %v4413 = vadd.f32 %v4409, 1.0
        %v4414 = vmul.f32 %v4314, %v4410
        %v4415 = vmul.f32 %v4315, %v4411
        %v4416 = vmul.f32 %v4316, %v4412
        %v4417 = vmul.f32 %v4317, %v4413
        %4418 = vrot.lane.b32.xlu0 %v4414, 15
        %v4419 = vpop.permute.xlu0 %4418
        %4420 = vrot.lane.b32.xlu0 %v4416, 15
        %v4421 = vpop.permute.xlu0 %4420
        %4422 = vrot.lane.b32.xlu0 %v4415, 15
        %v4423 = vpop.permute.xlu0 %4422
        %4424 = vrot.lane.b32.xlu0 %v4417, 15
        %v4425 = vpop.permute.xlu0 %4424
        %v4426 = vsel %vm229, %v4419, %v4423
        %v4427 = vsel %vm229, %v4421, %v4425
        %v4428 = vsel %vm229, %v4423, %v4419
        %v4429 = vsel %vm229, %v4425, %v4421
        %4430 = vrot.lane.b32.xlu0 %v4414, 127
        %v4431 = vpop.permute.xlu0 %4430
        %4432 = vrot.lane.b32.xlu0 %v4416, 127
        %v4433 = vpop.permute.xlu0 %4432
        %4434 = vrot.lane.b32.xlu0 %v4415, 127
        %v4435 = vpop.permute.xlu0 %4434
        %4436 = vrot.lane.b32.xlu0 %v4417, 127
        %v4437 = vpop.permute.xlu0 %4436
        %v4438 = vsel %vm242, %v4431, %v4435
        %v4439 = vsel %vm242, %v4433, %v4437
        %v4440 = vsel %vm242, %v4435, %v4431
        %v4441 = vsel %vm242, %v4437, %v4433
        %v4442 = vsel %vm215, %v4428, %v4438
        %v4443 = vsel %vm216, %v4426, %v4440
        %v4444 = vsel %vm215, %v4429, %v4439
        %v4445 = vsel %vm216, %v4427, %v4441
        %4446 = vrot.lane.b32.xlu0 %v4414, 113
        %v4447 = vpop.permute.xlu0 %4446
        %4448 = vrot.lane.b32.xlu0 %v4416, 113
        %v4449 = vpop.permute.xlu0 %4448
        %4450 = vrot.lane.b32.xlu0 %v4415, 113
        %v4451 = vpop.permute.xlu0 %4450
        %4452 = vrot.lane.b32.xlu0 %v4417, 113
        %v4453 = vpop.permute.xlu0 %4452
        %v4454 = vsel %vm259, %v4447, %v4451
        %v4455 = vsel %vm259, %v4449, %v4453
        %v4456 = vsel %vm259, %v4451, %v4447
        %v4457 = vsel %vm259, %v4453, %v4449
        %4458 = vrot.lane.b32.xlu0 %v4414, 1
        %v4459 = vpop.permute.xlu0 %4458
        %4460 = vrot.lane.b32.xlu0 %v4416, 1
        %v4461 = vpop.permute.xlu0 %4460
        %4462 = vrot.lane.b32.xlu0 %v4415, 1
        %v4463 = vpop.permute.xlu0 %4462
        %4464 = vrot.lane.b32.xlu0 %v4417, 1
        %v4465 = vpop.permute.xlu0 %4464
        %v4466 = vsel %vm272, %v4459, %v4463
        %v4467 = vsel %vm272, %v4461, %v4465
        %v4468 = vsel %vm272, %v4463, %v4459
        %v4469 = vsel %vm272, %v4465, %v4461
        %v4470 = vsel %vm213, %v4454, %v4468
        %v4471 = vsel %vm214, %v4456, %v4466
        %v4472 = vsel %vm213, %v4455, %v4469
        %v4473 = vsel %vm214, %v4457, %v4467
        %s4474 = scalar_lea.vmem %s2, 128
        %v4475 = vld [vmem:[%s4474] sm:$0xff]
        %v4476 = vld [vmem:[%s4474 + $0x8] sm:$0xff]
        %v4477 = vld [vmem:[%s4474 + $0x10] sm:$0xff]
        %v4478 = vld [vmem:[%s4474 + $0x18] sm:$0xff]
        %4479 = vrot.lane.b32.xlu0 %v4470, 16
        %v4480 = vpop.permute.xlu0 %4479
        %4481 = vrot.lane.b32.xlu0 %v4472, 16
        %v4482 = vpop.permute.xlu0 %4481
        %4483 = vrot.lane.b32.xlu0 %v4471, 16
        %v4484 = vpop.permute.xlu0 %4483
        %4485 = vrot.lane.b32.xlu0 %v4473, 16
        %v4486 = vpop.permute.xlu0 %4485
        %v4487 = vsel %vm293, %v4480, %v4484
        %v4488 = vsel %vm293, %v4482, %v4486
        %v4489 = vsel %vm293, %v4484, %v4480
        %v4490 = vsel %vm293, %v4486, %v4482
        %s4491 = scalar_lea.vmem [#allocation2], 576
        %v4492 = vld [vmem:[%s4491] sm:$0xff]
        %v4493 = vld [vmem:[%s4491 + $0x8] sm:$0xff]
        %v4495 = vsel %vm300, %v4492, 0
        %v4498 = vsel %vm300, %v4493, 0
        %4500 = vmatprep.subr.mxu0 %v4487
        %4501 = vmatpush1.msra.mxu0 %v4489
        %4502 = vmatprep.subr.mxu0 %v4488
        %4503 = vmatpush1.msra.mxu0 %v4490
        %4504 = vmatprep.subr.mxu0 0.0
        %4505 = vmatpush1.msra.mxu0 0.0
        %4506 = vmatprep.subr.mxu0 0.0
        %4507 = vmatpush1.msra.mxu0 0.0
        %4508 = vmatprep.subr.mxu0 0.0
        %4509 = vmatpush1.msra.mxu0 0.0
        %4510 = vmatprep.subr.mxu0 0.0
        %4511 = vmatpush1.msra.mxu0 0.0
        %4512 = vmatprep.subr.mxu0 0.0
        %4513 = vmatpush1.msra.mxu0 0.0
        %4514 = vmatprep.subr.mxu0 0.0
        %4515 = vmatpush1.msra.mxu0 0.0
        %4516 = vmatprep.subr.mxu0 0.0
        %4517 = vmatpush1.msra.mxu0 0.0
        %4518 = vmatprep.subr.mxu0 0.0
        %4519 = vmatpush1.msra.mxu0 0.0
        %4520 = vmatprep.subr.mxu0 0.0
        %4521 = vmatpush1.msra.mxu0 0.0
        %4522 = vmatprep.subr.mxu0 0.0
        %4523 = vmatpush1.msra.mxu0 0.0
        %4524 = vmatprep.subr.mxu0 0.0
        %4525 = vmatpush1.msra.mxu0 0.0
        %4526 = vmatprep.subr.mxu0 0.0
        %4527 = vmatpush1.msra.mxu0 0.0
        %4528 = vmatprep.subr.mxu0 0.0
        %4529 = vmatpush1.msra.mxu0 0.0
        %4530 = vmatprep.subr.mxu0 0.0
        %4531 = vmatpush1.msra.mxu0 0.0
        %4532 = vmatprep.subr.mxu0 0.0
        %4533 = vmatpush1.msra.mxu0 0.0
        %4534 = vmatprep.subr.mxu0 0.0
        %4535 = vmatpush1.msra.mxu0 0.0
        %4536 = vmatprep.subr.mxu0 0.0
        %4537 = vmatpush1.msra.mxu0 0.0
        %4538 = vmatprep.subr.mxu0 0.0
        %4539 = vmatpush1.msra.mxu0 0.0
        %4540 = vmatprep.subr.mxu0 0.0
        %4541 = vmatpush1.msra.mxu0 0.0
        %4542 = vmatprep.subr.mxu0 0.0
        %4543 = vmatpush1.msra.mxu0 0.0
        %4544 = vmatprep.subr.mxu0 0.0
        %4545 = vmatpush1.msra.mxu0 0.0
        %4546 = vmatprep.subr.mxu0 0.0
        %4547 = vmatpush1.msra.mxu0 0.0
        %4548 = vmatprep.subr.mxu0 0.0
        %4549 = vmatpush1.msra.mxu0 0.0
        %4550 = vmatprep.subr.mxu0 0.0
        %4551 = vmatpush1.msra.mxu0 0.0
        %4552 = vmatprep.subr.mxu0 0.0
        %4553 = vmatpush1.msra.mxu0 0.0
        %4554 = vmatprep.subr.mxu0 0.0
        %4555 = vmatpush1.msra.mxu0 0.0
        %4556 = vmatprep.subr.mxu0 0.0
        %4557 = vmatpush1.msra.mxu0 0.0
        %4558 = vmatprep.subr.mxu0 0.0
        %4559 = vmatpush1.msra.mxu0 0.0
        %4560 = vmatprep.subr.mxu0 0.0
        %4561 = vmatpush1.msra.mxu0 0.0
        %4562 = vmatprep.subr.mxu0 0.0
        %4563 = vmatpush1.msra.mxu0 0.0
        %4564 = vmatprep.mubr.f32.mxu0 0.0
        %4565 = vmatmul.mubr.f32.gmra.mrb[0].mxu0 %v4495
        %v4566 = vpop.f32.mrb[0].mxu0
        %v4567 = vadd.f32 0.0, %v4566
        %v4568 = vpop.f32.mrb[0].mxu0
        %v4569 = vadd.f32 0.0, %v4568
        %4570 = vmatprep.mubr.f32.mxu0 0.0
        %4571 = vmatmul.mubr.f32.gmra.mrb[0].mxu0 %v4498
        %v4572 = vpop.f32.mrb[0].mxu0
        %v4573 = vadd.f32 0.0, %v4572
        %v4574 = vpop.f32.mrb[0].mxu0
        %v4575 = vadd.f32 0.0, %v4574
        %4576 = vdwg.mxu0
        %v4577 = vadd.f32 %v4475, %v4567
        %v4578 = vadd.f32 %v4476, %v4569
        %v4579 = vadd.f32 %v4477, %v4573
        %v4580 = vadd.f32 %v4478, %v4575
        %4581 = vrot.lane.b32.xlu0 %v4414, 16
        %v4582 = vpop.permute.xlu0 %4581
        %4583 = vrot.lane.b32.xlu0 %v4416, 16
        %v4584 = vpop.permute.xlu0 %4583
        %4585 = vrot.lane.b32.xlu0 %v4415, 16
        %v4586 = vpop.permute.xlu0 %4585
        %4587 = vrot.lane.b32.xlu0 %v4417, 16
        %v4588 = vpop.permute.xlu0 %4587
        %v4589 = vsel %vm293, %v4582, %v4586
        %v4590 = vsel %vm293, %v4584, %v4588
        %v4591 = vsel %vm293, %v4586, %v4582
        %v4592 = vsel %vm293, %v4588, %v4584
        %s4593 = scalar_lea.vmem [#allocation2], 592
        %v4594 = vld [vmem:[%s4593] sm:$0xff]
        %v4595 = vld [vmem:[%s4593 + $0x8] sm:$0xff]
        %v4597 = vsel %vm300, %v4594, 0
        %v4600 = vsel %vm300, %v4595, 0
        %4602 = vmatprep.subr.mxu0 %v4589
        %4603 = vmatpush1.msra.mxu0 %v4591
        %4604 = vmatprep.subr.mxu0 %v4590
        %4605 = vmatpush1.msra.mxu0 %v4592
        %4606 = vmatprep.subr.mxu0 0.0
        %4607 = vmatpush1.msra.mxu0 0.0
        %4608 = vmatprep.subr.mxu0 0.0
        %4609 = vmatpush1.msra.mxu0 0.0
        %4610 = vmatprep.subr.mxu0 0.0
        %4611 = vmatpush1.msra.mxu0 0.0
        %4612 = vmatprep.subr.mxu0 0.0
        %4613 = vmatpush1.msra.mxu0 0.0
        %4614 = vmatprep.subr.mxu0 0.0
        %4615 = vmatpush1.msra.mxu0 0.0
        %4616 = vmatprep.subr.mxu0 0.0
        %4617 = vmatpush1.msra.mxu0 0.0
        %4618 = vmatprep.subr.mxu0 0.0
        %4619 = vmatpush1.msra.mxu0 0.0
        %4620 = vmatprep.subr.mxu0 0.0
        %4621 = vmatpush1.msra.mxu0 0.0
        %4622 = vmatprep.subr.mxu0 0.0
        %4623 = vmatpush1.msra.mxu0 0.0
        %4624 = vmatprep.subr.mxu0 0.0
        %4625 = vmatpush1.msra.mxu0 0.0
        %4626 = vmatprep.subr.mxu0 0.0
        %4627 = vmatpush1.msra.mxu0 0.0
        %4628 = vmatprep.subr.mxu0 0.0
        %4629 = vmatpush1.msra.mxu0 0.0
        %4630 = vmatprep.subr.mxu0 0.0
        %4631 = vmatpush1.msra.mxu0 0.0
        %4632 = vmatprep.subr.mxu0 0.0
        %4633 = vmatpush1.msra.mxu0 0.0
        %4634 = vmatprep.subr.mxu0 0.0
        %4635 = vmatpush1.msra.mxu0 0.0
        %4636 = vmatprep.subr.mxu0 0.0
        %4637 = vmatpush1.msra.mxu0 0.0
        %4638 = vmatprep.subr.mxu0 0.0
        %4639 = vmatpush1.msra.mxu0 0.0
        %4640 = vmatprep.subr.mxu0 0.0
        %4641 = vmatpush1.msra.mxu0 0.0
        %4642 = vmatprep.subr.mxu0 0.0
        %4643 = vmatpush1.msra.mxu0 0.0
        %4644 = vmatprep.subr.mxu0 0.0
        %4645 = vmatpush1.msra.mxu0 0.0
        %4646 = vmatprep.subr.mxu0 0.0
        %4647 = vmatpush1.msra.mxu0 0.0
        %4648 = vmatprep.subr.mxu0 0.0
        %4649 = vmatpush1.msra.mxu0 0.0
        %4650 = vmatprep.subr.mxu0 0.0
        %4651 = vmatpush1.msra.mxu0 0.0
        %4652 = vmatprep.subr.mxu0 0.0
        %4653 = vmatpush1.msra.mxu0 0.0
        %4654 = vmatprep.subr.mxu0 0.0
        %4655 = vmatpush1.msra.mxu0 0.0
        %4656 = vmatprep.subr.mxu0 0.0
        %4657 = vmatpush1.msra.mxu0 0.0
        %4658 = vmatprep.subr.mxu0 0.0
        %4659 = vmatpush1.msra.mxu0 0.0
        %4660 = vmatprep.subr.mxu0 0.0
        %4661 = vmatpush1.msra.mxu0 0.0
        %4662 = vmatprep.subr.mxu0 0.0
        %4663 = vmatpush1.msra.mxu0 0.0
        %4664 = vmatprep.subr.mxu0 0.0
        %4665 = vmatpush1.msra.mxu0 0.0
        %4666 = vmatprep.mubr.f32.mxu0 0.0
        %4667 = vmatmul.mubr.f32.gmra.mrb[0].mxu0 %v4597
        %v4668 = vpop.f32.mrb[0].mxu0
        %v4669 = vadd.f32 0.0, %v4668
        %v4670 = vpop.f32.mrb[0].mxu0
        %v4671 = vadd.f32 0.0, %v4670
        %4672 = vmatprep.mubr.f32.mxu0 0.0
        %4673 = vmatmul.mubr.f32.gmra.mrb[0].mxu0 %v4600
        %v4674 = vpop.f32.mrb[0].mxu0
        %v4675 = vadd.f32 0.0, %v4674
        %v4676 = vpop.f32.mrb[0].mxu0
        %v4677 = vadd.f32 0.0, %v4676
        %4678 = vdwg.mxu0
        %v4679 = vadd.f32 %v4577, %v4669
        %v4680 = vadd.f32 %v4578, %v4671
        %v4681 = vadd.f32 %v4579, %v4675
        %v4682 = vadd.f32 %v4580, %v4677
        %4683 = vrot.lane.b32.xlu0 %v4442, 16
        %v4684 = vpop.permute.xlu0 %4683
        %4685 = vrot.lane.b32.xlu0 %v4444, 16
        %v4686 = vpop.permute.xlu0 %4685
        %4687 = vrot.lane.b32.xlu0 %v4443, 16
        %v4688 = vpop.permute.xlu0 %4687
        %4689 = vrot.lane.b32.xlu0 %v4445, 16
        %v4690 = vpop.permute.xlu0 %4689
        %v4691 = vsel %vm293, %v4684, %v4688
        %v4692 = vsel %vm293, %v4686, %v4690
        %v4693 = vsel %vm293, %v4688, %v4684
        %v4694 = vsel %vm293, %v4690, %v4686
        %s4695 = scalar_lea.vmem [#allocation2], 608
        %v4696 = vld [vmem:[%s4695] sm:$0xff]
        %v4697 = vld [vmem:[%s4695 + $0x8] sm:$0xff]
        %v4699 = vsel %vm300, %v4696, 0
        %v4702 = vsel %vm300, %v4697, 0
        %4704 = vmatprep.subr.mxu0 %v4691
        %4705 = vmatpush1.msra.mxu0 %v4693
        %4706 = vmatprep.subr.mxu0 %v4692
        %4707 = vmatpush1.msra.mxu0 %v4694
        %4708 = vmatprep.subr.mxu0 0.0
        %4709 = vmatpush1.msra.mxu0 0.0
        %4710 = vmatprep.subr.mxu0 0.0
        %4711 = vmatpush1.msra.mxu0 0.0
        %4712 = vmatprep.subr.mxu0 0.0
        %4713 = vmatpush1.msra.mxu0 0.0
        %4714 = vmatprep.subr.mxu0 0.0
        %4715 = vmatpush1.msra.mxu0 0.0
        %4716 = vmatprep.subr.mxu0 0.0
        %4717 = vmatpush1.msra.mxu0 0.0
        %4718 = vmatprep.subr.mxu0 0.0
        %4719 = vmatpush1.msra.mxu0 0.0
        %4720 = vmatprep.subr.mxu0 0.0
        %4721 = vmatpush1.msra.mxu0 0.0
        %4722 = vmatprep.subr.mxu0 0.0
        %4723 = vmatpush1.msra.mxu0 0.0
        %4724 = vmatprep.subr.mxu0 0.0
        %4725 = vmatpush1.msra.mxu0 0.0
        %4726 = vmatprep.subr.mxu0 0.0
        %4727 = vmatpush1.msra.mxu0 0.0
        %4728 = vmatprep.subr.mxu0 0.0
        %4729 = vmatpush1.msra.mxu0 0.0
        %4730 = vmatprep.subr.mxu0 0.0
        %4731 = vmatpush1.msra.mxu0 0.0
        %4732 = vmatprep.subr.mxu0 0.0
        %4733 = vmatpush1.msra.mxu0 0.0
        %4734 = vmatprep.subr.mxu0 0.0
        %4735 = vmatpush1.msra.mxu0 0.0
        %4736 = vmatprep.subr.mxu0 0.0
        %4737 = vmatpush1.msra.mxu0 0.0
        %4738 = vmatprep.subr.mxu0 0.0
        %4739 = vmatpush1.msra.mxu0 0.0
        %4740 = vmatprep.subr.mxu0 0.0
        %4741 = vmatpush1.msra.mxu0 0.0
        %4742 = vmatprep.subr.mxu0 0.0
        %4743 = vmatpush1.msra.mxu0 0.0
        %4744 = vmatprep.subr.mxu0 0.0
        %4745 = vmatpush1.msra.mxu0 0.0
        %4746 = vmatprep.subr.mxu0 0.0
        %4747 = vmatpush1.msra.mxu0 0.0
        %4748 = vmatprep.subr.mxu0 0.0
        %4749 = vmatpush1.msra.mxu0 0.0
        %4750 = vmatprep.subr.mxu0 0.0
        %4751 = vmatpush1.msra.mxu0 0.0
        %4752 = vmatprep.subr.mxu0 0.0
        %4753 = vmatpush1.msra.mxu0 0.0
        %4754 = vmatprep.subr.mxu0 0.0
        %4755 = vmatpush1.msra.mxu0 0.0
        %4756 = vmatprep.subr.mxu0 0.0
        %4757 = vmatpush1.msra.mxu0 0.0
        %4758 = vmatprep.subr.mxu0 0.0
        %4759 = vmatpush1.msra.mxu0 0.0
        %4760 = vmatprep.subr.mxu0 0.0
        %4761 = vmatpush1.msra.mxu0 0.0
        %4762 = vmatprep.subr.mxu0 0.0
        %4763 = vmatpush1.msra.mxu0 0.0
        %4764 = vmatprep.subr.mxu0 0.0
        %4765 = vmatpush1.msra.mxu0 0.0
        %4766 = vmatprep.subr.mxu0 0.0
        %4767 = vmatpush1.msra.mxu0 0.0
        %4768 = vmatprep.mubr.f32.mxu0 0.0
        %4769 = vmatmul.mubr.f32.gmra.mrb[0].mxu0 %v4699
        %v4770 = vpop.f32.mrb[0].mxu0
        %v4771 = vadd.f32 0.0, %v4770
        %v4772 = vpop.f32.mrb[0].mxu0
        %v4773 = vadd.f32 0.0, %v4772
        %4774 = vmatprep.mubr.f32.mxu0 0.0
        %4775 = vmatmul.mubr.f32.gmra.mrb[0].mxu0 %v4702
        %v4776 = vpop.f32.mrb[0].mxu0
        %v4777 = vadd.f32 0.0, %v4776
        %v4778 = vpop.f32.mrb[0].mxu0
        %v4779 = vadd.f32 0.0, %v4778
        %4780 = vdwg.mxu0
        %v4781 = vadd.f32 %v4679, %v4771
        %v4782 = vadd.f32 %v4680, %v4773
        %v4783 = vadd.f32 %v4681, %v4777
        %v4784 = vadd.f32 %v4682, %v4779
        %s4785 = scalar_lea.vmem [#allocation2], 624
        %v4786 = vld [vmem:[%s4785] sm:$0xff]
        %v4787 = vld [vmem:[%s4785 + $0x8] sm:$0xff]
        %v4789 = vsel %vm300, %v4786, 0
        %v4792 = vsel %vm300, %v4787, 0
        %4794 = vmatprep.subr.mxu0 %v4471
        %4795 = vmatpush1.msra.mxu0 %v4470
        %4796 = vmatprep.subr.mxu0 %v4473
        %4797 = vmatpush1.msra.mxu0 %v4472
        %4798 = vmatprep.subr.mxu0 0.0
        %4799 = vmatpush1.msra.mxu0 0.0
        %4800 = vmatprep.subr.mxu0 0.0
        %4801 = vmatpush1.msra.mxu0 0.0
        %4802 = vmatprep.subr.mxu0 0.0
        %4803 = vmatpush1.msra.mxu0 0.0
        %4804 = vmatprep.subr.mxu0 0.0
        %4805 = vmatpush1.msra.mxu0 0.0
        %4806 = vmatprep.subr.mxu0 0.0
        %4807 = vmatpush1.msra.mxu0 0.0
        %4808 = vmatprep.subr.mxu0 0.0
        %4809 = vmatpush1.msra.mxu0 0.0
        %4810 = vmatprep.subr.mxu0 0.0
        %4811 = vmatpush1.msra.mxu0 0.0
        %4812 = vmatprep.subr.mxu0 0.0
        %4813 = vmatpush1.msra.mxu0 0.0
        %4814 = vmatprep.subr.mxu0 0.0
        %4815 = vmatpush1.msra.mxu0 0.0
        %4816 = vmatprep.subr.mxu0 0.0
        %4817 = vmatpush1.msra.mxu0 0.0
        %4818 = vmatprep.subr.mxu0 0.0
        %4819 = vmatpush1.msra.mxu0 0.0
        %4820 = vmatprep.subr.mxu0 0.0
        %4821 = vmatpush1.msra.mxu0 0.0
        %4822 = vmatprep.subr.mxu0 0.0
        %4823 = vmatpush1.msra.mxu0 0.0
        %4824 = vmatprep.subr.mxu0 0.0
        %4825 = vmatpush1.msra.mxu0 0.0
        %4826 = vmatprep.subr.mxu0 0.0
        %4827 = vmatpush1.msra.mxu0 0.0
        %4828 = vmatprep.subr.mxu0 0.0
        %4829 = vmatpush1.msra.mxu0 0.0
        %4830 = vmatprep.subr.mxu0 0.0
        %4831 = vmatpush1.msra.mxu0 0.0
        %4832 = vmatprep.subr.mxu0 0.0
        %4833 = vmatpush1.msra.mxu0 0.0
        %4834 = vmatprep.subr.mxu0 0.0
        %4835 = vmatpush1.msra.mxu0 0.0
        %4836 = vmatprep.subr.mxu0 0.0
        %4837 = vmatpush1.msra.mxu0 0.0
        %4838 = vmatprep.subr.mxu0 0.0
        %4839 = vmatpush1.msra.mxu0 0.0
        %4840 = vmatprep.subr.mxu0 0.0
        %4841 = vmatpush1.msra.mxu0 0.0
        %4842 = vmatprep.subr.mxu0 0.0
        %4843 = vmatpush1.msra.mxu0 0.0
        %4844 = vmatprep.subr.mxu0 0.0
        %4845 = vmatpush1.msra.mxu0 0.0
        %4846 = vmatprep.subr.mxu0 0.0
        %4847 = vmatpush1.msra.mxu0 0.0
        %4848 = vmatprep.subr.mxu0 0.0
        %4849 = vmatpush1.msra.mxu0 0.0
        %4850 = vmatprep.subr.mxu0 0.0
        %4851 = vmatpush1.msra.mxu0 0.0
        %4852 = vmatprep.subr.mxu0 0.0
        %4853 = vmatpush1.msra.mxu0 0.0
        %4854 = vmatprep.subr.mxu0 0.0
        %4855 = vmatpush1.msra.mxu0 0.0
        %4856 = vmatprep.subr.mxu0 0.0
        %4857 = vmatpush1.msra.mxu0 0.0
        %4858 = vmatprep.mubr.f32.mxu0 0.0
        %4859 = vmatmul.mubr.f32.gmra.mrb[0].mxu0 %v4789
        %v4860 = vpop.f32.mrb[0].mxu0
        %v4861 = vadd.f32 0.0, %v4860
        %v4862 = vpop.f32.mrb[0].mxu0
        %v4863 = vadd.f32 0.0, %v4862
        %4864 = vmatprep.mubr.f32.mxu0 0.0
        %4865 = vmatmul.mubr.f32.gmra.mrb[0].mxu0 %v4792
        %v4866 = vpop.f32.mrb[0].mxu0
        %v4867 = vadd.f32 0.0, %v4866
        %v4868 = vpop.f32.mrb[0].mxu0
        %v4869 = vadd.f32 0.0, %v4868
        %4870 = vdwg.mxu0
        %v4871 = vadd.f32 %v4781, %v4861
        %v4872 = vadd.f32 %v4782, %v4863
        %v4873 = vadd.f32 %v4783, %v4867
        %v4874 = vadd.f32 %v4784, %v4869
        %s4875 = scalar_lea.vmem [#allocation2], 640
        %v4876 = vld [vmem:[%s4875] sm:$0xff]
        %v4877 = vld [vmem:[%s4875 + $0x8] sm:$0xff]
        %v4879 = vsel %vm300, %v4876, 0
        %v4882 = vsel %vm300, %v4877, 0
        %4884 = vmatprep.subr.mxu0 %v4415
        %4885 = vmatpush1.msra.mxu0 %v4414
        %4886 = vmatprep.subr.mxu0 %v4417
        %4887 = vmatpush1.msra.mxu0 %v4416
        %4888 = vmatprep.subr.mxu0 0.0
        %4889 = vmatpush1.msra.mxu0 0.0
        %4890 = vmatprep.subr.mxu0 0.0
        %4891 = vmatpush1.msra.mxu0 0.0
        %4892 = vmatprep.subr.mxu0 0.0
        %4893 = vmatpush1.msra.mxu0 0.0
        %4894 = vmatprep.subr.mxu0 0.0
        %4895 = vmatpush1.msra.mxu0 0.0
        %4896 = vmatprep.subr.mxu0 0.0
        %4897 = vmatpush1.msra.mxu0 0.0
        %4898 = vmatprep.subr.mxu0 0.0
        %4899 = vmatpush1.msra.mxu0 0.0
        %4900 = vmatprep.subr.mxu0 0.0
        %4901 = vmatpush1.msra.mxu0 0.0
        %4902 = vmatprep.subr.mxu0 0.0
        %4903 = vmatpush1.msra.mxu0 0.0
        %4904 = vmatprep.subr.mxu0 0.0
        %4905 = vmatpush1.msra.mxu0 0.0
        %4906 = vmatprep.subr.mxu0 0.0
        %4907 = vmatpush1.msra.mxu0 0.0
        %4908 = vmatprep.subr.mxu0 0.0
        %4909 = vmatpush1.msra.mxu0 0.0
        %4910 = vmatprep.subr.mxu0 0.0
        %4911 = vmatpush1.msra.mxu0 0.0
        %4912 = vmatprep.subr.mxu0 0.0
        %4913 = vmatpush1.msra.mxu0 0.0
        %4914 = vmatprep.subr.mxu0 0.0
        %4915 = vmatpush1.msra.mxu0 0.0
        %4916 = vmatprep.subr.mxu0 0.0
        %4917 = vmatpush1.msra.mxu0 0.0
        %4918 = vmatprep.subr.mxu0 0.0
        %4919 = vmatpush1.msra.mxu0 0.0
        %4920 = vmatprep.subr.mxu0 0.0
        %4921 = vmatpush1.msra.mxu0 0.0
        %4922 = vmatprep.subr.mxu0 0.0
        %4923 = vmatpush1.msra.mxu0 0.0
        %4924 = vmatprep.subr.mxu0 0.0
        %4925 = vmatpush1.msra.mxu0 0.0
        %4926 = vmatprep.subr.mxu0 0.0
        %4927 = vmatpush1.msra.mxu0 0.0
        %4928 = vmatprep.subr.mxu0 0.0
        %4929 = vmatpush1.msra.mxu0 0.0
        %4930 = vmatprep.subr.mxu0 0.0
        %4931 = vmatpush1.msra.mxu0 0.0
        %4932 = vmatprep.subr.mxu0 0.0
        %4933 = vmatpush1.msra.mxu0 0.0
        %4934 = vmatprep.subr.mxu0 0.0
        %4935 = vmatpush1.msra.mxu0 0.0
        %4936 = vmatprep.subr.mxu0 0.0
        %4937 = vmatpush1.msra.mxu0 0.0
        %4938 = vmatprep.subr.mxu0 0.0
        %4939 = vmatpush1.msra.mxu0 0.0
        %4940 = vmatprep.subr.mxu0 0.0
        %4941 = vmatpush1.msra.mxu0 0.0
        %4942 = vmatprep.subr.mxu0 0.0
        %4943 = vmatpush1.msra.mxu0 0.0
        %4944 = vmatprep.subr.mxu0 0.0
        %4945 = vmatpush1.msra.mxu0 0.0
        %4946 = vmatprep.subr.mxu0 0.0
        %4947 = vmatpush1.msra.mxu0 0.0
        %4948 = vmatprep.mubr.f32.mxu0 0.0
        %4949 = vmatmul.mubr.f32.gmra.mrb[0].mxu0 %v4879
        %v4950 = vpop.f32.mrb[0].mxu0
        %v4951 = vadd.f32 0.0, %v4950
        %v4952 = vpop.f32.mrb[0].mxu0
        %v4953 = vadd.f32 0.0, %v4952
        %4954 = vmatprep.mubr.f32.mxu0 0.0
        %4955 = vmatmul.mubr.f32.gmra.mrb[0].mxu0 %v4882
        %v4956 = vpop.f32.mrb[0].mxu0
        %v4957 = vadd.f32 0.0, %v4956
        %v4958 = vpop.f32.mrb[0].mxu0
        %v4959 = vadd.f32 0.0, %v4958
        %4960 = vdwg.mxu0
        %v4961 = vadd.f32 %v4871, %v4951
        %v4962 = vadd.f32 %v4872, %v4953
        %v4963 = vadd.f32 %v4873, %v4957
        %v4964 = vadd.f32 %v4874, %v4959
        %s4965 = scalar_lea.vmem [#allocation2], 656
        %v4966 = vld [vmem:[%s4965] sm:$0xff]
        %v4967 = vld [vmem:[%s4965 + $0x8] sm:$0xff]
        %v4969 = vsel %vm300, %v4966, 0
        %v4972 = vsel %vm300, %v4967, 0
        %4974 = vmatprep.subr.mxu0 %v4443
        %4975 = vmatpush1.msra.mxu0 %v4442
        %4976 = vmatprep.subr.mxu0 %v4445
        %4977 = vmatpush1.msra.mxu0 %v4444
        %4978 = vmatprep.subr.mxu0 0.0
        %4979 = vmatpush1.msra.mxu0 0.0
        %4980 = vmatprep.subr.mxu0 0.0
        %4981 = vmatpush1.msra.mxu0 0.0
        %4982 = vmatprep.subr.mxu0 0.0
        %4983 = vmatpush1.msra.mxu0 0.0
        %4984 = vmatprep.subr.mxu0 0.0
        %4985 = vmatpush1.msra.mxu0 0.0
        %4986 = vmatprep.subr.mxu0 0.0
        %4987 = vmatpush1.msra.mxu0 0.0
        %4988 = vmatprep.subr.mxu0 0.0
        %4989 = vmatpush1.msra.mxu0 0.0
        %4990 = vmatprep.subr.mxu0 0.0
        %4991 = vmatpush1.msra.mxu0 0.0
        %4992 = vmatprep.subr.mxu0 0.0
        %4993 = vmatpush1.msra.mxu0 0.0
        %4994 = vmatprep.subr.mxu0 0.0
        %4995 = vmatpush1.msra.mxu0 0.0
        %4996 = vmatprep.subr.mxu0 0.0
        %4997 = vmatpush1.msra.mxu0 0.0
        %4998 = vmatprep.subr.mxu0 0.0
        %4999 = vmatpush1.msra.mxu0 0.0
        %5000 = vmatprep.subr.mxu0 0.0
        %5001 = vmatpush1.msra.mxu0 0.0
        %5002 = vmatprep.subr.mxu0 0.0
        %5003 = vmatpush1.msra.mxu0 0.0
        %5004 = vmatprep.subr.mxu0 0.0
        %5005 = vmatpush1.msra.mxu0 0.0
        %5006 = vmatprep.subr.mxu0 0.0
        %5007 = vmatpush1.msra.mxu0 0.0
        %5008 = vmatprep.subr.mxu0 0.0
        %5009 = vmatpush1.msra.mxu0 0.0
        %5010 = vmatprep.subr.mxu0 0.0
        %5011 = vmatpush1.msra.mxu0 0.0
        %5012 = vmatprep.subr.mxu0 0.0
        %5013 = vmatpush1.msra.mxu0 0.0
        %5014 = vmatprep.subr.mxu0 0.0
        %5015 = vmatpush1.msra.mxu0 0.0
        %5016 = vmatprep.subr.mxu0 0.0
        %5017 = vmatpush1.msra.mxu0 0.0
        %5018 = vmatprep.subr.mxu0 0.0
        %5019 = vmatpush1.msra.mxu0 0.0
        %5020 = vmatprep.subr.mxu0 0.0
        %5021 = vmatpush1.msra.mxu0 0.0
        %5022 = vmatprep.subr.mxu0 0.0
        %5023 = vmatpush1.msra.mxu0 0.0
        %5024 = vmatprep.subr.mxu0 0.0
        %5025 = vmatpush1.msra.mxu0 0.0
        %5026 = vmatprep.subr.mxu0 0.0
        %5027 = vmatpush1.msra.mxu0 0.0
        %5028 = vmatprep.subr.mxu0 0.0
        %5029 = vmatpush1.msra.mxu0 0.0
        %5030 = vmatprep.subr.mxu0 0.0
        %5031 = vmatpush1.msra.mxu0 0.0
        %5032 = vmatprep.subr.mxu0 0.0
        %5033 = vmatpush1.msra.mxu0 0.0
        %5034 = vmatprep.subr.mxu0 0.0
        %5035 = vmatpush1.msra.mxu0 0.0
        %5036 = vmatprep.subr.mxu0 0.0
        %5037 = vmatpush1.msra.mxu0 0.0
        %5038 = vmatprep.mubr.f32.mxu0 0.0
        %5039 = vmatmul.mubr.f32.gmra.mrb[0].mxu0 %v4969
        %v5040 = vpop.f32.mrb[0].mxu0
        %v5041 = vadd.f32 0.0, %v5040
        %v5042 = vpop.f32.mrb[0].mxu0
        %v5043 = vadd.f32 0.0, %v5042
        %5044 = vmatprep.mubr.f32.mxu0 0.0
        %5045 = vmatmul.mubr.f32.gmra.mrb[0].mxu0 %v4972
        %v5046 = vpop.f32.mrb[0].mxu0
        %v5047 = vadd.f32 0.0, %v5046
        %v5048 = vpop.f32.mrb[0].mxu0
        %v5049 = vadd.f32 0.0, %v5048
        %5050 = vdwg.mxu0
        %v5051 = vadd.f32 %v4961, %v5041
        %v5052 = vadd.f32 %v4962, %v5043
        %v5053 = vadd.f32 %v4963, %v5047
        %v5054 = vadd.f32 %v4964, %v5049
        %5055 = vrot.lane.b32.xlu0 %v4470, 112
        %v5056 = vpop.permute.xlu0 %5055
        %5057 = vrot.lane.b32.xlu0 %v4472, 112
        %v5058 = vpop.permute.xlu0 %5057
        %5059 = vrot.lane.b32.xlu0 %v4471, 112
        %v5060 = vpop.permute.xlu0 %5059
        %5061 = vrot.lane.b32.xlu0 %v4473, 112
        %v5062 = vpop.permute.xlu0 %5061
        %v5063 = vsel %vm870, %v5056, %v5060
        %v5064 = vsel %vm870, %v5058, %v5062
        %v5065 = vsel %vm870, %v5060, %v5056
        %v5066 = vsel %vm870, %v5062, %v5058
        %s5067 = scalar_lea.vmem [#allocation2], 672
        %v5068 = vld [vmem:[%s5067] sm:$0xff]
        %v5069 = vld [vmem:[%s5067 + $0x8] sm:$0xff]
        %v5071 = vsel %vm300, %v5068, 0
        %v5074 = vsel %vm300, %v5069, 0
        %5076 = vmatprep.subr.mxu0 %v5065
        %5077 = vmatpush1.msra.mxu0 %v5063
        %5078 = vmatprep.subr.mxu0 %v5066
        %5079 = vmatpush1.msra.mxu0 %v5064
        %5080 = vmatprep.subr.mxu0 0.0
        %5081 = vmatpush1.msra.mxu0 0.0
        %5082 = vmatprep.subr.mxu0 0.0
        %5083 = vmatpush1.msra.mxu0 0.0
        %5084 = vmatprep.subr.mxu0 0.0
        %5085 = vmatpush1.msra.mxu0 0.0
        %5086 = vmatprep.subr.mxu0 0.0
        %5087 = vmatpush1.msra.mxu0 0.0
        %5088 = vmatprep.subr.mxu0 0.0
        %5089 = vmatpush1.msra.mxu0 0.0
        %5090 = vmatprep.subr.mxu0 0.0
        %5091 = vmatpush1.msra.mxu0 0.0
        %5092 = vmatprep.subr.mxu0 0.0
        %5093 = vmatpush1.msra.mxu0 0.0
        %5094 = vmatprep.subr.mxu0 0.0
        %5095 = vmatpush1.msra.mxu0 0.0
        %5096 = vmatprep.subr.mxu0 0.0
        %5097 = vmatpush1.msra.mxu0 0.0
        %5098 = vmatprep.subr.mxu0 0.0
        %5099 = vmatpush1.msra.mxu0 0.0
        %5100 = vmatprep.subr.mxu0 0.0
        %5101 = vmatpush1.msra.mxu0 0.0
        %5102 = vmatprep.subr.mxu0 0.0
        %5103 = vmatpush1.msra.mxu0 0.0
        %5104 = vmatprep.subr.mxu0 0.0
        %5105 = vmatpush1.msra.mxu0 0.0
        %5106 = vmatprep.subr.mxu0 0.0
        %5107 = vmatpush1.msra.mxu0 0.0
        %5108 = vmatprep.subr.mxu0 0.0
        %5109 = vmatpush1.msra.mxu0 0.0
        %5110 = vmatprep.subr.mxu0 0.0
        %5111 = vmatpush1.msra.mxu0 0.0
        %5112 = vmatprep.subr.mxu0 0.0
        %5113 = vmatpush1.msra.mxu0 0.0
        %5114 = vmatprep.subr.mxu0 0.0
        %5115 = vmatpush1.msra.mxu0 0.0
        %5116 = vmatprep.subr.mxu0 0.0
        %5117 = vmatpush1.msra.mxu0 0.0
        %5118 = vmatprep.subr.mxu0 0.0
        %5119 = vmatpush1.msra.mxu0 0.0
        %5120 = vmatprep.subr.mxu0 0.0
        %5121 = vmatpush1.msra.mxu0 0.0
        %5122 = vmatprep.subr.mxu0 0.0
        %5123 = vmatpush1.msra.mxu0 0.0
        %5124 = vmatprep.subr.mxu0 0.0
        %5125 = vmatpush1.msra.mxu0 0.0
        %5126 = vmatprep.subr.mxu0 0.0
        %5127 = vmatpush1.msra.mxu0 0.0
        %5128 = vmatprep.subr.mxu0 0.0
        %5129 = vmatpush1.msra.mxu0 0.0
        %5130 = vmatprep.subr.mxu0 0.0
        %5131 = vmatpush1.msra.mxu0 0.0
        %5132 = vmatprep.subr.mxu0 0.0
        %5133 = vmatpush1.msra.mxu0 0.0
        %5134 = vmatprep.subr.mxu0 0.0
        %5135 = vmatpush1.msra.mxu0 0.0
        %5136 = vmatprep.subr.mxu0 0.0
        %5137 = vmatpush1.msra.mxu0 0.0
        %5138 = vmatprep.subr.mxu0 0.0
        %5139 = vmatpush1.msra.mxu0 0.0
        %5140 = vmatprep.mubr.f32.mxu0 0.0
        %5141 = vmatmul.mubr.f32.gmra.mrb[0].mxu0 %v5071
        %v5142 = vpop.f32.mrb[0].mxu0
        %v5143 = vadd.f32 0.0, %v5142
        %v5144 = vpop.f32.mrb[0].mxu0
        %v5145 = vadd.f32 0.0, %v5144
        %5146 = vmatprep.mubr.f32.mxu0 0.0
        %5147 = vmatmul.mubr.f32.gmra.mrb[0].mxu0 %v5074
        %v5148 = vpop.f32.mrb[0].mxu0
        %v5149 = vadd.f32 0.0, %v5148
        %v5150 = vpop.f32.mrb[0].mxu0
        %v5151 = vadd.f32 0.0, %v5150
        %5152 = vdwg.mxu0
        %v5153 = vadd.f32 %v5051, %v5143
        %v5154 = vadd.f32 %v5052, %v5145
        %v5155 = vadd.f32 %v5053, %v5149
        %v5156 = vadd.f32 %v5054, %v5151
        %5157 = vrot.lane.b32.xlu0 %v4414, 112
        %v5158 = vpop.permute.xlu0 %5157
        %5159 = vrot.lane.b32.xlu0 %v4416, 112
        %v5160 = vpop.permute.xlu0 %5159
        %5161 = vrot.lane.b32.xlu0 %v4415, 112
        %v5162 = vpop.permute.xlu0 %5161
        %5163 = vrot.lane.b32.xlu0 %v4417, 112
        %v5164 = vpop.permute.xlu0 %5163
        %v5165 = vsel %vm870, %v5158, %v5162
        %v5166 = vsel %vm870, %v5160, %v5164
        %v5167 = vsel %vm870, %v5162, %v5158
        %v5168 = vsel %vm870, %v5164, %v5160
        %s5169 = scalar_lea.vmem [#allocation2], 688
        %v5170 = vld [vmem:[%s5169] sm:$0xff]
        %v5171 = vld [vmem:[%s5169 + $0x8] sm:$0xff]
        %v5173 = vsel %vm300, %v5170, 0
        %v5176 = vsel %vm300, %v5171, 0
        %5178 = vmatprep.subr.mxu0 %v5167
        %5179 = vmatpush1.msra.mxu0 %v5165
        %5180 = vmatprep.subr.mxu0 %v5168
        %5181 = vmatpush1.msra.mxu0 %v5166
        %5182 = vmatprep.subr.mxu0 0.0
        %5183 = vmatpush1.msra.mxu0 0.0
        %5184 = vmatprep.subr.mxu0 0.0
        %5185 = vmatpush1.msra.mxu0 0.0
        %5186 = vmatprep.subr.mxu0 0.0
        %5187 = vmatpush1.msra.mxu0 0.0
        %5188 = vmatprep.subr.mxu0 0.0
        %5189 = vmatpush1.msra.mxu0 0.0
        %5190 = vmatprep.subr.mxu0 0.0
        %5191 = vmatpush1.msra.mxu0 0.0
        %5192 = vmatprep.subr.mxu0 0.0
        %5193 = vmatpush1.msra.mxu0 0.0
        %5194 = vmatprep.subr.mxu0 0.0
        %5195 = vmatpush1.msra.mxu0 0.0
        %5196 = vmatprep.subr.mxu0 0.0
        %5197 = vmatpush1.msra.mxu0 0.0
        %5198 = vmatprep.subr.mxu0 0.0
        %5199 = vmatpush1.msra.mxu0 0.0
        %5200 = vmatprep.subr.mxu0 0.0
        %5201 = vmatpush1.msra.mxu0 0.0
        %5202 = vmatprep.subr.mxu0 0.0
        %5203 = vmatpush1.msra.mxu0 0.0
        %5204 = vmatprep.subr.mxu0 0.0
        %5205 = vmatpush1.msra.mxu0 0.0
        %5206 = vmatprep.subr.mxu0 0.0
        %5207 = vmatpush1.msra.mxu0 0.0
        %5208 = vmatprep.subr.mxu0 0.0
        %5209 = vmatpush1.msra.mxu0 0.0
        %5210 = vmatprep.subr.mxu0 0.0
        %5211 = vmatpush1.msra.mxu0 0.0
        %5212 = vmatprep.subr.mxu0 0.0
        %5213 = vmatpush1.msra.mxu0 0.0
        %5214 = vmatprep.subr.mxu0 0.0
        %5215 = vmatpush1.msra.mxu0 0.0
        %5216 = vmatprep.subr.mxu0 0.0
        %5217 = vmatpush1.msra.mxu0 0.0
        %5218 = vmatprep.subr.mxu0 0.0
        %5219 = vmatpush1.msra.mxu0 0.0
        %5220 = vmatprep.subr.mxu0 0.0
        %5221 = vmatpush1.msra.mxu0 0.0
        %5222 = vmatprep.subr.mxu0 0.0
        %5223 = vmatpush1.msra.mxu0 0.0
        %5224 = vmatprep.subr.mxu0 0.0
        %5225 = vmatpush1.msra.mxu0 0.0
        %5226 = vmatprep.subr.mxu0 0.0
        %5227 = vmatpush1.msra.mxu0 0.0
        %5228 = vmatprep.subr.mxu0 0.0
        %5229 = vmatpush1.msra.mxu0 0.0
        %5230 = vmatprep.subr.mxu0 0.0
        %5231 = vmatpush1.msra.mxu0 0.0
        %5232 = vmatprep.subr.mxu0 0.0
        %5233 = vmatpush1.msra.mxu0 0.0
        %5234 = vmatprep.subr.mxu0 0.0
        %5235 = vmatpush1.msra.mxu0 0.0
        %5236 = vmatprep.subr.mxu0 0.0
        %5237 = vmatpush1.msra.mxu0 0.0
        %5238 = vmatprep.subr.mxu0 0.0
        %5239 = vmatpush1.msra.mxu0 0.0
        %5240 = vmatprep.subr.mxu0 0.0
        %5241 = vmatpush1.msra.mxu0 0.0
        %5242 = vmatprep.mubr.f32.mxu0 0.0
        %5243 = vmatmul.mubr.f32.gmra.mrb[0].mxu0 %v5173
        %v5244 = vpop.f32.mrb[0].mxu0
        %v5245 = vadd.f32 0.0, %v5244
        %v5246 = vpop.f32.mrb[0].mxu0
        %v5247 = vadd.f32 0.0, %v5246
        %5248 = vmatprep.mubr.f32.mxu0 0.0
        %5249 = vmatmul.mubr.f32.gmra.mrb[0].mxu0 %v5176
        %v5250 = vpop.f32.mrb[0].mxu0
        %v5251 = vadd.f32 0.0, %v5250
        %v5252 = vpop.f32.mrb[0].mxu0
        %v5253 = vadd.f32 0.0, %v5252
        %5254 = vdwg.mxu0
        %v5255 = vadd.f32 %v5153, %v5245
        %v5256 = vadd.f32 %v5154, %v5247
        %v5257 = vadd.f32 %v5155, %v5251
        %v5258 = vadd.f32 %v5156, %v5253
        %5259 = vrot.lane.b32.xlu0 %v4442, 112
        %v5260 = vpop.permute.xlu0 %5259
        %5261 = vrot.lane.b32.xlu0 %v4444, 112
        %v5262 = vpop.permute.xlu0 %5261
        %5263 = vrot.lane.b32.xlu0 %v4443, 112
        %v5264 = vpop.permute.xlu0 %5263
        %5265 = vrot.lane.b32.xlu0 %v4445, 112
        %v5266 = vpop.permute.xlu0 %5265
        %v5267 = vsel %vm870, %v5260, %v5264
        %v5268 = vsel %vm870, %v5262, %v5266
        %v5269 = vsel %vm870, %v5264, %v5260
        %v5270 = vsel %vm870, %v5266, %v5262
        %s5271 = scalar_lea.vmem [#allocation2], 704
        %v5272 = vld [vmem:[%s5271] sm:$0xff]
        %v5273 = vld [vmem:[%s5271 + $0x8] sm:$0xff]
        %v5275 = vsel %vm300, %v5272, 0
        %v5278 = vsel %vm300, %v5273, 0
        %5280 = vmatprep.subr.mxu0 %v5269
        %5281 = vmatpush1.msra.mxu0 %v5267
        %5282 = vmatprep.subr.mxu0 %v5270
        %5283 = vmatpush1.msra.mxu0 %v5268
        %5284 = vmatprep.subr.mxu0 0.0
        %5285 = vmatpush1.msra.mxu0 0.0
        %5286 = vmatprep.subr.mxu0 0.0
        %5287 = vmatpush1.msra.mxu0 0.0
        %5288 = vmatprep.subr.mxu0 0.0
        %5289 = vmatpush1.msra.mxu0 0.0
        %5290 = vmatprep.subr.mxu0 0.0
        %5291 = vmatpush1.msra.mxu0 0.0
        %5292 = vmatprep.subr.mxu0 0.0
        %5293 = vmatpush1.msra.mxu0 0.0
        %5294 = vmatprep.subr.mxu0 0.0
        %5295 = vmatpush1.msra.mxu0 0.0
        %5296 = vmatprep.subr.mxu0 0.0
        %5297 = vmatpush1.msra.mxu0 0.0
        %5298 = vmatprep.subr.mxu0 0.0
        %5299 = vmatpush1.msra.mxu0 0.0
        %5300 = vmatprep.subr.mxu0 0.0
        %5301 = vmatpush1.msra.mxu0 0.0
        %5302 = vmatprep.subr.mxu0 0.0
        %5303 = vmatpush1.msra.mxu0 0.0
        %5304 = vmatprep.subr.mxu0 0.0
        %5305 = vmatpush1.msra.mxu0 0.0
        %5306 = vmatprep.subr.mxu0 0.0
        %5307 = vmatpush1.msra.mxu0 0.0
        %5308 = vmatprep.subr.mxu0 0.0
        %5309 = vmatpush1.msra.mxu0 0.0
        %5310 = vmatprep.subr.mxu0 0.0
        %5311 = vmatpush1.msra.mxu0 0.0
        %5312 = vmatprep.subr.mxu0 0.0
        %5313 = vmatpush1.msra.mxu0 0.0
        %5314 = vmatprep.subr.mxu0 0.0
        %5315 = vmatpush1.msra.mxu0 0.0
        %5316 = vmatprep.subr.mxu0 0.0
        %5317 = vmatpush1.msra.mxu0 0.0
        %5318 = vmatprep.subr.mxu0 0.0
        %5319 = vmatpush1.msra.mxu0 0.0
        %5320 = vmatprep.subr.mxu0 0.0
        %5321 = vmatpush1.msra.mxu0 0.0
        %5322 = vmatprep.subr.mxu0 0.0
        %5323 = vmatpush1.msra.mxu0 0.0
        %5324 = vmatprep.subr.mxu0 0.0
        %5325 = vmatpush1.msra.mxu0 0.0
        %5326 = vmatprep.subr.mxu0 0.0
        %5327 = vmatpush1.msra.mxu0 0.0
        %5328 = vmatprep.subr.mxu0 0.0
        %5329 = vmatpush1.msra.mxu0 0.0
        %5330 = vmatprep.subr.mxu0 0.0
        %5331 = vmatpush1.msra.mxu0 0.0
        %5332 = vmatprep.subr.mxu0 0.0
        %5333 = vmatpush1.msra.mxu0 0.0
        %5334 = vmatprep.subr.mxu0 0.0
        %5335 = vmatpush1.msra.mxu0 0.0
        %5336 = vmatprep.subr.mxu0 0.0
        %5337 = vmatpush1.msra.mxu0 0.0
        %5338 = vmatprep.subr.mxu0 0.0
        %5339 = vmatpush1.msra.mxu0 0.0
        %5340 = vmatprep.subr.mxu0 0.0
        %5341 = vmatpush1.msra.mxu0 0.0
        %5342 = vmatprep.subr.mxu0 0.0
        %5343 = vmatpush1.msra.mxu0 0.0
        %5344 = vmatprep.mubr.f32.mxu0 0.0
        %5345 = vmatmul.mubr.f32.gmra.mrb[0].mxu0 %v5275
        %v5346 = vpop.f32.mrb[0].mxu0
        %v5347 = vadd.f32 0.0, %v5346
        %v5348 = vpop.f32.mrb[0].mxu0
        %v5349 = vadd.f32 0.0, %v5348
        %5350 = vmatprep.mubr.f32.mxu0 0.0
        %5351 = vmatmul.mubr.f32.gmra.mrb[0].mxu0 %v5278
        %v5352 = vpop.f32.mrb[0].mxu0
        %v5353 = vadd.f32 0.0, %v5352
        %v5354 = vpop.f32.mrb[0].mxu0
        %v5355 = vadd.f32 0.0, %v5354
        %5356 = vdwg.mxu0
        %v5357 = vadd.f32 %v5255, %v5347
        %v5358 = vadd.f32 %v5256, %v5349
        %v5359 = vadd.f32 %v5257, %v5353
        %v5360 = vadd.f32 %v5258, %v5355
        %v5361 = vadd.f32 %v5357, %v3367
        %v5362 = vadd.f32 %v5358, %v3368
        %v5363 = vadd.f32 %v5359, %v3369
        %v5364 = vadd.f32 %v5360, %v3370
        %v5365 = vmul.f32 %v5361, 0.5
        %v5366 = vmul.f32 %v5362, 0.5
        %v5367 = vmul.f32 %v5363, 0.5
        %v5368 = vmul.f32 %v5364, 0.5
        %v5369 = vmul.f32 %v5361, 0.70710677
        %v5370 = vmul.f32 %v5362, 0.70710677
        %v5371 = vmul.f32 %v5363, 0.70710677
        %v5372 = vmul.f32 %v5364, 0.70710677
        %vm5373 = vcmp.lt.f32.partialorder %v5369, 0.0
        %vm5374 = vcmp.lt.f32.partialorder %v5370, 0.0
        %vm5375 = vcmp.lt.f32.partialorder %v5371, 0.0
        %vm5376 = vcmp.lt.f32.partialorder %v5372, 0.0
        %v5377 = vsel %vm5373, -1.0, 1.0
        %v5378 = vsel %vm5374, -1.0, 1.0
        %v5379 = vsel %vm5375, -1.0, 1.0
        %v5380 = vsel %vm5376, -1.0, 1.0
        %v5381 = vand.u32 2147483647, %v5369
        %v5382 = vand.u32 2147483647, %v5370
        %v5383 = vand.u32 2147483647, %v5371
        %v5384 = vand.u32 2147483647, %v5372
        %v5385 = vmul.f32 %v5381, 0.3275911
        %v5386 = vmul.f32 %v5382, 0.3275911
        %v5387 = vmul.f32 %v5383, 0.3275911
        %v5388 = vmul.f32 %v5384, 0.3275911
        %v5389 = vadd.f32 %v5385, 1.0
        %v5390 = vadd.f32 %v5386, 1.0
        %v5391 = vadd.f32 %v5387, 1.0
        %v5392 = vadd.f32 %v5388, 1.0
        %v5393 = vrcp.pop %v5389
        %v5394 = vrcp.pop %v5390
        %v5395 = vrcp.pop %v5391
        %v5396 = vrcp.pop %v5392
        %v5397 = vmul.f32 %v5393, 1.0614054
        %v5398 = vmul.f32 %v5394, 1.0614054
        %v5399 = vmul.f32 %v5395, 1.0614054
        %v5400 = vmul.f32 %v5396, 1.0614054
        %v5401 = vadd.f32 %v5397, -1.4531521
        %v5402 = vadd.f32 %v5398, -1.4531521
        %v5403 = vadd.f32 %v5399, -1.4531521
        %v5404 = vadd.f32 %v5400, -1.4531521
        %v5405 = vmul.f32 %v5401, %v5393
        %v5406 = vmul.f32 %v5402, %v5394
        %v5407 = vmul.f32 %v5403, %v5395
        %v5408 = vmul.f32 %v5404, %v5396
        %v5409 = vadd.f32 %v5405, 1.4214138
        %v5410 = vadd.f32 %v5406, 1.4214138
        %v5411 = vadd.f32 %v5407, 1.4214138
        %v5412 = vadd.f32 %v5408, 1.4214138
        %v5413 = vmul.f32 %v5409, %v5393
        %v5414 = vmul.f32 %v5410, %v5394
        %v5415 = vmul.f32 %v5411, %v5395
        %v5416 = vmul.f32 %v5412, %v5396
        %v5417 = vadd.f32 %v5413, -0.28449672
        %v5418 = vadd.f32 %v5414, -0.28449672
        %v5419 = vadd.f32 %v5415, -0.28449672
        %v5420 = vadd.f32 %v5416, -0.28449672
        %v5421 = vmul.f32 %v5417, %v5393
        %v5422 = vmul.f32 %v5418, %v5394
        %v5423 = vmul.f32 %v5419, %v5395
        %v5424 = vmul.f32 %v5420, %v5396
        %v5425 = vadd.f32 %v5421, 0.2548296
        %v5426 = vadd.f32 %v5422, 0.2548296
        %v5427 = vadd.f32 %v5423, 0.2548296
        %v5428 = vadd.f32 %v5424, 0.2548296
        %v5429 = vmul.f32 %v5425, %v5393
        %v5430 = vmul.f32 %v5426, %v5394
        %v5431 = vmul.f32 %v5427, %v5395
        %v5432 = vmul.f32 %v5428, %v5396
        %v5433 = vsub.f32 0.0, %v5381
        %v5434 = vsub.f32 0.0, %v5382
        %v5435 = vsub.f32 0.0, %v5383
        %v5436 = vsub.f32 0.0, %v5384
        %v5437 = vmul.f32 %v5433, %v5381
        %v5438 = vmul.f32 %v5434, %v5382
        %v5439 = vmul.f32 %v5435, %v5383
        %v5440 = vmul.f32 %v5436, %v5384
        %v5441 = vmul.f32 %v5437, 1.442695
        %v5442 = vpow.pop %v5441
        %v5443 = vmul.f32 %v5438, 1.442695
        %v5444 = vpow.pop %v5443
        %v5445 = vmul.f32 %v5439, 1.442695
        %v5446 = vpow.pop %v5445
        %v5447 = vmul.f32 %v5440, 1.442695
        %v5448 = vpow.pop %v5447
        %v5449 = vmul.f32 %v5429, %v5442
        %v5450 = vmul.f32 %v5430, %v5444
        %v5451 = vmul.f32 %v5431, %v5446
        %v5452 = vmul.f32 %v5432, %v5448
        %v5453 = vsub.f32 1.0, %v5449
        %v5454 = vsub.f32 1.0, %v5450
        %v5455 = vsub.f32 1.0, %v5451
        %v5456 = vsub.f32 1.0, %v5452
        %v5457 = vmul.f32 %v5377, %v5453
        %v5458 = vmul.f32 %v5378, %v5454
        %v5459 = vmul.f32 %v5379, %v5455
        %v5460 = vmul.f32 %v5380, %v5456
        %v5461 = vadd.f32 %v5457, 1.0
        %v5462 = vadd.f32 %v5458, 1.0
        %v5463 = vadd.f32 %v5459, 1.0
        %v5464 = vadd.f32 %v5460, 1.0
        %v5465 = vmul.f32 %v5365, %v5461
        %v5466 = vmul.f32 %v5366, %v5462
        %v5467 = vmul.f32 %v5367, %v5463
        %v5468 = vmul.f32 %v5368, %v5464
        %5469 = vrot.lane.b32.xlu0 %v5465, 15
        %v5470 = vpop.permute.xlu0 %5469
        %5471 = vrot.lane.b32.xlu0 %v5467, 15
        %v5472 = vpop.permute.xlu0 %5471
        %5473 = vrot.lane.b32.xlu0 %v5466, 15
        %v5474 = vpop.permute.xlu0 %5473
        %5475 = vrot.lane.b32.xlu0 %v5468, 15
        %v5476 = vpop.permute.xlu0 %5475
        %v5477 = vsel %vm229, %v5470, %v5474
        %v5478 = vsel %vm229, %v5472, %v5476
        %v5479 = vsel %vm229, %v5474, %v5470
        %v5480 = vsel %vm229, %v5476, %v5472
        %5481 = vrot.lane.b32.xlu0 %v5465, 127
        %v5482 = vpop.permute.xlu0 %5481
        %5483 = vrot.lane.b32.xlu0 %v5467, 127
        %v5484 = vpop.permute.xlu0 %5483
        %5485 = vrot.lane.b32.xlu0 %v5466, 127
        %v5486 = vpop.permute.xlu0 %5485
        %5487 = vrot.lane.b32.xlu0 %v5468, 127
        %v5488 = vpop.permute.xlu0 %5487
        %v5489 = vsel %vm242, %v5482, %v5486
        %v5490 = vsel %vm242, %v5484, %v5488
        %v5491 = vsel %vm242, %v5486, %v5482
        %v5492 = vsel %vm242, %v5488, %v5484
        %v5493 = vsel %vm215, %v5479, %v5489
        %v5494 = vsel %vm216, %v5477, %v5491
        %v5495 = vsel %vm215, %v5480, %v5490
        %v5496 = vsel %vm216, %v5478, %v5492
        %5497 = vrot.lane.b32.xlu0 %v5465, 113
        %v5498 = vpop.permute.xlu0 %5497
        %5499 = vrot.lane.b32.xlu0 %v5467, 113
        %v5500 = vpop.permute.xlu0 %5499
        %5501 = vrot.lane.b32.xlu0 %v5466, 113
        %v5502 = vpop.permute.xlu0 %5501
        %5503 = vrot.lane.b32.xlu0 %v5468, 113
        %v5504 = vpop.permute.xlu0 %5503
        %v5505 = vsel %vm259, %v5498, %v5502
        %v5506 = vsel %vm259, %v5500, %v5504
        %v5507 = vsel %vm259, %v5502, %v5498
        %v5508 = vsel %vm259, %v5504, %v5500
        %5509 = vrot.lane.b32.xlu0 %v5465, 1
        %v5510 = vpop.permute.xlu0 %5509
        %5511 = vrot.lane.b32.xlu0 %v5467, 1
        %v5512 = vpop.permute.xlu0 %5511
        %5513 = vrot.lane.b32.xlu0 %v5466, 1
        %v5514 = vpop.permute.xlu0 %5513
        %5515 = vrot.lane.b32.xlu0 %v5468, 1
        %v5516 = vpop.permute.xlu0 %5515
        %v5517 = vsel %vm272, %v5510, %v5514
        %v5518 = vsel %vm272, %v5512, %v5516
        %v5519 = vsel %vm272, %v5514, %v5510
        %v5520 = vsel %vm272, %v5516, %v5512
        %v5521 = vsel %vm213, %v5505, %v5519
        %v5522 = vsel %vm214, %v5507, %v5517
        %v5523 = vsel %vm213, %v5506, %v5520
        %v5524 = vsel %vm214, %v5508, %v5518
        %s5525 = scalar_lea.vmem %s2, 160
        %v5526 = vld [vmem:[%s5525] sm:$0xff]
        %v5527 = vld [vmem:[%s5525 + $0x8] sm:$0xff]
        %v5528 = vld [vmem:[%s5525 + $0x10] sm:$0xff]
        %v5529 = vld [vmem:[%s5525 + $0x18] sm:$0xff]
        %5530 = vrot.lane.b32.xlu0 %v5521, 16
        %v5531 = vpop.permute.xlu0 %5530
        %5532 = vrot.lane.b32.xlu0 %v5523, 16
        %v5533 = vpop.permute.xlu0 %5532
        %5534 = vrot.lane.b32.xlu0 %v5522, 16
        %v5535 = vpop.permute.xlu0 %5534
        %5536 = vrot.lane.b32.xlu0 %v5524, 16
        %v5537 = vpop.permute.xlu0 %5536
        %v5538 = vsel %vm293, %v5531, %v5535
        %v5539 = vsel %vm293, %v5533, %v5537
        %v5540 = vsel %vm293, %v5535, %v5531
        %v5541 = vsel %vm293, %v5537, %v5533
        %s5542 = scalar_lea.vmem [#allocation2], 720
        %v5543 = vld [vmem:[%s5542] sm:$0xff]
        %v5544 = vld [vmem:[%s5542 + $0x8] sm:$0xff]
        %v5546 = vsel %vm300, %v5543, 0
        %v5549 = vsel %vm300, %v5544, 0
        %5551 = vmatprep.subr.mxu0 %v5538
        %5552 = vmatpush1.msra.mxu0 %v5540
        %5553 = vmatprep.subr.mxu0 %v5539
        %5554 = vmatpush1.msra.mxu0 %v5541
        %5555 = vmatprep.subr.mxu0 0.0
        %5556 = vmatpush1.msra.mxu0 0.0
        %5557 = vmatprep.subr.mxu0 0.0
        %5558 = vmatpush1.msra.mxu0 0.0
        %5559 = vmatprep.subr.mxu0 0.0
        %5560 = vmatpush1.msra.mxu0 0.0
        %5561 = vmatprep.subr.mxu0 0.0
        %5562 = vmatpush1.msra.mxu0 0.0
        %5563 = vmatprep.subr.mxu0 0.0
        %5564 = vmatpush1.msra.mxu0 0.0
        %5565 = vmatprep.subr.mxu0 0.0
        %5566 = vmatpush1.msra.mxu0 0.0
        %5567 = vmatprep.subr.mxu0 0.0
        %5568 = vmatpush1.msra.mxu0 0.0
        %5569 = vmatprep.subr.mxu0 0.0
        %5570 = vmatpush1.msra.mxu0 0.0
        %5571 = vmatprep.subr.mxu0 0.0
        %5572 = vmatpush1.msra.mxu0 0.0
        %5573 = vmatprep.subr.mxu0 0.0
        %5574 = vmatpush1.msra.mxu0 0.0
        %5575 = vmatprep.subr.mxu0 0.0
        %5576 = vmatpush1.msra.mxu0 0.0
        %5577 = vmatprep.subr.mxu0 0.0
        %5578 = vmatpush1.msra.mxu0 0.0
        %5579 = vmatprep.subr.mxu0 0.0
        %5580 = vmatpush1.msra.mxu0 0.0
        %5581 = vmatprep.subr.mxu0 0.0
        %5582 = vmatpush1.msra.mxu0 0.0
        %5583 = vmatprep.subr.mxu0 0.0
        %5584 = vmatpush1.msra.mxu0 0.0
        %5585 = vmatprep.subr.mxu0 0.0
        %5586 = vmatpush1.msra.mxu0 0.0
        %5587 = vmatprep.subr.mxu0 0.0
        %5588 = vmatpush1.msra.mxu0 0.0
        %5589 = vmatprep.subr.mxu0 0.0
        %5590 = vmatpush1.msra.mxu0 0.0
        %5591 = vmatprep.subr.mxu0 0.0
        %5592 = vmatpush1.msra.mxu0 0.0
        %5593 = vmatprep.subr.mxu0 0.0
        %5594 = vmatpush1.msra.mxu0 0.0
        %5595 = vmatprep.subr.mxu0 0.0
        %5596 = vmatpush1.msra.mxu0 0.0
        %5597 = vmatprep.subr.mxu0 0.0
        %5598 = vmatpush1.msra.mxu0 0.0
        %5599 = vmatprep.subr.mxu0 0.0
        %5600 = vmatpush1.msra.mxu0 0.0
        %5601 = vmatprep.subr.mxu0 0.0
        %5602 = vmatpush1.msra.mxu0 0.0
        %5603 = vmatprep.subr.mxu0 0.0
        %5604 = vmatpush1.msra.mxu0 0.0
        %5605 = vmatprep.subr.mxu0 0.0
        %5606 = vmatpush1.msra.mxu0 0.0
        %5607 = vmatprep.subr.mxu0 0.0
        %5608 = vmatpush1.msra.mxu0 0.0
        %5609 = vmatprep.subr.mxu0 0.0
        %5610 = vmatpush1.msra.mxu0 0.0
        %5611 = vmatprep.subr.mxu0 0.0
        %5612 = vmatpush1.msra.mxu0 0.0
        %5613 = vmatprep.subr.mxu0 0.0
        %5614 = vmatpush1.msra.mxu0 0.0
        %5615 = vmatprep.mubr.f32.mxu0 0.0
        %5616 = vmatmul.mubr.f32.gmra.mrb[0].mxu0 %v5546
        %v5617 = vpop.f32.mrb[0].mxu0
        %v5618 = vadd.f32 0.0, %v5617
        %v5619 = vpop.f32.mrb[0].mxu0
        %v5620 = vadd.f32 0.0, %v5619
        %5621 = vmatprep.mubr.f32.mxu0 0.0
        %5622 = vmatmul.mubr.f32.gmra.mrb[0].mxu0 %v5549
        %v5623 = vpop.f32.mrb[0].mxu0
        %v5624 = vadd.f32 0.0, %v5623
        %v5625 = vpop.f32.mrb[0].mxu0
        %v5626 = vadd.f32 0.0, %v5625
        %5627 = vdwg.mxu0
        %v5628 = vadd.f32 %v5526, %v5618
        %v5629 = vadd.f32 %v5527, %v5620
        %v5630 = vadd.f32 %v5528, %v5624
        %v5631 = vadd.f32 %v5529, %v5626
        %5632 = vrot.lane.b32.xlu0 %v5465, 16
        %v5633 = vpop.permute.xlu0 %5632
        %5634 = vrot.lane.b32.xlu0 %v5467, 16
        %v5635 = vpop.permute.xlu0 %5634
        %5636 = vrot.lane.b32.xlu0 %v5466, 16
        %v5637 = vpop.permute.xlu0 %5636
        %5638 = vrot.lane.b32.xlu0 %v5468, 16
        %v5639 = vpop.permute.xlu0 %5638
        %v5640 = vsel %vm293, %v5633, %v5637
        %v5641 = vsel %vm293, %v5635, %v5639
        %v5642 = vsel %vm293, %v5637, %v5633
        %v5643 = vsel %vm293, %v5639, %v5635
        %s5644 = scalar_lea.vmem [#allocation2], 736
        %v5645 = vld [vmem:[%s5644] sm:$0xff]
        %v5646 = vld [vmem:[%s5644 + $0x8] sm:$0xff]
        %v5648 = vsel %vm300, %v5645, 0
        %v5651 = vsel %vm300, %v5646, 0
        %5653 = vmatprep.subr.mxu0 %v5640
        %5654 = vmatpush1.msra.mxu0 %v5642
        %5655 = vmatprep.subr.mxu0 %v5641
        %5656 = vmatpush1.msra.mxu0 %v5643
        %5657 = vmatprep.subr.mxu0 0.0
        %5658 = vmatpush1.msra.mxu0 0.0
        %5659 = vmatprep.subr.mxu0 0.0
        %5660 = vmatpush1.msra.mxu0 0.0
        %5661 = vmatprep.subr.mxu0 0.0
        %5662 = vmatpush1.msra.mxu0 0.0
        %5663 = vmatprep.subr.mxu0 0.0
        %5664 = vmatpush1.msra.mxu0 0.0
        %5665 = vmatprep.subr.mxu0 0.0
        %5666 = vmatpush1.msra.mxu0 0.0
        %5667 = vmatprep.subr.mxu0 0.0
        %5668 = vmatpush1.msra.mxu0 0.0
        %5669 = vmatprep.subr.mxu0 0.0
        %5670 = vmatpush1.msra.mxu0 0.0
        %5671 = vmatprep.subr.mxu0 0.0
        %5672 = vmatpush1.msra.mxu0 0.0
        %5673 = vmatprep.subr.mxu0 0.0
        %5674 = vmatpush1.msra.mxu0 0.0
        %5675 = vmatprep.subr.mxu0 0.0
        %5676 = vmatpush1.msra.mxu0 0.0
        %5677 = vmatprep.subr.mxu0 0.0
        %5678 = vmatpush1.msra.mxu0 0.0
        %5679 = vmatprep.subr.mxu0 0.0
        %5680 = vmatpush1.msra.mxu0 0.0
        %5681 = vmatprep.subr.mxu0 0.0
        %5682 = vmatpush1.msra.mxu0 0.0
        %5683 = vmatprep.subr.mxu0 0.0
        %5684 = vmatpush1.msra.mxu0 0.0
        %5685 = vmatprep.subr.mxu0 0.0
        %5686 = vmatpush1.msra.mxu0 0.0
        %5687 = vmatprep.subr.mxu0 0.0
        %5688 = vmatpush1.msra.mxu0 0.0
        %5689 = vmatprep.subr.mxu0 0.0
        %5690 = vmatpush1.msra.mxu0 0.0
        %5691 = vmatprep.subr.mxu0 0.0
        %5692 = vmatpush1.msra.mxu0 0.0
        %5693 = vmatprep.subr.mxu0 0.0
        %5694 = vmatpush1.msra.mxu0 0.0
        %5695 = vmatprep.subr.mxu0 0.0
        %5696 = vmatpush1.msra.mxu0 0.0
        %5697 = vmatprep.subr.mxu0 0.0
        %5698 = vmatpush1.msra.mxu0 0.0
        %5699 = vmatprep.subr.mxu0 0.0
        %5700 = vmatpush1.msra.mxu0 0.0
        %5701 = vmatprep.subr.mxu0 0.0
        %5702 = vmatpush1.msra.mxu0 0.0
        %5703 = vmatprep.subr.mxu0 0.0
        %5704 = vmatpush1.msra.mxu0 0.0
        %5705 = vmatprep.subr.mxu0 0.0
        %5706 = vmatpush1.msra.mxu0 0.0
        %5707 = vmatprep.subr.mxu0 0.0
        %5708 = vmatpush1.msra.mxu0 0.0
        %5709 = vmatprep.subr.mxu0 0.0
        %5710 = vmatpush1.msra.mxu0 0.0
        %5711 = vmatprep.subr.mxu0 0.0
        %5712 = vmatpush1.msra.mxu0 0.0
        %5713 = vmatprep.subr.mxu0 0.0
        %5714 = vmatpush1.msra.mxu0 0.0
        %5715 = vmatprep.subr.mxu0 0.0
        %5716 = vmatpush1.msra.mxu0 0.0
        %5717 = vmatprep.mubr.f32.mxu0 0.0
        %5718 = vmatmul.mubr.f32.gmra.mrb[0].mxu0 %v5648
        %v5719 = vpop.f32.mrb[0].mxu0
        %v5720 = vadd.f32 0.0, %v5719
        %v5721 = vpop.f32.mrb[0].mxu0
        %v5722 = vadd.f32 0.0, %v5721
        %5723 = vmatprep.mubr.f32.mxu0 0.0
        %5724 = vmatmul.mubr.f32.gmra.mrb[0].mxu0 %v5651
        %v5725 = vpop.f32.mrb[0].mxu0
        %v5726 = vadd.f32 0.0, %v5725
        %v5727 = vpop.f32.mrb[0].mxu0
        %v5728 = vadd.f32 0.0, %v5727
        %5729 = vdwg.mxu0
        %v5730 = vadd.f32 %v5628, %v5720
        %v5731 = vadd.f32 %v5629, %v5722
        %v5732 = vadd.f32 %v5630, %v5726
        %v5733 = vadd.f32 %v5631, %v5728
        %5734 = vrot.lane.b32.xlu0 %v5493, 16
        %v5735 = vpop.permute.xlu0 %5734
        %5736 = vrot.lane.b32.xlu0 %v5495, 16
        %v5737 = vpop.permute.xlu0 %5736
        %5738 = vrot.lane.b32.xlu0 %v5494, 16
        %v5739 = vpop.permute.xlu0 %5738
        %5740 = vrot.lane.b32.xlu0 %v5496, 16
        %v5741 = vpop.permute.xlu0 %5740
        %v5742 = vsel %vm293, %v5735, %v5739
        %v5743 = vsel %vm293, %v5737, %v5741
        %v5744 = vsel %vm293, %v5739, %v5735
        %v5745 = vsel %vm293, %v5741, %v5737
        %s5746 = scalar_lea.vmem [#allocation2], 752
        %v5747 = vld [vmem:[%s5746] sm:$0xff]
        %v5748 = vld [vmem:[%s5746 + $0x8] sm:$0xff]
        %v5750 = vsel %vm300, %v5747, 0
        %v5753 = vsel %vm300, %v5748, 0
        %5755 = vmatprep.subr.mxu0 %v5742
        %5756 = vmatpush1.msra.mxu0 %v5744
        %5757 = vmatprep.subr.mxu0 %v5743
        %5758 = vmatpush1.msra.mxu0 %v5745
        %5759 = vmatprep.subr.mxu0 0.0
        %5760 = vmatpush1.msra.mxu0 0.0
        %5761 = vmatprep.subr.mxu0 0.0
        %5762 = vmatpush1.msra.mxu0 0.0
        %5763 = vmatprep.subr.mxu0 0.0
        %5764 = vmatpush1.msra.mxu0 0.0
        %5765 = vmatprep.subr.mxu0 0.0
        %5766 = vmatpush1.msra.mxu0 0.0
        %5767 = vmatprep.subr.mxu0 0.0
        %5768 = vmatpush1.msra.mxu0 0.0
        %5769 = vmatprep.subr.mxu0 0.0
        %5770 = vmatpush1.msra.mxu0 0.0
        %5771 = vmatprep.subr.mxu0 0.0
        %5772 = vmatpush1.msra.mxu0 0.0
        %5773 = vmatprep.subr.mxu0 0.0
        %5774 = vmatpush1.msra.mxu0 0.0
        %5775 = vmatprep.subr.mxu0 0.0
        %5776 = vmatpush1.msra.mxu0 0.0
        %5777 = vmatprep.subr.mxu0 0.0
        %5778 = vmatpush1.msra.mxu0 0.0
        %5779 = vmatprep.subr.mxu0 0.0
        %5780 = vmatpush1.msra.mxu0 0.0
        %5781 = vmatprep.subr.mxu0 0.0
        %5782 = vmatpush1.msra.mxu0 0.0
        %5783 = vmatprep.subr.mxu0 0.0
        %5784 = vmatpush1.msra.mxu0 0.0
        %5785 = vmatprep.subr.mxu0 0.0
        %5786 = vmatpush1.msra.mxu0 0.0
        %5787 = vmatprep.subr.mxu0 0.0
        %5788 = vmatpush1.msra.mxu0 0.0
        %5789 = vmatprep.subr.mxu0 0.0
        %5790 = vmatpush1.msra.mxu0 0.0
        %5791 = vmatprep.subr.mxu0 0.0
        %5792 = vmatpush1.msra.mxu0 0.0
        %5793 = vmatprep.subr.mxu0 0.0
        %5794 = vmatpush1.msra.mxu0 0.0
        %5795 = vmatprep.subr.mxu0 0.0
        %5796 = vmatpush1.msra.mxu0 0.0
        %5797 = vmatprep.subr.mxu0 0.0
        %5798 = vmatpush1.msra.mxu0 0.0
        %5799 = vmatprep.subr.mxu0 0.0
        %5800 = vmatpush1.msra.mxu0 0.0
        %5801 = vmatprep.subr.mxu0 0.0
        %5802 = vmatpush1.msra.mxu0 0.0
        %5803 = vmatprep.subr.mxu0 0.0
        %5804 = vmatpush1.msra.mxu0 0.0
        %5805 = vmatprep.subr.mxu0 0.0
        %5806 = vmatpush1.msra.mxu0 0.0
        %5807 = vmatprep.subr.mxu0 0.0
        %5808 = vmatpush1.msra.mxu0 0.0
        %5809 = vmatprep.subr.mxu0 0.0
        %5810 = vmatpush1.msra.mxu0 0.0
        %5811 = vmatprep.subr.mxu0 0.0
        %5812 = vmatpush1.msra.mxu0 0.0
        %5813 = vmatprep.subr.mxu0 0.0
        %5814 = vmatpush1.msra.mxu0 0.0
        %5815 = vmatprep.subr.mxu0 0.0
        %5816 = vmatpush1.msra.mxu0 0.0
        %5817 = vmatprep.subr.mxu0 0.0
        %5818 = vmatpush1.msra.mxu0 0.0
        %5819 = vmatprep.mubr.f32.mxu0 0.0
        %5820 = vmatmul.mubr.f32.gmra.mrb[0].mxu0 %v5750
        %v5821 = vpop.f32.mrb[0].mxu0
        %v5822 = vadd.f32 0.0, %v5821
        %v5823 = vpop.f32.mrb[0].mxu0
        %v5824 = vadd.f32 0.0, %v5823
        %5825 = vmatprep.mubr.f32.mxu0 0.0
        %5826 = vmatmul.mubr.f32.gmra.mrb[0].mxu0 %v5753
        %v5827 = vpop.f32.mrb[0].mxu0
        %v5828 = vadd.f32 0.0, %v5827
        %v5829 = vpop.f32.mrb[0].mxu0
        %v5830 = vadd.f32 0.0, %v5829
        %5831 = vdwg.mxu0
        %v5832 = vadd.f32 %v5730, %v5822
        %v5833 = vadd.f32 %v5731, %v5824
        %v5834 = vadd.f32 %v5732, %v5828
        %v5835 = vadd.f32 %v5733, %v5830
        %s5836 = scalar_lea.vmem [#allocation2], 768
        %v5837 = vld [vmem:[%s5836] sm:$0xff]
        %v5838 = vld [vmem:[%s5836 + $0x8] sm:$0xff]
        %v5840 = vsel %vm300, %v5837, 0
        %v5843 = vsel %vm300, %v5838, 0
        %5845 = vmatprep.subr.mxu0 %v5522
        %5846 = vmatpush1.msra.mxu0 %v5521
        %5847 = vmatprep.subr.mxu0 %v5524
        %5848 = vmatpush1.msra.mxu0 %v5523
        %5849 = vmatprep.subr.mxu0 0.0
        %5850 = vmatpush1.msra.mxu0 0.0
        %5851 = vmatprep.subr.mxu0 0.0
        %5852 = vmatpush1.msra.mxu0 0.0
        %5853 = vmatprep.subr.mxu0 0.0
        %5854 = vmatpush1.msra.mxu0 0.0
        %5855 = vmatprep.subr.mxu0 0.0
        %5856 = vmatpush1.msra.mxu0 0.0
        %5857 = vmatprep.subr.mxu0 0.0
        %5858 = vmatpush1.msra.mxu0 0.0
        %5859 = vmatprep.subr.mxu0 0.0
        %5860 = vmatpush1.msra.mxu0 0.0
        %5861 = vmatprep.subr.mxu0 0.0
        %5862 = vmatpush1.msra.mxu0 0.0
        %5863 = vmatprep.subr.mxu0 0.0
        %5864 = vmatpush1.msra.mxu0 0.0
        %5865 = vmatprep.subr.mxu0 0.0
        %5866 = vmatpush1.msra.mxu0 0.0
        %5867 = vmatprep.subr.mxu0 0.0
        %5868 = vmatpush1.msra.mxu0 0.0
        %5869 = vmatprep.subr.mxu0 0.0
        %5870 = vmatpush1.msra.mxu0 0.0
        %5871 = vmatprep.subr.mxu0 0.0
        %5872 = vmatpush1.msra.mxu0 0.0
        %5873 = vmatprep.subr.mxu0 0.0
        %5874 = vmatpush1.msra.mxu0 0.0
        %5875 = vmatprep.subr.mxu0 0.0
        %5876 = vmatpush1.msra.mxu0 0.0
        %5877 = vmatprep.subr.mxu0 0.0
        %5878 = vmatpush1.msra.mxu0 0.0
        %5879 = vmatprep.subr.mxu0 0.0
        %5880 = vmatpush1.msra.mxu0 0.0
        %5881 = vmatprep.subr.mxu0 0.0
        %5882 = vmatpush1.msra.mxu0 0.0
        %5883 = vmatprep.subr.mxu0 0.0
        %5884 = vmatpush1.msra.mxu0 0.0
        %5885 = vmatprep.subr.mxu0 0.0
        %5886 = vmatpush1.msra.mxu0 0.0
        %5887 = vmatprep.subr.mxu0 0.0
        %5888 = vmatpush1.msra.mxu0 0.0
        %5889 = vmatprep.subr.mxu0 0.0
        %5890 = vmatpush1.msra.mxu0 0.0
        %5891 = vmatprep.subr.mxu0 0.0
        %5892 = vmatpush1.msra.mxu0 0.0
        %5893 = vmatprep.subr.mxu0 0.0
        %5894 = vmatpush1.msra.mxu0 0.0
        %5895 = vmatprep.subr.mxu0 0.0
        %5896 = vmatpush1.msra.mxu0 0.0
        %5897 = vmatprep.subr.mxu0 0.0
        %5898 = vmatpush1.msra.mxu0 0.0
        %5899 = vmatprep.subr.mxu0 0.0
        %5900 = vmatpush1.msra.mxu0 0.0
        %5901 = vmatprep.subr.mxu0 0.0
        %5902 = vmatpush1.msra.mxu0 0.0
        %5903 = vmatprep.subr.mxu0 0.0
        %5904 = vmatpush1.msra.mxu0 0.0
        %5905 = vmatprep.subr.mxu0 0.0
        %5906 = vmatpush1.msra.mxu0 0.0
        %5907 = vmatprep.subr.mxu0 0.0
        %5908 = vmatpush1.msra.mxu0 0.0
        %5909 = vmatprep.mubr.f32.mxu0 0.0
        %5910 = vmatmul.mubr.f32.gmra.mrb[0].mxu0 %v5840
        %v5911 = vpop.f32.mrb[0].mxu0
        %v5912 = vadd.f32 0.0, %v5911
        %v5913 = vpop.f32.mrb[0].mxu0
        %v5914 = vadd.f32 0.0, %v5913
        %5915 = vmatprep.mubr.f32.mxu0 0.0
        %5916 = vmatmul.mubr.f32.gmra.mrb[0].mxu0 %v5843
        %v5917 = vpop.f32.mrb[0].mxu0
        %v5918 = vadd.f32 0.0, %v5917
        %v5919 = vpop.f32.mrb[0].mxu0
        %v5920 = vadd.f32 0.0, %v5919
        %5921 = vdwg.mxu0
        %v5922 = vadd.f32 %v5832, %v5912
        %v5923 = vadd.f32 %v5833, %v5914
        %v5924 = vadd.f32 %v5834, %v5918
        %v5925 = vadd.f32 %v5835, %v5920
        %s5926 = scalar_lea.vmem [#allocation2], 784
        %v5927 = vld [vmem:[%s5926] sm:$0xff]
        %v5928 = vld [vmem:[%s5926 + $0x8] sm:$0xff]
        %v5930 = vsel %vm300, %v5927, 0
        %v5933 = vsel %vm300, %v5928, 0
        %5935 = vmatprep.subr.mxu0 %v5466
        %5936 = vmatpush1.msra.mxu0 %v5465
        %5937 = vmatprep.subr.mxu0 %v5468
        %5938 = vmatpush1.msra.mxu0 %v5467
        %5939 = vmatprep.subr.mxu0 0.0
        %5940 = vmatpush1.msra.mxu0 0.0
        %5941 = vmatprep.subr.mxu0 0.0
        %5942 = vmatpush1.msra.mxu0 0.0
        %5943 = vmatprep.subr.mxu0 0.0
        %5944 = vmatpush1.msra.mxu0 0.0
        %5945 = vmatprep.subr.mxu0 0.0
        %5946 = vmatpush1.msra.mxu0 0.0
        %5947 = vmatprep.subr.mxu0 0.0
        %5948 = vmatpush1.msra.mxu0 0.0
        %5949 = vmatprep.subr.mxu0 0.0
        %5950 = vmatpush1.msra.mxu0 0.0
        %5951 = vmatprep.subr.mxu0 0.0
        %5952 = vmatpush1.msra.mxu0 0.0
        %5953 = vmatprep.subr.mxu0 0.0
        %5954 = vmatpush1.msra.mxu0 0.0
        %5955 = vmatprep.subr.mxu0 0.0
        %5956 = vmatpush1.msra.mxu0 0.0
        %5957 = vmatprep.subr.mxu0 0.0
        %5958 = vmatpush1.msra.mxu0 0.0
        %5959 = vmatprep.subr.mxu0 0.0
        %5960 = vmatpush1.msra.mxu0 0.0
        %5961 = vmatprep.subr.mxu0 0.0
        %5962 = vmatpush1.msra.mxu0 0.0
        %5963 = vmatprep.subr.mxu0 0.0
        %5964 = vmatpush1.msra.mxu0 0.0
        %5965 = vmatprep.subr.mxu0 0.0
        %5966 = vmatpush1.msra.mxu0 0.0
        %5967 = vmatprep.subr.mxu0 0.0
        %5968 = vmatpush1.msra.mxu0 0.0
        %5969 = vmatprep.subr.mxu0 0.0
        %5970 = vmatpush1.msra.mxu0 0.0
        %5971 = vmatprep.subr.mxu0 0.0
        %5972 = vmatpush1.msra.mxu0 0.0
        %5973 = vmatprep.subr.mxu0 0.0
        %5974 = vmatpush1.msra.mxu0 0.0
        %5975 = vmatprep.subr.mxu0 0.0
        %5976 = vmatpush1.msra.mxu0 0.0
        %5977 = vmatprep.subr.mxu0 0.0
        %5978 = vmatpush1.msra.mxu0 0.0
        %5979 = vmatprep.subr.mxu0 0.0
        %5980 = vmatpush1.msra.mxu0 0.0
        %5981 = vmatprep.subr.mxu0 0.0
        %5982 = vmatpush1.msra.mxu0 0.0
        %5983 = vmatprep.subr.mxu0 0.0
        %5984 = vmatpush1.msra.mxu0 0.0
        %5985 = vmatprep.subr.mxu0 0.0
        %5986 = vmatpush1.msra.mxu0 0.0
        %5987 = vmatprep.subr.mxu0 0.0
        %5988 = vmatpush1.msra.mxu0 0.0
        %5989 = vmatprep.subr.mxu0 0.0
        %5990 = vmatpush1.msra.mxu0 0.0
        %5991 = vmatprep.subr.mxu0 0.0
        %5992 = vmatpush1.msra.mxu0 0.0
        %5993 = vmatprep.subr.mxu0 0.0
        %5994 = vmatpush1.msra.mxu0 0.0
        %5995 = vmatprep.subr.mxu0 0.0
        %5996 = vmatpush1.msra.mxu0 0.0
        %5997 = vmatprep.subr.mxu0 0.0
        %5998 = vmatpush1.msra.mxu0 0.0
        %5999 = vmatprep.mubr.f32.mxu0 0.0
        %6000 = vmatmul.mubr.f32.gmra.mrb[0].mxu0 %v5930
        %v6001 = vpop.f32.mrb[0].mxu0
        %v6002 = vadd.f32 0.0, %v6001
        %v6003 = vpop.f32.mrb[0].mxu0
        %v6004 = vadd.f32 0.0, %v6003
        %6005 = vmatprep.mubr.f32.mxu0 0.0
        %6006 = vmatmul.mubr.f32.gmra.mrb[0].mxu0 %v5933
        %v6007 = vpop.f32.mrb[0].mxu0
        %v6008 = vadd.f32 0.0, %v6007
        %v6009 = vpop.f32.mrb[0].mxu0
        %v6010 = vadd.f32 0.0, %v6009
        %6011 = vdwg.mxu0
        %v6012 = vadd.f32 %v5922, %v6002
        %v6013 = vadd.f32 %v5923, %v6004
        %v6014 = vadd.f32 %v5924, %v6008
        %v6015 = vadd.f32 %v5925, %v6010
        %s6016 = scalar_lea.vmem [#allocation2], 800
        %v6017 = vld [vmem:[%s6016] sm:$0xff]
        %v6018 = vld [vmem:[%s6016 + $0x8] sm:$0xff]
        %v6020 = vsel %vm300, %v6017, 0
        %v6023 = vsel %vm300, %v6018, 0
        %6025 = vmatprep.subr.mxu0 %v5494
        %6026 = vmatpush1.msra.mxu0 %v5493
        %6027 = vmatprep.subr.mxu0 %v5496
        %6028 = vmatpush1.msra.mxu0 %v5495
        %6029 = vmatprep.subr.mxu0 0.0
        %6030 = vmatpush1.msra.mxu0 0.0
        %6031 = vmatprep.subr.mxu0 0.0
        %6032 = vmatpush1.msra.mxu0 0.0
        %6033 = vmatprep.subr.mxu0 0.0
        %6034 = vmatpush1.msra.mxu0 0.0
        %6035 = vmatprep.subr.mxu0 0.0
        %6036 = vmatpush1.msra.mxu0 0.0
        %6037 = vmatprep.subr.mxu0 0.0
        %6038 = vmatpush1.msra.mxu0 0.0
        %6039 = vmatprep.subr.mxu0 0.0
        %6040 = vmatpush1.msra.mxu0 0.0
        %6041 = vmatprep.subr.mxu0 0.0
        %6042 = vmatpush1.msra.mxu0 0.0
        %6043 = vmatprep.subr.mxu0 0.0
        %6044 = vmatpush1.msra.mxu0 0.0
        %6045 = vmatprep.subr.mxu0 0.0
        %6046 = vmatpush1.msra.mxu0 0.0
        %6047 = vmatprep.subr.mxu0 0.0
        %6048 = vmatpush1.msra.mxu0 0.0
        %6049 = vmatprep.subr.mxu0 0.0
        %6050 = vmatpush1.msra.mxu0 0.0
        %6051 = vmatprep.subr.mxu0 0.0
        %6052 = vmatpush1.msra.mxu0 0.0
        %6053 = vmatprep.subr.mxu0 0.0
        %6054 = vmatpush1.msra.mxu0 0.0
        %6055 = vmatprep.subr.mxu0 0.0
        %6056 = vmatpush1.msra.mxu0 0.0
        %6057 = vmatprep.subr.mxu0 0.0
        %6058 = vmatpush1.msra.mxu0 0.0
        %6059 = vmatprep.subr.mxu0 0.0
        %6060 = vmatpush1.msra.mxu0 0.0
        %6061 = vmatprep.subr.mxu0 0.0
        %6062 = vmatpush1.msra.mxu0 0.0
        %6063 = vmatprep.subr.mxu0 0.0
        %6064 = vmatpush1.msra.mxu0 0.0
        %6065 = vmatprep.subr.mxu0 0.0
        %6066 = vmatpush1.msra.mxu0 0.0
        %6067 = vmatprep.subr.mxu0 0.0
        %6068 = vmatpush1.msra.mxu0 0.0
        %6069 = vmatprep.subr.mxu0 0.0
        %6070 = vmatpush1.msra.mxu0 0.0
        %6071 = vmatprep.subr.mxu0 0.0
        %6072 = vmatpush1.msra.mxu0 0.0
        %6073 = vmatprep.subr.mxu0 0.0
        %6074 = vmatpush1.msra.mxu0 0.0
        %6075 = vmatprep.subr.mxu0 0.0
        %6076 = vmatpush1.msra.mxu0 0.0
        %6077 = vmatprep.subr.mxu0 0.0
        %6078 = vmatpush1.msra.mxu0 0.0
        %6079 = vmatprep.subr.mxu0 0.0
        %6080 = vmatpush1.msra.mxu0 0.0
        %6081 = vmatprep.subr.mxu0 0.0
        %6082 = vmatpush1.msra.mxu0 0.0
        %6083 = vmatprep.subr.mxu0 0.0
        %6084 = vmatpush1.msra.mxu0 0.0
        %6085 = vmatprep.subr.mxu0 0.0
        %6086 = vmatpush1.msra.mxu0 0.0
        %6087 = vmatprep.subr.mxu0 0.0
        %6088 = vmatpush1.msra.mxu0 0.0
        %6089 = vmatprep.mubr.f32.mxu0 0.0
        %6090 = vmatmul.mubr.f32.gmra.mrb[0].mxu0 %v6020
        %v6091 = vpop.f32.mrb[0].mxu0
        %v6092 = vadd.f32 0.0, %v6091
        %v6093 = vpop.f32.mrb[0].mxu0
        %v6094 = vadd.f32 0.0, %v6093
        %6095 = vmatprep.mubr.f32.mxu0 0.0
        %6096 = vmatmul.mubr.f32.gmra.mrb[0].mxu0 %v6023
        %v6097 = vpop.f32.mrb[0].mxu0
        %v6098 = vadd.f32 0.0, %v6097
        %v6099 = vpop.f32.mrb[0].mxu0
        %v6100 = vadd.f32 0.0, %v6099
        %6101 = vdwg.mxu0
        %v6102 = vadd.f32 %v6012, %v6092
        %v6103 = vadd.f32 %v6013, %v6094
        %v6104 = vadd.f32 %v6014, %v6098
        %v6105 = vadd.f32 %v6015, %v6100
        %6106 = vrot.lane.b32.xlu0 %v5521, 112
        %v6107 = vpop.permute.xlu0 %6106
        %6108 = vrot.lane.b32.xlu0 %v5523, 112
        %v6109 = vpop.permute.xlu0 %6108
        %6110 = vrot.lane.b32.xlu0 %v5522, 112
        %v6111 = vpop.permute.xlu0 %6110
        %6112 = vrot.lane.b32.xlu0 %v5524, 112
        %v6113 = vpop.permute.xlu0 %6112
        %v6114 = vsel %vm870, %v6107, %v6111
        %v6115 = vsel %vm870, %v6109, %v6113
        %v6116 = vsel %vm870, %v6111, %v6107
        %v6117 = vsel %vm870, %v6113, %v6109
        %s6118 = scalar_lea.vmem [#allocation2], 816
        %v6119 = vld [vmem:[%s6118] sm:$0xff]
        %v6120 = vld [vmem:[%s6118 + $0x8] sm:$0xff]
        %v6122 = vsel %vm300, %v6119, 0
        %v6125 = vsel %vm300, %v6120, 0
        %6127 = vmatprep.subr.mxu0 %v6116
        %6128 = vmatpush1.msra.mxu0 %v6114
        %6129 = vmatprep.subr.mxu0 %v6117
        %6130 = vmatpush1.msra.mxu0 %v6115
        %6131 = vmatprep.subr.mxu0 0.0
        %6132 = vmatpush1.msra.mxu0 0.0
        %6133 = vmatprep.subr.mxu0 0.0
        %6134 = vmatpush1.msra.mxu0 0.0
        %6135 = vmatprep.subr.mxu0 0.0
        %6136 = vmatpush1.msra.mxu0 0.0
        %6137 = vmatprep.subr.mxu0 0.0
        %6138 = vmatpush1.msra.mxu0 0.0
        %6139 = vmatprep.subr.mxu0 0.0
        %6140 = vmatpush1.msra.mxu0 0.0
        %6141 = vmatprep.subr.mxu0 0.0
        %6142 = vmatpush1.msra.mxu0 0.0
        %6143 = vmatprep.subr.mxu0 0.0
        %6144 = vmatpush1.msra.mxu0 0.0
        %6145 = vmatprep.subr.mxu0 0.0
        %6146 = vmatpush1.msra.mxu0 0.0
        %6147 = vmatprep.subr.mxu0 0.0
        %6148 = vmatpush1.msra.mxu0 0.0
        %6149 = vmatprep.subr.mxu0 0.0
        %6150 = vmatpush1.msra.mxu0 0.0
        %6151 = vmatprep.subr.mxu0 0.0
        %6152 = vmatpush1.msra.mxu0 0.0
        %6153 = vmatprep.subr.mxu0 0.0
        %6154 = vmatpush1.msra.mxu0 0.0
        %6155 = vmatprep.subr.mxu0 0.0
        %6156 = vmatpush1.msra.mxu0 0.0
        %6157 = vmatprep.subr.mxu0 0.0
        %6158 = vmatpush1.msra.mxu0 0.0
        %6159 = vmatprep.subr.mxu0 0.0
        %6160 = vmatpush1.msra.mxu0 0.0
        %6161 = vmatprep.subr.mxu0 0.0
        %6162 = vmatpush1.msra.mxu0 0.0
        %6163 = vmatprep.subr.mxu0 0.0
        %6164 = vmatpush1.msra.mxu0 0.0
        %6165 = vmatprep.subr.mxu0 0.0
        %6166 = vmatpush1.msra.mxu0 0.0
        %6167 = vmatprep.subr.mxu0 0.0
        %6168 = vmatpush1.msra.mxu0 0.0
        %6169 = vmatprep.subr.mxu0 0.0
        %6170 = vmatpush1.msra.mxu0 0.0
        %6171 = vmatprep.subr.mxu0 0.0
        %6172 = vmatpush1.msra.mxu0 0.0
        %6173 = vmatprep.subr.mxu0 0.0
        %6174 = vmatpush1.msra.mxu0 0.0
        %6175 = vmatprep.subr.mxu0 0.0
        %6176 = vmatpush1.msra.mxu0 0.0
        %6177 = vmatprep.subr.mxu0 0.0
        %6178 = vmatpush1.msra.mxu0 0.0
        %6179 = vmatprep.subr.mxu0 0.0
        %6180 = vmatpush1.msra.mxu0 0.0
        %6181 = vmatprep.subr.mxu0 0.0
        %6182 = vmatpush1.msra.mxu0 0.0
        %6183 = vmatprep.subr.mxu0 0.0
        %6184 = vmatpush1.msra.mxu0 0.0
        %6185 = vmatprep.subr.mxu0 0.0
        %6186 = vmatpush1.msra.mxu0 0.0
        %6187 = vmatprep.subr.mxu0 0.0
        %6188 = vmatpush1.msra.mxu0 0.0
        %6189 = vmatprep.subr.mxu0 0.0
        %6190 = vmatpush1.msra.mxu0 0.0
        %6191 = vmatprep.mubr.f32.mxu0 0.0
        %6192 = vmatmul.mubr.f32.gmra.mrb[0].mxu0 %v6122
        %v6193 = vpop.f32.mrb[0].mxu0
        %v6194 = vadd.f32 0.0, %v6193
        %v6195 = vpop.f32.mrb[0].mxu0
        %v6196 = vadd.f32 0.0, %v6195
        %6197 = vmatprep.mubr.f32.mxu0 0.0
        %6198 = vmatmul.mubr.f32.gmra.mrb[0].mxu0 %v6125
        %v6199 = vpop.f32.mrb[0].mxu0
        %v6200 = vadd.f32 0.0, %v6199
        %v6201 = vpop.f32.mrb[0].mxu0
        %v6202 = vadd.f32 0.0, %v6201
        %6203 = vdwg.mxu0
        %v6204 = vadd.f32 %v6102, %v6194
        %v6205 = vadd.f32 %v6103, %v6196
        %v6206 = vadd.f32 %v6104, %v6200
        %v6207 = vadd.f32 %v6105, %v6202
        %6208 = vrot.lane.b32.xlu0 %v5465, 112
        %v6209 = vpop.permute.xlu0 %6208
        %6210 = vrot.lane.b32.xlu0 %v5467, 112
        %v6211 = vpop.permute.xlu0 %6210
        %6212 = vrot.lane.b32.xlu0 %v5466, 112
        %v6213 = vpop.permute.xlu0 %6212
        %6214 = vrot.lane.b32.xlu0 %v5468, 112
        %v6215 = vpop.permute.xlu0 %6214
        %v6216 = vsel %vm870, %v6209, %v6213
        %v6217 = vsel %vm870, %v6211, %v6215
        %v6218 = vsel %vm870, %v6213, %v6209
        %v6219 = vsel %vm870, %v6215, %v6211
        %s6220 = scalar_lea.vmem [#allocation2], 832
        %v6221 = vld [vmem:[%s6220] sm:$0xff]
        %v6222 = vld [vmem:[%s6220 + $0x8] sm:$0xff]
        %v6224 = vsel %vm300, %v6221, 0
        %v6227 = vsel %vm300, %v6222, 0
        %6229 = vmatprep.subr.mxu0 %v6218
        %6230 = vmatpush1.msra.mxu0 %v6216
        %6231 = vmatprep.subr.mxu0 %v6219
        %6232 = vmatpush1.msra.mxu0 %v6217
        %6233 = vmatprep.subr.mxu0 0.0
        %6234 = vmatpush1.msra.mxu0 0.0
        %6235 = vmatprep.subr.mxu0 0.0
        %6236 = vmatpush1.msra.mxu0 0.0
        %6237 = vmatprep.subr.mxu0 0.0
        %6238 = vmatpush1.msra.mxu0 0.0
        %6239 = vmatprep.subr.mxu0 0.0
        %6240 = vmatpush1.msra.mxu0 0.0
        %6241 = vmatprep.subr.mxu0 0.0
        %6242 = vmatpush1.msra.mxu0 0.0
        %6243 = vmatprep.subr.mxu0 0.0
        %6244 = vmatpush1.msra.mxu0 0.0
        %6245 = vmatprep.subr.mxu0 0.0
        %6246 = vmatpush1.msra.mxu0 0.0
        %6247 = vmatprep.subr.mxu0 0.0
        %6248 = vmatpush1.msra.mxu0 0.0
        %6249 = vmatprep.subr.mxu0 0.0
        %6250 = vmatpush1.msra.mxu0 0.0
        %6251 = vmatprep.subr.mxu0 0.0
        %6252 = vmatpush1.msra.mxu0 0.0
        %6253 = vmatprep.subr.mxu0 0.0
        %6254 = vmatpush1.msra.mxu0 0.0
        %6255 = vmatprep.subr.mxu0 0.0
        %6256 = vmatpush1.msra.mxu0 0.0
        %6257 = vmatprep.subr.mxu0 0.0
        %6258 = vmatpush1.msra.mxu0 0.0
        %6259 = vmatprep.subr.mxu0 0.0
        %6260 = vmatpush1.msra.mxu0 0.0
        %6261 = vmatprep.subr.mxu0 0.0
        %6262 = vmatpush1.msra.mxu0 0.0
        %6263 = vmatprep.subr.mxu0 0.0
        %6264 = vmatpush1.msra.mxu0 0.0
        %6265 = vmatprep.subr.mxu0 0.0
        %6266 = vmatpush1.msra.mxu0 0.0
        %6267 = vmatprep.subr.mxu0 0.0
        %6268 = vmatpush1.msra.mxu0 0.0
        %6269 = vmatprep.subr.mxu0 0.0
        %6270 = vmatpush1.msra.mxu0 0.0
        %6271 = vmatprep.subr.mxu0 0.0
        %6272 = vmatpush1.msra.mxu0 0.0
        %6273 = vmatprep.subr.mxu0 0.0
        %6274 = vmatpush1.msra.mxu0 0.0
        %6275 = vmatprep.subr.mxu0 0.0
        %6276 = vmatpush1.msra.mxu0 0.0
        %6277 = vmatprep.subr.mxu0 0.0
        %6278 = vmatpush1.msra.mxu0 0.0
        %6279 = vmatprep.subr.mxu0 0.0
        %6280 = vmatpush1.msra.mxu0 0.0
        %6281 = vmatprep.subr.mxu0 0.0
        %6282 = vmatpush1.msra.mxu0 0.0
        %6283 = vmatprep.subr.mxu0 0.0
        %6284 = vmatpush1.msra.mxu0 0.0
        %6285 = vmatprep.subr.mxu0 0.0
        %6286 = vmatpush1.msra.mxu0 0.0
        %6287 = vmatprep.subr.mxu0 0.0
        %6288 = vmatpush1.msra.mxu0 0.0
        %6289 = vmatprep.subr.mxu0 0.0
        %6290 = vmatpush1.msra.mxu0 0.0
        %6291 = vmatprep.subr.mxu0 0.0
        %6292 = vmatpush1.msra.mxu0 0.0
        %6293 = vmatprep.mubr.f32.mxu0 0.0
        %6294 = vmatmul.mubr.f32.gmra.mrb[0].mxu0 %v6224
        %v6295 = vpop.f32.mrb[0].mxu0
        %v6296 = vadd.f32 0.0, %v6295
        %v6297 = vpop.f32.mrb[0].mxu0
        %v6298 = vadd.f32 0.0, %v6297
        %6299 = vmatprep.mubr.f32.mxu0 0.0
        %6300 = vmatmul.mubr.f32.gmra.mrb[0].mxu0 %v6227
        %v6301 = vpop.f32.mrb[0].mxu0
        %v6302 = vadd.f32 0.0, %v6301
        %v6303 = vpop.f32.mrb[0].mxu0
        %v6304 = vadd.f32 0.0, %v6303
        %6305 = vdwg.mxu0
        %v6306 = vadd.f32 %v6204, %v6296
        %v6307 = vadd.f32 %v6205, %v6298
        %v6308 = vadd.f32 %v6206, %v6302
        %v6309 = vadd.f32 %v6207, %v6304
        %6310 = vrot.lane.b32.xlu0 %v5493, 112
        %v6311 = vpop.permute.xlu0 %6310
        %6312 = vrot.lane.b32.xlu0 %v5495, 112
        %v6313 = vpop.permute.xlu0 %6312
        %6314 = vrot.lane.b32.xlu0 %v5494, 112
        %v6315 = vpop.permute.xlu0 %6314
        %6316 = vrot.lane.b32.xlu0 %v5496, 112
        %v6317 = vpop.permute.xlu0 %6316
        %v6318 = vsel %vm870, %v6311, %v6315
        %v6319 = vsel %vm870, %v6313, %v6317
        %v6320 = vsel %vm870, %v6315, %v6311
        %v6321 = vsel %vm870, %v6317, %v6313
        %s6322 = scalar_lea.vmem [#allocation2], 848
        %v6323 = vld [vmem:[%s6322] sm:$0xff]
        %v6324 = vld [vmem:[%s6322 + $0x8] sm:$0xff]
        %v6326 = vsel %vm300, %v6323, 0
        %v6329 = vsel %vm300, %v6324, 0
        %6331 = vmatprep.subr.mxu0 %v6320
        %6332 = vmatpush1.msra.mxu0 %v6318
        %6333 = vmatprep.subr.mxu0 %v6321
        %6334 = vmatpush1.msra.mxu0 %v6319
        %6335 = vmatprep.subr.mxu0 0.0
        %6336 = vmatpush1.msra.mxu0 0.0
        %6337 = vmatprep.subr.mxu0 0.0
        %6338 = vmatpush1.msra.mxu0 0.0
        %6339 = vmatprep.subr.mxu0 0.0
        %6340 = vmatpush1.msra.mxu0 0.0
        %6341 = vmatprep.subr.mxu0 0.0
        %6342 = vmatpush1.msra.mxu0 0.0
        %6343 = vmatprep.subr.mxu0 0.0
        %6344 = vmatpush1.msra.mxu0 0.0
        %6345 = vmatprep.subr.mxu0 0.0
        %6346 = vmatpush1.msra.mxu0 0.0
        %6347 = vmatprep.subr.mxu0 0.0
        %6348 = vmatpush1.msra.mxu0 0.0
        %6349 = vmatprep.subr.mxu0 0.0
        %6350 = vmatpush1.msra.mxu0 0.0
        %6351 = vmatprep.subr.mxu0 0.0
        %6352 = vmatpush1.msra.mxu0 0.0
        %6353 = vmatprep.subr.mxu0 0.0
        %6354 = vmatpush1.msra.mxu0 0.0
        %6355 = vmatprep.subr.mxu0 0.0
        %6356 = vmatpush1.msra.mxu0 0.0
        %6357 = vmatprep.subr.mxu0 0.0
        %6358 = vmatpush1.msra.mxu0 0.0
        %6359 = vmatprep.subr.mxu0 0.0
        %6360 = vmatpush1.msra.mxu0 0.0
        %6361 = vmatprep.subr.mxu0 0.0
        %6362 = vmatpush1.msra.mxu0 0.0
        %6363 = vmatprep.subr.mxu0 0.0
        %6364 = vmatpush1.msra.mxu0 0.0
        %6365 = vmatprep.subr.mxu0 0.0
        %6366 = vmatpush1.msra.mxu0 0.0
        %6367 = vmatprep.subr.mxu0 0.0
        %6368 = vmatpush1.msra.mxu0 0.0
        %6369 = vmatprep.subr.mxu0 0.0
        %6370 = vmatpush1.msra.mxu0 0.0
        %6371 = vmatprep.subr.mxu0 0.0
        %6372 = vmatpush1.msra.mxu0 0.0
        %6373 = vmatprep.subr.mxu0 0.0
        %6374 = vmatpush1.msra.mxu0 0.0
        %6375 = vmatprep.subr.mxu0 0.0
        %6376 = vmatpush1.msra.mxu0 0.0
        %6377 = vmatprep.subr.mxu0 0.0
        %6378 = vmatpush1.msra.mxu0 0.0
        %6379 = vmatprep.subr.mxu0 0.0
        %6380 = vmatpush1.msra.mxu0 0.0
        %6381 = vmatprep.subr.mxu0 0.0
        %6382 = vmatpush1.msra.mxu0 0.0
        %6383 = vmatprep.subr.mxu0 0.0
        %6384 = vmatpush1.msra.mxu0 0.0
        %6385 = vmatprep.subr.mxu0 0.0
        %6386 = vmatpush1.msra.mxu0 0.0
        %6387 = vmatprep.subr.mxu0 0.0
        %6388 = vmatpush1.msra.mxu0 0.0
        %6389 = vmatprep.subr.mxu0 0.0
        %6390 = vmatpush1.msra.mxu0 0.0
        %6391 = vmatprep.subr.mxu0 0.0
        %6392 = vmatpush1.msra.mxu0 0.0
        %6393 = vmatprep.subr.mxu0 0.0
        %6394 = vmatpush1.msra.mxu0 0.0
        %6395 = vmatprep.mubr.f32.mxu0 0.0
        %6396 = vmatmul.mubr.f32.gmra.mrb[0].mxu0 %v6326
        %v6397 = vpop.f32.mrb[0].mxu0
        %v6398 = vadd.f32 0.0, %v6397
        %v6399 = vpop.f32.mrb[0].mxu0
        %v6400 = vadd.f32 0.0, %v6399
        %6401 = vmatprep.mubr.f32.mxu0 0.0
        %6402 = vmatmul.mubr.f32.gmra.mrb[0].mxu0 %v6329
        %v6403 = vpop.f32.mrb[0].mxu0
        %v6404 = vadd.f32 0.0, %v6403
        %v6405 = vpop.f32.mrb[0].mxu0
        %v6406 = vadd.f32 0.0, %v6405
        %6407 = vdwg.mxu0
        %v6408 = vadd.f32 %v6306, %v6398
        %v6409 = vadd.f32 %v6307, %v6400
        %v6410 = vadd.f32 %v6308, %v6404
        %v6411 = vadd.f32 %v6309, %v6406
        %v6412 = vmul.f32 %v6408, 0.5
        %v6413 = vmul.f32 %v6409, 0.5
        %v6414 = vmul.f32 %v6410, 0.5
        %v6415 = vmul.f32 %v6411, 0.5
        %v6416 = vmul.f32 %v6408, 0.70710677
        %v6417 = vmul.f32 %v6409, 0.70710677
        %v6418 = vmul.f32 %v6410, 0.70710677
        %v6419 = vmul.f32 %v6411, 0.70710677
        %vm6420 = vcmp.lt.f32.partialorder %v6416, 0.0
        %vm6421 = vcmp.lt.f32.partialorder %v6417, 0.0
        %vm6422 = vcmp.lt.f32.partialorder %v6418, 0.0
        %vm6423 = vcmp.lt.f32.partialorder %v6419, 0.0
        %v6424 = vsel %vm6420, -1.0, 1.0
        %v6425 = vsel %vm6421, -1.0, 1.0
        %v6426 = vsel %vm6422, -1.0, 1.0
        %v6427 = vsel %vm6423, -1.0, 1.0
        %v6428 = vand.u32 2147483647, %v6416
        %v6429 = vand.u32 2147483647, %v6417
        %v6430 = vand.u32 2147483647, %v6418
        %v6431 = vand.u32 2147483647, %v6419
        %v6432 = vmul.f32 %v6428, 0.3275911
        %v6433 = vmul.f32 %v6429, 0.3275911
        %v6434 = vmul.f32 %v6430, 0.3275911
        %v6435 = vmul.f32 %v6431, 0.3275911
        %v6436 = vadd.f32 %v6432, 1.0
        %v6437 = vadd.f32 %v6433, 1.0
        %v6438 = vadd.f32 %v6434, 1.0
        %v6439 = vadd.f32 %v6435, 1.0
        %v6440 = vrcp.pop %v6436
        %v6441 = vrcp.pop %v6437
        %v6442 = vrcp.pop %v6438
        %v6443 = vrcp.pop %v6439
        %v6444 = vmul.f32 %v6440, 1.0614054
        %v6445 = vmul.f32 %v6441, 1.0614054
        %v6446 = vmul.f32 %v6442, 1.0614054
        %v6447 = vmul.f32 %v6443, 1.0614054
        %v6448 = vadd.f32 %v6444, -1.4531521
        %v6449 = vadd.f32 %v6445, -1.4531521
        %v6450 = vadd.f32 %v6446, -1.4531521
        %v6451 = vadd.f32 %v6447, -1.4531521
        %v6452 = vmul.f32 %v6448, %v6440
        %v6453 = vmul.f32 %v6449, %v6441
        %v6454 = vmul.f32 %v6450, %v6442
        %v6455 = vmul.f32 %v6451, %v6443
        %v6456 = vadd.f32 %v6452, 1.4214138
        %v6457 = vadd.f32 %v6453, 1.4214138
        %v6458 = vadd.f32 %v6454, 1.4214138
        %v6459 = vadd.f32 %v6455, 1.4214138
        %v6460 = vmul.f32 %v6456, %v6440
        %v6461 = vmul.f32 %v6457, %v6441
        %v6462 = vmul.f32 %v6458, %v6442
        %v6463 = vmul.f32 %v6459, %v6443
        %v6464 = vadd.f32 %v6460, -0.28449672
        %v6465 = vadd.f32 %v6461, -0.28449672
        %v6466 = vadd.f32 %v6462, -0.28449672
        %v6467 = vadd.f32 %v6463, -0.28449672
        %v6468 = vmul.f32 %v6464, %v6440
        %v6469 = vmul.f32 %v6465, %v6441
        %v6470 = vmul.f32 %v6466, %v6442
        %v6471 = vmul.f32 %v6467, %v6443
        %v6472 = vadd.f32 %v6468, 0.2548296
        %v6473 = vadd.f32 %v6469, 0.2548296
        %v6474 = vadd.f32 %v6470, 0.2548296
        %v6475 = vadd.f32 %v6471, 0.2548296
        %v6476 = vmul.f32 %v6472, %v6440
        %v6477 = vmul.f32 %v6473, %v6441
        %v6478 = vmul.f32 %v6474, %v6442
        %v6479 = vmul.f32 %v6475, %v6443
        %v6480 = vsub.f32 0.0, %v6428
        %v6481 = vsub.f32 0.0, %v6429
        %v6482 = vsub.f32 0.0, %v6430
        %v6483 = vsub.f32 0.0, %v6431
        %v6484 = vmul.f32 %v6480, %v6428
        %v6485 = vmul.f32 %v6481, %v6429
        %v6486 = vmul.f32 %v6482, %v6430
        %v6487 = vmul.f32 %v6483, %v6431
        %v6488 = vmul.f32 %v6484, 1.442695
        %v6489 = vpow.pop %v6488
        %v6490 = vmul.f32 %v6485, 1.442695
        %v6491 = vpow.pop %v6490
        %v6492 = vmul.f32 %v6486, 1.442695
        %v6493 = vpow.pop %v6492
        %v6494 = vmul.f32 %v6487, 1.442695
        %v6495 = vpow.pop %v6494
        %v6496 = vmul.f32 %v6476, %v6489
        %v6497 = vmul.f32 %v6477, %v6491
        %v6498 = vmul.f32 %v6478, %v6493
        %v6499 = vmul.f32 %v6479, %v6495
        %v6500 = vsub.f32 1.0, %v6496
        %v6501 = vsub.f32 1.0, %v6497
        %v6502 = vsub.f32 1.0, %v6498
        %v6503 = vsub.f32 1.0, %v6499
        %v6504 = vmul.f32 %v6424, %v6500
        %v6505 = vmul.f32 %v6425, %v6501
        %v6506 = vmul.f32 %v6426, %v6502
        %v6507 = vmul.f32 %v6427, %v6503
        %v6508 = vadd.f32 %v6504, 1.0
        %v6509 = vadd.f32 %v6505, 1.0
        %v6510 = vadd.f32 %v6506, 1.0
        %v6511 = vadd.f32 %v6507, 1.0
        %v6512 = vmul.f32 %v6412, %v6508
        %v6513 = vmul.f32 %v6413, %v6509
        %v6514 = vmul.f32 %v6414, %v6510
        %v6515 = vmul.f32 %v6415, %v6511
        %6516 = vrot.lane.b32.xlu0 %v6512, 15
        %v6517 = vpop.permute.xlu0 %6516
        %6518 = vrot.lane.b32.xlu0 %v6514, 15
        %v6519 = vpop.permute.xlu0 %6518
        %6520 = vrot.lane.b32.xlu0 %v6513, 15
        %v6521 = vpop.permute.xlu0 %6520
        %6522 = vrot.lane.b32.xlu0 %v6515, 15
        %v6523 = vpop.permute.xlu0 %6522
        %v6524 = vsel %vm229, %v6517, %v6521
        %v6525 = vsel %vm229, %v6519, %v6523
        %v6526 = vsel %vm229, %v6521, %v6517
        %v6527 = vsel %vm229, %v6523, %v6519
        %6528 = vrot.lane.b32.xlu0 %v6512, 127
        %v6529 = vpop.permute.xlu0 %6528
        %6530 = vrot.lane.b32.xlu0 %v6514, 127
        %v6531 = vpop.permute.xlu0 %6530
        %6532 = vrot.lane.b32.xlu0 %v6513, 127
        %v6533 = vpop.permute.xlu0 %6532
        %6534 = vrot.lane.b32.xlu0 %v6515, 127
        %v6535 = vpop.permute.xlu0 %6534
        %v6536 = vsel %vm242, %v6529, %v6533
        %v6537 = vsel %vm242, %v6531, %v6535
        %v6538 = vsel %vm242, %v6533, %v6529
        %v6539 = vsel %vm242, %v6535, %v6531
        %v6540 = vsel %vm215, %v6526, %v6536
        %v6541 = vsel %vm216, %v6524, %v6538
        %v6542 = vsel %vm215, %v6527, %v6537
        %v6543 = vsel %vm216, %v6525, %v6539
        %6544 = vrot.lane.b32.xlu0 %v6512, 113
        %v6545 = vpop.permute.xlu0 %6544
        %6546 = vrot.lane.b32.xlu0 %v6514, 113
        %v6547 = vpop.permute.xlu0 %6546
        %6548 = vrot.lane.b32.xlu0 %v6513, 113
        %v6549 = vpop.permute.xlu0 %6548
        %6550 = vrot.lane.b32.xlu0 %v6515, 113
        %v6551 = vpop.permute.xlu0 %6550
        %v6552 = vsel %vm259, %v6545, %v6549
        %v6553 = vsel %vm259, %v6547, %v6551
        %v6554 = vsel %vm259, %v6549, %v6545
        %v6555 = vsel %vm259, %v6551, %v6547
        %6556 = vrot.lane.b32.xlu0 %v6512, 1
        %v6557 = vpop.permute.xlu0 %6556
        %6558 = vrot.lane.b32.xlu0 %v6514, 1
        %v6559 = vpop.permute.xlu0 %6558
        %6560 = vrot.lane.b32.xlu0 %v6513, 1
        %v6561 = vpop.permute.xlu0 %6560
        %6562 = vrot.lane.b32.xlu0 %v6515, 1
        %v6563 = vpop.permute.xlu0 %6562
        %v6564 = vsel %vm272, %v6557, %v6561
        %v6565 = vsel %vm272, %v6559, %v6563
        %v6566 = vsel %vm272, %v6561, %v6557
        %v6567 = vsel %vm272, %v6563, %v6559
        %v6568 = vsel %vm213, %v6552, %v6566
        %v6569 = vsel %vm214, %v6554, %v6564
        %v6570 = vsel %vm213, %v6553, %v6567
        %v6571 = vsel %vm214, %v6555, %v6565
        %s6572 = scalar_lea.vmem %s2, 192
        %v6573 = vld [vmem:[%s6572] sm:$0xff]
        %v6574 = vld [vmem:[%s6572 + $0x8] sm:$0xff]
        %v6575 = vld [vmem:[%s6572 + $0x10] sm:$0xff]
        %v6576 = vld [vmem:[%s6572 + $0x18] sm:$0xff]
        %6577 = vrot.lane.b32.xlu0 %v6568, 16
        %v6578 = vpop.permute.xlu0 %6577
        %6579 = vrot.lane.b32.xlu0 %v6570, 16
        %v6580 = vpop.permute.xlu0 %6579
        %6581 = vrot.lane.b32.xlu0 %v6569, 16
        %v6582 = vpop.permute.xlu0 %6581
        %6583 = vrot.lane.b32.xlu0 %v6571, 16
        %v6584 = vpop.permute.xlu0 %6583
        %v6585 = vsel %vm293, %v6578, %v6582
        %v6586 = vsel %vm293, %v6580, %v6584
        %v6587 = vsel %vm293, %v6582, %v6578
        %v6588 = vsel %vm293, %v6584, %v6580
        %s6589 = scalar_lea.vmem [#allocation2], 864
        %v6590 = vld [vmem:[%s6589] sm:$0xff]
        %v6591 = vld [vmem:[%s6589 + $0x8] sm:$0xff]
        %v6593 = vsel %vm300, %v6590, 0
        %v6596 = vsel %vm300, %v6591, 0
        %6598 = vmatprep.subr.mxu0 %v6585
        %6599 = vmatpush1.msra.mxu0 %v6587
        %6600 = vmatprep.subr.mxu0 %v6586
        %6601 = vmatpush1.msra.mxu0 %v6588
        %6602 = vmatprep.subr.mxu0 0.0
        %6603 = vmatpush1.msra.mxu0 0.0
        %6604 = vmatprep.subr.mxu0 0.0
        %6605 = vmatpush1.msra.mxu0 0.0
        %6606 = vmatprep.subr.mxu0 0.0
        %6607 = vmatpush1.msra.mxu0 0.0
        %6608 = vmatprep.subr.mxu0 0.0
        %6609 = vmatpush1.msra.mxu0 0.0
        %6610 = vmatprep.subr.mxu0 0.0
        %6611 = vmatpush1.msra.mxu0 0.0
        %6612 = vmatprep.subr.mxu0 0.0
        %6613 = vmatpush1.msra.mxu0 0.0
        %6614 = vmatprep.subr.mxu0 0.0
        %6615 = vmatpush1.msra.mxu0 0.0
        %6616 = vmatprep.subr.mxu0 0.0
        %6617 = vmatpush1.msra.mxu0 0.0
        %6618 = vmatprep.subr.mxu0 0.0
        %6619 = vmatpush1.msra.mxu0 0.0
        %6620 = vmatprep.subr.mxu0 0.0
        %6621 = vmatpush1.msra.mxu0 0.0
        %6622 = vmatprep.subr.mxu0 0.0
        %6623 = vmatpush1.msra.mxu0 0.0
        %6624 = vmatprep.subr.mxu0 0.0
        %6625 = vmatpush1.msra.mxu0 0.0
        %6626 = vmatprep.subr.mxu0 0.0
        %6627 = vmatpush1.msra.mxu0 0.0
        %6628 = vmatprep.subr.mxu0 0.0
        %6629 = vmatpush1.msra.mxu0 0.0
        %6630 = vmatprep.subr.mxu0 0.0
        %6631 = vmatpush1.msra.mxu0 0.0
        %6632 = vmatprep.subr.mxu0 0.0
        %6633 = vmatpush1.msra.mxu0 0.0
        %6634 = vmatprep.subr.mxu0 0.0
        %6635 = vmatpush1.msra.mxu0 0.0
        %6636 = vmatprep.subr.mxu0 0.0
        %6637 = vmatpush1.msra.mxu0 0.0
        %6638 = vmatprep.subr.mxu0 0.0
        %6639 = vmatpush1.msra.mxu0 0.0
        %6640 = vmatprep.subr.mxu0 0.0
        %6641 = vmatpush1.msra.mxu0 0.0
        %6642 = vmatprep.subr.mxu0 0.0
        %6643 = vmatpush1.msra.mxu0 0.0
        %6644 = vmatprep.subr.mxu0 0.0
        %6645 = vmatpush1.msra.mxu0 0.0
        %6646 = vmatprep.subr.mxu0 0.0
        %6647 = vmatpush1.msra.mxu0 0.0
        %6648 = vmatprep.subr.mxu0 0.0
        %6649 = vmatpush1.msra.mxu0 0.0
        %6650 = vmatprep.subr.mxu0 0.0
        %6651 = vmatpush1.msra.mxu0 0.0
        %6652 = vmatprep.subr.mxu0 0.0
        %6653 = vmatpush1.msra.mxu0 0.0
        %6654 = vmatprep.subr.mxu0 0.0
        %6655 = vmatpush1.msra.mxu0 0.0
        %6656 = vmatprep.subr.mxu0 0.0
        %6657 = vmatpush1.msra.mxu0 0.0
        %6658 = vmatprep.subr.mxu0 0.0
        %6659 = vmatpush1.msra.mxu0 0.0
        %6660 = vmatprep.subr.mxu0 0.0
        %6661 = vmatpush1.msra.mxu0 0.0
        %6662 = vmatprep.mubr.f32.mxu0 0.0
        %6663 = vmatmul.mubr.f32.gmra.mrb[0].mxu0 %v6593
        %v6664 = vpop.f32.mrb[0].mxu0
        %v6665 = vadd.f32 0.0, %v6664
        %v6666 = vpop.f32.mrb[0].mxu0
        %v6667 = vadd.f32 0.0, %v6666
        %6668 = vmatprep.mubr.f32.mxu0 0.0
        %6669 = vmatmul.mubr.f32.gmra.mrb[0].mxu0 %v6596
        %v6670 = vpop.f32.mrb[0].mxu0
        %v6671 = vadd.f32 0.0, %v6670
        %v6672 = vpop.f32.mrb[0].mxu0
        %v6673 = vadd.f32 0.0, %v6672
        %6674 = vdwg.mxu0
        %v6675 = vadd.f32 %v6573, %v6665
        %v6676 = vadd.f32 %v6574, %v6667
        %v6677 = vadd.f32 %v6575, %v6671
        %v6678 = vadd.f32 %v6576, %v6673
        %6679 = vrot.lane.b32.xlu0 %v6512, 16
        %v6680 = vpop.permute.xlu0 %6679
        %6681 = vrot.lane.b32.xlu0 %v6514, 16
        %v6682 = vpop.permute.xlu0 %6681
        %6683 = vrot.lane.b32.xlu0 %v6513, 16
        %v6684 = vpop.permute.xlu0 %6683
        %6685 = vrot.lane.b32.xlu0 %v6515, 16
        %v6686 = vpop.permute.xlu0 %6685
        %v6687 = vsel %vm293, %v6680, %v6684
        %v6688 = vsel %vm293, %v6682, %v6686
        %v6689 = vsel %vm293, %v6684, %v6680
        %v6690 = vsel %vm293, %v6686, %v6682
        %s6691 = scalar_lea.vmem [#allocation2], 880
        %v6692 = vld [vmem:[%s6691] sm:$0xff]
        %v6693 = vld [vmem:[%s6691 + $0x8] sm:$0xff]
        %v6695 = vsel %vm300, %v6692, 0
        %v6698 = vsel %vm300, %v6693, 0
        %6700 = vmatprep.subr.mxu0 %v6687
        %6701 = vmatpush1.msra.mxu0 %v6689
        %6702 = vmatprep.subr.mxu0 %v6688
        %6703 = vmatpush1.msra.mxu0 %v6690
        %6704 = vmatprep.subr.mxu0 0.0
        %6705 = vmatpush1.msra.mxu0 0.0
        %6706 = vmatprep.subr.mxu0 0.0
        %6707 = vmatpush1.msra.mxu0 0.0
        %6708 = vmatprep.subr.mxu0 0.0
        %6709 = vmatpush1.msra.mxu0 0.0
        %6710 = vmatprep.subr.mxu0 0.0
        %6711 = vmatpush1.msra.mxu0 0.0
        %6712 = vmatprep.subr.mxu0 0.0
        %6713 = vmatpush1.msra.mxu0 0.0
        %6714 = vmatprep.subr.mxu0 0.0
        %6715 = vmatpush1.msra.mxu0 0.0
        %6716 = vmatprep.subr.mxu0 0.0
        %6717 = vmatpush1.msra.mxu0 0.0
        %6718 = vmatprep.subr.mxu0 0.0
        %6719 = vmatpush1.msra.mxu0 0.0
        %6720 = vmatprep.subr.mxu0 0.0
        %6721 = vmatpush1.msra.mxu0 0.0
        %6722 = vmatprep.subr.mxu0 0.0
        %6723 = vmatpush1.msra.mxu0 0.0
        %6724 = vmatprep.subr.mxu0 0.0
        %6725 = vmatpush1.msra.mxu0 0.0
        %6726 = vmatprep.subr.mxu0 0.0
        %6727 = vmatpush1.msra.mxu0 0.0
        %6728 = vmatprep.subr.mxu0 0.0
        %6729 = vmatpush1.msra.mxu0 0.0
        %6730 = vmatprep.subr.mxu0 0.0
        %6731 = vmatpush1.msra.mxu0 0.0
        %6732 = vmatprep.subr.mxu0 0.0
        %6733 = vmatpush1.msra.mxu0 0.0
        %6734 = vmatprep.subr.mxu0 0.0
        %6735 = vmatpush1.msra.mxu0 0.0
        %6736 = vmatprep.subr.mxu0 0.0
        %6737 = vmatpush1.msra.mxu0 0.0
        %6738 = vmatprep.subr.mxu0 0.0
        %6739 = vmatpush1.msra.mxu0 0.0
        %6740 = vmatprep.subr.mxu0 0.0
        %6741 = vmatpush1.msra.mxu0 0.0
        %6742 = vmatprep.subr.mxu0 0.0
        %6743 = vmatpush1.msra.mxu0 0.0
        %6744 = vmatprep.subr.mxu0 0.0
        %6745 = vmatpush1.msra.mxu0 0.0
        %6746 = vmatprep.subr.mxu0 0.0
        %6747 = vmatpush1.msra.mxu0 0.0
        %6748 = vmatprep.subr.mxu0 0.0
        %6749 = vmatpush1.msra.mxu0 0.0
        %6750 = vmatprep.subr.mxu0 0.0
        %6751 = vmatpush1.msra.mxu0 0.0
        %6752 = vmatprep.subr.mxu0 0.0
        %6753 = vmatpush1.msra.mxu0 0.0
        %6754 = vmatprep.subr.mxu0 0.0
        %6755 = vmatpush1.msra.mxu0 0.0
        %6756 = vmatprep.subr.mxu0 0.0
        %6757 = vmatpush1.msra.mxu0 0.0
        %6758 = vmatprep.subr.mxu0 0.0
        %6759 = vmatpush1.msra.mxu0 0.0
        %6760 = vmatprep.subr.mxu0 0.0
        %6761 = vmatpush1.msra.mxu0 0.0
        %6762 = vmatprep.subr.mxu0 0.0
        %6763 = vmatpush1.msra.mxu0 0.0
        %6764 = vmatprep.mubr.f32.mxu0 0.0
        %6765 = vmatmul.mubr.f32.gmra.mrb[0].mxu0 %v6695
        %v6766 = vpop.f32.mrb[0].mxu0
        %v6767 = vadd.f32 0.0, %v6766
        %v6768 = vpop.f32.mrb[0].mxu0
        %v6769 = vadd.f32 0.0, %v6768
        %6770 = vmatprep.mubr.f32.mxu0 0.0
        %6771 = vmatmul.mubr.f32.gmra.mrb[0].mxu0 %v6698
        %v6772 = vpop.f32.mrb[0].mxu0
        %v6773 = vadd.f32 0.0, %v6772
        %v6774 = vpop.f32.mrb[0].mxu0
        %v6775 = vadd.f32 0.0, %v6774
        %6776 = vdwg.mxu0
        %v6777 = vadd.f32 %v6675, %v6767
        %v6778 = vadd.f32 %v6676, %v6769
        %v6779 = vadd.f32 %v6677, %v6773
        %v6780 = vadd.f32 %v6678, %v6775
        %6781 = vrot.lane.b32.xlu0 %v6540, 16
        %v6782 = vpop.permute.xlu0 %6781
        %6783 = vrot.lane.b32.xlu0 %v6542, 16
        %v6784 = vpop.permute.xlu0 %6783
        %6785 = vrot.lane.b32.xlu0 %v6541, 16
        %v6786 = vpop.permute.xlu0 %6785
        %6787 = vrot.lane.b32.xlu0 %v6543, 16
        %v6788 = vpop.permute.xlu0 %6787
        %v6789 = vsel %vm293, %v6782, %v6786
        %v6790 = vsel %vm293, %v6784, %v6788
        %v6791 = vsel %vm293, %v6786, %v6782
        %v6792 = vsel %vm293, %v6788, %v6784
        %s6793 = scalar_lea.vmem [#allocation2], 896
        %v6794 = vld [vmem:[%s6793] sm:$0xff]
        %v6795 = vld [vmem:[%s6793 + $0x8] sm:$0xff]
        %v6797 = vsel %vm300, %v6794, 0
        %v6800 = vsel %vm300, %v6795, 0
        %6802 = vmatprep.subr.mxu0 %v6789
        %6803 = vmatpush1.msra.mxu0 %v6791
        %6804 = vmatprep.subr.mxu0 %v6790
        %6805 = vmatpush1.msra.mxu0 %v6792
        %6806 = vmatprep.subr.mxu0 0.0
        %6807 = vmatpush1.msra.mxu0 0.0
        %6808 = vmatprep.subr.mxu0 0.0
        %6809 = vmatpush1.msra.mxu0 0.0
        %6810 = vmatprep.subr.mxu0 0.0
        %6811 = vmatpush1.msra.mxu0 0.0
        %6812 = vmatprep.subr.mxu0 0.0
        %6813 = vmatpush1.msra.mxu0 0.0
        %6814 = vmatprep.subr.mxu0 0.0
        %6815 = vmatpush1.msra.mxu0 0.0
        %6816 = vmatprep.subr.mxu0 0.0
        %6817 = vmatpush1.msra.mxu0 0.0
        %6818 = vmatprep.subr.mxu0 0.0
        %6819 = vmatpush1.msra.mxu0 0.0
        %6820 = vmatprep.subr.mxu0 0.0
        %6821 = vmatpush1.msra.mxu0 0.0
        %6822 = vmatprep.subr.mxu0 0.0
        %6823 = vmatpush1.msra.mxu0 0.0
        %6824 = vmatprep.subr.mxu0 0.0
        %6825 = vmatpush1.msra.mxu0 0.0
        %6826 = vmatprep.subr.mxu0 0.0
        %6827 = vmatpush1.msra.mxu0 0.0
        %6828 = vmatprep.subr.mxu0 0.0
        %6829 = vmatpush1.msra.mxu0 0.0
        %6830 = vmatprep.subr.mxu0 0.0
        %6831 = vmatpush1.msra.mxu0 0.0
        %6832 = vmatprep.subr.mxu0 0.0
        %6833 = vmatpush1.msra.mxu0 0.0
        %6834 = vmatprep.subr.mxu0 0.0
        %6835 = vmatpush1.msra.mxu0 0.0
        %6836 = vmatprep.subr.mxu0 0.0
        %6837 = vmatpush1.msra.mxu0 0.0
        %6838 = vmatprep.subr.mxu0 0.0
        %6839 = vmatpush1.msra.mxu0 0.0
        %6840 = vmatprep.subr.mxu0 0.0
        %6841 = vmatpush1.msra.mxu0 0.0
        %6842 = vmatprep.subr.mxu0 0.0
        %6843 = vmatpush1.msra.mxu0 0.0
        %6844 = vmatprep.subr.mxu0 0.0
        %6845 = vmatpush1.msra.mxu0 0.0
        %6846 = vmatprep.subr.mxu0 0.0
        %6847 = vmatpush1.msra.mxu0 0.0
        %6848 = vmatprep.subr.mxu0 0.0
        %6849 = vmatpush1.msra.mxu0 0.0
        %6850 = vmatprep.subr.mxu0 0.0
        %6851 = vmatpush1.msra.mxu0 0.0
        %6852 = vmatprep.subr.mxu0 0.0
        %6853 = vmatpush1.msra.mxu0 0.0
        %6854 = vmatprep.subr.mxu0 0.0
        %6855 = vmatpush1.msra.mxu0 0.0
        %6856 = vmatprep.subr.mxu0 0.0
        %6857 = vmatpush1.msra.mxu0 0.0
        %6858 = vmatprep.subr.mxu0 0.0
        %6859 = vmatpush1.msra.mxu0 0.0
        %6860 = vmatprep.subr.mxu0 0.0
        %6861 = vmatpush1.msra.mxu0 0.0
        %6862 = vmatprep.subr.mxu0 0.0
        %6863 = vmatpush1.msra.mxu0 0.0
        %6864 = vmatprep.subr.mxu0 0.0
        %6865 = vmatpush1.msra.mxu0 0.0
        %6866 = vmatprep.mubr.f32.mxu0 0.0
        %6867 = vmatmul.mubr.f32.gmra.mrb[0].mxu0 %v6797
        %v6868 = vpop.f32.mrb[0].mxu0
        %v6869 = vadd.f32 0.0, %v6868
        %v6870 = vpop.f32.mrb[0].mxu0
        %v6871 = vadd.f32 0.0, %v6870
        %6872 = vmatprep.mubr.f32.mxu0 0.0
        %6873 = vmatmul.mubr.f32.gmra.mrb[0].mxu0 %v6800
        %v6874 = vpop.f32.mrb[0].mxu0
        %v6875 = vadd.f32 0.0, %v6874
        %v6876 = vpop.f32.mrb[0].mxu0
        %v6877 = vadd.f32 0.0, %v6876
        %6878 = vdwg.mxu0
        %v6879 = vadd.f32 %v6777, %v6869
        %v6880 = vadd.f32 %v6778, %v6871
        %v6881 = vadd.f32 %v6779, %v6875
        %v6882 = vadd.f32 %v6780, %v6877
        %s6883 = scalar_lea.vmem [#allocation2], 912
        %v6884 = vld [vmem:[%s6883] sm:$0xff]
        %v6885 = vld [vmem:[%s6883 + $0x8] sm:$0xff]
        %v6887 = vsel %vm300, %v6884, 0
        %v6890 = vsel %vm300, %v6885, 0
        %6892 = vmatprep.subr.mxu0 %v6569
        %6893 = vmatpush1.msra.mxu0 %v6568
        %6894 = vmatprep.subr.mxu0 %v6571
        %6895 = vmatpush1.msra.mxu0 %v6570
        %6896 = vmatprep.subr.mxu0 0.0
        %6897 = vmatpush1.msra.mxu0 0.0
        %6898 = vmatprep.subr.mxu0 0.0
        %6899 = vmatpush1.msra.mxu0 0.0
        %6900 = vmatprep.subr.mxu0 0.0
        %6901 = vmatpush1.msra.mxu0 0.0
        %6902 = vmatprep.subr.mxu0 0.0
        %6903 = vmatpush1.msra.mxu0 0.0
        %6904 = vmatprep.subr.mxu0 0.0
        %6905 = vmatpush1.msra.mxu0 0.0
        %6906 = vmatprep.subr.mxu0 0.0
        %6907 = vmatpush1.msra.mxu0 0.0
        %6908 = vmatprep.subr.mxu0 0.0
        %6909 = vmatpush1.msra.mxu0 0.0
        %6910 = vmatprep.subr.mxu0 0.0
        %6911 = vmatpush1.msra.mxu0 0.0
        %6912 = vmatprep.subr.mxu0 0.0
        %6913 = vmatpush1.msra.mxu0 0.0
        %6914 = vmatprep.subr.mxu0 0.0
        %6915 = vmatpush1.msra.mxu0 0.0
        %6916 = vmatprep.subr.mxu0 0.0
        %6917 = vmatpush1.msra.mxu0 0.0
        %6918 = vmatprep.subr.mxu0 0.0
        %6919 = vmatpush1.msra.mxu0 0.0
        %6920 = vmatprep.subr.mxu0 0.0
        %6921 = vmatpush1.msra.mxu0 0.0
        %6922 = vmatprep.subr.mxu0 0.0
        %6923 = vmatpush1.msra.mxu0 0.0
        %6924 = vmatprep.subr.mxu0 0.0
        %6925 = vmatpush1.msra.mxu0 0.0
        %6926 = vmatprep.subr.mxu0 0.0
        %6927 = vmatpush1.msra.mxu0 0.0
        %6928 = vmatprep.subr.mxu0 0.0
        %6929 = vmatpush1.msra.mxu0 0.0
        %6930 = vmatprep.subr.mxu0 0.0
        %6931 = vmatpush1.msra.mxu0 0.0
        %6932 = vmatprep.subr.mxu0 0.0
        %6933 = vmatpush1.msra.mxu0 0.0
        %6934 = vmatprep.subr.mxu0 0.0
        %6935 = vmatpush1.msra.mxu0 0.0
        %6936 = vmatprep.subr.mxu0 0.0
        %6937 = vmatpush1.msra.mxu0 0.0
        %6938 = vmatprep.subr.mxu0 0.0
        %6939 = vmatpush1.msra.mxu0 0.0
        %6940 = vmatprep.subr.mxu0 0.0
        %6941 = vmatpush1.msra.mxu0 0.0
        %6942 = vmatprep.subr.mxu0 0.0
        %6943 = vmatpush1.msra.mxu0 0.0
        %6944 = vmatprep.subr.mxu0 0.0
        %6945 = vmatpush1.msra.mxu0 0.0
        %6946 = vmatprep.subr.mxu0 0.0
        %6947 = vmatpush1.msra.mxu0 0.0
        %6948 = vmatprep.subr.mxu0 0.0
        %6949 = vmatpush1.msra.mxu0 0.0
        %6950 = vmatprep.subr.mxu0 0.0
        %6951 = vmatpush1.msra.mxu0 0.0
        %6952 = vmatprep.subr.mxu0 0.0
        %6953 = vmatpush1.msra.mxu0 0.0
        %6954 = vmatprep.subr.mxu0 0.0
        %6955 = vmatpush1.msra.mxu0 0.0
        %6956 = vmatprep.mubr.f32.mxu0 0.0
        %6957 = vmatmul.mubr.f32.gmra.mrb[0].mxu0 %v6887
        %v6958 = vpop.f32.mrb[0].mxu0
        %v6959 = vadd.f32 0.0, %v6958
        %v6960 = vpop.f32.mrb[0].mxu0
        %v6961 = vadd.f32 0.0, %v6960
        %6962 = vmatprep.mubr.f32.mxu0 0.0
        %6963 = vmatmul.mubr.f32.gmra.mrb[0].mxu0 %v6890
        %v6964 = vpop.f32.mrb[0].mxu0
        %v6965 = vadd.f32 0.0, %v6964
        %v6966 = vpop.f32.mrb[0].mxu0
        %v6967 = vadd.f32 0.0, %v6966
        %6968 = vdwg.mxu0
        %v6969 = vadd.f32 %v6879, %v6959
        %v6970 = vadd.f32 %v6880, %v6961
        %v6971 = vadd.f32 %v6881, %v6965
        %v6972 = vadd.f32 %v6882, %v6967
        %s6973 = scalar_lea.vmem [#allocation2], 928
        %v6974 = vld [vmem:[%s6973] sm:$0xff]
        %v6975 = vld [vmem:[%s6973 + $0x8] sm:$0xff]
        %v6977 = vsel %vm300, %v6974, 0
        %v6980 = vsel %vm300, %v6975, 0
        %6982 = vmatprep.subr.mxu0 %v6513
        %6983 = vmatpush1.msra.mxu0 %v6512
        %6984 = vmatprep.subr.mxu0 %v6515
        %6985 = vmatpush1.msra.mxu0 %v6514
        %6986 = vmatprep.subr.mxu0 0.0
        %6987 = vmatpush1.msra.mxu0 0.0
        %6988 = vmatprep.subr.mxu0 0.0
        %6989 = vmatpush1.msra.mxu0 0.0
        %6990 = vmatprep.subr.mxu0 0.0
        %6991 = vmatpush1.msra.mxu0 0.0
        %6992 = vmatprep.subr.mxu0 0.0
        %6993 = vmatpush1.msra.mxu0 0.0
        %6994 = vmatprep.subr.mxu0 0.0
        %6995 = vmatpush1.msra.mxu0 0.0
        %6996 = vmatprep.subr.mxu0 0.0
        %6997 = vmatpush1.msra.mxu0 0.0
        %6998 = vmatprep.subr.mxu0 0.0
        %6999 = vmatpush1.msra.mxu0 0.0
        %7000 = vmatprep.subr.mxu0 0.0
        %7001 = vmatpush1.msra.mxu0 0.0
        %7002 = vmatprep.subr.mxu0 0.0
        %7003 = vmatpush1.msra.mxu0 0.0
        %7004 = vmatprep.subr.mxu0 0.0
        %7005 = vmatpush1.msra.mxu0 0.0
        %7006 = vmatprep.subr.mxu0 0.0
        %7007 = vmatpush1.msra.mxu0 0.0
        %7008 = vmatprep.subr.mxu0 0.0
        %7009 = vmatpush1.msra.mxu0 0.0
        %7010 = vmatprep.subr.mxu0 0.0
        %7011 = vmatpush1.msra.mxu0 0.0
        %7012 = vmatprep.subr.mxu0 0.0
        %7013 = vmatpush1.msra.mxu0 0.0
        %7014 = vmatprep.subr.mxu0 0.0
        %7015 = vmatpush1.msra.mxu0 0.0
        %7016 = vmatprep.subr.mxu0 0.0
        %7017 = vmatpush1.msra.mxu0 0.0
        %7018 = vmatprep.subr.mxu0 0.0
        %7019 = vmatpush1.msra.mxu0 0.0
        %7020 = vmatprep.subr.mxu0 0.0
        %7021 = vmatpush1.msra.mxu0 0.0
        %7022 = vmatprep.subr.mxu0 0.0
        %7023 = vmatpush1.msra.mxu0 0.0
        %7024 = vmatprep.subr.mxu0 0.0
        %7025 = vmatpush1.msra.mxu0 0.0
        %7026 = vmatprep.subr.mxu0 0.0
        %7027 = vmatpush1.msra.mxu0 0.0
        %7028 = vmatprep.subr.mxu0 0.0
        %7029 = vmatpush1.msra.mxu0 0.0
        %7030 = vmatprep.subr.mxu0 0.0
        %7031 = vmatpush1.msra.mxu0 0.0
        %7032 = vmatprep.subr.mxu0 0.0
        %7033 = vmatpush1.msra.mxu0 0.0
        %7034 = vmatprep.subr.mxu0 0.0
        %7035 = vmatpush1.msra.mxu0 0.0
        %7036 = vmatprep.subr.mxu0 0.0
        %7037 = vmatpush1.msra.mxu0 0.0
        %7038 = vmatprep.subr.mxu0 0.0
        %7039 = vmatpush1.msra.mxu0 0.0
        %7040 = vmatprep.subr.mxu0 0.0
        %7041 = vmatpush1.msra.mxu0 0.0
        %7042 = vmatprep.subr.mxu0 0.0
        %7043 = vmatpush1.msra.mxu0 0.0
        %7044 = vmatprep.subr.mxu0 0.0
        %7045 = vmatpush1.msra.mxu0 0.0
        %7046 = vmatprep.mubr.f32.mxu0 0.0
        %7047 = vmatmul.mubr.f32.gmra.mrb[0].mxu0 %v6977
        %v7048 = vpop.f32.mrb[0].mxu0
        %v7049 = vadd.f32 0.0, %v7048
        %v7050 = vpop.f32.mrb[0].mxu0
        %v7051 = vadd.f32 0.0, %v7050
        %7052 = vmatprep.mubr.f32.mxu0 0.0
        %7053 = vmatmul.mubr.f32.gmra.mrb[0].mxu0 %v6980
        %v7054 = vpop.f32.mrb[0].mxu0
        %v7055 = vadd.f32 0.0, %v7054
        %v7056 = vpop.f32.mrb[0].mxu0
        %v7057 = vadd.f32 0.0, %v7056
        %7058 = vdwg.mxu0
        %v7059 = vadd.f32 %v6969, %v7049
        %v7060 = vadd.f32 %v6970, %v7051
        %v7061 = vadd.f32 %v6971, %v7055
        %v7062 = vadd.f32 %v6972, %v7057
        %s7063 = scalar_lea.vmem [#allocation2], 944
        %v7064 = vld [vmem:[%s7063] sm:$0xff]
        %v7065 = vld [vmem:[%s7063 + $0x8] sm:$0xff]
        %v7067 = vsel %vm300, %v7064, 0
        %v7070 = vsel %vm300, %v7065, 0
        %7072 = vmatprep.subr.mxu0 %v6541
        %7073 = vmatpush1.msra.mxu0 %v6540
        %7074 = vmatprep.subr.mxu0 %v6543
        %7075 = vmatpush1.msra.mxu0 %v6542
        %7076 = vmatprep.subr.mxu0 0.0
        %7077 = vmatpush1.msra.mxu0 0.0
        %7078 = vmatprep.subr.mxu0 0.0
        %7079 = vmatpush1.msra.mxu0 0.0
        %7080 = vmatprep.subr.mxu0 0.0
        %7081 = vmatpush1.msra.mxu0 0.0
        %7082 = vmatprep.subr.mxu0 0.0
        %7083 = vmatpush1.msra.mxu0 0.0
        %7084 = vmatprep.subr.mxu0 0.0
        %7085 = vmatpush1.msra.mxu0 0.0
        %7086 = vmatprep.subr.mxu0 0.0
        %7087 = vmatpush1.msra.mxu0 0.0
        %7088 = vmatprep.subr.mxu0 0.0
        %7089 = vmatpush1.msra.mxu0 0.0
        %7090 = vmatprep.subr.mxu0 0.0
        %7091 = vmatpush1.msra.mxu0 0.0
        %7092 = vmatprep.subr.mxu0 0.0
        %7093 = vmatpush1.msra.mxu0 0.0
        %7094 = vmatprep.subr.mxu0 0.0
        %7095 = vmatpush1.msra.mxu0 0.0
        %7096 = vmatprep.subr.mxu0 0.0
        %7097 = vmatpush1.msra.mxu0 0.0
        %7098 = vmatprep.subr.mxu0 0.0
        %7099 = vmatpush1.msra.mxu0 0.0
        %7100 = vmatprep.subr.mxu0 0.0
        %7101 = vmatpush1.msra.mxu0 0.0
        %7102 = vmatprep.subr.mxu0 0.0
        %7103 = vmatpush1.msra.mxu0 0.0
        %7104 = vmatprep.subr.mxu0 0.0
        %7105 = vmatpush1.msra.mxu0 0.0
        %7106 = vmatprep.subr.mxu0 0.0
        %7107 = vmatpush1.msra.mxu0 0.0
        %7108 = vmatprep.subr.mxu0 0.0
        %7109 = vmatpush1.msra.mxu0 0.0
        %7110 = vmatprep.subr.mxu0 0.0
        %7111 = vmatpush1.msra.mxu0 0.0
        %7112 = vmatprep.subr.mxu0 0.0
        %7113 = vmatpush1.msra.mxu0 0.0
        %7114 = vmatprep.subr.mxu0 0.0
        %7115 = vmatpush1.msra.mxu0 0.0
        %7116 = vmatprep.subr.mxu0 0.0
        %7117 = vmatpush1.msra.mxu0 0.0
        %7118 = vmatprep.subr.mxu0 0.0
        %7119 = vmatpush1.msra.mxu0 0.0
        %7120 = vmatprep.subr.mxu0 0.0
        %7121 = vmatpush1.msra.mxu0 0.0
        %7122 = vmatprep.subr.mxu0 0.0
        %7123 = vmatpush1.msra.mxu0 0.0
        %7124 = vmatprep.subr.mxu0 0.0
        %7125 = vmatpush1.msra.mxu0 0.0
        %7126 = vmatprep.subr.mxu0 0.0
        %7127 = vmatpush1.msra.mxu0 0.0
        %7128 = vmatprep.subr.mxu0 0.0
        %7129 = vmatpush1.msra.mxu0 0.0
        %7130 = vmatprep.subr.mxu0 0.0
        %7131 = vmatpush1.msra.mxu0 0.0
        %7132 = vmatprep.subr.mxu0 0.0
        %7133 = vmatpush1.msra.mxu0 0.0
        %7134 = vmatprep.subr.mxu0 0.0
        %7135 = vmatpush1.msra.mxu0 0.0
        %7136 = vmatprep.mubr.f32.mxu0 0.0
        %7137 = vmatmul.mubr.f32.gmra.mrb[0].mxu0 %v7067
        %v7138 = vpop.f32.mrb[0].mxu0
        %v7139 = vadd.f32 0.0, %v7138
        %v7140 = vpop.f32.mrb[0].mxu0
        %v7141 = vadd.f32 0.0, %v7140
        %7142 = vmatprep.mubr.f32.mxu0 0.0
        %7143 = vmatmul.mubr.f32.gmra.mrb[0].mxu0 %v7070
        %v7144 = vpop.f32.mrb[0].mxu0
        %v7145 = vadd.f32 0.0, %v7144
        %v7146 = vpop.f32.mrb[0].mxu0
        %v7147 = vadd.f32 0.0, %v7146
        %7148 = vdwg.mxu0
        %v7149 = vadd.f32 %v7059, %v7139
        %v7150 = vadd.f32 %v7060, %v7141
        %v7151 = vadd.f32 %v7061, %v7145
        %v7152 = vadd.f32 %v7062, %v7147
        %7153 = vrot.lane.b32.xlu0 %v6568, 112
        %v7154 = vpop.permute.xlu0 %7153
        %7155 = vrot.lane.b32.xlu0 %v6570, 112
        %v7156 = vpop.permute.xlu0 %7155
        %7157 = vrot.lane.b32.xlu0 %v6569, 112
        %v7158 = vpop.permute.xlu0 %7157
        %7159 = vrot.lane.b32.xlu0 %v6571, 112
        %v7160 = vpop.permute.xlu0 %7159
        %v7161 = vsel %vm870, %v7154, %v7158
        %v7162 = vsel %vm870, %v7156, %v7160
        %v7163 = vsel %vm870, %v7158, %v7154
        %v7164 = vsel %vm870, %v7160, %v7156
        %s7165 = scalar_lea.vmem [#allocation2], 960
        %v7166 = vld [vmem:[%s7165] sm:$0xff]
        %v7167 = vld [vmem:[%s7165 + $0x8] sm:$0xff]
        %v7169 = vsel %vm300, %v7166, 0
        %v7172 = vsel %vm300, %v7167, 0
        %7174 = vmatprep.subr.mxu0 %v7163
        %7175 = vmatpush1.msra.mxu0 %v7161
        %7176 = vmatprep.subr.mxu0 %v7164
        %7177 = vmatpush1.msra.mxu0 %v7162
        %7178 = vmatprep.subr.mxu0 0.0
        %7179 = vmatpush1.msra.mxu0 0.0
        %7180 = vmatprep.subr.mxu0 0.0
        %7181 = vmatpush1.msra.mxu0 0.0
        %7182 = vmatprep.subr.mxu0 0.0
        %7183 = vmatpush1.msra.mxu0 0.0
        %7184 = vmatprep.subr.mxu0 0.0
        %7185 = vmatpush1.msra.mxu0 0.0
        %7186 = vmatprep.subr.mxu0 0.0
        %7187 = vmatpush1.msra.mxu0 0.0
        %7188 = vmatprep.subr.mxu0 0.0
        %7189 = vmatpush1.msra.mxu0 0.0
        %7190 = vmatprep.subr.mxu0 0.0
        %7191 = vmatpush1.msra.mxu0 0.0
        %7192 = vmatprep.subr.mxu0 0.0
        %7193 = vmatpush1.msra.mxu0 0.0
        %7194 = vmatprep.subr.mxu0 0.0
        %7195 = vmatpush1.msra.mxu0 0.0
        %7196 = vmatprep.subr.mxu0 0.0
        %7197 = vmatpush1.msra.mxu0 0.0
        %7198 = vmatprep.subr.mxu0 0.0
        %7199 = vmatpush1.msra.mxu0 0.0
        %7200 = vmatprep.subr.mxu0 0.0
        %7201 = vmatpush1.msra.mxu0 0.0
        %7202 = vmatprep.subr.mxu0 0.0
        %7203 = vmatpush1.msra.mxu0 0.0
        %7204 = vmatprep.subr.mxu0 0.0
        %7205 = vmatpush1.msra.mxu0 0.0
        %7206 = vmatprep.subr.mxu0 0.0
        %7207 = vmatpush1.msra.mxu0 0.0
        %7208 = vmatprep.subr.mxu0 0.0
        %7209 = vmatpush1.msra.mxu0 0.0
        %7210 = vmatprep.subr.mxu0 0.0
        %7211 = vmatpush1.msra.mxu0 0.0
        %7212 = vmatprep.subr.mxu0 0.0
        %7213 = vmatpush1.msra.mxu0 0.0
        %7214 = vmatprep.subr.mxu0 0.0
        %7215 = vmatpush1.msra.mxu0 0.0
        %7216 = vmatprep.subr.mxu0 0.0
        %7217 = vmatpush1.msra.mxu0 0.0
        %7218 = vmatprep.subr.mxu0 0.0
        %7219 = vmatpush1.msra.mxu0 0.0
        %7220 = vmatprep.subr.mxu0 0.0
        %7221 = vmatpush1.msra.mxu0 0.0
        %7222 = vmatprep.subr.mxu0 0.0
        %7223 = vmatpush1.msra.mxu0 0.0
        %7224 = vmatprep.subr.mxu0 0.0
        %7225 = vmatpush1.msra.mxu0 0.0
        %7226 = vmatprep.subr.mxu0 0.0
        %7227 = vmatpush1.msra.mxu0 0.0
        %7228 = vmatprep.subr.mxu0 0.0
        %7229 = vmatpush1.msra.mxu0 0.0
        %7230 = vmatprep.subr.mxu0 0.0
        %7231 = vmatpush1.msra.mxu0 0.0
        %7232 = vmatprep.subr.mxu0 0.0
        %7233 = vmatpush1.msra.mxu0 0.0
        %7234 = vmatprep.subr.mxu0 0.0
        %7235 = vmatpush1.msra.mxu0 0.0
        %7236 = vmatprep.subr.mxu0 0.0
        %7237 = vmatpush1.msra.mxu0 0.0
        %7238 = vmatprep.mubr.f32.mxu0 0.0
        %7239 = vmatmul.mubr.f32.gmra.mrb[0].mxu0 %v7169
        %v7240 = vpop.f32.mrb[0].mxu0
        %v7241 = vadd.f32 0.0, %v7240
        %v7242 = vpop.f32.mrb[0].mxu0
        %v7243 = vadd.f32 0.0, %v7242
        %7244 = vmatprep.mubr.f32.mxu0 0.0
        %7245 = vmatmul.mubr.f32.gmra.mrb[0].mxu0 %v7172
        %v7246 = vpop.f32.mrb[0].mxu0
        %v7247 = vadd.f32 0.0, %v7246
        %v7248 = vpop.f32.mrb[0].mxu0
        %v7249 = vadd.f32 0.0, %v7248
        %7250 = vdwg.mxu0
        %v7251 = vadd.f32 %v7149, %v7241
        %v7252 = vadd.f32 %v7150, %v7243
        %v7253 = vadd.f32 %v7151, %v7247
        %v7254 = vadd.f32 %v7152, %v7249
        %7255 = vrot.lane.b32.xlu0 %v6512, 112
        %v7256 = vpop.permute.xlu0 %7255
        %7257 = vrot.lane.b32.xlu0 %v6514, 112
        %v7258 = vpop.permute.xlu0 %7257
        %7259 = vrot.lane.b32.xlu0 %v6513, 112
        %v7260 = vpop.permute.xlu0 %7259
        %7261 = vrot.lane.b32.xlu0 %v6515, 112
        %v7262 = vpop.permute.xlu0 %7261
        %v7263 = vsel %vm870, %v7256, %v7260
        %v7264 = vsel %vm870, %v7258, %v7262
        %v7265 = vsel %vm870, %v7260, %v7256
        %v7266 = vsel %vm870, %v7262, %v7258
        %s7267 = scalar_lea.vmem [#allocation2], 976
        %v7268 = vld [vmem:[%s7267] sm:$0xff]
        %v7269 = vld [vmem:[%s7267 + $0x8] sm:$0xff]
        %v7271 = vsel %vm300, %v7268, 0
        %v7274 = vsel %vm300, %v7269, 0
        %7276 = vmatprep.subr.mxu0 %v7265
        %7277 = vmatpush1.msra.mxu0 %v7263
        %7278 = vmatprep.subr.mxu0 %v7266
        %7279 = vmatpush1.msra.mxu0 %v7264
        %7280 = vmatprep.subr.mxu0 0.0
        %7281 = vmatpush1.msra.mxu0 0.0
        %7282 = vmatprep.subr.mxu0 0.0
        %7283 = vmatpush1.msra.mxu0 0.0
        %7284 = vmatprep.subr.mxu0 0.0
        %7285 = vmatpush1.msra.mxu0 0.0
        %7286 = vmatprep.subr.mxu0 0.0
        %7287 = vmatpush1.msra.mxu0 0.0
        %7288 = vmatprep.subr.mxu0 0.0
        %7289 = vmatpush1.msra.mxu0 0.0
        %7290 = vmatprep.subr.mxu0 0.0
        %7291 = vmatpush1.msra.mxu0 0.0
        %7292 = vmatprep.subr.mxu0 0.0
        %7293 = vmatpush1.msra.mxu0 0.0
        %7294 = vmatprep.subr.mxu0 0.0
        %7295 = vmatpush1.msra.mxu0 0.0
        %7296 = vmatprep.subr.mxu0 0.0
        %7297 = vmatpush1.msra.mxu0 0.0
        %7298 = vmatprep.subr.mxu0 0.0
        %7299 = vmatpush1.msra.mxu0 0.0
        %7300 = vmatprep.subr.mxu0 0.0
        %7301 = vmatpush1.msra.mxu0 0.0
        %7302 = vmatprep.subr.mxu0 0.0
        %7303 = vmatpush1.msra.mxu0 0.0
        %7304 = vmatprep.subr.mxu0 0.0
        %7305 = vmatpush1.msra.mxu0 0.0
        %7306 = vmatprep.subr.mxu0 0.0
        %7307 = vmatpush1.msra.mxu0 0.0
        %7308 = vmatprep.subr.mxu0 0.0
        %7309 = vmatpush1.msra.mxu0 0.0
        %7310 = vmatprep.subr.mxu0 0.0
        %7311 = vmatpush1.msra.mxu0 0.0
        %7312 = vmatprep.subr.mxu0 0.0
        %7313 = vmatpush1.msra.mxu0 0.0
        %7314 = vmatprep.subr.mxu0 0.0
        %7315 = vmatpush1.msra.mxu0 0.0
        %7316 = vmatprep.subr.mxu0 0.0
        %7317 = vmatpush1.msra.mxu0 0.0
        %7318 = vmatprep.subr.mxu0 0.0
        %7319 = vmatpush1.msra.mxu0 0.0
        %7320 = vmatprep.subr.mxu0 0.0
        %7321 = vmatpush1.msra.mxu0 0.0
        %7322 = vmatprep.subr.mxu0 0.0
        %7323 = vmatpush1.msra.mxu0 0.0
        %7324 = vmatprep.subr.mxu0 0.0
        %7325 = vmatpush1.msra.mxu0 0.0
        %7326 = vmatprep.subr.mxu0 0.0
        %7327 = vmatpush1.msra.mxu0 0.0
        %7328 = vmatprep.subr.mxu0 0.0
        %7329 = vmatpush1.msra.mxu0 0.0
        %7330 = vmatprep.subr.mxu0 0.0
        %7331 = vmatpush1.msra.mxu0 0.0
        %7332 = vmatprep.subr.mxu0 0.0
        %7333 = vmatpush1.msra.mxu0 0.0
        %7334 = vmatprep.subr.mxu0 0.0
        %7335 = vmatpush1.msra.mxu0 0.0
        %7336 = vmatprep.subr.mxu0 0.0
        %7337 = vmatpush1.msra.mxu0 0.0
        %7338 = vmatprep.subr.mxu0 0.0
        %7339 = vmatpush1.msra.mxu0 0.0
        %7340 = vmatprep.mubr.f32.mxu0 0.0
        %7341 = vmatmul.mubr.f32.gmra.mrb[0].mxu0 %v7271
        %v7342 = vpop.f32.mrb[0].mxu0
        %v7343 = vadd.f32 0.0, %v7342
        %v7344 = vpop.f32.mrb[0].mxu0
        %v7345 = vadd.f32 0.0, %v7344
        %7346 = vmatprep.mubr.f32.mxu0 0.0
        %7347 = vmatmul.mubr.f32.gmra.mrb[0].mxu0 %v7274
        %v7348 = vpop.f32.mrb[0].mxu0
        %v7349 = vadd.f32 0.0, %v7348
        %v7350 = vpop.f32.mrb[0].mxu0
        %v7351 = vadd.f32 0.0, %v7350
        %7352 = vdwg.mxu0
        %v7353 = vadd.f32 %v7251, %v7343
        %v7354 = vadd.f32 %v7252, %v7345
        %v7355 = vadd.f32 %v7253, %v7349
        %v7356 = vadd.f32 %v7254, %v7351
        %7357 = vrot.lane.b32.xlu0 %v6540, 112
        %v7358 = vpop.permute.xlu0 %7357
        %7359 = vrot.lane.b32.xlu0 %v6542, 112
        %v7360 = vpop.permute.xlu0 %7359
        %7361 = vrot.lane.b32.xlu0 %v6541, 112
        %v7362 = vpop.permute.xlu0 %7361
        %7363 = vrot.lane.b32.xlu0 %v6543, 112
        %v7364 = vpop.permute.xlu0 %7363
        %v7365 = vsel %vm870, %v7358, %v7362
        %v7366 = vsel %vm870, %v7360, %v7364
        %v7367 = vsel %vm870, %v7362, %v7358
        %v7368 = vsel %vm870, %v7364, %v7360
        %s7369 = scalar_lea.vmem [#allocation2], 992
        %v7370 = vld [vmem:[%s7369] sm:$0xff]
        %v7371 = vld [vmem:[%s7369 + $0x8] sm:$0xff]
        %v7373 = vsel %vm300, %v7370, 0
        %v7376 = vsel %vm300, %v7371, 0
        %7378 = vmatprep.subr.mxu0 %v7367
        %7379 = vmatpush1.msra.mxu0 %v7365
        %7380 = vmatprep.subr.mxu0 %v7368
        %7381 = vmatpush1.msra.mxu0 %v7366
        %7382 = vmatprep.subr.mxu0 0.0
        %7383 = vmatpush1.msra.mxu0 0.0
        %7384 = vmatprep.subr.mxu0 0.0
        %7385 = vmatpush1.msra.mxu0 0.0
        %7386 = vmatprep.subr.mxu0 0.0
        %7387 = vmatpush1.msra.mxu0 0.0
        %7388 = vmatprep.subr.mxu0 0.0
        %7389 = vmatpush1.msra.mxu0 0.0
        %7390 = vmatprep.subr.mxu0 0.0
        %7391 = vmatpush1.msra.mxu0 0.0
        %7392 = vmatprep.subr.mxu0 0.0
        %7393 = vmatpush1.msra.mxu0 0.0
        %7394 = vmatprep.subr.mxu0 0.0
        %7395 = vmatpush1.msra.mxu0 0.0
        %7396 = vmatprep.subr.mxu0 0.0
        %7397 = vmatpush1.msra.mxu0 0.0
        %7398 = vmatprep.subr.mxu0 0.0
        %7399 = vmatpush1.msra.mxu0 0.0
        %7400 = vmatprep.subr.mxu0 0.0
        %7401 = vmatpush1.msra.mxu0 0.0
        %7402 = vmatprep.subr.mxu0 0.0
        %7403 = vmatpush1.msra.mxu0 0.0
        %7404 = vmatprep.subr.mxu0 0.0
        %7405 = vmatpush1.msra.mxu0 0.0
        %7406 = vmatprep.subr.mxu0 0.0
        %7407 = vmatpush1.msra.mxu0 0.0
        %7408 = vmatprep.subr.mxu0 0.0
        %7409 = vmatpush1.msra.mxu0 0.0
        %7410 = vmatprep.subr.mxu0 0.0
        %7411 = vmatpush1.msra.mxu0 0.0
        %7412 = vmatprep.subr.mxu0 0.0
        %7413 = vmatpush1.msra.mxu0 0.0
        %7414 = vmatprep.subr.mxu0 0.0
        %7415 = vmatpush1.msra.mxu0 0.0
        %7416 = vmatprep.subr.mxu0 0.0
        %7417 = vmatpush1.msra.mxu0 0.0
        %7418 = vmatprep.subr.mxu0 0.0
        %7419 = vmatpush1.msra.mxu0 0.0
        %7420 = vmatprep.subr.mxu0 0.0
        %7421 = vmatpush1.msra.mxu0 0.0
        %7422 = vmatprep.subr.mxu0 0.0
        %7423 = vmatpush1.msra.mxu0 0.0
        %7424 = vmatprep.subr.mxu0 0.0
        %7425 = vmatpush1.msra.mxu0 0.0
        %7426 = vmatprep.subr.mxu0 0.0
        %7427 = vmatpush1.msra.mxu0 0.0
        %7428 = vmatprep.subr.mxu0 0.0
        %7429 = vmatpush1.msra.mxu0 0.0
        %7430 = vmatprep.subr.mxu0 0.0
        %7431 = vmatpush1.msra.mxu0 0.0
        %7432 = vmatprep.subr.mxu0 0.0
        %7433 = vmatpush1.msra.mxu0 0.0
        %7434 = vmatprep.subr.mxu0 0.0
        %7435 = vmatpush1.msra.mxu0 0.0
        %7436 = vmatprep.subr.mxu0 0.0
        %7437 = vmatpush1.msra.mxu0 0.0
        %7438 = vmatprep.subr.mxu0 0.0
        %7439 = vmatpush1.msra.mxu0 0.0
        %7440 = vmatprep.subr.mxu0 0.0
        %7441 = vmatpush1.msra.mxu0 0.0
        %7442 = vmatprep.mubr.f32.mxu0 0.0
        %7443 = vmatmul.mubr.f32.gmra.mrb[0].mxu0 %v7373
        %v7444 = vpop.f32.mrb[0].mxu0
        %v7445 = vadd.f32 0.0, %v7444
        %v7446 = vpop.f32.mrb[0].mxu0
        %v7447 = vadd.f32 0.0, %v7446
        %7448 = vmatprep.mubr.f32.mxu0 0.0
        %7449 = vmatmul.mubr.f32.gmra.mrb[0].mxu0 %v7376
        %v7450 = vpop.f32.mrb[0].mxu0
        %v7451 = vadd.f32 0.0, %v7450
        %v7452 = vpop.f32.mrb[0].mxu0
        %v7453 = vadd.f32 0.0, %v7452
        %7454 = vdwg.mxu0
        %v7455 = vadd.f32 %v7353, %v7445
        %v7456 = vadd.f32 %v7354, %v7447
        %v7457 = vadd.f32 %v7355, %v7451
        %v7458 = vadd.f32 %v7356, %v7453
        %v7459 = vadd.f32 %v7455, %v5465
        %v7460 = vadd.f32 %v7456, %v5466
        %v7461 = vadd.f32 %v7457, %v5467
        %v7462 = vadd.f32 %v7458, %v5468
        %v7463 = vmul.f32 %v7459, 0.5
        %v7464 = vmul.f32 %v7460, 0.5
        %v7465 = vmul.f32 %v7461, 0.5
        %v7466 = vmul.f32 %v7462, 0.5
        %v7467 = vmul.f32 %v7459, 0.70710677
        %v7468 = vmul.f32 %v7460, 0.70710677
        %v7469 = vmul.f32 %v7461, 0.70710677
        %v7470 = vmul.f32 %v7462, 0.70710677
        %vm7471 = vcmp.lt.f32.partialorder %v7467, 0.0
        %vm7472 = vcmp.lt.f32.partialorder %v7468, 0.0
        %vm7473 = vcmp.lt.f32.partialorder %v7469, 0.0
        %vm7474 = vcmp.lt.f32.partialorder %v7470, 0.0
        %v7475 = vsel %vm7471, -1.0, 1.0
        %v7476 = vsel %vm7472, -1.0, 1.0
        %v7477 = vsel %vm7473, -1.0, 1.0
        %v7478 = vsel %vm7474, -1.0, 1.0
        %v7479 = vand.u32 2147483647, %v7467
        %v7480 = vand.u32 2147483647, %v7468
        %v7481 = vand.u32 2147483647, %v7469
        %v7482 = vand.u32 2147483647, %v7470
        %v7483 = vmul.f32 %v7479, 0.3275911
        %v7484 = vmul.f32 %v7480, 0.3275911
        %v7485 = vmul.f32 %v7481, 0.3275911
        %v7486 = vmul.f32 %v7482, 0.3275911
        %v7487 = vadd.f32 %v7483, 1.0
        %v7488 = vadd.f32 %v7484, 1.0
        %v7489 = vadd.f32 %v7485, 1.0
        %v7490 = vadd.f32 %v7486, 1.0
        %v7491 = vrcp.pop %v7487
        %v7492 = vrcp.pop %v7488
        %v7493 = vrcp.pop %v7489
        %v7494 = vrcp.pop %v7490
        %v7495 = vmul.f32 %v7491, 1.0614054
        %v7496 = vmul.f32 %v7492, 1.0614054
        %v7497 = vmul.f32 %v7493, 1.0614054
        %v7498 = vmul.f32 %v7494, 1.0614054
        %v7499 = vadd.f32 %v7495, -1.4531521
        %v7500 = vadd.f32 %v7496, -1.4531521
        %v7501 = vadd.f32 %v7497, -1.4531521
        %v7502 = vadd.f32 %v7498, -1.4531521
        %v7503 = vmul.f32 %v7499, %v7491
        %v7504 = vmul.f32 %v7500, %v7492
        %v7505 = vmul.f32 %v7501, %v7493
        %v7506 = vmul.f32 %v7502, %v7494
        %v7507 = vadd.f32 %v7503, 1.4214138
        %v7508 = vadd.f32 %v7504, 1.4214138
        %v7509 = vadd.f32 %v7505, 1.4214138
        %v7510 = vadd.f32 %v7506, 1.4214138
        %v7511 = vmul.f32 %v7507, %v7491
        %v7512 = vmul.f32 %v7508, %v7492
        %v7513 = vmul.f32 %v7509, %v7493
        %v7514 = vmul.f32 %v7510, %v7494
        %v7515 = vadd.f32 %v7511, -0.28449672
        %v7516 = vadd.f32 %v7512, -0.28449672
        %v7517 = vadd.f32 %v7513, -0.28449672
        %v7518 = vadd.f32 %v7514, -0.28449672
        %v7519 = vmul.f32 %v7515, %v7491
        %v7520 = vmul.f32 %v7516, %v7492
        %v7521 = vmul.f32 %v7517, %v7493
        %v7522 = vmul.f32 %v7518, %v7494
        %v7523 = vadd.f32 %v7519, 0.2548296
        %v7524 = vadd.f32 %v7520, 0.2548296
        %v7525 = vadd.f32 %v7521, 0.2548296
        %v7526 = vadd.f32 %v7522, 0.2548296
        %v7527 = vmul.f32 %v7523, %v7491
        %v7528 = vmul.f32 %v7524, %v7492
        %v7529 = vmul.f32 %v7525, %v7493
        %v7530 = vmul.f32 %v7526, %v7494
        %v7531 = vsub.f32 0.0, %v7479
        %v7532 = vsub.f32 0.0, %v7480
        %v7533 = vsub.f32 0.0, %v7481
        %v7534 = vsub.f32 0.0, %v7482
        %v7535 = vmul.f32 %v7531, %v7479
        %v7536 = vmul.f32 %v7532, %v7480
        %v7537 = vmul.f32 %v7533, %v7481
        %v7538 = vmul.f32 %v7534, %v7482
        %v7539 = vmul.f32 %v7535, 1.442695
        %v7540 = vpow.pop %v7539
        %v7541 = vmul.f32 %v7536, 1.442695
        %v7542 = vpow.pop %v7541
        %v7543 = vmul.f32 %v7537, 1.442695
        %v7544 = vpow.pop %v7543
        %v7545 = vmul.f32 %v7538, 1.442695
        %v7546 = vpow.pop %v7545
        %v7547 = vmul.f32 %v7527, %v7540
        %v7548 = vmul.f32 %v7528, %v7542
        %v7549 = vmul.f32 %v7529, %v7544
        %v7550 = vmul.f32 %v7530, %v7546
        %v7551 = vsub.f32 1.0, %v7547
        %v7552 = vsub.f32 1.0, %v7548
        %v7553 = vsub.f32 1.0, %v7549
        %v7554 = vsub.f32 1.0, %v7550
        %v7555 = vmul.f32 %v7475, %v7551
        %v7556 = vmul.f32 %v7476, %v7552
        %v7557 = vmul.f32 %v7477, %v7553
        %v7558 = vmul.f32 %v7478, %v7554
        %v7559 = vadd.f32 %v7555, 1.0
        %v7560 = vadd.f32 %v7556, 1.0
        %v7561 = vadd.f32 %v7557, 1.0
        %v7562 = vadd.f32 %v7558, 1.0
        %v7563 = vmul.f32 %v7463, %v7559
        %v7564 = vmul.f32 %v7464, %v7560
        %v7565 = vmul.f32 %v7465, %v7561
        %v7566 = vmul.f32 %v7466, %v7562
        %7567 = vrot.lane.b32.xlu0 %v7563, 15
        %v7568 = vpop.permute.xlu0 %7567
        %7569 = vrot.lane.b32.xlu0 %v7565, 15
        %v7570 = vpop.permute.xlu0 %7569
        %7571 = vrot.lane.b32.xlu0 %v7564, 15
        %v7572 = vpop.permute.xlu0 %7571
        %7573 = vrot.lane.b32.xlu0 %v7566, 15
        %v7574 = vpop.permute.xlu0 %7573
        %v7575 = vsel %vm229, %v7568, %v7572
        %v7576 = vsel %vm229, %v7570, %v7574
        %v7577 = vsel %vm229, %v7572, %v7568
        %v7578 = vsel %vm229, %v7574, %v7570
        %7579 = vrot.lane.b32.xlu0 %v7563, 127
        %v7580 = vpop.permute.xlu0 %7579
        %7581 = vrot.lane.b32.xlu0 %v7565, 127
        %v7582 = vpop.permute.xlu0 %7581
        %7583 = vrot.lane.b32.xlu0 %v7564, 127
        %v7584 = vpop.permute.xlu0 %7583
        %7585 = vrot.lane.b32.xlu0 %v7566, 127
        %v7586 = vpop.permute.xlu0 %7585
        %v7587 = vsel %vm242, %v7580, %v7584
        %v7588 = vsel %vm242, %v7582, %v7586
        %v7589 = vsel %vm242, %v7584, %v7580
        %v7590 = vsel %vm242, %v7586, %v7582
        %v7591 = vsel %vm215, %v7577, %v7587
        %v7592 = vsel %vm216, %v7575, %v7589
        %v7593 = vsel %vm215, %v7578, %v7588
        %v7594 = vsel %vm216, %v7576, %v7590
        %7595 = vrot.lane.b32.xlu0 %v7563, 113
        %v7596 = vpop.permute.xlu0 %7595
        %7597 = vrot.lane.b32.xlu0 %v7565, 113
        %v7598 = vpop.permute.xlu0 %7597
        %7599 = vrot.lane.b32.xlu0 %v7564, 113
        %v7600 = vpop.permute.xlu0 %7599
        %7601 = vrot.lane.b32.xlu0 %v7566, 113
        %v7602 = vpop.permute.xlu0 %7601
        %v7603 = vsel %vm259, %v7596, %v7600
        %v7604 = vsel %vm259, %v7598, %v7602
        %v7605 = vsel %vm259, %v7600, %v7596
        %v7606 = vsel %vm259, %v7602, %v7598
        %7607 = vrot.lane.b32.xlu0 %v7563, 1
        %v7608 = vpop.permute.xlu0 %7607
        %7609 = vrot.lane.b32.xlu0 %v7565, 1
        %v7610 = vpop.permute.xlu0 %7609
        %7611 = vrot.lane.b32.xlu0 %v7564, 1
        %v7612 = vpop.permute.xlu0 %7611
        %7613 = vrot.lane.b32.xlu0 %v7566, 1
        %v7614 = vpop.permute.xlu0 %7613
        %v7615 = vsel %vm272, %v7608, %v7612
        %v7616 = vsel %vm272, %v7610, %v7614
        %v7617 = vsel %vm272, %v7612, %v7608
        %v7618 = vsel %vm272, %v7614, %v7610
        %v7619 = vsel %vm213, %v7603, %v7617
        %v7620 = vsel %vm214, %v7605, %v7615
        %v7621 = vsel %vm213, %v7604, %v7618
        %v7622 = vsel %vm214, %v7606, %v7616
        %s7623 = scalar_lea.vmem %s2, 224
        %v7624 = vld [vmem:[%s7623] sm:$0xff]
        %v7625 = vld [vmem:[%s7623 + $0x8] sm:$0xff]
        %v7626 = vld [vmem:[%s7623 + $0x10] sm:$0xff]
        %v7627 = vld [vmem:[%s7623 + $0x18] sm:$0xff]
        %7628 = vrot.lane.b32.xlu0 %v7619, 16
        %v7629 = vpop.permute.xlu0 %7628
        %7630 = vrot.lane.b32.xlu0 %v7621, 16
        %v7631 = vpop.permute.xlu0 %7630
        %7632 = vrot.lane.b32.xlu0 %v7620, 16
        %v7633 = vpop.permute.xlu0 %7632
        %7634 = vrot.lane.b32.xlu0 %v7622, 16
        %v7635 = vpop.permute.xlu0 %7634
        %v7636 = vsel %vm293, %v7629, %v7633
        %v7637 = vsel %vm293, %v7631, %v7635
        %v7638 = vsel %vm293, %v7633, %v7629
        %v7639 = vsel %vm293, %v7635, %v7631
        %s7640 = scalar_lea.vmem [#allocation2], 1008
        %v7641 = vld [vmem:[%s7640] sm:$0xff]
        %v7642 = vld [vmem:[%s7640 + $0x8] sm:$0xff]
        %v7644 = vsel %vm300, %v7641, 0
        %v7647 = vsel %vm300, %v7642, 0
        %7649 = vmatprep.subr.mxu0 %v7636
        %7650 = vmatpush1.msra.mxu0 %v7638
        %7651 = vmatprep.subr.mxu0 %v7637
        %7652 = vmatpush1.msra.mxu0 %v7639
        %7653 = vmatprep.subr.mxu0 0.0
        %7654 = vmatpush1.msra.mxu0 0.0
        %7655 = vmatprep.subr.mxu0 0.0
        %7656 = vmatpush1.msra.mxu0 0.0
        %7657 = vmatprep.subr.mxu0 0.0
        %7658 = vmatpush1.msra.mxu0 0.0
        %7659 = vmatprep.subr.mxu0 0.0
        %7660 = vmatpush1.msra.mxu0 0.0
        %7661 = vmatprep.subr.mxu0 0.0
        %7662 = vmatpush1.msra.mxu0 0.0
        %7663 = vmatprep.subr.mxu0 0.0
        %7664 = vmatpush1.msra.mxu0 0.0
        %7665 = vmatprep.subr.mxu0 0.0
        %7666 = vmatpush1.msra.mxu0 0.0
        %7667 = vmatprep.subr.mxu0 0.0
        %7668 = vmatpush1.msra.mxu0 0.0
        %7669 = vmatprep.subr.mxu0 0.0
        %7670 = vmatpush1.msra.mxu0 0.0
        %7671 = vmatprep.subr.mxu0 0.0
        %7672 = vmatpush1.msra.mxu0 0.0
        %7673 = vmatprep.subr.mxu0 0.0
        %7674 = vmatpush1.msra.mxu0 0.0
        %7675 = vmatprep.subr.mxu0 0.0
        %7676 = vmatpush1.msra.mxu0 0.0
        %7677 = vmatprep.subr.mxu0 0.0
        %7678 = vmatpush1.msra.mxu0 0.0
        %7679 = vmatprep.subr.mxu0 0.0
        %7680 = vmatpush1.msra.mxu0 0.0
        %7681 = vmatprep.subr.mxu0 0.0
        %7682 = vmatpush1.msra.mxu0 0.0
        %7683 = vmatprep.subr.mxu0 0.0
        %7684 = vmatpush1.msra.mxu0 0.0
        %7685 = vmatprep.subr.mxu0 0.0
        %7686 = vmatpush1.msra.mxu0 0.0
        %7687 = vmatprep.subr.mxu0 0.0
        %7688 = vmatpush1.msra.mxu0 0.0
        %7689 = vmatprep.subr.mxu0 0.0
        %7690 = vmatpush1.msra.mxu0 0.0
        %7691 = vmatprep.subr.mxu0 0.0
        %7692 = vmatpush1.msra.mxu0 0.0
        %7693 = vmatprep.subr.mxu0 0.0
        %7694 = vmatpush1.msra.mxu0 0.0
        %7695 = vmatprep.subr.mxu0 0.0
        %7696 = vmatpush1.msra.mxu0 0.0
        %7697 = vmatprep.subr.mxu0 0.0
        %7698 = vmatpush1.msra.mxu0 0.0
        %7699 = vmatprep.subr.mxu0 0.0
        %7700 = vmatpush1.msra.mxu0 0.0
        %7701 = vmatprep.subr.mxu0 0.0
        %7702 = vmatpush1.msra.mxu0 0.0
        %7703 = vmatprep.subr.mxu0 0.0
        %7704 = vmatpush1.msra.mxu0 0.0
        %7705 = vmatprep.subr.mxu0 0.0
        %7706 = vmatpush1.msra.mxu0 0.0
        %7707 = vmatprep.subr.mxu0 0.0
        %7708 = vmatpush1.msra.mxu0 0.0
        %7709 = vmatprep.subr.mxu0 0.0
        %7710 = vmatpush1.msra.mxu0 0.0
        %7711 = vmatprep.subr.mxu0 0.0
        %7712 = vmatpush1.msra.mxu0 0.0
        %7713 = vmatprep.mubr.f32.mxu0 0.0
        %7714 = vmatmul.mubr.f32.gmra.mrb[0].mxu0 %v7644
        %v7715 = vpop.f32.mrb[0].mxu0
        %v7716 = vadd.f32 0.0, %v7715
        %v7717 = vpop.f32.mrb[0].mxu0
        %v7718 = vadd.f32 0.0, %v7717
        %7719 = vmatprep.mubr.f32.mxu0 0.0
        %7720 = vmatmul.mubr.f32.gmra.mrb[0].mxu0 %v7647
        %v7721 = vpop.f32.mrb[0].mxu0
        %v7722 = vadd.f32 0.0, %v7721
        %v7723 = vpop.f32.mrb[0].mxu0
        %v7724 = vadd.f32 0.0, %v7723
        %7725 = vdwg.mxu0
        %v7726 = vadd.f32 %v7624, %v7716
        %v7727 = vadd.f32 %v7625, %v7718
        %v7728 = vadd.f32 %v7626, %v7722
        %v7729 = vadd.f32 %v7627, %v7724
        %7730 = vrot.lane.b32.xlu0 %v7563, 16
        %v7731 = vpop.permute.xlu0 %7730
        %7732 = vrot.lane.b32.xlu0 %v7565, 16
        %v7733 = vpop.permute.xlu0 %7732
        %7734 = vrot.lane.b32.xlu0 %v7564, 16
        %v7735 = vpop.permute.xlu0 %7734
        %7736 = vrot.lane.b32.xlu0 %v7566, 16
        %v7737 = vpop.permute.xlu0 %7736
        %v7738 = vsel %vm293, %v7731, %v7735
        %v7739 = vsel %vm293, %v7733, %v7737
        %v7740 = vsel %vm293, %v7735, %v7731
        %v7741 = vsel %vm293, %v7737, %v7733
        %s7742 = scalar_lea.vmem [#allocation2], 1024
        %v7743 = vld [vmem:[%s7742] sm:$0xff]
        %v7744 = vld [vmem:[%s7742 + $0x8] sm:$0xff]
        %v7746 = vsel %vm300, %v7743, 0
        %v7749 = vsel %vm300, %v7744, 0
        %7751 = vmatprep.subr.mxu0 %v7738
        %7752 = vmatpush1.msra.mxu0 %v7740
        %7753 = vmatprep.subr.mxu0 %v7739
        %7754 = vmatpush1.msra.mxu0 %v7741
        %7755 = vmatprep.subr.mxu0 0.0
        %7756 = vmatpush1.msra.mxu0 0.0
        %7757 = vmatprep.subr.mxu0 0.0
        %7758 = vmatpush1.msra.mxu0 0.0
        %7759 = vmatprep.subr.mxu0 0.0
        %7760 = vmatpush1.msra.mxu0 0.0
        %7761 = vmatprep.subr.mxu0 0.0
        %7762 = vmatpush1.msra.mxu0 0.0
        %7763 = vmatprep.subr.mxu0 0.0
        %7764 = vmatpush1.msra.mxu0 0.0
        %7765 = vmatprep.subr.mxu0 0.0
        %7766 = vmatpush1.msra.mxu0 0.0
        %7767 = vmatprep.subr.mxu0 0.0
        %7768 = vmatpush1.msra.mxu0 0.0
        %7769 = vmatprep.subr.mxu0 0.0
        %7770 = vmatpush1.msra.mxu0 0.0
        %7771 = vmatprep.subr.mxu0 0.0
        %7772 = vmatpush1.msra.mxu0 0.0
        %7773 = vmatprep.subr.mxu0 0.0
        %7774 = vmatpush1.msra.mxu0 0.0
        %7775 = vmatprep.subr.mxu0 0.0
        %7776 = vmatpush1.msra.mxu0 0.0
        %7777 = vmatprep.subr.mxu0 0.0
        %7778 = vmatpush1.msra.mxu0 0.0
        %7779 = vmatprep.subr.mxu0 0.0
        %7780 = vmatpush1.msra.mxu0 0.0
        %7781 = vmatprep.subr.mxu0 0.0
        %7782 = vmatpush1.msra.mxu0 0.0
        %7783 = vmatprep.subr.mxu0 0.0
        %7784 = vmatpush1.msra.mxu0 0.0
        %7785 = vmatprep.subr.mxu0 0.0
        %7786 = vmatpush1.msra.mxu0 0.0
        %7787 = vmatprep.subr.mxu0 0.0
        %7788 = vmatpush1.msra.mxu0 0.0
        %7789 = vmatprep.subr.mxu0 0.0
        %7790 = vmatpush1.msra.mxu0 0.0
        %7791 = vmatprep.subr.mxu0 0.0
        %7792 = vmatpush1.msra.mxu0 0.0
        %7793 = vmatprep.subr.mxu0 0.0
        %7794 = vmatpush1.msra.mxu0 0.0
        %7795 = vmatprep.subr.mxu0 0.0
        %7796 = vmatpush1.msra.mxu0 0.0
        %7797 = vmatprep.subr.mxu0 0.0
        %7798 = vmatpush1.msra.mxu0 0.0
        %7799 = vmatprep.subr.mxu0 0.0
        %7800 = vmatpush1.msra.mxu0 0.0
        %7801 = vmatprep.subr.mxu0 0.0
        %7802 = vmatpush1.msra.mxu0 0.0
        %7803 = vmatprep.subr.mxu0 0.0
        %7804 = vmatpush1.msra.mxu0 0.0
        %7805 = vmatprep.subr.mxu0 0.0
        %7806 = vmatpush1.msra.mxu0 0.0
        %7807 = vmatprep.subr.mxu0 0.0
        %7808 = vmatpush1.msra.mxu0 0.0
        %7809 = vmatprep.subr.mxu0 0.0
        %7810 = vmatpush1.msra.mxu0 0.0
        %7811 = vmatprep.subr.mxu0 0.0
        %7812 = vmatpush1.msra.mxu0 0.0
        %7813 = vmatprep.subr.mxu0 0.0
        %7814 = vmatpush1.msra.mxu0 0.0
        %7815 = vmatprep.mubr.f32.mxu0 0.0
        %7816 = vmatmul.mubr.f32.gmra.mrb[0].mxu0 %v7746
        %v7817 = vpop.f32.mrb[0].mxu0
        %v7818 = vadd.f32 0.0, %v7817
        %v7819 = vpop.f32.mrb[0].mxu0
        %v7820 = vadd.f32 0.0, %v7819
        %7821 = vmatprep.mubr.f32.mxu0 0.0
        %7822 = vmatmul.mubr.f32.gmra.mrb[0].mxu0 %v7749
        %v7823 = vpop.f32.mrb[0].mxu0
        %v7824 = vadd.f32 0.0, %v7823
        %v7825 = vpop.f32.mrb[0].mxu0
        %v7826 = vadd.f32 0.0, %v7825
        %7827 = vdwg.mxu0
        %v7828 = vadd.f32 %v7726, %v7818
        %v7829 = vadd.f32 %v7727, %v7820
        %v7830 = vadd.f32 %v7728, %v7824
        %v7831 = vadd.f32 %v7729, %v7826
        %7832 = vrot.lane.b32.xlu0 %v7591, 16
        %v7833 = vpop.permute.xlu0 %7832
        %7834 = vrot.lane.b32.xlu0 %v7593, 16
        %v7835 = vpop.permute.xlu0 %7834
        %7836 = vrot.lane.b32.xlu0 %v7592, 16
        %v7837 = vpop.permute.xlu0 %7836
        %7838 = vrot.lane.b32.xlu0 %v7594, 16
        %v7839 = vpop.permute.xlu0 %7838
        %v7840 = vsel %vm293, %v7833, %v7837
        %v7841 = vsel %vm293, %v7835, %v7839
        %v7842 = vsel %vm293, %v7837, %v7833
        %v7843 = vsel %vm293, %v7839, %v7835
        %s7844 = scalar_lea.vmem [#allocation2], 1040
        %v7845 = vld [vmem:[%s7844] sm:$0xff]
        %v7846 = vld [vmem:[%s7844 + $0x8] sm:$0xff]
        %v7848 = vsel %vm300, %v7845, 0
        %v7851 = vsel %vm300, %v7846, 0
        %7853 = vmatprep.subr.mxu0 %v7840
        %7854 = vmatpush1.msra.mxu0 %v7842
        %7855 = vmatprep.subr.mxu0 %v7841
        %7856 = vmatpush1.msra.mxu0 %v7843
        %7857 = vmatprep.subr.mxu0 0.0
        %7858 = vmatpush1.msra.mxu0 0.0
        %7859 = vmatprep.subr.mxu0 0.0
        %7860 = vmatpush1.msra.mxu0 0.0
        %7861 = vmatprep.subr.mxu0 0.0
        %7862 = vmatpush1.msra.mxu0 0.0
        %7863 = vmatprep.subr.mxu0 0.0
        %7864 = vmatpush1.msra.mxu0 0.0
        %7865 = vmatprep.subr.mxu0 0.0
        %7866 = vmatpush1.msra.mxu0 0.0
        %7867 = vmatprep.subr.mxu0 0.0
        %7868 = vmatpush1.msra.mxu0 0.0
        %7869 = vmatprep.subr.mxu0 0.0
        %7870 = vmatpush1.msra.mxu0 0.0
        %7871 = vmatprep.subr.mxu0 0.0
        %7872 = vmatpush1.msra.mxu0 0.0
        %7873 = vmatprep.subr.mxu0 0.0
        %7874 = vmatpush1.msra.mxu0 0.0
        %7875 = vmatprep.subr.mxu0 0.0
        %7876 = vmatpush1.msra.mxu0 0.0
        %7877 = vmatprep.subr.mxu0 0.0
        %7878 = vmatpush1.msra.mxu0 0.0
        %7879 = vmatprep.subr.mxu0 0.0
        %7880 = vmatpush1.msra.mxu0 0.0
        %7881 = vmatprep.subr.mxu0 0.0
        %7882 = vmatpush1.msra.mxu0 0.0
        %7883 = vmatprep.subr.mxu0 0.0
        %7884 = vmatpush1.msra.mxu0 0.0
        %7885 = vmatprep.subr.mxu0 0.0
        %7886 = vmatpush1.msra.mxu0 0.0
        %7887 = vmatprep.subr.mxu0 0.0
        %7888 = vmatpush1.msra.mxu0 0.0
        %7889 = vmatprep.subr.mxu0 0.0
        %7890 = vmatpush1.msra.mxu0 0.0
        %7891 = vmatprep.subr.mxu0 0.0
        %7892 = vmatpush1.msra.mxu0 0.0
        %7893 = vmatprep.subr.mxu0 0.0
        %7894 = vmatpush1.msra.mxu0 0.0
        %7895 = vmatprep.subr.mxu0 0.0
        %7896 = vmatpush1.msra.mxu0 0.0
        %7897 = vmatprep.subr.mxu0 0.0
        %7898 = vmatpush1.msra.mxu0 0.0
        %7899 = vmatprep.subr.mxu0 0.0
        %7900 = vmatpush1.msra.mxu0 0.0
        %7901 = vmatprep.subr.mxu0 0.0
        %7902 = vmatpush1.msra.mxu0 0.0
        %7903 = vmatprep.subr.mxu0 0.0
        %7904 = vmatpush1.msra.mxu0 0.0
        %7905 = vmatprep.subr.mxu0 0.0
        %7906 = vmatpush1.msra.mxu0 0.0
        %7907 = vmatprep.subr.mxu0 0.0
        %7908 = vmatpush1.msra.mxu0 0.0
        %7909 = vmatprep.subr.mxu0 0.0
        %7910 = vmatpush1.msra.mxu0 0.0
        %7911 = vmatprep.subr.mxu0 0.0
        %7912 = vmatpush1.msra.mxu0 0.0
        %7913 = vmatprep.subr.mxu0 0.0
        %7914 = vmatpush1.msra.mxu0 0.0
        %7915 = vmatprep.subr.mxu0 0.0
        %7916 = vmatpush1.msra.mxu0 0.0
        %7917 = vmatprep.mubr.f32.mxu0 0.0
        %7918 = vmatmul.mubr.f32.gmra.mrb[0].mxu0 %v7848
        %v7919 = vpop.f32.mrb[0].mxu0
        %v7920 = vadd.f32 0.0, %v7919
        %v7921 = vpop.f32.mrb[0].mxu0
        %v7922 = vadd.f32 0.0, %v7921
        %7923 = vmatprep.mubr.f32.mxu0 0.0
        %7924 = vmatmul.mubr.f32.gmra.mrb[0].mxu0 %v7851
        %v7925 = vpop.f32.mrb[0].mxu0
        %v7926 = vadd.f32 0.0, %v7925
        %v7927 = vpop.f32.mrb[0].mxu0
        %v7928 = vadd.f32 0.0, %v7927
        %7929 = vdwg.mxu0
        %v7930 = vadd.f32 %v7828, %v7920
        %v7931 = vadd.f32 %v7829, %v7922
        %v7932 = vadd.f32 %v7830, %v7926
        %v7933 = vadd.f32 %v7831, %v7928
        %s7934 = scalar_lea.vmem [#allocation2], 1056
        %v7935 = vld [vmem:[%s7934] sm:$0xff]
        %v7936 = vld [vmem:[%s7934 + $0x8] sm:$0xff]
        %v7938 = vsel %vm300, %v7935, 0
        %v7941 = vsel %vm300, %v7936, 0
        %7943 = vmatprep.subr.mxu0 %v7620
        %7944 = vmatpush1.msra.mxu0 %v7619
        %7945 = vmatprep.subr.mxu0 %v7622
        %7946 = vmatpush1.msra.mxu0 %v7621
        %7947 = vmatprep.subr.mxu0 0.0
        %7948 = vmatpush1.msra.mxu0 0.0
        %7949 = vmatprep.subr.mxu0 0.0
        %7950 = vmatpush1.msra.mxu0 0.0
        %7951 = vmatprep.subr.mxu0 0.0
        %7952 = vmatpush1.msra.mxu0 0.0
        %7953 = vmatprep.subr.mxu0 0.0
        %7954 = vmatpush1.msra.mxu0 0.0
        %7955 = vmatprep.subr.mxu0 0.0
        %7956 = vmatpush1.msra.mxu0 0.0
        %7957 = vmatprep.subr.mxu0 0.0
        %7958 = vmatpush1.msra.mxu0 0.0
        %7959 = vmatprep.subr.mxu0 0.0
        %7960 = vmatpush1.msra.mxu0 0.0
        %7961 = vmatprep.subr.mxu0 0.0
        %7962 = vmatpush1.msra.mxu0 0.0
        %7963 = vmatprep.subr.mxu0 0.0
        %7964 = vmatpush1.msra.mxu0 0.0
        %7965 = vmatprep.subr.mxu0 0.0
        %7966 = vmatpush1.msra.mxu0 0.0
        %7967 = vmatprep.subr.mxu0 0.0
        %7968 = vmatpush1.msra.mxu0 0.0
        %7969 = vmatprep.subr.mxu0 0.0
        %7970 = vmatpush1.msra.mxu0 0.0
        %7971 = vmatprep.subr.mxu0 0.0
        %7972 = vmatpush1.msra.mxu0 0.0
        %7973 = vmatprep.subr.mxu0 0.0
        %7974 = vmatpush1.msra.mxu0 0.0
        %7975 = vmatprep.subr.mxu0 0.0
        %7976 = vmatpush1.msra.mxu0 0.0
        %7977 = vmatprep.subr.mxu0 0.0
        %7978 = vmatpush1.msra.mxu0 0.0
        %7979 = vmatprep.subr.mxu0 0.0
        %7980 = vmatpush1.msra.mxu0 0.0
        %7981 = vmatprep.subr.mxu0 0.0
        %7982 = vmatpush1.msra.mxu0 0.0
        %7983 = vmatprep.subr.mxu0 0.0
        %7984 = vmatpush1.msra.mxu0 0.0
        %7985 = vmatprep.subr.mxu0 0.0
        %7986 = vmatpush1.msra.mxu0 0.0
        %7987 = vmatprep.subr.mxu0 0.0
        %7988 = vmatpush1.msra.mxu0 0.0
        %7989 = vmatprep.subr.mxu0 0.0
        %7990 = vmatpush1.msra.mxu0 0.0
        %7991 = vmatprep.subr.mxu0 0.0
        %7992 = vmatpush1.msra.mxu0 0.0
        %7993 = vmatprep.subr.mxu0 0.0
        %7994 = vmatpush1.msra.mxu0 0.0
        %7995 = vmatprep.subr.mxu0 0.0
        %7996 = vmatpush1.msra.mxu0 0.0
        %7997 = vmatprep.subr.mxu0 0.0
        %7998 = vmatpush1.msra.mxu0 0.0
        %7999 = vmatprep.subr.mxu0 0.0
        %8000 = vmatpush1.msra.mxu0 0.0
        %8001 = vmatprep.subr.mxu0 0.0
        %8002 = vmatpush1.msra.mxu0 0.0
        %8003 = vmatprep.subr.mxu0 0.0
        %8004 = vmatpush1.msra.mxu0 0.0
        %8005 = vmatprep.subr.mxu0 0.0
        %8006 = vmatpush1.msra.mxu0 0.0
        %8007 = vmatprep.mubr.f32.mxu0 0.0
        %8008 = vmatmul.mubr.f32.gmra.mrb[0].mxu0 %v7938
        %v8009 = vpop.f32.mrb[0].mxu0
        %v8010 = vadd.f32 0.0, %v8009
        %v8011 = vpop.f32.mrb[0].mxu0
        %v8012 = vadd.f32 0.0, %v8011
        %8013 = vmatprep.mubr.f32.mxu0 0.0
        %8014 = vmatmul.mubr.f32.gmra.mrb[0].mxu0 %v7941
        %v8015 = vpop.f32.mrb[0].mxu0
        %v8016 = vadd.f32 0.0, %v8015
        %v8017 = vpop.f32.mrb[0].mxu0
        %v8018 = vadd.f32 0.0, %v8017
        %8019 = vdwg.mxu0
        %v8020 = vadd.f32 %v7930, %v8010
        %v8021 = vadd.f32 %v7931, %v8012
        %v8022 = vadd.f32 %v7932, %v8016
        %v8023 = vadd.f32 %v7933, %v8018
        %s8024 = scalar_lea.vmem [#allocation2], 1072
        %v8025 = vld [vmem:[%s8024] sm:$0xff]
        %v8026 = vld [vmem:[%s8024 + $0x8] sm:$0xff]
        %v8028 = vsel %vm300, %v8025, 0
        %v8031 = vsel %vm300, %v8026, 0
        %8033 = vmatprep.subr.mxu0 %v7564
        %8034 = vmatpush1.msra.mxu0 %v7563
        %8035 = vmatprep.subr.mxu0 %v7566
        %8036 = vmatpush1.msra.mxu0 %v7565
        %8037 = vmatprep.subr.mxu0 0.0
        %8038 = vmatpush1.msra.mxu0 0.0
        %8039 = vmatprep.subr.mxu0 0.0
        %8040 = vmatpush1.msra.mxu0 0.0
        %8041 = vmatprep.subr.mxu0 0.0
        %8042 = vmatpush1.msra.mxu0 0.0
        %8043 = vmatprep.subr.mxu0 0.0
        %8044 = vmatpush1.msra.mxu0 0.0
        %8045 = vmatprep.subr.mxu0 0.0
        %8046 = vmatpush1.msra.mxu0 0.0
        %8047 = vmatprep.subr.mxu0 0.0
        %8048 = vmatpush1.msra.mxu0 0.0
        %8049 = vmatprep.subr.mxu0 0.0
        %8050 = vmatpush1.msra.mxu0 0.0
        %8051 = vmatprep.subr.mxu0 0.0
        %8052 = vmatpush1.msra.mxu0 0.0
        %8053 = vmatprep.subr.mxu0 0.0
        %8054 = vmatpush1.msra.mxu0 0.0
        %8055 = vmatprep.subr.mxu0 0.0
        %8056 = vmatpush1.msra.mxu0 0.0
        %8057 = vmatprep.subr.mxu0 0.0
        %8058 = vmatpush1.msra.mxu0 0.0
        %8059 = vmatprep.subr.mxu0 0.0
        %8060 = vmatpush1.msra.mxu0 0.0
        %8061 = vmatprep.subr.mxu0 0.0
        %8062 = vmatpush1.msra.mxu0 0.0
        %8063 = vmatprep.subr.mxu0 0.0
        %8064 = vmatpush1.msra.mxu0 0.0
        %8065 = vmatprep.subr.mxu0 0.0
        %8066 = vmatpush1.msra.mxu0 0.0
        %8067 = vmatprep.subr.mxu0 0.0
        %8068 = vmatpush1.msra.mxu0 0.0
        %8069 = vmatprep.subr.mxu0 0.0
        %8070 = vmatpush1.msra.mxu0 0.0
        %8071 = vmatprep.subr.mxu0 0.0
        %8072 = vmatpush1.msra.mxu0 0.0
        %8073 = vmatprep.subr.mxu0 0.0
        %8074 = vmatpush1.msra.mxu0 0.0
        %8075 = vmatprep.subr.mxu0 0.0
        %8076 = vmatpush1.msra.mxu0 0.0
        %8077 = vmatprep.subr.mxu0 0.0
        %8078 = vmatpush1.msra.mxu0 0.0
        %8079 = vmatprep.subr.mxu0 0.0
        %8080 = vmatpush1.msra.mxu0 0.0
        %8081 = vmatprep.subr.mxu0 0.0
        %8082 = vmatpush1.msra.mxu0 0.0
        %8083 = vmatprep.subr.mxu0 0.0
        %8084 = vmatpush1.msra.mxu0 0.0
        %8085 = vmatprep.subr.mxu0 0.0
        %8086 = vmatpush1.msra.mxu0 0.0
        %8087 = vmatprep.subr.mxu0 0.0
        %8088 = vmatpush1.msra.mxu0 0.0
        %8089 = vmatprep.subr.mxu0 0.0
        %8090 = vmatpush1.msra.mxu0 0.0
        %8091 = vmatprep.subr.mxu0 0.0
        %8092 = vmatpush1.msra.mxu0 0.0
        %8093 = vmatprep.subr.mxu0 0.0
        %8094 = vmatpush1.msra.mxu0 0.0
        %8095 = vmatprep.subr.mxu0 0.0
        %8096 = vmatpush1.msra.mxu0 0.0
        %8097 = vmatprep.mubr.f32.mxu0 0.0
        %8098 = vmatmul.mubr.f32.gmra.mrb[0].mxu0 %v8028
        %v8099 = vpop.f32.mrb[0].mxu0
        %v8100 = vadd.f32 0.0, %v8099
        %v8101 = vpop.f32.mrb[0].mxu0
        %v8102 = vadd.f32 0.0, %v8101
        %8103 = vmatprep.mubr.f32.mxu0 0.0
        %8104 = vmatmul.mubr.f32.gmra.mrb[0].mxu0 %v8031
        %v8105 = vpop.f32.mrb[0].mxu0
        %v8106 = vadd.f32 0.0, %v8105
        %v8107 = vpop.f32.mrb[0].mxu0
        %v8108 = vadd.f32 0.0, %v8107
        %8109 = vdwg.mxu0
        %v8110 = vadd.f32 %v8020, %v8100
        %v8111 = vadd.f32 %v8021, %v8102
        %v8112 = vadd.f32 %v8022, %v8106
        %v8113 = vadd.f32 %v8023, %v8108
        %s8114 = scalar_lea.vmem [#allocation2], 1088
        %v8115 = vld [vmem:[%s8114] sm:$0xff]
        %v8116 = vld [vmem:[%s8114 + $0x8] sm:$0xff]
        %v8118 = vsel %vm300, %v8115, 0
        %v8121 = vsel %vm300, %v8116, 0
        %8123 = vmatprep.subr.mxu0 %v7592
        %8124 = vmatpush1.msra.mxu0 %v7591
        %8125 = vmatprep.subr.mxu0 %v7594
        %8126 = vmatpush1.msra.mxu0 %v7593
        %8127 = vmatprep.subr.mxu0 0.0
        %8128 = vmatpush1.msra.mxu0 0.0
        %8129 = vmatprep.subr.mxu0 0.0
        %8130 = vmatpush1.msra.mxu0 0.0
        %8131 = vmatprep.subr.mxu0 0.0
        %8132 = vmatpush1.msra.mxu0 0.0
        %8133 = vmatprep.subr.mxu0 0.0
        %8134 = vmatpush1.msra.mxu0 0.0
        %8135 = vmatprep.subr.mxu0 0.0
        %8136 = vmatpush1.msra.mxu0 0.0
        %8137 = vmatprep.subr.mxu0 0.0
        %8138 = vmatpush1.msra.mxu0 0.0
        %8139 = vmatprep.subr.mxu0 0.0
        %8140 = vmatpush1.msra.mxu0 0.0
        %8141 = vmatprep.subr.mxu0 0.0
        %8142 = vmatpush1.msra.mxu0 0.0
        %8143 = vmatprep.subr.mxu0 0.0
        %8144 = vmatpush1.msra.mxu0 0.0
        %8145 = vmatprep.subr.mxu0 0.0
        %8146 = vmatpush1.msra.mxu0 0.0
        %8147 = vmatprep.subr.mxu0 0.0
        %8148 = vmatpush1.msra.mxu0 0.0
        %8149 = vmatprep.subr.mxu0 0.0
        %8150 = vmatpush1.msra.mxu0 0.0
        %8151 = vmatprep.subr.mxu0 0.0
        %8152 = vmatpush1.msra.mxu0 0.0
        %8153 = vmatprep.subr.mxu0 0.0
        %8154 = vmatpush1.msra.mxu0 0.0
        %8155 = vmatprep.subr.mxu0 0.0
        %8156 = vmatpush1.msra.mxu0 0.0
        %8157 = vmatprep.subr.mxu0 0.0
        %8158 = vmatpush1.msra.mxu0 0.0
        %8159 = vmatprep.subr.mxu0 0.0
        %8160 = vmatpush1.msra.mxu0 0.0
        %8161 = vmatprep.subr.mxu0 0.0
        %8162 = vmatpush1.msra.mxu0 0.0
        %8163 = vmatprep.subr.mxu0 0.0
        %8164 = vmatpush1.msra.mxu0 0.0
        %8165 = vmatprep.subr.mxu0 0.0
        %8166 = vmatpush1.msra.mxu0 0.0
        %8167 = vmatprep.subr.mxu0 0.0
        %8168 = vmatpush1.msra.mxu0 0.0
        %8169 = vmatprep.subr.mxu0 0.0
        %8170 = vmatpush1.msra.mxu0 0.0
        %8171 = vmatprep.subr.mxu0 0.0
        %8172 = vmatpush1.msra.mxu0 0.0
        %8173 = vmatprep.subr.mxu0 0.0
        %8174 = vmatpush1.msra.mxu0 0.0
        %8175 = vmatprep.subr.mxu0 0.0
        %8176 = vmatpush1.msra.mxu0 0.0
        %8177 = vmatprep.subr.mxu0 0.0
        %8178 = vmatpush1.msra.mxu0 0.0
        %8179 = vmatprep.subr.mxu0 0.0
        %8180 = vmatpush1.msra.mxu0 0.0
        %8181 = vmatprep.subr.mxu0 0.0
        %8182 = vmatpush1.msra.mxu0 0.0
        %8183 = vmatprep.subr.mxu0 0.0
        %8184 = vmatpush1.msra.mxu0 0.0
        %8185 = vmatprep.subr.mxu0 0.0
        %8186 = vmatpush1.msra.mxu0 0.0
        %8187 = vmatprep.mubr.f32.mxu0 0.0
        %8188 = vmatmul.mubr.f32.gmra.mrb[0].mxu0 %v8118
        %v8189 = vpop.f32.mrb[0].mxu0
        %v8190 = vadd.f32 0.0, %v8189
        %v8191 = vpop.f32.mrb[0].mxu0
        %v8192 = vadd.f32 0.0, %v8191
        %8193 = vmatprep.mubr.f32.mxu0 0.0
        %8194 = vmatmul.mubr.f32.gmra.mrb[0].mxu0 %v8121
        %v8195 = vpop.f32.mrb[0].mxu0
        %v8196 = vadd.f32 0.0, %v8195
        %v8197 = vpop.f32.mrb[0].mxu0
        %v8198 = vadd.f32 0.0, %v8197
        %8199 = vdwg.mxu0
        %v8200 = vadd.f32 %v8110, %v8190
        %v8201 = vadd.f32 %v8111, %v8192
        %v8202 = vadd.f32 %v8112, %v8196
        %v8203 = vadd.f32 %v8113, %v8198
        %8204 = vrot.lane.b32.xlu0 %v7619, 112
        %v8205 = vpop.permute.xlu0 %8204
        %8206 = vrot.lane.b32.xlu0 %v7621, 112
        %v8207 = vpop.permute.xlu0 %8206
        %8208 = vrot.lane.b32.xlu0 %v7620, 112
        %v8209 = vpop.permute.xlu0 %8208
        %8210 = vrot.lane.b32.xlu0 %v7622, 112
        %v8211 = vpop.permute.xlu0 %8210
        %v8212 = vsel %vm870, %v8205, %v8209
        %v8213 = vsel %vm870, %v8207, %v8211
        %v8214 = vsel %vm870, %v8209, %v8205
        %v8215 = vsel %vm870, %v8211, %v8207
        %s8216 = scalar_lea.vmem [#allocation2], 1104
        %v8217 = vld [vmem:[%s8216] sm:$0xff]
        %v8218 = vld [vmem:[%s8216 + $0x8] sm:$0xff]
        %v8220 = vsel %vm300, %v8217, 0
        %v8223 = vsel %vm300, %v8218, 0
        %8225 = vmatprep.subr.mxu0 %v8214
        %8226 = vmatpush1.msra.mxu0 %v8212
        %8227 = vmatprep.subr.mxu0 %v8215
        %8228 = vmatpush1.msra.mxu0 %v8213
        %8229 = vmatprep.subr.mxu0 0.0
        %8230 = vmatpush1.msra.mxu0 0.0
        %8231 = vmatprep.subr.mxu0 0.0
        %8232 = vmatpush1.msra.mxu0 0.0
        %8233 = vmatprep.subr.mxu0 0.0
        %8234 = vmatpush1.msra.mxu0 0.0
        %8235 = vmatprep.subr.mxu0 0.0
        %8236 = vmatpush1.msra.mxu0 0.0
        %8237 = vmatprep.subr.mxu0 0.0
        %8238 = vmatpush1.msra.mxu0 0.0
        %8239 = vmatprep.subr.mxu0 0.0
        %8240 = vmatpush1.msra.mxu0 0.0
        %8241 = vmatprep.subr.mxu0 0.0
        %8242 = vmatpush1.msra.mxu0 0.0
        %8243 = vmatprep.subr.mxu0 0.0
        %8244 = vmatpush1.msra.mxu0 0.0
        %8245 = vmatprep.subr.mxu0 0.0
        %8246 = vmatpush1.msra.mxu0 0.0
        %8247 = vmatprep.subr.mxu0 0.0
        %8248 = vmatpush1.msra.mxu0 0.0
        %8249 = vmatprep.subr.mxu0 0.0
        %8250 = vmatpush1.msra.mxu0 0.0
        %8251 = vmatprep.subr.mxu0 0.0
        %8252 = vmatpush1.msra.mxu0 0.0
        %8253 = vmatprep.subr.mxu0 0.0
        %8254 = vmatpush1.msra.mxu0 0.0
        %8255 = vmatprep.subr.mxu0 0.0
        %8256 = vmatpush1.msra.mxu0 0.0
        %8257 = vmatprep.subr.mxu0 0.0
        %8258 = vmatpush1.msra.mxu0 0.0
        %8259 = vmatprep.subr.mxu0 0.0
        %8260 = vmatpush1.msra.mxu0 0.0
        %8261 = vmatprep.subr.mxu0 0.0
        %8262 = vmatpush1.msra.mxu0 0.0
        %8263 = vmatprep.subr.mxu0 0.0
        %8264 = vmatpush1.msra.mxu0 0.0
        %8265 = vmatprep.subr.mxu0 0.0
        %8266 = vmatpush1.msra.mxu0 0.0
        %8267 = vmatprep.subr.mxu0 0.0
        %8268 = vmatpush1.msra.mxu0 0.0
        %8269 = vmatprep.subr.mxu0 0.0
        %8270 = vmatpush1.msra.mxu0 0.0
        %8271 = vmatprep.subr.mxu0 0.0
        %8272 = vmatpush1.msra.mxu0 0.0
        %8273 = vmatprep.subr.mxu0 0.0
        %8274 = vmatpush1.msra.mxu0 0.0
        %8275 = vmatprep.subr.mxu0 0.0
        %8276 = vmatpush1.msra.mxu0 0.0
        %8277 = vmatprep.subr.mxu0 0.0
        %8278 = vmatpush1.msra.mxu0 0.0
        %8279 = vmatprep.subr.mxu0 0.0
        %8280 = vmatpush1.msra.mxu0 0.0
        %8281 = vmatprep.subr.mxu0 0.0
        %8282 = vmatpush1.msra.mxu0 0.0
        %8283 = vmatprep.subr.mxu0 0.0
        %8284 = vmatpush1.msra.mxu0 0.0
        %8285 = vmatprep.subr.mxu0 0.0
        %8286 = vmatpush1.msra.mxu0 0.0
        %8287 = vmatprep.subr.mxu0 0.0
        %8288 = vmatpush1.msra.mxu0 0.0
        %8289 = vmatprep.mubr.f32.mxu0 0.0
        %8290 = vmatmul.mubr.f32.gmra.mrb[0].mxu0 %v8220
        %v8291 = vpop.f32.mrb[0].mxu0
        %v8292 = vadd.f32 0.0, %v8291
        %v8293 = vpop.f32.mrb[0].mxu0
        %v8294 = vadd.f32 0.0, %v8293
        %8295 = vmatprep.mubr.f32.mxu0 0.0
        %8296 = vmatmul.mubr.f32.gmra.mrb[0].mxu0 %v8223
        %v8297 = vpop.f32.mrb[0].mxu0
        %v8298 = vadd.f32 0.0, %v8297
        %v8299 = vpop.f32.mrb[0].mxu0
        %v8300 = vadd.f32 0.0, %v8299
        %8301 = vdwg.mxu0
        %v8302 = vadd.f32 %v8200, %v8292
        %v8303 = vadd.f32 %v8201, %v8294
        %v8304 = vadd.f32 %v8202, %v8298
        %v8305 = vadd.f32 %v8203, %v8300
        %8306 = vrot.lane.b32.xlu0 %v7563, 112
        %v8307 = vpop.permute.xlu0 %8306
        %8308 = vrot.lane.b32.xlu0 %v7565, 112
        %v8309 = vpop.permute.xlu0 %8308
        %8310 = vrot.lane.b32.xlu0 %v7564, 112
        %v8311 = vpop.permute.xlu0 %8310
        %8312 = vrot.lane.b32.xlu0 %v7566, 112
        %v8313 = vpop.permute.xlu0 %8312
        %v8314 = vsel %vm870, %v8307, %v8311
        %v8315 = vsel %vm870, %v8309, %v8313
        %v8316 = vsel %vm870, %v8311, %v8307
        %v8317 = vsel %vm870, %v8313, %v8309
        %s8318 = scalar_lea.vmem [#allocation2], 1120
        %v8319 = vld [vmem:[%s8318] sm:$0xff]
        %v8320 = vld [vmem:[%s8318 + $0x8] sm:$0xff]
        %v8322 = vsel %vm300, %v8319, 0
        %v8325 = vsel %vm300, %v8320, 0
        %8327 = vmatprep.subr.mxu0 %v8316
        %8328 = vmatpush1.msra.mxu0 %v8314
        %8329 = vmatprep.subr.mxu0 %v8317
        %8330 = vmatpush1.msra.mxu0 %v8315
        %8331 = vmatprep.subr.mxu0 0.0
        %8332 = vmatpush1.msra.mxu0 0.0
        %8333 = vmatprep.subr.mxu0 0.0
        %8334 = vmatpush1.msra.mxu0 0.0
        %8335 = vmatprep.subr.mxu0 0.0
        %8336 = vmatpush1.msra.mxu0 0.0
        %8337 = vmatprep.subr.mxu0 0.0
        %8338 = vmatpush1.msra.mxu0 0.0
        %8339 = vmatprep.subr.mxu0 0.0
        %8340 = vmatpush1.msra.mxu0 0.0
        %8341 = vmatprep.subr.mxu0 0.0
        %8342 = vmatpush1.msra.mxu0 0.0
        %8343 = vmatprep.subr.mxu0 0.0
        %8344 = vmatpush1.msra.mxu0 0.0
        %8345 = vmatprep.subr.mxu0 0.0
        %8346 = vmatpush1.msra.mxu0 0.0
        %8347 = vmatprep.subr.mxu0 0.0
        %8348 = vmatpush1.msra.mxu0 0.0
        %8349 = vmatprep.subr.mxu0 0.0
        %8350 = vmatpush1.msra.mxu0 0.0
        %8351 = vmatprep.subr.mxu0 0.0
        %8352 = vmatpush1.msra.mxu0 0.0
        %8353 = vmatprep.subr.mxu0 0.0
        %8354 = vmatpush1.msra.mxu0 0.0
        %8355 = vmatprep.subr.mxu0 0.0
        %8356 = vmatpush1.msra.mxu0 0.0
        %8357 = vmatprep.subr.mxu0 0.0
        %8358 = vmatpush1.msra.mxu0 0.0
        %8359 = vmatprep.subr.mxu0 0.0
        %8360 = vmatpush1.msra.mxu0 0.0
        %8361 = vmatprep.subr.mxu0 0.0
        %8362 = vmatpush1.msra.mxu0 0.0
        %8363 = vmatprep.subr.mxu0 0.0
        %8364 = vmatpush1.msra.mxu0 0.0
        %8365 = vmatprep.subr.mxu0 0.0
        %8366 = vmatpush1.msra.mxu0 0.0
        %8367 = vmatprep.subr.mxu0 0.0
        %8368 = vmatpush1.msra.mxu0 0.0
        %8369 = vmatprep.subr.mxu0 0.0
        %8370 = vmatpush1.msra.mxu0 0.0
        %8371 = vmatprep.subr.mxu0 0.0
        %8372 = vmatpush1.msra.mxu0 0.0
        %8373 = vmatprep.subr.mxu0 0.0
        %8374 = vmatpush1.msra.mxu0 0.0
        %8375 = vmatprep.subr.mxu0 0.0
        %8376 = vmatpush1.msra.mxu0 0.0
        %8377 = vmatprep.subr.mxu0 0.0
        %8378 = vmatpush1.msra.mxu0 0.0
        %8379 = vmatprep.subr.mxu0 0.0
        %8380 = vmatpush1.msra.mxu0 0.0
        %8381 = vmatprep.subr.mxu0 0.0
        %8382 = vmatpush1.msra.mxu0 0.0
        %8383 = vmatprep.subr.mxu0 0.0
        %8384 = vmatpush1.msra.mxu0 0.0
        %8385 = vmatprep.subr.mxu0 0.0
        %8386 = vmatpush1.msra.mxu0 0.0
        %8387 = vmatprep.subr.mxu0 0.0
        %8388 = vmatpush1.msra.mxu0 0.0
        %8389 = vmatprep.subr.mxu0 0.0
        %8390 = vmatpush1.msra.mxu0 0.0
        %8391 = vmatprep.mubr.f32.mxu0 0.0
        %8392 = vmatmul.mubr.f32.gmra.mrb[0].mxu0 %v8322
        %v8393 = vpop.f32.mrb[0].mxu0
        %v8394 = vadd.f32 0.0, %v8393
        %v8395 = vpop.f32.mrb[0].mxu0
        %v8396 = vadd.f32 0.0, %v8395
        %8397 = vmatprep.mubr.f32.mxu0 0.0
        %8398 = vmatmul.mubr.f32.gmra.mrb[0].mxu0 %v8325
        %v8399 = vpop.f32.mrb[0].mxu0
        %v8400 = vadd.f32 0.0, %v8399
        %v8401 = vpop.f32.mrb[0].mxu0
        %v8402 = vadd.f32 0.0, %v8401
        %8403 = vdwg.mxu0
        %v8404 = vadd.f32 %v8302, %v8394
        %v8405 = vadd.f32 %v8303, %v8396
        %v8406 = vadd.f32 %v8304, %v8400
        %v8407 = vadd.f32 %v8305, %v8402
        %8408 = vrot.lane.b32.xlu0 %v7591, 112
        %v8409 = vpop.permute.xlu0 %8408
        %8410 = vrot.lane.b32.xlu0 %v7593, 112
        %v8411 = vpop.permute.xlu0 %8410
        %8412 = vrot.lane.b32.xlu0 %v7592, 112
        %v8413 = vpop.permute.xlu0 %8412
        %8414 = vrot.lane.b32.xlu0 %v7594, 112
        %v8415 = vpop.permute.xlu0 %8414
        %v8416 = vsel %vm870, %v8409, %v8413
        %v8417 = vsel %vm870, %v8411, %v8415
        %v8418 = vsel %vm870, %v8413, %v8409
        %v8419 = vsel %vm870, %v8415, %v8411
        %s8420 = scalar_lea.vmem [#allocation2], 1136
        %v8421 = vld [vmem:[%s8420] sm:$0xff]
        %v8422 = vld [vmem:[%s8420 + $0x8] sm:$0xff]
        %v8424 = vsel %vm300, %v8421, 0
        %v8427 = vsel %vm300, %v8422, 0
        %8429 = vmatprep.subr.mxu0 %v8418
        %8430 = vmatpush1.msra.mxu0 %v8416
        %8431 = vmatprep.subr.mxu0 %v8419
        %8432 = vmatpush1.msra.mxu0 %v8417
        %8433 = vmatprep.subr.mxu0 0.0
        %8434 = vmatpush1.msra.mxu0 0.0
        %8435 = vmatprep.subr.mxu0 0.0
        %8436 = vmatpush1.msra.mxu0 0.0
        %8437 = vmatprep.subr.mxu0 0.0
        %8438 = vmatpush1.msra.mxu0 0.0
        %8439 = vmatprep.subr.mxu0 0.0
        %8440 = vmatpush1.msra.mxu0 0.0
        %8441 = vmatprep.subr.mxu0 0.0
        %8442 = vmatpush1.msra.mxu0 0.0
        %8443 = vmatprep.subr.mxu0 0.0
        %8444 = vmatpush1.msra.mxu0 0.0
        %8445 = vmatprep.subr.mxu0 0.0
        %8446 = vmatpush1.msra.mxu0 0.0
        %8447 = vmatprep.subr.mxu0 0.0
        %8448 = vmatpush1.msra.mxu0 0.0
        %8449 = vmatprep.subr.mxu0 0.0
        %8450 = vmatpush1.msra.mxu0 0.0
        %8451 = vmatprep.subr.mxu0 0.0
        %8452 = vmatpush1.msra.mxu0 0.0
        %8453 = vmatprep.subr.mxu0 0.0
        %8454 = vmatpush1.msra.mxu0 0.0
        %8455 = vmatprep.subr.mxu0 0.0
        %8456 = vmatpush1.msra.mxu0 0.0
        %8457 = vmatprep.subr.mxu0 0.0
        %8458 = vmatpush1.msra.mxu0 0.0
        %8459 = vmatprep.subr.mxu0 0.0
        %8460 = vmatpush1.msra.mxu0 0.0
        %8461 = vmatprep.subr.mxu0 0.0
        %8462 = vmatpush1.msra.mxu0 0.0
        %8463 = vmatprep.subr.mxu0 0.0
        %8464 = vmatpush1.msra.mxu0 0.0
        %8465 = vmatprep.subr.mxu0 0.0
        %8466 = vmatpush1.msra.mxu0 0.0
        %8467 = vmatprep.subr.mxu0 0.0
        %8468 = vmatpush1.msra.mxu0 0.0
        %8469 = vmatprep.subr.mxu0 0.0
        %8470 = vmatpush1.msra.mxu0 0.0
        %8471 = vmatprep.subr.mxu0 0.0
        %8472 = vmatpush1.msra.mxu0 0.0
        %8473 = vmatprep.subr.mxu0 0.0
        %8474 = vmatpush1.msra.mxu0 0.0
        %8475 = vmatprep.subr.mxu0 0.0
        %8476 = vmatpush1.msra.mxu0 0.0
        %8477 = vmatprep.subr.mxu0 0.0
        %8478 = vmatpush1.msra.mxu0 0.0
        %8479 = vmatprep.subr.mxu0 0.0
        %8480 = vmatpush1.msra.mxu0 0.0
        %8481 = vmatprep.subr.mxu0 0.0
        %8482 = vmatpush1.msra.mxu0 0.0
        %8483 = vmatprep.subr.mxu0 0.0
        %8484 = vmatpush1.msra.mxu0 0.0
        %8485 = vmatprep.subr.mxu0 0.0
        %8486 = vmatpush1.msra.mxu0 0.0
        %8487 = vmatprep.subr.mxu0 0.0
        %8488 = vmatpush1.msra.mxu0 0.0
        %8489 = vmatprep.subr.mxu0 0.0
        %8490 = vmatpush1.msra.mxu0 0.0
        %8491 = vmatprep.subr.mxu0 0.0
        %8492 = vmatpush1.msra.mxu0 0.0
        %8493 = vmatprep.mubr.f32.mxu0 0.0
        %8494 = vmatmul.mubr.f32.gmra.mrb[0].mxu0 %v8424
        %v8495 = vpop.f32.mrb[0].mxu0
        %v8496 = vadd.f32 0.0, %v8495
        %v8497 = vpop.f32.mrb[0].mxu0
        %v8498 = vadd.f32 0.0, %v8497
        %8499 = vmatprep.mubr.f32.mxu0 0.0
        %8500 = vmatmul.mubr.f32.gmra.mrb[0].mxu0 %v8427
        %v8501 = vpop.f32.mrb[0].mxu0
        %v8502 = vadd.f32 0.0, %v8501
        %v8503 = vpop.f32.mrb[0].mxu0
        %v8504 = vadd.f32 0.0, %v8503
        %8505 = vdwg.mxu0
        %v8506 = vadd.f32 %v8404, %v8496
        %v8507 = vadd.f32 %v8405, %v8498
        %v8508 = vadd.f32 %v8406, %v8502
        %v8509 = vadd.f32 %v8407, %v8504
        %v8510 = vmul.f32 %v8506, 0.5
        %v8511 = vmul.f32 %v8507, 0.5
        %v8512 = vmul.f32 %v8508, 0.5
        %v8513 = vmul.f32 %v8509, 0.5
        %v8514 = vmul.f32 %v8506, 0.70710677
        %v8515 = vmul.f32 %v8507, 0.70710677
        %v8516 = vmul.f32 %v8508, 0.70710677
        %v8517 = vmul.f32 %v8509, 0.70710677
        %vm8518 = vcmp.lt.f32.partialorder %v8514, 0.0
        %vm8519 = vcmp.lt.f32.partialorder %v8515, 0.0
        %vm8520 = vcmp.lt.f32.partialorder %v8516, 0.0
        %vm8521 = vcmp.lt.f32.partialorder %v8517, 0.0
        %v8522 = vsel %vm8518, -1.0, 1.0
        %v8523 = vsel %vm8519, -1.0, 1.0
        %v8524 = vsel %vm8520, -1.0, 1.0
        %v8525 = vsel %vm8521, -1.0, 1.0
        %v8526 = vand.u32 2147483647, %v8514
        %v8527 = vand.u32 2147483647, %v8515
        %v8528 = vand.u32 2147483647, %v8516
        %v8529 = vand.u32 2147483647, %v8517
        %v8530 = vmul.f32 %v8526, 0.3275911
        %v8531 = vmul.f32 %v8527, 0.3275911
        %v8532 = vmul.f32 %v8528, 0.3275911
        %v8533 = vmul.f32 %v8529, 0.3275911
        %v8534 = vadd.f32 %v8530, 1.0
        %v8535 = vadd.f32 %v8531, 1.0
        %v8536 = vadd.f32 %v8532, 1.0
        %v8537 = vadd.f32 %v8533, 1.0
        %v8538 = vrcp.pop %v8534
        %v8539 = vrcp.pop %v8535
        %v8540 = vrcp.pop %v8536
        %v8541 = vrcp.pop %v8537
        %v8542 = vmul.f32 %v8538, 1.0614054
        %v8543 = vmul.f32 %v8539, 1.0614054
        %v8544 = vmul.f32 %v8540, 1.0614054
        %v8545 = vmul.f32 %v8541, 1.0614054
        %v8546 = vadd.f32 %v8542, -1.4531521
        %v8547 = vadd.f32 %v8543, -1.4531521
        %v8548 = vadd.f32 %v8544, -1.4531521
        %v8549 = vadd.f32 %v8545, -1.4531521
        %v8550 = vmul.f32 %v8546, %v8538
        %v8551 = vmul.f32 %v8547, %v8539
        %v8552 = vmul.f32 %v8548, %v8540
        %v8553 = vmul.f32 %v8549, %v8541
        %v8554 = vadd.f32 %v8550, 1.4214138
        %v8555 = vadd.f32 %v8551, 1.4214138
        %v8556 = vadd.f32 %v8552, 1.4214138
        %v8557 = vadd.f32 %v8553, 1.4214138
        %v8558 = vmul.f32 %v8554, %v8538
        %v8559 = vmul.f32 %v8555, %v8539
        %v8560 = vmul.f32 %v8556, %v8540
        %v8561 = vmul.f32 %v8557, %v8541
        %v8562 = vadd.f32 %v8558, -0.28449672
        %v8563 = vadd.f32 %v8559, -0.28449672
        %v8564 = vadd.f32 %v8560, -0.28449672
        %v8565 = vadd.f32 %v8561, -0.28449672
        %v8566 = vmul.f32 %v8562, %v8538
        %v8567 = vmul.f32 %v8563, %v8539
        %v8568 = vmul.f32 %v8564, %v8540
        %v8569 = vmul.f32 %v8565, %v8541
        %v8570 = vadd.f32 %v8566, 0.2548296
        %v8571 = vadd.f32 %v8567, 0.2548296
        %v8572 = vadd.f32 %v8568, 0.2548296
        %v8573 = vadd.f32 %v8569, 0.2548296
        %v8574 = vmul.f32 %v8570, %v8538
        %v8575 = vmul.f32 %v8571, %v8539
        %v8576 = vmul.f32 %v8572, %v8540
        %v8577 = vmul.f32 %v8573, %v8541
        %v8578 = vsub.f32 0.0, %v8526
        %v8579 = vsub.f32 0.0, %v8527
        %v8580 = vsub.f32 0.0, %v8528
        %v8581 = vsub.f32 0.0, %v8529
        %v8582 = vmul.f32 %v8578, %v8526
        %v8583 = vmul.f32 %v8579, %v8527
        %v8584 = vmul.f32 %v8580, %v8528
        %v8585 = vmul.f32 %v8581, %v8529
        %v8586 = vmul.f32 %v8582, 1.442695
        %v8587 = vpow.pop %v8586
        %v8588 = vmul.f32 %v8583, 1.442695
        %v8589 = vpow.pop %v8588
        %v8590 = vmul.f32 %v8584, 1.442695
        %v8591 = vpow.pop %v8590
        %v8592 = vmul.f32 %v8585, 1.442695
        %v8593 = vpow.pop %v8592
        %v8594 = vmul.f32 %v8574, %v8587
        %v8595 = vmul.f32 %v8575, %v8589
        %v8596 = vmul.f32 %v8576, %v8591
        %v8597 = vmul.f32 %v8577, %v8593
        %v8598 = vsub.f32 1.0, %v8594
        %v8599 = vsub.f32 1.0, %v8595
        %v8600 = vsub.f32 1.0, %v8596
        %v8601 = vsub.f32 1.0, %v8597
        %v8602 = vmul.f32 %v8522, %v8598
        %v8603 = vmul.f32 %v8523, %v8599
        %v8604 = vmul.f32 %v8524, %v8600
        %v8605 = vmul.f32 %v8525, %v8601
        %v8606 = vadd.f32 %v8602, 1.0
        %v8607 = vadd.f32 %v8603, 1.0
        %v8608 = vadd.f32 %v8604, 1.0
        %v8609 = vadd.f32 %v8605, 1.0
        %v8610 = vmul.f32 %v8510, %v8606
        %v8611 = vmul.f32 %v8511, %v8607
        %v8612 = vmul.f32 %v8512, %v8608
        %v8613 = vmul.f32 %v8513, %v8609
        %vm8614 = vcmp.lt.f32.partialorder %v8610, 0.0
        %vm8615 = vcmp.lt.f32.partialorder %v8611, 0.0
        %vm8616 = vcmp.lt.f32.partialorder %v8612, 0.0
        %vm8617 = vcmp.lt.f32.partialorder %v8613, 0.0
        %v8618 = vsel %vm8614, -1.0, 1.0
        %v8619 = vsel %vm8615, -1.0, 1.0
        %v8620 = vsel %vm8616, -1.0, 1.0
        %v8621 = vsel %vm8617, -1.0, 1.0
        %v8622 = vand.u32 2147483647, %v8610
        %v8623 = vand.u32 2147483647, %v8611
        %v8624 = vand.u32 2147483647, %v8612
        %v8625 = vand.u32 2147483647, %v8613
        %vm8626 = vcmp.gt.f32.partialorder %v8622, 2.4142137
        %vm8627 = vcmp.gt.f32.partialorder %v8623, 2.4142137
        %vm8628 = vcmp.gt.f32.partialorder %v8624, 2.4142137
        %vm8629 = vcmp.gt.f32.partialorder %v8625, 2.4142137
        %vm8630 = vcmp.gt.f32.partialorder %v8622, 0.41421357
        %vm8631 = vcmp.gt.f32.partialorder %v8623, 0.41421357
        %vm8632 = vcmp.gt.f32.partialorder %v8624, 0.41421357
        %vm8633 = vcmp.gt.f32.partialorder %v8625, 0.41421357
        %v8634 = vmax.f32 %v8622, 1e-30
        %v8635 = vmax.f32 %v8623, 1e-30
        %v8636 = vmax.f32 %v8624, 1e-30
        %v8637 = vmax.f32 %v8625, 1e-30
        %v8638 = vrcp.pop %v8634
        %v8639 = vmul.f32 -1.0, %v8638
        %v8640 = vrcp.pop %v8635
        %v8641 = vmul.f32 -1.0, %v8640
        %v8642 = vrcp.pop %v8636
        %v8643 = vmul.f32 -1.0, %v8642
        %v8644 = vrcp.pop %v8637
        %v8645 = vmul.f32 -1.0, %v8644
        %v8646 = vsub.f32 %v8622, 1.0
        %v8647 = vsub.f32 %v8623, 1.0
        %v8648 = vsub.f32 %v8624, 1.0
        %v8649 = vsub.f32 %v8625, 1.0
        %v8650 = vadd.f32 %v8622, 1.0
        %v8651 = vadd.f32 %v8623, 1.0
        %v8652 = vadd.f32 %v8624, 1.0
        %v8653 = vadd.f32 %v8625, 1.0
        %v8654 = vrcp.pop %v8650
        %v8655 = vmul.f32 %v8646, %v8654
        %v8656 = vrcp.pop %v8651
        %v8657 = vmul.f32 %v8647, %v8656
        %v8658 = vrcp.pop %v8652
        %v8659 = vmul.f32 %v8648, %v8658
        %v8660 = vrcp.pop %v8653
        %v8661 = vmul.f32 %v8649, %v8660
        %v8662 = vsel %vm8630, %v8655, %v8622
        %v8663 = vsel %vm8631, %v8657, %v8623
        %v8664 = vsel %vm8632, %v8659, %v8624
        %v8665 = vsel %vm8633, %v8661, %v8625
        %v8666 = vsel %vm8626, %v8639, %v8662
        %v8667 = vsel %vm8627, %v8641, %v8663
        %v8668 = vsel %vm8628, %v8643, %v8664
        %v8669 = vsel %vm8629, %v8645, %v8665
        %v8670 = vsel %vm8630, 0.7853982, 0.0
        %v8671 = vsel %vm8631, 0.7853982, 0.0
        %v8672 = vsel %vm8632, 0.7853982, 0.0
        %v8673 = vsel %vm8633, 0.7853982, 0.0
        %v8674 = vsel %vm8626, 1.5707964, %v8670
        %v8675 = vsel %vm8627, 1.5707964, %v8671
        %v8676 = vsel %vm8628, 1.5707964, %v8672
        %v8677 = vsel %vm8629, 1.5707964, %v8673
        %v8678 = vmul.f32 %v8666, %v8666
        %v8679 = vmul.f32 %v8667, %v8667
        %v8680 = vmul.f32 %v8668, %v8668
        %v8681 = vmul.f32 %v8669, %v8669
        %v8682 = vmul.f32 %v8678, 0.080537446
        %v8683 = vmul.f32 %v8679, 0.080537446
        %v8684 = vmul.f32 %v8680, 0.080537446
        %v8685 = vmul.f32 %v8681, 0.080537446
        %v8686 = vsub.f32 %v8682, 0.13877685
        %v8687 = vsub.f32 %v8683, 0.13877685
        %v8688 = vsub.f32 %v8684, 0.13877685
        %v8689 = vsub.f32 %v8685, 0.13877685
        %v8690 = vmul.f32 %v8686, %v8678
        %v8691 = vmul.f32 %v8687, %v8679
        %v8692 = vmul.f32 %v8688, %v8680
        %v8693 = vmul.f32 %v8689, %v8681
        %v8694 = vadd.f32 %v8690, 0.19977711
        %v8695 = vadd.f32 %v8691, 0.19977711
        %v8696 = vadd.f32 %v8692, 0.19977711
        %v8697 = vadd.f32 %v8693, 0.19977711
        %v8698 = vmul.f32 %v8694, %v8678
        %v8699 = vmul.f32 %v8695, %v8679
        %v8700 = vmul.f32 %v8696, %v8680
        %v8701 = vmul.f32 %v8697, %v8681
        %v8702 = vsub.f32 %v8698, 0.3333295
        %v8703 = vsub.f32 %v8699, 0.3333295
        %v8704 = vsub.f32 %v8700, 0.3333295
        %v8705 = vsub.f32 %v8701, 0.3333295
        %v8706 = vmul.f32 %v8702, %v8678
        %v8707 = vmul.f32 %v8703, %v8679
        %v8708 = vmul.f32 %v8704, %v8680
        %v8709 = vmul.f32 %v8705, %v8681
        %v8710 = vmul.f32 %v8706, %v8666
        %v8711 = vmul.f32 %v8707, %v8667
        %v8712 = vmul.f32 %v8708, %v8668
        %v8713 = vmul.f32 %v8709, %v8669
        %v8714 = vadd.f32 %v8710, %v8666
        %v8715 = vadd.f32 %v8711, %v8667
        %v8716 = vadd.f32 %v8712, %v8668
        %v8717 = vadd.f32 %v8713, %v8669
        %v8718 = vadd.f32 %v8674, %v8714
        %v8719 = vadd.f32 %v8675, %v8715
        %v8720 = vadd.f32 %v8676, %v8716
        %v8721 = vadd.f32 %v8677, %v8717
        %v8722 = vmul.f32 %v8618, %v8718
        %v8723 = vmul.f32 %v8619, %v8719
        %v8724 = vmul.f32 %v8620, %v8720
        %v8725 = vmul.f32 %v8621, %v8721
        %v8726 = vmul.f32 %v8722, 0.15915494
        %v8727 = vmul.f32 %v8723, 0.15915494
        %v8728 = vmul.f32 %v8724, 0.15915494
        %v8729 = vmul.f32 %v8725, 0.15915494
        %8730 = vst [vmem:[%s185] sm:$0xff] %v8726
        %8731 = vst [vmem:[%s185 + $0x8] sm:$0xff] %v8727
        %8732 = vst [vmem:[%s185 + $0x10] sm:$0xff] %v8728
        %8733 = vst [vmem:[%s185 + $0x18] sm:$0xff] %v8729
        %p8734 = scmp.lt.s32.totalorder %s15, 1
        %s8735 = scalar_select %p8734, %s15, 1
        %s8736 = smul.addr %s8735, 4
        %s8737 = smul.addr %s8736, 8
        %s8738 = scalar_lea.vmem %s3, %s8737
        // Predicated region
        $region37: #{_joint_cnn_forward.1} parent=31 // pred_check
          %p8739 = pneg %p101
        $region38: #{_joint_cnn_forward.1} parent=31 // pred_check_branch
          %8741 = sbr.rel (%p8739) target = $region40
        $region39: #{_joint_cnn_forward.1} parent=31 // pred_region
          _
        $region40: #{_joint_cnn_forward.1} parent=31 // pred_fallthru
          _
      $region32: #{_joint_cnn_forward.1} parent=5 // pred_fallthru
        _
      %p8742 = scmp.le.s32.totalorder 2, %s10
      // Predicated region
      $region41: #{_joint_cnn_forward.1} parent=5 // pred_check
        %p8743 = pneg %p8742
      $region42: #{_joint_cnn_forward.1} parent=5 // pred_check_branch
        %8745 = sbr.rel (%p8743) target = $region44
      $region43: #{_joint_cnn_forward.1} parent=5 // pred_region
        %s8746 = ssub.s32 %s10, 2
        // Predicated region
        $region45: #{_joint_cnn_forward.1} parent=43 // pred_check
          %p8747 = pneg %p107
        $region46: #{_joint_cnn_forward.1} parent=43 // pred_check_branch
          %8749 = sbr.rel (%p8747) target = $region48
        $region47: #{_joint_cnn_forward.1} parent=43 // pred_region
          %p8750 = scmp.lt.s32.totalorder %s16, 1
          %s8751 = scalar_select %p8750, %s16, 1
          %s8752 = smul.addr %s8751, 4
          %s8753 = smul.addr %s8752, 8
          %s8754 = scalar_lea.vmem %s3, %s8753
        $region48: #{_joint_cnn_forward.1} parent=43 // pred_fallthru
          _
      $region44: #{_joint_cnn_forward.1} parent=5 // pred_fallthru
        _
    $region6: #{_joint_cnn_forward.1} parent=1 // loop_footer
      %s14 = sadd.s32 1, %s10
    $region7: #{_joint_cnn_forward.1} parent=1 // loop_footer_branch
      %9 = sbr.rel target = $region3
    $region8: #{_joint_cnn_forward.1} parent=1 // loop_exit
      _
    %8755 = vsyncpa [#allocation3], 1
    %s8756 = scalar_lea.sflag [#allocation3], 1
    %8757 = vsyncpa %s8756, 1

</llo_original>
